<compile_context>
chip_gen: v7x
topology: tpu7x:2x2x1
jax: 0.10.0
libtpu: 0.0.40
codegen_flags: <defaults>
</compile_context>

<pallas_src>
import numpy as np
import jax
import jax.numpy as jnp
from jax.experimental import pallas as pl
from jax.experimental.pallas import tpu as pltpu

EPS = 1e-5
NEG_SLOPE = 0.2
_VMEM = pl.BlockSpec(memory_space=pltpu.MemorySpace.VMEM)


# ---------------------------------------------------------------------------
# Fused Pallas kernel
# ---------------------------------------------------------------------------
def _ct_bn_lrelu(xb, l_ref, r_ref, gb_ref, g_ref, gt_ref, n_taps):
    """(Transposed) conv as matmuls + BatchNorm (batch stats) + LeakyReLU(0.2).

    xb:     bf16 (B*H_in, W_in*C_in)   activation, rows=(b,y), lanes=(x,c)
    l_ref:  bf16 (n_taps, B*H_out, B*H_in)   0/1 row-shift matrices (y taps)
    r_ref:  bf16 (n_taps*W_in*C_in, W_out*C_out)  x-taps + channel mixing
    gb_ref: f32  (2, C_out)            gamma / beta
    g_ref:  f32  (W_out*C_out, C_out)  lane-group -> channel (0/1)
    gt_ref: f32  (C_out, W_out*C_out)  channel -> lane-group (0/1)
    """
    parts = [jnp.dot(l_ref[k], xb, preferred_element_type=jnp.float32)
             for k in range(n_taps)]
    cat = jnp.concatenate(parts, axis=1).astype(jnp.bfloat16)           # (M, taps*K)
    y = jnp.dot(cat, r_ref[...], preferred_element_type=jnp.float32)    # (M, W*C) f32

    c = g_ref.shape[1]
    n = y.shape[0] * (y.shape[1] // c)          # B * H_out * W_out
    inv_n = 1.0 / float(n)
    s1 = jnp.sum(y, axis=0, keepdims=True)                              # (1, W*C)
    s2 = jnp.sum(y * y, axis=0, keepdims=True)
    mean = jnp.dot(s1, g_ref[...], preferred_element_type=jnp.float32) * inv_n  # (1, C)
    ex2 = jnp.dot(s2, g_ref[...], preferred_element_type=jnp.float32) * inv_n
    var = ex2 - mean * mean                     # biased variance (BN training mode)
    inv_std = jax.lax.rsqrt(var + EPS)
    scale_c = gb_ref[0:1, :] * inv_std
    shift_c = gb_ref[1:2, :] - mean * scale_c
    scale_l = jnp.dot(scale_c, gt_ref[...], preferred_element_type=jnp.float32)  # (1, W*C)
    shift_l = jnp.dot(shift_c, gt_ref[...], preferred_element_type=jnp.float32)
    z = y * scale_l + shift_l
    z = jnp.where(z > 0, z, NEG_SLOPE * z)
    return z.astype(jnp.bfloat16)


def _generator_kernel(xp_ref, emb_ref, lw_ref, lb_ref,
                      ep_ref, rp_ref, gbp_ref, gp_ref, gtp_ref,
                      l1_ref, r1_ref, gb1_ref, g1_ref, gt1_ref,
                      l2_ref, r2_ref, gb2_ref, g2_ref, gt2_ref,
                      l3_ref, r3_ref, gb3_ref, g3_ref, gt3_ref,
                      lo_ref, ro_ref, bo_ref, out_ref):
    # Linear(64 -> 100) on the embedded labels (output padded to 128 lanes).
    lab = jnp.dot(emb_ref[...].astype(jnp.bfloat16), lw_ref[...],
                  preferred_element_type=jnp.float32) + lb_ref[...]
    # z = cat([noise, label_proj], channel) on a 128-lane aligned layout.
    z = jnp.concatenate([xp_ref[...], lab], axis=1).astype(jnp.bfloat16)  # (B, 256)

    # project (ConvTranspose 1x1 -> 4x4) + three stride-2 blocks, each fused
    # with BatchNorm (batch stats) and LeakyReLU(0.2).
    h = _ct_bn_lrelu(z, ep_ref, rp_ref, gbp_ref, gp_ref, gtp_ref, 4)   # 4x4,   c0
    h = _ct_bn_lrelu(h, l1_ref, r1_ref, gb1_ref, g1_ref, gt1_ref, 4)   # 8x8,   c0/2
    h = _ct_bn_lrelu(h, l2_ref, r2_ref, gb2_ref, g2_ref, gt2_ref, 4)   # 16x16, c0/4
    h = _ct_bn_lrelu(h, l3_ref, r3_ref, gb3_ref, g3_ref, gt3_ref, 4)   # 32x32, c0/8

    # Output Conv2d(k=3, padding='same') + bias + tanh.
    parts = [jnp.dot(lo_ref[k], h, preferred_element_type=jnp.float32)
             for k in range(3)]
    cat = jnp.concatenate(parts, axis=1).astype(jnp.bfloat16)
    y = jnp.dot(cat, ro_ref[...], preferred_element_type=jnp.float32)   # (B*32, 32)
    out_ref[...] = jnp.tanh(y + bo_ref[...])


# ---------------------------------------------------------------------------
# One-time packing of PyTorch-layout parameters into kernel-ready matrices
# ---------------------------------------------------------------------------
def _kron_batch(lb, batch):
    eye = np.eye(batch, dtype=np.float32)
    return np.stack([np.kron(eye, lb[k]) for k in range(lb.shape[0])])


def _build_ct_lr(w, h_in, batch):
    """L/R for ConvTranspose2d(k=4, s=2, p=1, bias=False); w: (Cin, Cout, 4, 4)."""
    cin, cout, kh, kw = w.shape
    h_out = 2 * h_in
    lb = np.zeros((kh, h_out, h_in), np.float32)
    for ky in range(kh):
        for y in range(h_in):
            yo = 2 * y - 1 + ky
            if 0 <= yo < h_out:
                lb[ky, yo, y] = 1.0
    r = np.zeros((kh, h_in * cin, h_out * cout), np.float32)
    for ky in range(kh):
        for x in range(h_in):
            for kx in range(kw):
                xo = 2 * x - 1 + kx
                if 0 <= xo < h_out:
                    r[ky, x * cin:(x + 1) * cin, xo * cout:(xo + 1) * cout] = w[:, :, ky, kx]
    return _kron_batch(lb, batch), r.reshape(kh * h_in * cin, h_out * cout)


def _build_conv_lr(w, h, batch):
    """L/R for Conv2d(k=3, stride=1, padding=1); w: (Cout, Cin, 3, 3)."""
    cout, cin, kh, kw = w.shape
    lb = np.zeros((kh, h, h), np.float32)
    for ky in range(kh):
        for yo in range(h):
            y = yo + ky - 1
            if 0 <= y < h:
                lb[ky, yo, y] = 1.0
    r = np.zeros((kh, h * cin, h * cout), np.float32)
    for ky in range(kh):
        for xo in range(h):
            for kx in range(kw):
                x = xo + kx - 1
                if 0 <= x < h:
                    r[ky, x * cin:(x + 1) * cin, xo * cout:(xo + 1) * cout] = w[:, :, ky, kx].T
    return _kron_batch(lb, batch), r.reshape(kh * h * cin, h * cout)


def _build_proj_er(w, batch):
    """ConvTranspose2d(200, c0, 4, 1, 0) on a 1x1 input, noise|label channels
    each padded to 128 lanes (z layout: [0:100]=noise, [128:228]=label)."""
    cin, cout, kh, kw = w.shape                  # (200, c0, 4, 4)
    e = np.zeros((kh, batch * kh, batch), np.float32)
    for y in range(kh):
        for b in range(batch):
            e[y, b * kh + y, b] = 1.0
    r = np.zeros((kh, 256, kw * cout), np.float32)
    for y in range(kh):
        for xo in range(kw):
            r[y, 0:100, xo * cout:(xo + 1) * cout] = w[0:100, :, y, xo]
            r[y, 128:228, xo * cout:(xo + 1) * cout] = w[100:200, :, y, xo]
    return e, r.reshape(kh * 256, kw * cout)


def _build_g(w_sp, c):
    g = np.tile(np.eye(c, dtype=np.float32), (w_sp, 1))   # (W*C, C)
    return g, np.ascontiguousarray(g.T)


def init_generator_params(key, img_size=8, img_ch=1, n_classes=10):
    in_ch = img_size * 8
    c0, c1, c2, c3 = in_ch, in_ch // 2, in_ch // 4, in_ch // 8
    ks = jax.random.split(key, 8)
    s = 0.05
    return {
        "emb": jax.random.normal(ks[0], (n_classes, 64), jnp.float32),
        "lin_w": jax.random.normal(ks[1], (64, 100), jnp.float32) * s,
        "lin_b": jnp.zeros((100,), jnp.float32),
        # ConvTranspose2d weights: (in_ch, out_ch, kH, kW)
        "proj_w": jax.random.normal(ks[2], (200, c0, 4, 4), jnp.float32) * s,
        "proj_g": jnp.ones((c0,), jnp.float32), "proj_b": jnp.zeros((c0,), jnp.float32),
        "c1_w": jax.random.normal(ks[3], (c0, c1, 4, 4), jnp.float32) * s,
        "c1_g": jnp.ones((c1,), jnp.float32), "c1_b": jnp.zeros((c1,), jnp.float32),
        "c2_w": jax.random.normal(ks[4], (c1, c2, 4, 4), jnp.float32) * s,
        "c2_g": jnp.ones((c2,), jnp.float32), "c2_b": jnp.zeros((c2,), jnp.float32),
        "c3_w": jax.random.normal(ks[5], (c2, c3, 4, 4), jnp.float32) * s,
        "c3_g": jnp.ones((c3,), jnp.float32), "c3_b": jnp.zeros((c3,), jnp.float32),
        # Conv2d weight: (out_ch, in_ch, kH, kW)
        "out_w": jax.random.normal(ks[6], (img_ch, c3, 3, 3), jnp.float32) * s,
        "out_b": jnp.zeros((img_ch,), jnp.float32),
    }


def prepare_generator(params, batch):
    f32, bf16 = np.float32, jnp.bfloat16
    pw = np.asarray(params["proj_w"], f32)
    c1w = np.asarray(params["c1_w"], f32)
    c2w = np.asarray(params["c2_w"], f32)
    c3w = np.asarray(params["c3_w"], f32)
    ow = np.asarray(params["out_w"], f32)
    c0, c1, c2, c3 = pw.shape[1], c1w.shape[1], c2w.shape[1], c3w.shape[1]

    e_p, r_p = _build_proj_er(pw, batch)
    l1, r1 = _build_ct_lr(c1w, 4, batch)
    l2, r2 = _build_ct_lr(c2w, 8, batch)
    l3, r3 = _build_ct_lr(c3w, 16, batch)
    lo, ro = _build_conv_lr(ow, 32, batch)
    gp, gtp = _build_g(4, c0)
    g1, gt1 = _build_g(8, c1)
    g2, gt2 = _build_g(16, c2)
    g3, gt3 = _build_g(32, c3)

    lw = np.zeros((64, 128), f32); lw[:, :100] = np.asarray(params["lin_w"], f32)
    lb = np.zeros((1, 128), f32);  lb[0, :100] = np.asarray(params["lin_b"], f32)
    bias = np.asarray(params["out_b"], f32)
    bo = np.tile(bias, ro.shape[1] // bias.shape[0]).reshape(1, -1)

    def _gb(g, b):
        return jnp.stack([params[g], params[b]]).astype(jnp.float32)

    return {
        "emb": jnp.asarray(params["emb"], jnp.float32),
        "lin_w": jnp.asarray(lw, bf16), "lin_b": jnp.asarray(lb),
        "e_proj": jnp.asarray(e_p, bf16), "r_proj": jnp.asarray(r_p, bf16),
        "gb_proj": _gb("proj_g", "proj_b"),
        "g_proj": jnp.asarray(gp), "gt_proj": jnp.asarray(gtp),
        "l1": jnp.asarray(l1, bf16), "r1": jnp.asarray(r1, bf16),
        "gb1": _gb("c1_g", "c1_b"), "g1": jnp.asarray(g1), "gt1": jnp.asarray(gt1),
        "l2": jnp.asarray(l2, bf16), "r2": jnp.asarray(r2, bf16),
        "gb2": _gb("c2_g", "c2_b"), "g2": jnp.asarray(g2), "gt2": jnp.asarray(gt2),
        "l3": jnp.asarray(l3, bf16), "r3": jnp.asarray(r3, bf16),
        "gb3": _gb("c3_g", "c3_b"), "g3": jnp.asarray(g3), "gt3": jnp.asarray(gt3),
        "l_out": jnp.asarray(lo, bf16), "r_out": jnp.asarray(ro, bf16),
        "b_out": jnp.asarray(bo),
    }


# ---------------------------------------------------------------------------
# Forward pass (single fused pallas_call)
# ---------------------------------------------------------------------------
@jax.jit
def generator_forward(prep, x_nchw, labels):
    B = x_nchw.shape[0]
    emb = jnp.take(prep["emb"], labels, axis=0)                        # (B, 64)
    x = x_nchw.reshape(B, -1).astype(jnp.float32)                      # (B, 100)
    x_p = jnp.zeros((B, 128), jnp.float32).at[:, : x.shape[1]].set(x)  # lane pad

    args = (x_p, emb, prep["lin_w"], prep["lin_b"],
            prep["e_proj"], prep["r_proj"], prep["gb_proj"], prep["g_proj"], prep["gt_proj"],
            prep["l1"], prep["r1"], prep["gb1"], prep["g1"], prep["gt1"],
            prep["l2"], prep["r2"], prep["gb2"], prep["g2"], prep["gt2"],
            prep["l3"], prep["r3"], prep["gb3"], prep["g3"], prep["gt3"],
            prep["l_out"], prep["r_out"], prep["b_out"])

    h_out = prep["l_out"].shape[1] // B          # 32
    w_lanes = prep["r_out"].shape[1]             # 32 * img_ch
    img_ch = w_lanes // h_out
    out2d = pl.pallas_call(
        _generator_kernel,
        out_shape=jax.ShapeDtypeStruct((B * h_out, w_lanes), jnp.float32),
        in_specs=[_VMEM] * len(args),
        out_specs=_VMEM,
    )(*args)
    # rows=(b, y), lanes=(x, c)  ->  NCHW
    return jnp.transpose(out2d.reshape(B, h_out, h_out, img_ch), (0, 3, 1, 2))


if __name__ == "__main__":
    IMG_SIZE = 8       # -> in_ch = 64, output image 32x32
    BATCH = 2
    N_CLASSES = 10

    key = jax.random.PRNGKey(0)
    k_params, k_x, k_lab = jax.random.split(key, 3)

    params = init_generator_params(k_params, IMG_SIZE, 1, N_CLASSES)
    prep = prepare_generator(params, BATCH)     # one-time weight packing

    x = jax.random.normal(k_x, (BATCH, 100, 1, 1), jnp.float32)
    labels = jax.random.randint(k_lab, (BATCH,), 0, N_CLASSES, jnp.int32)

    out = generator_forward(prep, x, labels)
    out = jax.block_until_ready(out)

    assert out.shape == (BATCH, 1, 32, 32), out.shape
    assert bool(jnp.all(jnp.isfinite(out)))
    assert bool(jnp.all(jnp.abs(out) <= 1.0 + 1e-6))
    print("KERNEL_OK")
</pallas_src>

<mosaic_0001>
module attributes {stable_mosaic.version = 11 : i64} {
  func.func @_generator_kernel(%arg0: memref<2x128xf32, #tpu.memory_space<vmem>>, %arg1: memref<2x64xf32, #tpu.memory_space<vmem>>, %arg2: memref<64x128xbf16, #tpu.memory_space<vmem>>, %arg3: memref<1x128xf32, #tpu.memory_space<vmem>>, %arg4: memref<4x8x2xbf16, #tpu.memory_space<vmem>>, %arg5: memref<1024x256xbf16, #tpu.memory_space<vmem>>, %arg6: memref<2x64xf32, #tpu.memory_space<vmem>>, %arg7: memref<256x64xf32, #tpu.memory_space<vmem>>, %arg8: memref<64x256xf32, #tpu.memory_space<vmem>>, %arg9: memref<4x16x8xbf16, #tpu.memory_space<vmem>>, %arg10: memref<1024x256xbf16, #tpu.memory_space<vmem>>, %arg11: memref<2x32xf32, #tpu.memory_space<vmem>>, %arg12: memref<256x32xf32, #tpu.memory_space<vmem>>, %arg13: memref<32x256xf32, #tpu.memory_space<vmem>>, %arg14: memref<4x32x16xbf16, #tpu.memory_space<vmem>>, %arg15: memref<1024x256xbf16, #tpu.memory_space<vmem>>, %arg16: memref<2x16xf32, #tpu.memory_space<vmem>>, %arg17: memref<256x16xf32, #tpu.memory_space<vmem>>, %arg18: memref<16x256xf32, #tpu.memory_space<vmem>>, %arg19: memref<4x64x32xbf16, #tpu.memory_space<vmem>>, %arg20: memref<1024x256xbf16, #tpu.memory_space<vmem>>, %arg21: memref<2x8xf32, #tpu.memory_space<vmem>>, %arg22: memref<256x8xf32, #tpu.memory_space<vmem>>, %arg23: memref<8x256xf32, #tpu.memory_space<vmem>>, %arg24: memref<3x64x64xbf16, #tpu.memory_space<vmem>>, %arg25: memref<768x32xbf16, #tpu.memory_space<vmem>>, %arg26: memref<1x32xf32, #tpu.memory_space<vmem>>, %arg27: memref<64x32xf32, #tpu.memory_space<vmem>>) attributes {dimension_semantics = [], scalar_prefetch = 0 : i64, scratch_operands = 0 : i64, tpu.core_type = #tpu.core_type<tc>} {
    %c0 = arith.constant 0 : index
    %c0_0 = arith.constant 0 : index
    %0 = vector.load %arg1[%c0, %c0_0] : memref<2x64xf32, #tpu.memory_space<vmem>>, vector<2x64xf32>
    %1 = arith.truncf %0 : vector<2x64xf32> to vector<2x64xbf16>
    %c0_1 = arith.constant 0 : index
    %c0_2 = arith.constant 0 : index
    %2 = vector.load %arg2[%c0_1, %c0_2] : memref<64x128xbf16, #tpu.memory_space<vmem>>, vector<64x128xbf16>
    %cst = arith.constant dense<0.000000e+00> : vector<2x128xf32>
    %3 = tpu.matmul %1, %2, %cst {dimension_numbers = #tpu.dot_dimension_numbers<[1], [0], [0], [1], [0, 0, 1, 1], [], []>} : vector<2x64xbf16>, vector<64x128xbf16>, vector<2x128xf32> -> vector<2x128xf32>
    %c0_3 = arith.constant 0 : index
    %c0_4 = arith.constant 0 : index
    %4 = vector.load %arg3[%c0_3, %c0_4] : memref<1x128xf32, #tpu.memory_space<vmem>>, vector<1x128xf32>
    %5 = vector.broadcast %4 : vector<1x128xf32> to vector<2x128xf32>
    %6 = arith.addf %3, %5 : vector<2x128xf32>
    %c0_5 = arith.constant 0 : index
    %c0_6 = arith.constant 0 : index
    %7 = vector.load %arg0[%c0_5, %c0_6] : memref<2x128xf32, #tpu.memory_space<vmem>>, vector<2x128xf32>
    %8 = tpu.concatenate %7, %6 in 1 : vector<2x128xf32>, vector<2x128xf32> -> vector<2x256xf32>
    %9 = arith.truncf %8 : vector<2x256xf32> to vector<2x256xbf16>
    %c0_7 = arith.constant 0 : index
    %c0_8 = arith.constant 0 : index
    %c0_9 = arith.constant 0 : index
    %10 = vector.load %arg4[%c0_7, %c0_8, %c0_9] : memref<4x8x2xbf16, #tpu.memory_space<vmem>>, vector<1x8x2xbf16>
    %11 = vector.shape_cast %10 : vector<1x8x2xbf16> to vector<8x2xbf16>
    %cst_10 = arith.constant dense<0.000000e+00> : vector<8x256xf32>
    %12 = tpu.matmul %11, %9, %cst_10 {dimension_numbers = #tpu.dot_dimension_numbers<[1], [0], [0], [1], [0, 0, 1, 1], [], []>} : vector<8x2xbf16>, vector<2x256xbf16>, vector<8x256xf32> -> vector<8x256xf32>
    %c1 = arith.constant 1 : index
    %c0_11 = arith.constant 0 : index
    %c0_12 = arith.constant 0 : index
    %13 = vector.load %arg4[%c1, %c0_11, %c0_12] : memref<4x8x2xbf16, #tpu.memory_space<vmem>>, vector<1x8x2xbf16>
    %14 = vector.shape_cast %13 : vector<1x8x2xbf16> to vector<8x2xbf16>
    %cst_13 = arith.constant dense<0.000000e+00> : vector<8x256xf32>
    %15 = tpu.matmul %14, %9, %cst_13 {dimension_numbers = #tpu.dot_dimension_numbers<[1], [0], [0], [1], [0, 0, 1, 1], [], []>} : vector<8x2xbf16>, vector<2x256xbf16>, vector<8x256xf32> -> vector<8x256xf32>
    %c2 = arith.constant 2 : index
    %c0_14 = arith.constant 0 : index
    %c0_15 = arith.constant 0 : index
    %16 = vector.load %arg4[%c2, %c0_14, %c0_15] : memref<4x8x2xbf16, #tpu.memory_space<vmem>>, vector<1x8x2xbf16>
    %17 = vector.shape_cast %16 : vector<1x8x2xbf16> to vector<8x2xbf16>
    %cst_16 = arith.constant dense<0.000000e+00> : vector<8x256xf32>
    %18 = tpu.matmul %17, %9, %cst_16 {dimension_numbers = #tpu.dot_dimension_numbers<[1], [0], [0], [1], [0, 0, 1, 1], [], []>} : vector<8x2xbf16>, vector<2x256xbf16>, vector<8x256xf32> -> vector<8x256xf32>
    %c3 = arith.constant 3 : index
    %c0_17 = arith.constant 0 : index
    %c0_18 = arith.constant 0 : index
    %19 = vector.load %arg4[%c3, %c0_17, %c0_18] : memref<4x8x2xbf16, #tpu.memory_space<vmem>>, vector<1x8x2xbf16>
    %20 = vector.shape_cast %19 : vector<1x8x2xbf16> to vector<8x2xbf16>
    %cst_19 = arith.constant dense<0.000000e+00> : vector<8x256xf32>
    %21 = tpu.matmul %20, %9, %cst_19 {dimension_numbers = #tpu.dot_dimension_numbers<[1], [0], [0], [1], [0, 0, 1, 1], [], []>} : vector<8x2xbf16>, vector<2x256xbf16>, vector<8x256xf32> -> vector<8x256xf32>
    %22 = tpu.concatenate %12, %15, %18, %21 in 1 : vector<8x256xf32>, vector<8x256xf32>, vector<8x256xf32>, vector<8x256xf32> -> vector<8x1024xf32>
    %23 = arith.truncf %22 : vector<8x1024xf32> to vector<8x1024xbf16>
    %c0_20 = arith.constant 0 : index
    %c0_21 = arith.constant 0 : index
    %24 = vector.load %arg5[%c0_20, %c0_21] : memref<1024x256xbf16, #tpu.memory_space<vmem>>, vector<1024x256xbf16>
    %cst_22 = arith.constant dense<0.000000e+00> : vector<8x256xf32>
    %25 = tpu.matmul %23, %24, %cst_22 {dimension_numbers = #tpu.dot_dimension_numbers<[1], [0], [0], [1], [0, 0, 1, 1], [], []>} : vector<8x1024xbf16>, vector<1024x256xbf16>, vector<8x256xf32> -> vector<8x256xf32>
    %cst_23 = arith.constant dense<0.000000e+00> : vector<256xf32>
    %26 = vector.multi_reduction <add>, %25, %cst_23 [0] : vector<8x256xf32> to vector<256xf32>
    %27 = vector.shape_cast %26 : vector<256xf32> to vector<1x256xf32>
    %28 = arith.mulf %25, %25 : vector<8x256xf32>
    %cst_24 = arith.constant dense<0.000000e+00> : vector<256xf32>
    %29 = vector.multi_reduction <add>, %28, %cst_24 [0] : vector<8x256xf32> to vector<256xf32>
    %30 = vector.shape_cast %29 : vector<256xf32> to vector<1x256xf32>
    %c0_25 = arith.constant 0 : index
    %c0_26 = arith.constant 0 : index
    %31 = vector.load %arg7[%c0_25, %c0_26] : memref<256x64xf32, #tpu.memory_space<vmem>>, vector<256x64xf32>
    %cst_27 = arith.constant dense<0.000000e+00> : vector<1x64xf32>
    %32 = tpu.matmul %27, %31, %cst_27 {dimension_numbers = #tpu.dot_dimension_numbers<[1], [0], [0], [1], [0, 0, 1, 1], [], []>} : vector<1x256xf32>, vector<256x64xf32>, vector<1x64xf32> -> vector<1x64xf32>
    %cst_28 = arith.constant 3.125000e-02 : f32
    %33 = vector.broadcast %cst_28 : f32 to vector<1x64xf32>
    %34 = arith.mulf %32, %33 : vector<1x64xf32>
    %c0_29 = arith.constant 0 : index
    %c0_30 = arith.constant 0 : index
    %35 = vector.load %arg7[%c0_29, %c0_30] : memref<256x64xf32, #tpu.memory_space<vmem>>, vector<256x64xf32>
    %cst_31 = arith.constant dense<0.000000e+00> : vector<1x64xf32>
    %36 = tpu.matmul %30, %35, %cst_31 {dimension_numbers = #tpu.dot_dimension_numbers<[1], [0], [0], [1], [0, 0, 1, 1], [], []>} : vector<1x256xf32>, vector<256x64xf32>, vector<1x64xf32> -> vector<1x64xf32>
    %cst_32 = arith.constant 3.125000e-02 : f32
    %37 = vector.broadcast %cst_32 : f32 to vector<1x64xf32>
    %38 = arith.mulf %36, %37 : vector<1x64xf32>
    %39 = arith.mulf %34, %34 : vector<1x64xf32>
    %40 = arith.subf %38, %39 : vector<1x64xf32>
    %cst_33 = arith.constant 9.99999974E-6 : f32
    %41 = vector.broadcast %cst_33 : f32 to vector<1x64xf32>
    %42 = arith.addf %40, %41 : vector<1x64xf32>
    %43 = math.rsqrt %42 : vector<1x64xf32>
    %c0_34 = arith.constant 0 : index
    %c0_35 = arith.constant 0 : index
    %44 = vector.load %arg6[%c0_34, %c0_35] : memref<2x64xf32, #tpu.memory_space<vmem>>, vector<1x64xf32>
    %45 = arith.mulf %44, %43 : vector<1x64xf32>
    %c1_36 = arith.constant 1 : index
    %c0_37 = arith.constant 0 : index
    %46 = vector.load %arg6[%c1_36, %c0_37] : memref<2x64xf32, #tpu.memory_space<vmem>>, vector<1x64xf32>
    %47 = arith.mulf %34, %45 : vector<1x64xf32>
    %48 = arith.subf %46, %47 : vector<1x64xf32>
    %c0_38 = arith.constant 0 : index
    %c0_39 = arith.constant 0 : index
    %49 = vector.load %arg8[%c0_38, %c0_39] : memref<64x256xf32, #tpu.memory_space<vmem>>, vector<64x256xf32>
    %cst_40 = arith.constant dense<0.000000e+00> : vector<1x256xf32>
    %50 = tpu.matmul %45, %49, %cst_40 {dimension_numbers = #tpu.dot_dimension_numbers<[1], [0], [0], [1], [0, 0, 1, 1], [], []>} : vector<1x64xf32>, vector<64x256xf32>, vector<1x256xf32> -> vector<1x256xf32>
    %c0_41 = arith.constant 0 : index
    %c0_42 = arith.constant 0 : index
    %51 = vector.load %arg8[%c0_41, %c0_42] : memref<64x256xf32, #tpu.memory_space<vmem>>, vector<64x256xf32>
    %cst_43 = arith.constant dense<0.000000e+00> : vector<1x256xf32>
    %52 = tpu.matmul %48, %51, %cst_43 {dimension_numbers = #tpu.dot_dimension_numbers<[1], [0], [0], [1], [0, 0, 1, 1], [], []>} : vector<1x64xf32>, vector<64x256xf32>, vector<1x256xf32> -> vector<1x256xf32>
    %53 = vector.broadcast %50 : vector<1x256xf32> to vector<8x256xf32>
    %54 = arith.mulf %25, %53 : vector<8x256xf32>
    %55 = vector.broadcast %52 : vector<1x256xf32> to vector<8x256xf32>
    %56 = arith.addf %54, %55 : vector<8x256xf32>
    %cst_44 = arith.constant 0.000000e+00 : f32
    %57 = vector.broadcast %cst_44 : f32 to vector<8x256xf32>
    %58 = arith.cmpf ogt, %56, %57 : vector<8x256xf32>
    %cst_45 = arith.constant 2.000000e-01 : f32
    %59 = vector.broadcast %cst_45 : f32 to vector<8x256xf32>
    %60 = arith.mulf %59, %56 : vector<8x256xf32>
    %61 = arith.select %58, %56, %60 : vector<8x256xi1>, vector<8x256xf32>
    %62 = arith.truncf %61 : vector<8x256xf32> to vector<8x256xbf16>
    %c0_46 = arith.constant 0 : index
    %c0_47 = arith.constant 0 : index
    %c0_48 = arith.constant 0 : index
    %63 = vector.load %arg9[%c0_46, %c0_47, %c0_48] : memref<4x16x8xbf16, #tpu.memory_space<vmem>>, vector<1x16x8xbf16>
    %64 = vector.shape_cast %63 : vector<1x16x8xbf16> to vector<16x8xbf16>
    %cst_49 = arith.constant dense<0.000000e+00> : vector<16x256xf32>
    %65 = tpu.matmul %64, %62, %cst_49 {dimension_numbers = #tpu.dot_dimension_numbers<[1], [0], [0], [1], [0, 0, 1, 1], [], []>} : vector<16x8xbf16>, vector<8x256xbf16>, vector<16x256xf32> -> vector<16x256xf32>
    %c1_50 = arith.constant 1 : index
    %c0_51 = arith.constant 0 : index
    %c0_52 = arith.constant 0 : index
    %66 = vector.load %arg9[%c1_50, %c0_51, %c0_52] : memref<4x16x8xbf16, #tpu.memory_space<vmem>>, vector<1x16x8xbf16>
    %67 = vector.shape_cast %66 : vector<1x16x8xbf16> to vector<16x8xbf16>
    %cst_53 = arith.constant dense<0.000000e+00> : vector<16x256xf32>
    %68 = tpu.matmul %67, %62, %cst_53 {dimension_numbers = #tpu.dot_dimension_numbers<[1], [0], [0], [1], [0, 0, 1, 1], [], []>} : vector<16x8xbf16>, vector<8x256xbf16>, vector<16x256xf32> -> vector<16x256xf32>
    %c2_54 = arith.constant 2 : index
    %c0_55 = arith.constant 0 : index
    %c0_56 = arith.constant 0 : index
    %69 = vector.load %arg9[%c2_54, %c0_55, %c0_56] : memref<4x16x8xbf16, #tpu.memory_space<vmem>>, vector<1x16x8xbf16>
    %70 = vector.shape_cast %69 : vector<1x16x8xbf16> to vector<16x8xbf16>
    %cst_57 = arith.constant dense<0.000000e+00> : vector<16x256xf32>
    %71 = tpu.matmul %70, %62, %cst_57 {dimension_numbers = #tpu.dot_dimension_numbers<[1], [0], [0], [1], [0, 0, 1, 1], [], []>} : vector<16x8xbf16>, vector<8x256xbf16>, vector<16x256xf32> -> vector<16x256xf32>
    %c3_58 = arith.constant 3 : index
    %c0_59 = arith.constant 0 : index
    %c0_60 = arith.constant 0 : index
    %72 = vector.load %arg9[%c3_58, %c0_59, %c0_60] : memref<4x16x8xbf16, #tpu.memory_space<vmem>>, vector<1x16x8xbf16>
    %73 = vector.shape_cast %72 : vector<1x16x8xbf16> to vector<16x8xbf16>
    %cst_61 = arith.constant dense<0.000000e+00> : vector<16x256xf32>
    %74 = tpu.matmul %73, %62, %cst_61 {dimension_numbers = #tpu.dot_dimension_numbers<[1], [0], [0], [1], [0, 0, 1, 1], [], []>} : vector<16x8xbf16>, vector<8x256xbf16>, vector<16x256xf32> -> vector<16x256xf32>
    %75 = tpu.concatenate %65, %68, %71, %74 in 1 : vector<16x256xf32>, vector<16x256xf32>, vector<16x256xf32>, vector<16x256xf32> -> vector<16x1024xf32>
    %76 = arith.truncf %75 : vector<16x1024xf32> to vector<16x1024xbf16>
    %c0_62 = arith.constant 0 : index
    %c0_63 = arith.constant 0 : index
    %77 = vector.load %arg10[%c0_62, %c0_63] : memref<1024x256xbf16, #tpu.memory_space<vmem>>, vector<1024x256xbf16>
    %cst_64 = arith.constant dense<0.000000e+00> : vector<16x256xf32>
    %78 = tpu.matmul %76, %77, %cst_64 {dimension_numbers = #tpu.dot_dimension_numbers<[1], [0], [0], [1], [0, 0, 1, 1], [], []>} : vector<16x1024xbf16>, vector<1024x256xbf16>, vector<16x256xf32> -> vector<16x256xf32>
    %cst_65 = arith.constant dense<0.000000e+00> : vector<256xf32>
    %79 = vector.multi_reduction <add>, %78, %cst_65 [0] : vector<16x256xf32> to vector<256xf32>
    %80 = vector.shape_cast %79 : vector<256xf32> to vector<1x256xf32>
    %81 = arith.mulf %78, %78 : vector<16x256xf32>
    %cst_66 = arith.constant dense<0.000000e+00> : vector<256xf32>
    %82 = vector.multi_reduction <add>, %81, %cst_66 [0] : vector<16x256xf32> to vector<256xf32>
    %83 = vector.shape_cast %82 : vector<256xf32> to vector<1x256xf32>
    %c0_67 = arith.constant 0 : index
    %c0_68 = arith.constant 0 : index
    %84 = vector.load %arg12[%c0_67, %c0_68] : memref<256x32xf32, #tpu.memory_space<vmem>>, vector<256x32xf32>
    %cst_69 = arith.constant dense<0.000000e+00> : vector<1x32xf32>
    %85 = tpu.matmul %80, %84, %cst_69 {dimension_numbers = #tpu.dot_dimension_numbers<[1], [0], [0], [1], [0, 0, 1, 1], [], []>} : vector<1x256xf32>, vector<256x32xf32>, vector<1x32xf32> -> vector<1x32xf32>
    %cst_70 = arith.constant 7.812500e-03 : f32
    %86 = vector.broadcast %cst_70 : f32 to vector<1x32xf32>
    %87 = arith.mulf %85, %86 : vector<1x32xf32>
    %c0_71 = arith.constant 0 : index
    %c0_72 = arith.constant 0 : index
    %88 = vector.load %arg12[%c0_71, %c0_72] : memref<256x32xf32, #tpu.memory_space<vmem>>, vector<256x32xf32>
    %cst_73 = arith.constant dense<0.000000e+00> : vector<1x32xf32>
    %89 = tpu.matmul %83, %88, %cst_73 {dimension_numbers = #tpu.dot_dimension_numbers<[1], [0], [0], [1], [0, 0, 1, 1], [], []>} : vector<1x256xf32>, vector<256x32xf32>, vector<1x32xf32> -> vector<1x32xf32>
    %cst_74 = arith.constant 7.812500e-03 : f32
    %90 = vector.broadcast %cst_74 : f32 to vector<1x32xf32>
    %91 = arith.mulf %89, %90 : vector<1x32xf32>
    %92 = arith.mulf %87, %87 : vector<1x32xf32>
    %93 = arith.subf %91, %92 : vector<1x32xf32>
    %cst_75 = arith.constant 9.99999974E-6 : f32
    %94 = vector.broadcast %cst_75 : f32 to vector<1x32xf32>
    %95 = arith.addf %93, %94 : vector<1x32xf32>
    %96 = math.rsqrt %95 : vector<1x32xf32>
    %c0_76 = arith.constant 0 : index
    %c0_77 = arith.constant 0 : index
    %97 = vector.load %arg11[%c0_76, %c0_77] : memref<2x32xf32, #tpu.memory_space<vmem>>, vector<1x32xf32>
    %98 = arith.mulf %97, %96 : vector<1x32xf32>
    %c1_78 = arith.constant 1 : index
    %c0_79 = arith.constant 0 : index
    %99 = vector.load %arg11[%c1_78, %c0_79] : memref<2x32xf32, #tpu.memory_space<vmem>>, vector<1x32xf32>
    %100 = arith.mulf %87, %98 : vector<1x32xf32>
    %101 = arith.subf %99, %100 : vector<1x32xf32>
    %c0_80 = arith.constant 0 : index
    %c0_81 = arith.constant 0 : index
    %102 = vector.load %arg13[%c0_80, %c0_81] : memref<32x256xf32, #tpu.memory_space<vmem>>, vector<32x256xf32>
    %cst_82 = arith.constant dense<0.000000e+00> : vector<1x256xf32>
    %103 = tpu.matmul %98, %102, %cst_82 {dimension_numbers = #tpu.dot_dimension_numbers<[1], [0], [0], [1], [0, 0, 1, 1], [], []>} : vector<1x32xf32>, vector<32x256xf32>, vector<1x256xf32> -> vector<1x256xf32>
    %c0_83 = arith.constant 0 : index
    %c0_84 = arith.constant 0 : index
    %104 = vector.load %arg13[%c0_83, %c0_84] : memref<32x256xf32, #tpu.memory_space<vmem>>, vector<32x256xf32>
    %cst_85 = arith.constant dense<0.000000e+00> : vector<1x256xf32>
    %105 = tpu.matmul %101, %104, %cst_85 {dimension_numbers = #tpu.dot_dimension_numbers<[1], [0], [0], [1], [0, 0, 1, 1], [], []>} : vector<1x32xf32>, vector<32x256xf32>, vector<1x256xf32> -> vector<1x256xf32>
    %106 = vector.broadcast %103 : vector<1x256xf32> to vector<16x256xf32>
    %107 = arith.mulf %78, %106 : vector<16x256xf32>
    %108 = vector.broadcast %105 : vector<1x256xf32> to vector<16x256xf32>
    %109 = arith.addf %107, %108 : vector<16x256xf32>
    %cst_86 = arith.constant 0.000000e+00 : f32
    %110 = vector.broadcast %cst_86 : f32 to vector<16x256xf32>
    %111 = arith.cmpf ogt, %109, %110 : vector<16x256xf32>
    %cst_87 = arith.constant 2.000000e-01 : f32
    %112 = vector.broadcast %cst_87 : f32 to vector<16x256xf32>
    %113 = arith.mulf %112, %109 : vector<16x256xf32>
    %114 = arith.select %111, %109, %113 : vector<16x256xi1>, vector<16x256xf32>
    %115 = arith.truncf %114 : vector<16x256xf32> to vector<16x256xbf16>
    %c0_88 = arith.constant 0 : index
    %c0_89 = arith.constant 0 : index
    %c0_90 = arith.constant 0 : index
    %116 = vector.load %arg14[%c0_88, %c0_89, %c0_90] : memref<4x32x16xbf16, #tpu.memory_space<vmem>>, vector<1x32x16xbf16>
    %117 = vector.shape_cast %116 : vector<1x32x16xbf16> to vector<32x16xbf16>
    %cst_91 = arith.constant dense<0.000000e+00> : vector<32x256xf32>
    %118 = tpu.matmul %117, %115, %cst_91 {dimension_numbers = #tpu.dot_dimension_numbers<[1], [0], [0], [1], [0, 0, 1, 1], [], []>} : vector<32x16xbf16>, vector<16x256xbf16>, vector<32x256xf32> -> vector<32x256xf32>
    %c1_92 = arith.constant 1 : index
    %c0_93 = arith.constant 0 : index
    %c0_94 = arith.constant 0 : index
    %119 = vector.load %arg14[%c1_92, %c0_93, %c0_94] : memref<4x32x16xbf16, #tpu.memory_space<vmem>>, vector<1x32x16xbf16>
    %120 = vector.shape_cast %119 : vector<1x32x16xbf16> to vector<32x16xbf16>
    %cst_95 = arith.constant dense<0.000000e+00> : vector<32x256xf32>
    %121 = tpu.matmul %120, %115, %cst_95 {dimension_numbers = #tpu.dot_dimension_numbers<[1], [0], [0], [1], [0, 0, 1, 1], [], []>} : vector<32x16xbf16>, vector<16x256xbf16>, vector<32x256xf32> -> vector<32x256xf32>
    %c2_96 = arith.constant 2 : index
    %c0_97 = arith.constant 0 : index
    %c0_98 = arith.constant 0 : index
    %122 = vector.load %arg14[%c2_96, %c0_97, %c0_98] : memref<4x32x16xbf16, #tpu.memory_space<vmem>>, vector<1x32x16xbf16>
    %123 = vector.shape_cast %122 : vector<1x32x16xbf16> to vector<32x16xbf16>
    %cst_99 = arith.constant dense<0.000000e+00> : vector<32x256xf32>
    %124 = tpu.matmul %123, %115, %cst_99 {dimension_numbers = #tpu.dot_dimension_numbers<[1], [0], [0], [1], [0, 0, 1, 1], [], []>} : vector<32x16xbf16>, vector<16x256xbf16>, vector<32x256xf32> -> vector<32x256xf32>
    %c3_100 = arith.constant 3 : index
    %c0_101 = arith.constant 0 : index
    %c0_102 = arith.constant 0 : index
    %125 = vector.load %arg14[%c3_100, %c0_101, %c0_102] : memref<4x32x16xbf16, #tpu.memory_space<vmem>>, vector<1x32x16xbf16>
    %126 = vector.shape_cast %125 : vector<1x32x16xbf16> to vector<32x16xbf16>
    %cst_103 = arith.constant dense<0.000000e+00> : vector<32x256xf32>
    %127 = tpu.matmul %126, %115, %cst_103 {dimension_numbers = #tpu.dot_dimension_numbers<[1], [0], [0], [1], [0, 0, 1, 1], [], []>} : vector<32x16xbf16>, vector<16x256xbf16>, vector<32x256xf32> -> vector<32x256xf32>
    %128 = tpu.concatenate %118, %121, %124, %127 in 1 : vector<32x256xf32>, vector<32x256xf32>, vector<32x256xf32>, vector<32x256xf32> -> vector<32x1024xf32>
    %129 = arith.truncf %128 : vector<32x1024xf32> to vector<32x1024xbf16>
    %c0_104 = arith.constant 0 : index
    %c0_105 = arith.constant 0 : index
    %130 = vector.load %arg15[%c0_104, %c0_105] : memref<1024x256xbf16, #tpu.memory_space<vmem>>, vector<1024x256xbf16>
    %cst_106 = arith.constant dense<0.000000e+00> : vector<32x256xf32>
    %131 = tpu.matmul %129, %130, %cst_106 {dimension_numbers = #tpu.dot_dimension_numbers<[1], [0], [0], [1], [0, 0, 1, 1], [], []>} : vector<32x1024xbf16>, vector<1024x256xbf16>, vector<32x256xf32> -> vector<32x256xf32>
    %cst_107 = arith.constant dense<0.000000e+00> : vector<256xf32>
    %132 = vector.multi_reduction <add>, %131, %cst_107 [0] : vector<32x256xf32> to vector<256xf32>
    %133 = vector.shape_cast %132 : vector<256xf32> to vector<1x256xf32>
    %134 = arith.mulf %131, %131 : vector<32x256xf32>
    %cst_108 = arith.constant dense<0.000000e+00> : vector<256xf32>
    %135 = vector.multi_reduction <add>, %134, %cst_108 [0] : vector<32x256xf32> to vector<256xf32>
    %136 = vector.shape_cast %135 : vector<256xf32> to vector<1x256xf32>
    %c0_109 = arith.constant 0 : index
    %c0_110 = arith.constant 0 : index
    %137 = vector.load %arg17[%c0_109, %c0_110] : memref<256x16xf32, #tpu.memory_space<vmem>>, vector<256x16xf32>
    %cst_111 = arith.constant dense<0.000000e+00> : vector<1x16xf32>
    %138 = tpu.matmul %133, %137, %cst_111 {dimension_numbers = #tpu.dot_dimension_numbers<[1], [0], [0], [1], [0, 0, 1, 1], [], []>} : vector<1x256xf32>, vector<256x16xf32>, vector<1x16xf32> -> vector<1x16xf32>
    %cst_112 = arith.constant 0.001953125 : f32
    %139 = vector.broadcast %cst_112 : f32 to vector<1x16xf32>
    %140 = arith.mulf %138, %139 : vector<1x16xf32>
    %c0_113 = arith.constant 0 : index
    %c0_114 = arith.constant 0 : index
    %141 = vector.load %arg17[%c0_113, %c0_114] : memref<256x16xf32, #tpu.memory_space<vmem>>, vector<256x16xf32>
    %cst_115 = arith.constant dense<0.000000e+00> : vector<1x16xf32>
    %142 = tpu.matmul %136, %141, %cst_115 {dimension_numbers = #tpu.dot_dimension_numbers<[1], [0], [0], [1], [0, 0, 1, 1], [], []>} : vector<1x256xf32>, vector<256x16xf32>, vector<1x16xf32> -> vector<1x16xf32>
    %cst_116 = arith.constant 0.001953125 : f32
    %143 = vector.broadcast %cst_116 : f32 to vector<1x16xf32>
    %144 = arith.mulf %142, %143 : vector<1x16xf32>
    %145 = arith.mulf %140, %140 : vector<1x16xf32>
    %146 = arith.subf %144, %145 : vector<1x16xf32>
    %cst_117 = arith.constant 9.99999974E-6 : f32
    %147 = vector.broadcast %cst_117 : f32 to vector<1x16xf32>
    %148 = arith.addf %146, %147 : vector<1x16xf32>
    %149 = math.rsqrt %148 : vector<1x16xf32>
    %c0_118 = arith.constant 0 : index
    %c0_119 = arith.constant 0 : index
    %150 = vector.load %arg16[%c0_118, %c0_119] : memref<2x16xf32, #tpu.memory_space<vmem>>, vector<1x16xf32>
    %151 = arith.mulf %150, %149 : vector<1x16xf32>
    %c1_120 = arith.constant 1 : index
    %c0_121 = arith.constant 0 : index
    %152 = vector.load %arg16[%c1_120, %c0_121] : memref<2x16xf32, #tpu.memory_space<vmem>>, vector<1x16xf32>
    %153 = arith.mulf %140, %151 : vector<1x16xf32>
    %154 = arith.subf %152, %153 : vector<1x16xf32>
    %c0_122 = arith.constant 0 : index
    %c0_123 = arith.constant 0 : index
    %155 = vector.load %arg18[%c0_122, %c0_123] : memref<16x256xf32, #tpu.memory_space<vmem>>, vector<16x256xf32>
    %cst_124 = arith.constant dense<0.000000e+00> : vector<1x256xf32>
    %156 = tpu.matmul %151, %155, %cst_124 {dimension_numbers = #tpu.dot_dimension_numbers<[1], [0], [0], [1], [0, 0, 1, 1], [], []>} : vector<1x16xf32>, vector<16x256xf32>, vector<1x256xf32> -> vector<1x256xf32>
    %c0_125 = arith.constant 0 : index
    %c0_126 = arith.constant 0 : index
    %157 = vector.load %arg18[%c0_125, %c0_126] : memref<16x256xf32, #tpu.memory_space<vmem>>, vector<16x256xf32>
    %cst_127 = arith.constant dense<0.000000e+00> : vector<1x256xf32>
    %158 = tpu.matmul %154, %157, %cst_127 {dimension_numbers = #tpu.dot_dimension_numbers<[1], [0], [0], [1], [0, 0, 1, 1], [], []>} : vector<1x16xf32>, vector<16x256xf32>, vector<1x256xf32> -> vector<1x256xf32>
    %159 = vector.broadcast %156 : vector<1x256xf32> to vector<32x256xf32>
    %160 = arith.mulf %131, %159 : vector<32x256xf32>
    %161 = vector.broadcast %158 : vector<1x256xf32> to vector<32x256xf32>
    %162 = arith.addf %160, %161 : vector<32x256xf32>
    %cst_128 = arith.constant 0.000000e+00 : f32
    %163 = vector.broadcast %cst_128 : f32 to vector<32x256xf32>
    %164 = arith.cmpf ogt, %162, %163 : vector<32x256xf32>
    %cst_129 = arith.constant 2.000000e-01 : f32
    %165 = vector.broadcast %cst_129 : f32 to vector<32x256xf32>
    %166 = arith.mulf %165, %162 : vector<32x256xf32>
    %167 = arith.select %164, %162, %166 : vector<32x256xi1>, vector<32x256xf32>
    %168 = arith.truncf %167 : vector<32x256xf32> to vector<32x256xbf16>
    %c0_130 = arith.constant 0 : index
    %c0_131 = arith.constant 0 : index
    %c0_132 = arith.constant 0 : index
    %169 = vector.load %arg19[%c0_130, %c0_131, %c0_132] : memref<4x64x32xbf16, #tpu.memory_space<vmem>>, vector<1x64x32xbf16>
    %170 = vector.shape_cast %169 : vector<1x64x32xbf16> to vector<64x32xbf16>
    %cst_133 = arith.constant dense<0.000000e+00> : vector<64x256xf32>
    %171 = tpu.matmul %170, %168, %cst_133 {dimension_numbers = #tpu.dot_dimension_numbers<[1], [0], [0], [1], [0, 0, 1, 1], [], []>} : vector<64x32xbf16>, vector<32x256xbf16>, vector<64x256xf32> -> vector<64x256xf32>
    %c1_134 = arith.constant 1 : index
    %c0_135 = arith.constant 0 : index
    %c0_136 = arith.constant 0 : index
    %172 = vector.load %arg19[%c1_134, %c0_135, %c0_136] : memref<4x64x32xbf16, #tpu.memory_space<vmem>>, vector<1x64x32xbf16>
    %173 = vector.shape_cast %172 : vector<1x64x32xbf16> to vector<64x32xbf16>
    %cst_137 = arith.constant dense<0.000000e+00> : vector<64x256xf32>
    %174 = tpu.matmul %173, %168, %cst_137 {dimension_numbers = #tpu.dot_dimension_numbers<[1], [0], [0], [1], [0, 0, 1, 1], [], []>} : vector<64x32xbf16>, vector<32x256xbf16>, vector<64x256xf32> -> vector<64x256xf32>
    %c2_138 = arith.constant 2 : index
    %c0_139 = arith.constant 0 : index
    %c0_140 = arith.constant 0 : index
    %175 = vector.load %arg19[%c2_138, %c0_139, %c0_140] : memref<4x64x32xbf16, #tpu.memory_space<vmem>>, vector<1x64x32xbf16>
    %176 = vector.shape_cast %175 : vector<1x64x32xbf16> to vector<64x32xbf16>
    %cst_141 = arith.constant dense<0.000000e+00> : vector<64x256xf32>
    %177 = tpu.matmul %176, %168, %cst_141 {dimension_numbers = #tpu.dot_dimension_numbers<[1], [0], [0], [1], [0, 0, 1, 1], [], []>} : vector<64x32xbf16>, vector<32x256xbf16>, vector<64x256xf32> -> vector<64x256xf32>
    %c3_142 = arith.constant 3 : index
    %c0_143 = arith.constant 0 : index
    %c0_144 = arith.constant 0 : index
    %178 = vector.load %arg19[%c3_142, %c0_143, %c0_144] : memref<4x64x32xbf16, #tpu.memory_space<vmem>>, vector<1x64x32xbf16>
    %179 = vector.shape_cast %178 : vector<1x64x32xbf16> to vector<64x32xbf16>
    %cst_145 = arith.constant dense<0.000000e+00> : vector<64x256xf32>
    %180 = tpu.matmul %179, %168, %cst_145 {dimension_numbers = #tpu.dot_dimension_numbers<[1], [0], [0], [1], [0, 0, 1, 1], [], []>} : vector<64x32xbf16>, vector<32x256xbf16>, vector<64x256xf32> -> vector<64x256xf32>
    %181 = tpu.concatenate %171, %174, %177, %180 in 1 : vector<64x256xf32>, vector<64x256xf32>, vector<64x256xf32>, vector<64x256xf32> -> vector<64x1024xf32>
    %182 = arith.truncf %181 : vector<64x1024xf32> to vector<64x1024xbf16>
    %c0_146 = arith.constant 0 : index
    %c0_147 = arith.constant 0 : index
    %183 = vector.load %arg20[%c0_146, %c0_147] : memref<1024x256xbf16, #tpu.memory_space<vmem>>, vector<1024x256xbf16>
    %cst_148 = arith.constant dense<0.000000e+00> : vector<64x256xf32>
    %184 = tpu.matmul %182, %183, %cst_148 {dimension_numbers = #tpu.dot_dimension_numbers<[1], [0], [0], [1], [0, 0, 1, 1], [], []>} : vector<64x1024xbf16>, vector<1024x256xbf16>, vector<64x256xf32> -> vector<64x256xf32>
    %cst_149 = arith.constant dense<0.000000e+00> : vector<256xf32>
    %185 = vector.multi_reduction <add>, %184, %cst_149 [0] : vector<64x256xf32> to vector<256xf32>
    %186 = vector.shape_cast %185 : vector<256xf32> to vector<1x256xf32>
    %187 = arith.mulf %184, %184 : vector<64x256xf32>
    %cst_150 = arith.constant dense<0.000000e+00> : vector<256xf32>
    %188 = vector.multi_reduction <add>, %187, %cst_150 [0] : vector<64x256xf32> to vector<256xf32>
    %189 = vector.shape_cast %188 : vector<256xf32> to vector<1x256xf32>
    %c0_151 = arith.constant 0 : index
    %c0_152 = arith.constant 0 : index
    %190 = vector.load %arg22[%c0_151, %c0_152] : memref<256x8xf32, #tpu.memory_space<vmem>>, vector<256x8xf32>
    %cst_153 = arith.constant dense<0.000000e+00> : vector<1x8xf32>
    %191 = tpu.matmul %186, %190, %cst_153 {dimension_numbers = #tpu.dot_dimension_numbers<[1], [0], [0], [1], [0, 0, 1, 1], [], []>} : vector<1x256xf32>, vector<256x8xf32>, vector<1x8xf32> -> vector<1x8xf32>
    %cst_154 = arith.constant 4.8828125E-4 : f32
    %192 = vector.broadcast %cst_154 : f32 to vector<1x8xf32>
    %193 = arith.mulf %191, %192 : vector<1x8xf32>
    %c0_155 = arith.constant 0 : index
    %c0_156 = arith.constant 0 : index
    %194 = vector.load %arg22[%c0_155, %c0_156] : memref<256x8xf32, #tpu.memory_space<vmem>>, vector<256x8xf32>
    %cst_157 = arith.constant dense<0.000000e+00> : vector<1x8xf32>
    %195 = tpu.matmul %189, %194, %cst_157 {dimension_numbers = #tpu.dot_dimension_numbers<[1], [0], [0], [1], [0, 0, 1, 1], [], []>} : vector<1x256xf32>, vector<256x8xf32>, vector<1x8xf32> -> vector<1x8xf32>
    %cst_158 = arith.constant 4.8828125E-4 : f32
    %196 = vector.broadcast %cst_158 : f32 to vector<1x8xf32>
    %197 = arith.mulf %195, %196 : vector<1x8xf32>
    %198 = arith.mulf %193, %193 : vector<1x8xf32>
    %199 = arith.subf %197, %198 : vector<1x8xf32>
    %cst_159 = arith.constant 9.99999974E-6 : f32
    %200 = vector.broadcast %cst_159 : f32 to vector<1x8xf32>
    %201 = arith.addf %199, %200 : vector<1x8xf32>
    %202 = math.rsqrt %201 : vector<1x8xf32>
    %c0_160 = arith.constant 0 : index
    %c0_161 = arith.constant 0 : index
    %203 = vector.load %arg21[%c0_160, %c0_161] : memref<2x8xf32, #tpu.memory_space<vmem>>, vector<1x8xf32>
    %204 = arith.mulf %203, %202 : vector<1x8xf32>
    %c1_162 = arith.constant 1 : index
    %c0_163 = arith.constant 0 : index
    %205 = vector.load %arg21[%c1_162, %c0_163] : memref<2x8xf32, #tpu.memory_space<vmem>>, vector<1x8xf32>
    %206 = arith.mulf %193, %204 : vector<1x8xf32>
    %207 = arith.subf %205, %206 : vector<1x8xf32>
    %c0_164 = arith.constant 0 : index
    %c0_165 = arith.constant 0 : index
    %208 = vector.load %arg23[%c0_164, %c0_165] : memref<8x256xf32, #tpu.memory_space<vmem>>, vector<8x256xf32>
    %cst_166 = arith.constant dense<0.000000e+00> : vector<1x256xf32>
    %209 = tpu.matmul %204, %208, %cst_166 {dimension_numbers = #tpu.dot_dimension_numbers<[1], [0], [0], [1], [0, 0, 1, 1], [], []>} : vector<1x8xf32>, vector<8x256xf32>, vector<1x256xf32> -> vector<1x256xf32>
    %c0_167 = arith.constant 0 : index
    %c0_168 = arith.constant 0 : index
    %210 = vector.load %arg23[%c0_167, %c0_168] : memref<8x256xf32, #tpu.memory_space<vmem>>, vector<8x256xf32>
    %cst_169 = arith.constant dense<0.000000e+00> : vector<1x256xf32>
    %211 = tpu.matmul %207, %210, %cst_169 {dimension_numbers = #tpu.dot_dimension_numbers<[1], [0], [0], [1], [0, 0, 1, 1], [], []>} : vector<1x8xf32>, vector<8x256xf32>, vector<1x256xf32> -> vector<1x256xf32>
    %212 = vector.broadcast %209 : vector<1x256xf32> to vector<64x256xf32>
    %213 = arith.mulf %184, %212 : vector<64x256xf32>
    %214 = vector.broadcast %211 : vector<1x256xf32> to vector<64x256xf32>
    %215 = arith.addf %213, %214 : vector<64x256xf32>
    %cst_170 = arith.constant 0.000000e+00 : f32
    %216 = vector.broadcast %cst_170 : f32 to vector<64x256xf32>
    %217 = arith.cmpf ogt, %215, %216 : vector<64x256xf32>
    %cst_171 = arith.constant 2.000000e-01 : f32
    %218 = vector.broadcast %cst_171 : f32 to vector<64x256xf32>
    %219 = arith.mulf %218, %215 : vector<64x256xf32>
    %220 = arith.select %217, %215, %219 : vector<64x256xi1>, vector<64x256xf32>
    %221 = arith.truncf %220 : vector<64x256xf32> to vector<64x256xbf16>
    %c0_172 = arith.constant 0 : index
    %c0_173 = arith.constant 0 : index
    %c0_174 = arith.constant 0 : index
    %222 = vector.load %arg24[%c0_172, %c0_173, %c0_174] : memref<3x64x64xbf16, #tpu.memory_space<vmem>>, vector<1x64x64xbf16>
    %223 = vector.shape_cast %222 : vector<1x64x64xbf16> to vector<64x64xbf16>
    %cst_175 = arith.constant dense<0.000000e+00> : vector<64x256xf32>
    %224 = tpu.matmul %223, %221, %cst_175 {dimension_numbers = #tpu.dot_dimension_numbers<[1], [0], [0], [1], [0, 0, 1, 1], [], []>} : vector<64x64xbf16>, vector<64x256xbf16>, vector<64x256xf32> -> vector<64x256xf32>
    %c1_176 = arith.constant 1 : index
    %c0_177 = arith.constant 0 : index
    %c0_178 = arith.constant 0 : index
    %225 = vector.load %arg24[%c1_176, %c0_177, %c0_178] : memref<3x64x64xbf16, #tpu.memory_space<vmem>>, vector<1x64x64xbf16>
    %226 = vector.shape_cast %225 : vector<1x64x64xbf16> to vector<64x64xbf16>
    %cst_179 = arith.constant dense<0.000000e+00> : vector<64x256xf32>
    %227 = tpu.matmul %226, %221, %cst_179 {dimension_numbers = #tpu.dot_dimension_numbers<[1], [0], [0], [1], [0, 0, 1, 1], [], []>} : vector<64x64xbf16>, vector<64x256xbf16>, vector<64x256xf32> -> vector<64x256xf32>
    %c2_180 = arith.constant 2 : index
    %c0_181 = arith.constant 0 : index
    %c0_182 = arith.constant 0 : index
    %228 = vector.load %arg24[%c2_180, %c0_181, %c0_182] : memref<3x64x64xbf16, #tpu.memory_space<vmem>>, vector<1x64x64xbf16>
    %229 = vector.shape_cast %228 : vector<1x64x64xbf16> to vector<64x64xbf16>
    %cst_183 = arith.constant dense<0.000000e+00> : vector<64x256xf32>
    %230 = tpu.matmul %229, %221, %cst_183 {dimension_numbers = #tpu.dot_dimension_numbers<[1], [0], [0], [1], [0, 0, 1, 1], [], []>} : vector<64x64xbf16>, vector<64x256xbf16>, vector<64x256xf32> -> vector<64x256xf32>
    %231 = tpu.concatenate %224, %227, %230 in 1 : vector<64x256xf32>, vector<64x256xf32>, vector<64x256xf32> -> vector<64x768xf32>
    %232 = arith.truncf %231 : vector<64x768xf32> to vector<64x768xbf16>
    %c0_184 = arith.constant 0 : index
    %c0_185 = arith.constant 0 : index
    %233 = vector.load %arg25[%c0_184, %c0_185] : memref<768x32xbf16, #tpu.memory_space<vmem>>, vector<768x32xbf16>
    %cst_186 = arith.constant dense<0.000000e+00> : vector<64x32xf32>
    %234 = tpu.matmul %232, %233, %cst_186 {dimension_numbers = #tpu.dot_dimension_numbers<[1], [0], [0], [1], [0, 0, 1, 1], [], []>} : vector<64x768xbf16>, vector<768x32xbf16>, vector<64x32xf32> -> vector<64x32xf32>
    %c0_187 = arith.constant 0 : index
    %c0_188 = arith.constant 0 : index
    %235 = vector.load %arg26[%c0_187, %c0_188] : memref<1x32xf32, #tpu.memory_space<vmem>>, vector<1x32xf32>
    %236 = vector.broadcast %235 : vector<1x32xf32> to vector<64x32xf32>
    %237 = arith.addf %234, %236 : vector<64x32xf32>
    %238 = math.tanh %237 : vector<64x32xf32>
    %c0_189 = arith.constant 0 : index
    %c0_190 = arith.constant 0 : index
    %239 = vector.load %arg27[%c0_189, %c0_190] : memref<64x32xf32, #tpu.memory_space<vmem>>, vector<64x32xf32>
    tpu.vector_store %arg27[%c0_189, %c0_190], %238 {strides = array<i32>} : memref<64x32xf32, #tpu.memory_space<vmem>>, vector<64x32xf32>,
    return
  }
}

</mosaic_0001>

<llo_original>
// kernel: generator_forward.1
$region0: #{generator_forward.1}
  #allocation0 [shape = 'u32[]', space=smem, size = 0x4, offset = 0x4, fixed_abs, tag = 'smem constant byte address 0x4 - core index']
  #allocation1 [shape = 'u32[144,128]{1,0:T(1,128)}', space=vmem, size = 0x12000, scoped, tag = 'internal scratch']
  %s0 = inlined_call_operand.vmem [shape: f32[2,128], index: 0, kind: input, shape index: {}]
  %s1 = inlined_call_operand.vmem [shape: f32[2,64], index: 1, kind: input, shape index: {}]
  %s2 = inlined_call_operand.vmem [shape: bf16[64,128], index: 2, kind: input, shape index: {}]
  %s3 = inlined_call_operand.hbm [shape: f32[1,128], index: 3, kind: input, shape index: {}]
  %s4 = inlined_call_operand.vmem [shape: bf16[4,8,2], index: 4, kind: input, shape index: {}]
  %s5 = inlined_call_operand.vmem [shape: bf16[1024,256], index: 5, kind: input, shape index: {}]
  %s6 = inlined_call_operand.vmem [shape: f32[2,64], index: 6, kind: input, shape index: {}]
  %s7 = inlined_call_operand.vmem [shape: f32[256,64], index: 7, kind: input, shape index: {}]
  %s8 = inlined_call_operand.vmem [shape: f32[64,256], index: 8, kind: input, shape index: {}]
  %s9 = inlined_call_operand.vmem [shape: bf16[4,16,8], index: 9, kind: input, shape index: {}]
  %s10 = inlined_call_operand.vmem [shape: bf16[1024,256], index: 10, kind: input, shape index: {}]
  %s11 = inlined_call_operand.hbm [shape: f32[2,32], index: 11, kind: input, shape index: {}]
  %s12 = inlined_call_operand.vmem [shape: f32[256,32], index: 12, kind: input, shape index: {}]
  %s13 = inlined_call_operand.hbm [shape: f32[32,256], index: 13, kind: input, shape index: {}]
  %s14 = inlined_call_operand.vmem [shape: bf16[4,32,16], index: 14, kind: input, shape index: {}]
  %s15 = inlined_call_operand.hbm [shape: bf16[1024,256], index: 15, kind: input, shape index: {}]
  %s16 = inlined_call_operand.hbm [shape: f32[2,16], index: 16, kind: input, shape index: {}]
  %s17 = inlined_call_operand.vmem [shape: f32[256,16], index: 17, kind: input, shape index: {}]
  %s18 = inlined_call_operand.hbm [shape: f32[16,256], index: 18, kind: input, shape index: {}]
  %s19 = inlined_call_operand.vmem [shape: bf16[4,64,32], index: 19, kind: input, shape index: {}]
  %s20 = inlined_call_operand.hbm [shape: bf16[1024,256], index: 20, kind: input, shape index: {}]
  %s21 = inlined_call_operand.hbm [shape: f32[2,8], index: 21, kind: input, shape index: {}]
  %s22 = inlined_call_operand.vmem [shape: f32[256,8], index: 22, kind: input, shape index: {}]
  %s23 = inlined_call_operand.vmem [shape: f32[8,256], index: 23, kind: input, shape index: {}]
  %s24 = inlined_call_operand.hbm [shape: bf16[3,64,64], index: 24, kind: input, shape index: {}]
  %s25 = inlined_call_operand.vmem [shape: bf16[768,32], index: 25, kind: input, shape index: {}]
  %s26 = inlined_call_operand.hbm [shape: f32[1,32], index: 26, kind: input, shape index: {}]
  %s27 = inlined_call_operand.hbm [shape: f32[64,32], index: 27, kind: output, shape index: {}]
  %s28 = sld [smem:[#allocation0]]
  $region158: #{generator_forward.1} parent=0
    _
  %s30 = ssub.s32 1, %s28
  %s31 = scalar_select 0, %s30, %s28
  $region1: #{generator_forward.1} parent=0
    #allocation2 [shape = 'u8[512]{0}', space=vmem, size = 0x400, scoped, tag = 'input window, operand 3, single buffered']
    #allocation3 [shape = 's32[1]{0}', space=sflag, size = 0x4, scoped, tag = 'scoped memory for generator_forward.1']
    #allocation4 [shape = 's32[1]{0}', space=sflag, size = 0x4, scoped, tag = 'scoped memory for generator_forward.1']
    #allocation5 [shape = 'u8[1024]{0}', space=vmem, size = 0x400, scoped, tag = 'input window, operand 11, single buffered']
    #allocation6 [shape = 's32[1]{0}', space=sflag, size = 0x4, scoped, tag = 'scoped memory for generator_forward.1']
    #allocation7 [shape = 'u8[32768]{0}', space=vmem, size = 0x8000, scoped, tag = 'input window, operand 13, single buffered']
    #allocation8 [shape = 'u8[524288]{0}', space=vmem, size = 0x80000, scoped, tag = 'input window, operand 15, single buffered']
    #allocation9 [shape = 's32[1]{0}', space=sflag, size = 0x4, scoped, tag = 'scoped memory for generator_forward.1']
    #allocation10 [shape = 'u8[1024]{0}', space=vmem, size = 0x400, scoped, tag = 'input window, operand 16, single buffered']
    #allocation11 [shape = 'u8[16384]{0}', space=vmem, size = 0x4000, scoped, tag = 'input window, operand 18, single buffered']
    #allocation12 [shape = 's32[1]{0}', space=sflag, size = 0x4, scoped, tag = 'scoped memory for generator_forward.1']
    #allocation13 [shape = 'u8[524288]{0}', space=vmem, size = 0x80000, scoped, tag = 'input window, operand 20, single buffered']
    #allocation14 [shape = 'u8[1024]{0}', space=vmem, size = 0x400, scoped, tag = 'input window, operand 21, single buffered']
    #allocation15 [shape = 's32[1]{0}', space=sflag, size = 0x4, scoped, tag = 'scoped memory for generator_forward.1']
    #allocation16 [shape = 'u8[49152]{0}', space=vmem, size = 0xc000, scoped, tag = 'input window, operand 24, single buffered']
    #allocation17 [shape = 'u8[512]{0}', space=vmem, size = 0x400, scoped, tag = 'input window, operand 26, single buffered']
    #allocation18 [shape = 's32[1]{0}', space=sflag, size = 0x4, scoped, tag = 'scoped memory for generator_forward.1']
    #allocation19 [shape = 'u8[32768]{0}', space=vmem, size = 0x8000, scoped, tag = 'output window, operand 0, single buffered']
    %32 = vsyncpa [#allocation3], 0
    %33 = vsyncpa [#allocation6], 0
    %34 = vsyncpa [#allocation9], 0
    %35 = vsyncpa [#allocation12], 0
    %36 = vsyncpa [#allocation15], 0
    %37 = vsyncpa [#allocation18], 0
    %38 = vsyncpa [#allocation4], 0
    // Predicated region
    $region2: #{generator_forward.1} parent=1 // pred_check
      _
    $region3: #{generator_forward.1} parent=1 // pred_check_branch
      %40 = sbr.rel (0) target = $region5
    $region4: #{generator_forward.1} parent=1 // pred_region
      _
    $region5: #{generator_forward.1} parent=1 // pred_fallthru
      _
    // Predicated region
    $region6: #{generator_forward.1} parent=1 // pred_check
      _
    $region7: #{generator_forward.1} parent=1 // pred_check_branch
      %42 = sbr.rel (0) target = $region9
    $region8: #{generator_forward.1} parent=1 // pred_region
      _
    $region9: #{generator_forward.1} parent=1 // pred_fallthru
      _
    // Predicated region
    $region10: #{generator_forward.1} parent=1 // pred_check
      _
    $region11: #{generator_forward.1} parent=1 // pred_check_branch
      %44 = sbr.rel (0) target = $region13
    $region12: #{generator_forward.1} parent=1 // pred_region
      _
    $region13: #{generator_forward.1} parent=1 // pred_fallthru
      _
    // Predicated region
    $region14: #{generator_forward.1} parent=1 // pred_check
      _
    $region15: #{generator_forward.1} parent=1 // pred_check_branch
      %46 = sbr.rel (0) target = $region17
    $region16: #{generator_forward.1} parent=1 // pred_region
      %s48 = ssub.s32 16, 16
      %49 = vsyncadd [#allocation3], %s48
      %s51 = sshll.u32 [#allocation2], 4
      %s52 = int_to_ptr.vmem [resolvable:$true] %s51
      %54 = dma.hbm_to_vmem [thread:$0]  %s3, 16, %s52, [#allocation3]
    $region17: #{generator_forward.1} parent=1 // pred_fallthru
      _
    // Predicated region
    $region18: #{generator_forward.1} parent=1 // pred_check
      _
    $region19: #{generator_forward.1} parent=1 // pred_check_branch
      %56 = sbr.rel (0) target = $region21
    $region20: #{generator_forward.1} parent=1 // pred_region
      _
    $region21: #{generator_forward.1} parent=1 // pred_fallthru
      _
    // Predicated region
    $region22: #{generator_forward.1} parent=1 // pred_check
      _
    $region23: #{generator_forward.1} parent=1 // pred_check_branch
      %58 = sbr.rel (0) target = $region25
    $region24: #{generator_forward.1} parent=1 // pred_region
      _
    $region25: #{generator_forward.1} parent=1 // pred_fallthru
      _
    // Predicated region
    $region26: #{generator_forward.1} parent=1 // pred_check
      _
    $region27: #{generator_forward.1} parent=1 // pred_check_branch
      %60 = sbr.rel (0) target = $region29
    $region28: #{generator_forward.1} parent=1 // pred_region
      _
    $region29: #{generator_forward.1} parent=1 // pred_fallthru
      _
    // Predicated region
    $region30: #{generator_forward.1} parent=1 // pred_check
      _
    $region31: #{generator_forward.1} parent=1 // pred_check_branch
      %62 = sbr.rel (0) target = $region33
    $region32: #{generator_forward.1} parent=1 // pred_region
      _
    $region33: #{generator_forward.1} parent=1 // pred_fallthru
      _
    // Predicated region
    $region34: #{generator_forward.1} parent=1 // pred_check
      _
    $region35: #{generator_forward.1} parent=1 // pred_check_branch
      %64 = sbr.rel (0) target = $region37
    $region36: #{generator_forward.1} parent=1 // pred_region
      _
    $region37: #{generator_forward.1} parent=1 // pred_fallthru
      _
    // Predicated region
    $region38: #{generator_forward.1} parent=1 // pred_check
      _
    $region39: #{generator_forward.1} parent=1 // pred_check_branch
      %66 = sbr.rel (0) target = $region41
    $region40: #{generator_forward.1} parent=1 // pred_region
      _
    $region41: #{generator_forward.1} parent=1 // pred_fallthru
      _
    // Predicated region
    $region42: #{generator_forward.1} parent=1 // pred_check
      _
    $region43: #{generator_forward.1} parent=1 // pred_check_branch
      %68 = sbr.rel (0) target = $region45
    $region44: #{generator_forward.1} parent=1 // pred_region
      _
    $region45: #{generator_forward.1} parent=1 // pred_fallthru
      _
    // Predicated region
    $region46: #{generator_forward.1} parent=1 // pred_check
      _
    $region47: #{generator_forward.1} parent=1 // pred_check_branch
      %70 = sbr.rel (0) target = $region49
    $region48: #{generator_forward.1} parent=1 // pred_region
      %s72 = ssub.s32 32, 32
      %73 = vsyncadd [#allocation6], %s72
      %s75 = sshll.u32 [#allocation5], 4
      %s76 = int_to_ptr.vmem [resolvable:$true] %s75
      %78 = dma.hbm_to_vmem [thread:$0]  %s11, 32, %s76, [#allocation6]
    $region49: #{generator_forward.1} parent=1 // pred_fallthru
      _
    // Predicated region
    $region50: #{generator_forward.1} parent=1 // pred_check
      _
    $region51: #{generator_forward.1} parent=1 // pred_check_branch
      %80 = sbr.rel (0) target = $region53
    $region52: #{generator_forward.1} parent=1 // pred_region
      _
    $region53: #{generator_forward.1} parent=1 // pred_fallthru
      _
    // Predicated region
    $region54: #{generator_forward.1} parent=1 // pred_check
      _
    $region55: #{generator_forward.1} parent=1 // pred_check_branch
      %82 = sbr.rel (0) target = $region57
    $region56: #{generator_forward.1} parent=1 // pred_region
      %s84 = ssub.s32 1024, 1024
      %85 = vsyncadd [#allocation6], %s84
      %s86 = sshll.u32 [#allocation7], 4
      %s87 = int_to_ptr.vmem [resolvable:$true] %s86
      %92 = dma.hbm_to_vmem [thread:$0]  %s13, 1024, %s87, [#allocation6], 256, 256, 16
    $region57: #{generator_forward.1} parent=1 // pred_fallthru
      _
    // Predicated region
    $region58: #{generator_forward.1} parent=1 // pred_check
      _
    $region59: #{generator_forward.1} parent=1 // pred_check_branch
      %94 = sbr.rel (0) target = $region61
    $region60: #{generator_forward.1} parent=1 // pred_region
      _
    $region61: #{generator_forward.1} parent=1 // pred_fallthru
      _
    // Predicated region
    $region62: #{generator_forward.1} parent=1 // pred_check
      _
    $region63: #{generator_forward.1} parent=1 // pred_check_branch
      %96 = sbr.rel (0) target = $region65
    $region64: #{generator_forward.1} parent=1 // pred_region
      %s98 = ssub.s32 16384, 16384
      %99 = vsyncadd [#allocation9], %s98
      %s100 = sshll.u32 [#allocation8], 4
      %s101 = int_to_ptr.vmem [resolvable:$true] %s100
      %106 = dma.hbm_to_vmem [thread:$0]  %s15, 16384, %s101, [#allocation9], 128, 128, 8
    $region65: #{generator_forward.1} parent=1 // pred_fallthru
      _
    // Predicated region
    $region66: #{generator_forward.1} parent=1 // pred_check
      _
    $region67: #{generator_forward.1} parent=1 // pred_check_branch
      %108 = sbr.rel (0) target = $region69
    $region68: #{generator_forward.1} parent=1 // pred_region
      %s110 = ssub.s32 32, 32
      %111 = vsyncadd [#allocation9], %s110
      %s113 = sshll.u32 [#allocation10], 4
      %s114 = int_to_ptr.vmem [resolvable:$true] %s113
      %116 = dma.hbm_to_vmem [thread:$0]  %s16, 32, %s114, [#allocation9]
    $region69: #{generator_forward.1} parent=1 // pred_fallthru
      _
    // Predicated region
    $region70: #{generator_forward.1} parent=1 // pred_check
      _
    $region71: #{generator_forward.1} parent=1 // pred_check_branch
      %118 = sbr.rel (0) target = $region73
    $region72: #{generator_forward.1} parent=1 // pred_region
      _
    $region73: #{generator_forward.1} parent=1 // pred_fallthru
      _
    // Predicated region
    $region74: #{generator_forward.1} parent=1 // pred_check
      _
    $region75: #{generator_forward.1} parent=1 // pred_check_branch
      %120 = sbr.rel (0) target = $region77
    $region76: #{generator_forward.1} parent=1 // pred_region
      %s122 = ssub.s32 512, 512
      %123 = vsyncadd [#allocation12], %s122
      %s124 = sshll.u32 [#allocation11], 4
      %s125 = int_to_ptr.vmem [resolvable:$true] %s124
      %130 = dma.hbm_to_vmem [thread:$0]  %s18, 512, %s125, [#allocation12], 256, 256, 16
    $region77: #{generator_forward.1} parent=1 // pred_fallthru
      _
    // Predicated region
    $region78: #{generator_forward.1} parent=1 // pred_check
      _
    $region79: #{generator_forward.1} parent=1 // pred_check_branch
      %132 = sbr.rel (0) target = $region81
    $region80: #{generator_forward.1} parent=1 // pred_region
      _
    $region81: #{generator_forward.1} parent=1 // pred_fallthru
      _
    // Predicated region
    $region82: #{generator_forward.1} parent=1 // pred_check
      _
    $region83: #{generator_forward.1} parent=1 // pred_check_branch
      %134 = sbr.rel (0) target = $region85
    $region84: #{generator_forward.1} parent=1 // pred_region
      %s136 = ssub.s32 16384, 16384
      %137 = vsyncadd [#allocation12], %s136
      %s138 = sshll.u32 [#allocation13], 4
      %s139 = int_to_ptr.vmem [resolvable:$true] %s138
      %144 = dma.hbm_to_vmem [thread:$0]  %s20, 16384, %s139, [#allocation12], 128, 128, 8
    $region85: #{generator_forward.1} parent=1 // pred_fallthru
      _
    // Predicated region
    $region86: #{generator_forward.1} parent=1 // pred_check
      _
    $region87: #{generator_forward.1} parent=1 // pred_check_branch
      %146 = sbr.rel (0) target = $region89
    $region88: #{generator_forward.1} parent=1 // pred_region
      %s148 = ssub.s32 32, 32
      %149 = vsyncadd [#allocation15], %s148
      %s151 = sshll.u32 [#allocation14], 4
      %s152 = int_to_ptr.vmem [resolvable:$true] %s151
      %154 = dma.hbm_to_vmem [thread:$0]  %s21, 32, %s152, [#allocation15]
    $region89: #{generator_forward.1} parent=1 // pred_fallthru
      _
    // Predicated region
    $region90: #{generator_forward.1} parent=1 // pred_check
      _
    $region91: #{generator_forward.1} parent=1 // pred_check_branch
      %156 = sbr.rel (0) target = $region93
    $region92: #{generator_forward.1} parent=1 // pred_region
      _
    $region93: #{generator_forward.1} parent=1 // pred_fallthru
      _
    // Predicated region
    $region94: #{generator_forward.1} parent=1 // pred_check
      _
    $region95: #{generator_forward.1} parent=1 // pred_check_branch
      %158 = sbr.rel (0) target = $region97
    $region96: #{generator_forward.1} parent=1 // pred_region
      _
    $region97: #{generator_forward.1} parent=1 // pred_fallthru
      _
    // Predicated region
    $region98: #{generator_forward.1} parent=1 // pred_check
      _
    $region99: #{generator_forward.1} parent=1 // pred_check_branch
      %160 = sbr.rel (0) target = $region101
    $region100: #{generator_forward.1} parent=1 // pred_region
      %s162 = ssub.s32 1536, 1536
      %163 = vsyncadd [#allocation15], %s162
      %s164 = sshll.u32 [#allocation16], 4
      %s165 = int_to_ptr.vmem [resolvable:$true] %s164
      %170 = dma.hbm_to_vmem [thread:$0]  %s24, 1536, %s165, [#allocation15], 64, 64, 4
    $region101: #{generator_forward.1} parent=1 // pred_fallthru
      _
    // Predicated region
    $region102: #{generator_forward.1} parent=1 // pred_check
      _
    $region103: #{generator_forward.1} parent=1 // pred_check_branch
      %172 = sbr.rel (0) target = $region105
    $region104: #{generator_forward.1} parent=1 // pred_region
      _
    $region105: #{generator_forward.1} parent=1 // pred_fallthru
      _
    // Predicated region
    $region106: #{generator_forward.1} parent=1 // pred_check
      _
    $region107: #{generator_forward.1} parent=1 // pred_check_branch
      %174 = sbr.rel (0) target = $region109
    $region108: #{generator_forward.1} parent=1 // pred_region
      %s176 = ssub.s32 16, 16
      %177 = vsyncadd [#allocation18], %s176
      %s179 = sshll.u32 [#allocation17], 4
      %s180 = int_to_ptr.vmem [resolvable:$true] %s179
      %182 = dma.hbm_to_vmem [thread:$0]  %s26, 16, %s180, [#allocation18]
    $region109: #{generator_forward.1} parent=1 // pred_fallthru
      _
    // Predicated region
    $region110: #{generator_forward.1} parent=1 // pred_check
      _
    $region111: #{generator_forward.1} parent=1 // pred_check_branch
      %184 = sbr.rel (0) target = $region113
    $region112: #{generator_forward.1} parent=1 // pred_region
      %185 = dma.done [#allocation3], 16
    $region113: #{generator_forward.1} parent=1 // pred_fallthru
      _
    // Predicated region
    $region114: #{generator_forward.1} parent=1 // pred_check
      _
    $region115: #{generator_forward.1} parent=1 // pred_check_branch
      %187 = sbr.rel (0) target = $region117
    $region116: #{generator_forward.1} parent=1 // pred_region
      %188 = dma.done [#allocation6], 32
    $region117: #{generator_forward.1} parent=1 // pred_fallthru
      _
    // Predicated region
    $region118: #{generator_forward.1} parent=1 // pred_check
      _
    $region119: #{generator_forward.1} parent=1 // pred_check_branch
      %190 = sbr.rel (0) target = $region121
    $region120: #{generator_forward.1} parent=1 // pred_region
      %191 = dma.done [#allocation6], 1024
    $region121: #{generator_forward.1} parent=1 // pred_fallthru
      _
    // Predicated region
    $region122: #{generator_forward.1} parent=1 // pred_check
      _
    $region123: #{generator_forward.1} parent=1 // pred_check_branch
      %193 = sbr.rel (0) target = $region125
    $region124: #{generator_forward.1} parent=1 // pred_region
      %194 = dma.done [#allocation9], 16384
    $region125: #{generator_forward.1} parent=1 // pred_fallthru
      _
    // Predicated region
    $region126: #{generator_forward.1} parent=1 // pred_check
      _
    $region127: #{generator_forward.1} parent=1 // pred_check_branch
      %196 = sbr.rel (0) target = $region129
    $region128: #{generator_forward.1} parent=1 // pred_region
      %197 = dma.done [#allocation9], 32
    $region129: #{generator_forward.1} parent=1 // pred_fallthru
      _
    // Predicated region
    $region130: #{generator_forward.1} parent=1 // pred_check
      _
    $region131: #{generator_forward.1} parent=1 // pred_check_branch
      %199 = sbr.rel (0) target = $region133
    $region132: #{generator_forward.1} parent=1 // pred_region
      %200 = dma.done [#allocation12], 512
    $region133: #{generator_forward.1} parent=1 // pred_fallthru
      _
    // Predicated region
    $region134: #{generator_forward.1} parent=1 // pred_check
      _
    $region135: #{generator_forward.1} parent=1 // pred_check_branch
      %202 = sbr.rel (0) target = $region137
    $region136: #{generator_forward.1} parent=1 // pred_region
      %203 = dma.done [#allocation12], 16384
    $region137: #{generator_forward.1} parent=1 // pred_fallthru
      _
    // Predicated region
    $region138: #{generator_forward.1} parent=1 // pred_check
      _
    $region139: #{generator_forward.1} parent=1 // pred_check_branch
      %205 = sbr.rel (0) target = $region141
    $region140: #{generator_forward.1} parent=1 // pred_region
      %206 = dma.done [#allocation15], 32
    $region141: #{generator_forward.1} parent=1 // pred_fallthru
      _
    // Predicated region
    $region142: #{generator_forward.1} parent=1 // pred_check
      _
    $region143: #{generator_forward.1} parent=1 // pred_check_branch
      %208 = sbr.rel (0) target = $region145
    $region144: #{generator_forward.1} parent=1 // pred_region
      %209 = dma.done [#allocation15], 1536
    $region145: #{generator_forward.1} parent=1 // pred_fallthru
      _
    // Predicated region
    $region146: #{generator_forward.1} parent=1 // pred_check
      _
    $region147: #{generator_forward.1} parent=1 // pred_check_branch
      %211 = sbr.rel (0) target = $region149
    $region148: #{generator_forward.1} parent=1 // pred_region
      %212 = dma.done [#allocation18], 16
    $region149: #{generator_forward.1} parent=1 // pred_fallthru
      _
    %v214 = vld [vmem:[%s1] sm:$0x3]
    %v215 = vpack.c.bf16 %v214, %v214
    %v216 = vld [vmem:[%s2] sm:$0xf]
    %v217 = vld [vmem:[%s2 + $0x4] sm:$0xf]
    %v218 = vld [vmem:[%s2 + $0x8] sm:$0xf]
    %v219 = vld [vmem:[%s2 + $0xc] sm:$0xf]
    %v220 = vld [vmem:[%s2 + $0x10] sm:$0xf]
    %v221 = vld [vmem:[%s2 + $0x14] sm:$0xf]
    %v222 = vld [vmem:[%s2 + $0x18] sm:$0xf]
    %v223 = vld [vmem:[%s2 + $0x1c] sm:$0xf]
    %v224 = vld [vmem:[#allocation2] sm:$0x1]
    %v226 = vlaneseq
    %v227 = vshrl.u32 %v226, 7
    %v228 = vsub.s32 0, %v227
    %v229 = vrot.slane %v224, %v228
    %v239 = vunpack.c.l.b16 %v216
    %v240 = vunpack.c.l.b16 %v217
    %v241 = vunpack.c.l.b16 %v218
    %v242 = vunpack.c.l.b16 %v219
    %v243 = vunpack.c.l.b16 %v220
    %v244 = vunpack.c.l.b16 %v221
    %v245 = vunpack.c.l.b16 %v222
    %v246 = vunpack.c.l.b16 %v223
    %v247 = vpack.c.b16 %v240, %v239
    %v248 = vpack.c.b16 %v242, %v241
    %v249 = vpack.c.b16 %v244, %v243
    %v250 = vpack.c.b16 %v246, %v245
    %vm255 = vcmask 523264
    %v257 = vsel %vm255, %v215, 0
    %259 = vmatprep.subr.bf16.mxu0 0
    %260 = vmatpush1.bf16.msra.mxu0 %v247
    %261 = vmatprep.subr.bf16.mxu0 0
    %262 = vmatpush1.bf16.msra.mxu0 %v248
    %263 = vmatprep.subr.bf16.mxu0 0
    %264 = vmatpush1.bf16.msra.mxu0 %v249
    %265 = vmatprep.subr.bf16.mxu0 0
    %266 = vmatpush1.bf16.msra.mxu0 %v250
    %267 = vmatprep.subr.bf16.mxu0 0
    %268 = vmatpush1.bf16.msra.mxu0 0
    %269 = vmatprep.subr.bf16.mxu0 0
    %270 = vmatpush1.bf16.msra.mxu0 0
    %271 = vmatprep.subr.bf16.mxu0 0
    %272 = vmatpush1.bf16.msra.mxu0 0
    %273 = vmatprep.subr.bf16.mxu0 0
    %274 = vmatpush1.bf16.msra.mxu0 0
    %275 = vmatprep.subr.bf16.mxu0 0
    %276 = vmatpush1.bf16.msra.mxu0 0
    %277 = vmatprep.subr.bf16.mxu0 0
    %278 = vmatpush1.bf16.msra.mxu0 0
    %279 = vmatprep.subr.bf16.mxu0 0
    %280 = vmatpush1.bf16.msra.mxu0 0
    %281 = vmatprep.subr.bf16.mxu0 0
    %282 = vmatpush1.bf16.msra.mxu0 0
    %283 = vmatprep.subr.bf16.mxu0 0
    %284 = vmatpush1.bf16.msra.mxu0 0
    %285 = vmatprep.subr.bf16.mxu0 0
    %286 = vmatpush1.bf16.msra.mxu0 0
    %287 = vmatprep.subr.bf16.mxu0 0
    %288 = vmatpush1.bf16.msra.mxu0 0
    %289 = vmatprep.subr.bf16.mxu0 0
    %290 = vmatpush1.bf16.msra.mxu0 0
    %291 = vmatprep.mubr.bf16.mxu0 0
    %292 = vmatmul.mubr.bf16.gmra.mrb[0].mxu0 %v257
    %v293 = vpop.f32.mrb[0].mxu0
    %v294 = vadd.f32 %v229, %v293
    %v295 = vpop.f32.mrb[0].mxu0
    %v296 = vpop.f32.mrb[0].mxu0
    %v297 = vpop.f32.mrb[0].mxu0
    %298 = vdwg.mxu0
    %v299 = vld [vmem:[%s0] sm:$0x3]
    %v300 = vpack.c.bf16 %v299, %v299
    %v301 = vpack.c.bf16 %v294, %v294
    %v302 = vld [vmem:[%s4] sm:$0xf]
    %vm303 = vcmask 15360
    %v305 = vsel %vm303, %v302, 0
    %vm307 = vcmask 1040384
    %v309 = vsel %vm307, %v300, 0
    %v312 = vsel %vm307, %v301, 0
    %314 = vmatprep.subr.bf16.mxu0 %v312
    %315 = vmatpush1.bf16.msra.mxu0 %v309
    %316 = vmatprep.subr.bf16.mxu0 0
    %317 = vmatpush1.bf16.msra.mxu0 0
    %318 = vmatprep.subr.bf16.mxu0 0
    %319 = vmatpush1.bf16.msra.mxu0 0
    %320 = vmatprep.subr.bf16.mxu0 0
    %321 = vmatpush1.bf16.msra.mxu0 0
    %322 = vmatprep.subr.bf16.mxu0 0
    %323 = vmatpush1.bf16.msra.mxu0 0
    %324 = vmatprep.subr.bf16.mxu0 0
    %325 = vmatpush1.bf16.msra.mxu0 0
    %326 = vmatprep.subr.bf16.mxu0 0
    %327 = vmatpush1.bf16.msra.mxu0 0
    %328 = vmatprep.subr.bf16.mxu0 0
    %329 = vmatpush1.bf16.msra.mxu0 0
    %330 = vmatprep.subr.bf16.mxu0 0
    %331 = vmatpush1.bf16.msra.mxu0 0
    %332 = vmatprep.subr.bf16.mxu0 0
    %333 = vmatpush1.bf16.msra.mxu0 0
    %334 = vmatprep.subr.bf16.mxu0 0
    %335 = vmatpush1.bf16.msra.mxu0 0
    %336 = vmatprep.subr.bf16.mxu0 0
    %337 = vmatpush1.bf16.msra.mxu0 0
    %338 = vmatprep.subr.bf16.mxu0 0
    %339 = vmatpush1.bf16.msra.mxu0 0
    %340 = vmatprep.subr.bf16.mxu0 0
    %341 = vmatpush1.bf16.msra.mxu0 0
    %342 = vmatprep.subr.bf16.mxu0 0
    %343 = vmatpush1.bf16.msra.mxu0 0
    %344 = vmatprep.subr.bf16.mxu0 0
    %345 = vmatpush1.bf16.msra.mxu0 0
    %346 = vmatprep.mubr.bf16.mxu0 0
    %347 = vmatmul.mubr.bf16.gmra.mrb[0].mxu0 %v305
    %v348 = vpop.f32.mrb[0].mxu0
    %v349 = vadd.f32 0.0, %v348
    %v350 = vpop.f32.mrb[0].mxu0
    %v351 = vadd.f32 0.0, %v350
    %v352 = vpop.f32.mrb[0].mxu0
    %v353 = vpop.f32.mrb[0].mxu0
    %354 = vdwg.mxu0
    %s355 = scalar_lea.vmem %s4, 4
    %v356 = vld [vmem:[%s355] sm:$0xf]
    %v358 = vsel %vm303, %v356, 0
    %360 = vmatprep.subr.bf16.mxu0 %v312
    %361 = vmatpush1.bf16.msra.mxu0 %v309
    %362 = vmatprep.subr.bf16.mxu0 0
    %363 = vmatpush1.bf16.msra.mxu0 0
    %364 = vmatprep.subr.bf16.mxu0 0
    %365 = vmatpush1.bf16.msra.mxu0 0
    %366 = vmatprep.subr.bf16.mxu0 0
    %367 = vmatpush1.bf16.msra.mxu0 0
    %368 = vmatprep.subr.bf16.mxu0 0
    %369 = vmatpush1.bf16.msra.mxu0 0
    %370 = vmatprep.subr.bf16.mxu0 0
    %371 = vmatpush1.bf16.msra.mxu0 0
    %372 = vmatprep.subr.bf16.mxu0 0
    %373 = vmatpush1.bf16.msra.mxu0 0
    %374 = vmatprep.subr.bf16.mxu0 0
    %375 = vmatpush1.bf16.msra.mxu0 0
    %376 = vmatprep.subr.bf16.mxu0 0
    %377 = vmatpush1.bf16.msra.mxu0 0
    %378 = vmatprep.subr.bf16.mxu0 0
    %379 = vmatpush1.bf16.msra.mxu0 0
    %380 = vmatprep.subr.bf16.mxu0 0
    %381 = vmatpush1.bf16.msra.mxu0 0
    %382 = vmatprep.subr.bf16.mxu0 0
    %383 = vmatpush1.bf16.msra.mxu0 0
    %384 = vmatprep.subr.bf16.mxu0 0
    %385 = vmatpush1.bf16.msra.mxu0 0
    %386 = vmatprep.subr.bf16.mxu0 0
    %387 = vmatpush1.bf16.msra.mxu0 0
    %388 = vmatprep.subr.bf16.mxu0 0
    %389 = vmatpush1.bf16.msra.mxu0 0
    %390 = vmatprep.subr.bf16.mxu0 0
    %391 = vmatpush1.bf16.msra.mxu0 0
    %392 = vmatprep.mubr.bf16.mxu0 0
    %393 = vmatmul.mubr.bf16.gmra.mrb[0].mxu0 %v358
    %v394 = vpop.f32.mrb[0].mxu0
    %v395 = vadd.f32 0.0, %v394
    %v396 = vpop.f32.mrb[0].mxu0
    %v397 = vadd.f32 0.0, %v396
    %v398 = vpop.f32.mrb[0].mxu0
    %v399 = vpop.f32.mrb[0].mxu0
    %400 = vdwg.mxu0
    %s401 = scalar_lea.vmem %s4, 8
    %v402 = vld [vmem:[%s401] sm:$0xf]
    %v404 = vsel %vm303, %v402, 0
    %406 = vmatprep.subr.bf16.mxu0 %v312
    %407 = vmatpush1.bf16.msra.mxu0 %v309
    %408 = vmatprep.subr.bf16.mxu0 0
    %409 = vmatpush1.bf16.msra.mxu0 0
    %410 = vmatprep.subr.bf16.mxu0 0
    %411 = vmatpush1.bf16.msra.mxu0 0
    %412 = vmatprep.subr.bf16.mxu0 0
    %413 = vmatpush1.bf16.msra.mxu0 0
    %414 = vmatprep.subr.bf16.mxu0 0
    %415 = vmatpush1.bf16.msra.mxu0 0
    %416 = vmatprep.subr.bf16.mxu0 0
    %417 = vmatpush1.bf16.msra.mxu0 0
    %418 = vmatprep.subr.bf16.mxu0 0
    %419 = vmatpush1.bf16.msra.mxu0 0
    %420 = vmatprep.subr.bf16.mxu0 0
    %421 = vmatpush1.bf16.msra.mxu0 0
    %422 = vmatprep.subr.bf16.mxu0 0
    %423 = vmatpush1.bf16.msra.mxu0 0
    %424 = vmatprep.subr.bf16.mxu0 0
    %425 = vmatpush1.bf16.msra.mxu0 0
    %426 = vmatprep.subr.bf16.mxu0 0
    %427 = vmatpush1.bf16.msra.mxu0 0
    %428 = vmatprep.subr.bf16.mxu0 0
    %429 = vmatpush1.bf16.msra.mxu0 0
    %430 = vmatprep.subr.bf16.mxu0 0
    %431 = vmatpush1.bf16.msra.mxu0 0
    %432 = vmatprep.subr.bf16.mxu0 0
    %433 = vmatpush1.bf16.msra.mxu0 0
    %434 = vmatprep.subr.bf16.mxu0 0
    %435 = vmatpush1.bf16.msra.mxu0 0
    %436 = vmatprep.subr.bf16.mxu0 0
    %437 = vmatpush1.bf16.msra.mxu0 0
    %438 = vmatprep.mubr.bf16.mxu0 0
    %439 = vmatmul.mubr.bf16.gmra.mrb[0].mxu0 %v404
    %v440 = vpop.f32.mrb[0].mxu0
    %v441 = vadd.f32 0.0, %v440
    %v442 = vpop.f32.mrb[0].mxu0
    %v443 = vadd.f32 0.0, %v442
    %v444 = vpop.f32.mrb[0].mxu0
    %v445 = vpop.f32.mrb[0].mxu0
    %446 = vdwg.mxu0
    %s447 = scalar_lea.vmem %s4, 12
    %v448 = vld [vmem:[%s447] sm:$0xf]
    %v450 = vsel %vm303, %v448, 0
    %452 = vmatprep.subr.bf16.mxu0 %v312
    %453 = vmatpush1.bf16.msra.mxu0 %v309
    %454 = vmatprep.subr.bf16.mxu0 0
    %455 = vmatpush1.bf16.msra.mxu0 0
    %456 = vmatprep.subr.bf16.mxu0 0
    %457 = vmatpush1.bf16.msra.mxu0 0
    %458 = vmatprep.subr.bf16.mxu0 0
    %459 = vmatpush1.bf16.msra.mxu0 0
    %460 = vmatprep.subr.bf16.mxu0 0
    %461 = vmatpush1.bf16.msra.mxu0 0
    %462 = vmatprep.subr.bf16.mxu0 0
    %463 = vmatpush1.bf16.msra.mxu0 0
    %464 = vmatprep.subr.bf16.mxu0 0
    %465 = vmatpush1.bf16.msra.mxu0 0
    %466 = vmatprep.subr.bf16.mxu0 0
    %467 = vmatpush1.bf16.msra.mxu0 0
    %468 = vmatprep.subr.bf16.mxu0 0
    %469 = vmatpush1.bf16.msra.mxu0 0
    %470 = vmatprep.subr.bf16.mxu0 0
    %471 = vmatpush1.bf16.msra.mxu0 0
    %472 = vmatprep.subr.bf16.mxu0 0
    %473 = vmatpush1.bf16.msra.mxu0 0
    %474 = vmatprep.subr.bf16.mxu0 0
    %475 = vmatpush1.bf16.msra.mxu0 0
    %476 = vmatprep.subr.bf16.mxu0 0
    %477 = vmatpush1.bf16.msra.mxu0 0
    %478 = vmatprep.subr.bf16.mxu0 0
    %479 = vmatpush1.bf16.msra.mxu0 0
    %480 = vmatprep.subr.bf16.mxu0 0
    %481 = vmatpush1.bf16.msra.mxu0 0
    %482 = vmatprep.subr.bf16.mxu0 0
    %483 = vmatpush1.bf16.msra.mxu0 0
    %484 = vmatprep.mubr.bf16.mxu0 0
    %485 = vmatmul.mubr.bf16.gmra.mrb[0].mxu0 %v450
    %v486 = vpop.f32.mrb[0].mxu0
    %v487 = vadd.f32 0.0, %v486
    %v488 = vpop.f32.mrb[0].mxu0
    %v489 = vadd.f32 0.0, %v488
    %v490 = vpop.f32.mrb[0].mxu0
    %v491 = vpop.f32.mrb[0].mxu0
    %492 = vdwg.mxu0
    %v493 = vpack.c.bf16 %v349, %v349
    %v494 = vpack.c.bf16 %v351, %v351
    %v495 = vpack.c.bf16 %v395, %v395
    %v496 = vpack.c.bf16 %v397, %v397
    %v497 = vpack.c.bf16 %v441, %v441
    %v498 = vpack.c.bf16 %v443, %v443
    %v499 = vpack.c.bf16 %v487, %v487
    %v500 = vpack.c.bf16 %v489, %v489
    %v501 = vld [vmem:[%s5] sm:$0xff]
    %v502 = vld [vmem:[%s5 + $0x8] sm:$0xff]
    %v503 = vld [vmem:[%s5 + $0x10] sm:$0xff]
    %v504 = vld [vmem:[%s5 + $0x18] sm:$0xff]
    %v505 = vld [vmem:[%s5 + $0x20] sm:$0xff]
    %v506 = vld [vmem:[%s5 + $0x28] sm:$0xff]
    %v507 = vld [vmem:[%s5 + $0x30] sm:$0xff]
    %v508 = vld [vmem:[%s5 + $0x38] sm:$0xff]
    %v509 = vld [vmem:[%s5 + $0x40] sm:$0xff]
    %v510 = vld [vmem:[%s5 + $0x48] sm:$0xff]
    %v511 = vld [vmem:[%s5 + $0x50] sm:$0xff]
    %v512 = vld [vmem:[%s5 + $0x58] sm:$0xff]
    %v513 = vld [vmem:[%s5 + $0x60] sm:$0xff]
    %v514 = vld [vmem:[%s5 + $0x68] sm:$0xff]
    %v515 = vld [vmem:[%s5 + $0x70] sm:$0xff]
    %v516 = vld [vmem:[%s5 + $0x78] sm:$0xff]
    %v517 = vld [vmem:[%s5 + $0x80] sm:$0xff]
    %v518 = vld [vmem:[%s5 + $0x88] sm:$0xff]
    %v519 = vld [vmem:[%s5 + $0x90] sm:$0xff]
    %v520 = vld [vmem:[%s5 + $0x98] sm:$0xff]
    %v521 = vld [vmem:[%s5 + $0xa0] sm:$0xff]
    %v522 = vld [vmem:[%s5 + $0xa8] sm:$0xff]
    %v523 = vld [vmem:[%s5 + $0xb0] sm:$0xff]
    %v524 = vld [vmem:[%s5 + $0xb8] sm:$0xff]
    %v525 = vld [vmem:[%s5 + $0xc0] sm:$0xff]
    %v526 = vld [vmem:[%s5 + $0xc8] sm:$0xff]
    %v527 = vld [vmem:[%s5 + $0xd0] sm:$0xff]
    %v528 = vld [vmem:[%s5 + $0xd8] sm:$0xff]
    %v529 = vld [vmem:[%s5 + $0xe0] sm:$0xff]
    %v530 = vld [vmem:[%s5 + $0xe8] sm:$0xff]
    %v531 = vld [vmem:[%s5 + $0xf0] sm:$0xff]
    %v532 = vld [vmem:[%s5 + $0xf8] sm:$0xff]
    %v533 = vld [vmem:[%s5 + $0x100] sm:$0xff]
    %v534 = vld [vmem:[%s5 + $0x108] sm:$0xff]
    %v535 = vld [vmem:[%s5 + $0x110] sm:$0xff]
    %v536 = vld [vmem:[%s5 + $0x118] sm:$0xff]
    %v537 = vld [vmem:[%s5 + $0x120] sm:$0xff]
    %v538 = vld [vmem:[%s5 + $0x128] sm:$0xff]
    %v539 = vld [vmem:[%s5 + $0x130] sm:$0xff]
    %v540 = vld [vmem:[%s5 + $0x138] sm:$0xff]
    %v541 = vld [vmem:[%s5 + $0x140] sm:$0xff]
    %v542 = vld [vmem:[%s5 + $0x148] sm:$0xff]
    %v543 = vld [vmem:[%s5 + $0x150] sm:$0xff]
    %v544 = vld [vmem:[%s5 + $0x158] sm:$0xff]
    %v545 = vld [vmem:[%s5 + $0x160] sm:$0xff]
    %v546 = vld [vmem:[%s5 + $0x168] sm:$0xff]
    %v547 = vld [vmem:[%s5 + $0x170] sm:$0xff]
    %v548 = vld [vmem:[%s5 + $0x178] sm:$0xff]
    %v549 = vld [vmem:[%s5 + $0x180] sm:$0xff]
    %v550 = vld [vmem:[%s5 + $0x188] sm:$0xff]
    %v551 = vld [vmem:[%s5 + $0x190] sm:$0xff]
    %v552 = vld [vmem:[%s5 + $0x198] sm:$0xff]
    %v553 = vld [vmem:[%s5 + $0x1a0] sm:$0xff]
    %v554 = vld [vmem:[%s5 + $0x1a8] sm:$0xff]
    %v555 = vld [vmem:[%s5 + $0x1b0] sm:$0xff]
    %v556 = vld [vmem:[%s5 + $0x1b8] sm:$0xff]
    %v557 = vld [vmem:[%s5 + $0x1c0] sm:$0xff]
    %v558 = vld [vmem:[%s5 + $0x1c8] sm:$0xff]
    %v559 = vld [vmem:[%s5 + $0x1d0] sm:$0xff]
    %v560 = vld [vmem:[%s5 + $0x1d8] sm:$0xff]
    %v561 = vld [vmem:[%s5 + $0x1e0] sm:$0xff]
    %v562 = vld [vmem:[%s5 + $0x1e8] sm:$0xff]
    %v563 = vld [vmem:[%s5 + $0x1f0] sm:$0xff]
    %v564 = vld [vmem:[%s5 + $0x1f8] sm:$0xff]
    %v565 = vld [vmem:[%s5 + $0x200] sm:$0xff]
    %v566 = vld [vmem:[%s5 + $0x208] sm:$0xff]
    %v567 = vld [vmem:[%s5 + $0x210] sm:$0xff]
    %v568 = vld [vmem:[%s5 + $0x218] sm:$0xff]
    %v569 = vld [vmem:[%s5 + $0x220] sm:$0xff]
    %v570 = vld [vmem:[%s5 + $0x228] sm:$0xff]
    %v571 = vld [vmem:[%s5 + $0x230] sm:$0xff]
    %v572 = vld [vmem:[%s5 + $0x238] sm:$0xff]
    %v573 = vld [vmem:[%s5 + $0x240] sm:$0xff]
    %v574 = vld [vmem:[%s5 + $0x248] sm:$0xff]
    %v575 = vld [vmem:[%s5 + $0x250] sm:$0xff]
    %v576 = vld [vmem:[%s5 + $0x258] sm:$0xff]
    %v577 = vld [vmem:[%s5 + $0x260] sm:$0xff]
    %v578 = vld [vmem:[%s5 + $0x268] sm:$0xff]
    %v579 = vld [vmem:[%s5 + $0x270] sm:$0xff]
    %v580 = vld [vmem:[%s5 + $0x278] sm:$0xff]
    %v581 = vld [vmem:[%s5 + $0x280] sm:$0xff]
    %v582 = vld [vmem:[%s5 + $0x288] sm:$0xff]
    %v583 = vld [vmem:[%s5 + $0x290] sm:$0xff]
    %v584 = vld [vmem:[%s5 + $0x298] sm:$0xff]
    %v585 = vld [vmem:[%s5 + $0x2a0] sm:$0xff]
    %v586 = vld [vmem:[%s5 + $0x2a8] sm:$0xff]
    %v587 = vld [vmem:[%s5 + $0x2b0] sm:$0xff]
    %v588 = vld [vmem:[%s5 + $0x2b8] sm:$0xff]
    %v589 = vld [vmem:[%s5 + $0x2c0] sm:$0xff]
    %v590 = vld [vmem:[%s5 + $0x2c8] sm:$0xff]
    %v591 = vld [vmem:[%s5 + $0x2d0] sm:$0xff]
    %v592 = vld [vmem:[%s5 + $0x2d8] sm:$0xff]
    %v593 = vld [vmem:[%s5 + $0x2e0] sm:$0xff]
    %v594 = vld [vmem:[%s5 + $0x2e8] sm:$0xff]
    %v595 = vld [vmem:[%s5 + $0x2f0] sm:$0xff]
    %v596 = vld [vmem:[%s5 + $0x2f8] sm:$0xff]
    %v597 = vld [vmem:[%s5 + $0x300] sm:$0xff]
    %v598 = vld [vmem:[%s5 + $0x308] sm:$0xff]
    %v599 = vld [vmem:[%s5 + $0x310] sm:$0xff]
    %v600 = vld [vmem:[%s5 + $0x318] sm:$0xff]
    %v601 = vld [vmem:[%s5 + $0x320] sm:$0xff]
    %v602 = vld [vmem:[%s5 + $0x328] sm:$0xff]
    %v603 = vld [vmem:[%s5 + $0x330] sm:$0xff]
    %v604 = vld [vmem:[%s5 + $0x338] sm:$0xff]
    %v605 = vld [vmem:[%s5 + $0x340] sm:$0xff]
    %v606 = vld [vmem:[%s5 + $0x348] sm:$0xff]
    %v607 = vld [vmem:[%s5 + $0x350] sm:$0xff]
    %v608 = vld [vmem:[%s5 + $0x358] sm:$0xff]
    %v609 = vld [vmem:[%s5 + $0x360] sm:$0xff]
    %v610 = vld [vmem:[%s5 + $0x368] sm:$0xff]
    %v611 = vld [vmem:[%s5 + $0x370] sm:$0xff]
    %v612 = vld [vmem:[%s5 + $0x378] sm:$0xff]
    %v613 = vld [vmem:[%s5 + $0x380] sm:$0xff]
    %v614 = vld [vmem:[%s5 + $0x388] sm:$0xff]
    %v615 = vld [vmem:[%s5 + $0x390] sm:$0xff]
    %v616 = vld [vmem:[%s5 + $0x398] sm:$0xff]
    %v617 = vld [vmem:[%s5 + $0x3a0] sm:$0xff]
    %v618 = vld [vmem:[%s5 + $0x3a8] sm:$0xff]
    %v619 = vld [vmem:[%s5 + $0x3b0] sm:$0xff]
    %v620 = vld [vmem:[%s5 + $0x3b8] sm:$0xff]
    %v621 = vld [vmem:[%s5 + $0x3c0] sm:$0xff]
    %v622 = vld [vmem:[%s5 + $0x3c8] sm:$0xff]
    %v623 = vld [vmem:[%s5 + $0x3d0] sm:$0xff]
    %v624 = vld [vmem:[%s5 + $0x3d8] sm:$0xff]
    %v625 = vld [vmem:[%s5 + $0x3e0] sm:$0xff]
    %v626 = vld [vmem:[%s5 + $0x3e8] sm:$0xff]
    %v627 = vld [vmem:[%s5 + $0x3f0] sm:$0xff]
    %v628 = vld [vmem:[%s5 + $0x3f8] sm:$0xff]
    %v757 = vunpack.c.l.b16 %v501
    %v758 = vunpack.c.h.b16 %v501
    %v759 = vunpack.c.l.b16 %v502
    %v760 = vunpack.c.h.b16 %v502
    %v761 = vunpack.c.l.b16 %v503
    %v762 = vunpack.c.h.b16 %v503
    %v763 = vunpack.c.l.b16 %v504
    %v764 = vunpack.c.h.b16 %v504
    %v765 = vunpack.c.l.b16 %v505
    %v766 = vunpack.c.h.b16 %v505
    %v767 = vunpack.c.l.b16 %v506
    %v768 = vunpack.c.h.b16 %v506
    %v769 = vunpack.c.l.b16 %v507
    %v770 = vunpack.c.h.b16 %v507
    %v771 = vunpack.c.l.b16 %v508
    %v772 = vunpack.c.h.b16 %v508
    %v773 = vunpack.c.l.b16 %v509
    %v774 = vunpack.c.h.b16 %v509
    %v775 = vunpack.c.l.b16 %v510
    %v776 = vunpack.c.h.b16 %v510
    %v777 = vunpack.c.l.b16 %v511
    %v778 = vunpack.c.h.b16 %v511
    %v779 = vunpack.c.l.b16 %v512
    %v780 = vunpack.c.h.b16 %v512
    %v781 = vunpack.c.l.b16 %v513
    %v782 = vunpack.c.h.b16 %v513
    %v783 = vunpack.c.l.b16 %v514
    %v784 = vunpack.c.h.b16 %v514
    %v785 = vunpack.c.l.b16 %v515
    %v786 = vunpack.c.h.b16 %v515
    %v787 = vunpack.c.l.b16 %v516
    %v788 = vunpack.c.h.b16 %v516
    %v789 = vunpack.c.l.b16 %v517
    %v790 = vunpack.c.h.b16 %v517
    %v791 = vunpack.c.l.b16 %v518
    %v792 = vunpack.c.h.b16 %v518
    %v793 = vunpack.c.l.b16 %v519
    %v794 = vunpack.c.h.b16 %v519
    %v795 = vunpack.c.l.b16 %v520
    %v796 = vunpack.c.h.b16 %v520
    %v797 = vunpack.c.l.b16 %v521
    %v798 = vunpack.c.h.b16 %v521
    %v799 = vunpack.c.l.b16 %v522
    %v800 = vunpack.c.h.b16 %v522
    %v801 = vunpack.c.l.b16 %v523
    %v802 = vunpack.c.h.b16 %v523
    %v803 = vunpack.c.l.b16 %v524
    %v804 = vunpack.c.h.b16 %v524
    %v805 = vunpack.c.l.b16 %v525
    %v806 = vunpack.c.h.b16 %v525
    %v807 = vunpack.c.l.b16 %v526
    %v808 = vunpack.c.h.b16 %v526
    %v809 = vunpack.c.l.b16 %v527
    %v810 = vunpack.c.h.b16 %v527
    %v811 = vunpack.c.l.b16 %v528
    %v812 = vunpack.c.h.b16 %v528
    %v813 = vunpack.c.l.b16 %v529
    %v814 = vunpack.c.h.b16 %v529
    %v815 = vunpack.c.l.b16 %v530
    %v816 = vunpack.c.h.b16 %v530
    %v817 = vunpack.c.l.b16 %v531
    %v818 = vunpack.c.h.b16 %v531
    %v819 = vunpack.c.l.b16 %v532
    %v820 = vunpack.c.h.b16 %v532
    %v821 = vunpack.c.l.b16 %v533
    %v822 = vunpack.c.h.b16 %v533
    %v823 = vunpack.c.l.b16 %v534
    %v824 = vunpack.c.h.b16 %v534
    %v825 = vunpack.c.l.b16 %v535
    %v826 = vunpack.c.h.b16 %v535
    %v827 = vunpack.c.l.b16 %v536
    %v828 = vunpack.c.h.b16 %v536
    %v829 = vunpack.c.l.b16 %v537
    %v830 = vunpack.c.h.b16 %v537
    %v831 = vunpack.c.l.b16 %v538
    %v832 = vunpack.c.h.b16 %v538
    %v833 = vunpack.c.l.b16 %v539
    %v834 = vunpack.c.h.b16 %v539
    %v835 = vunpack.c.l.b16 %v540
    %v836 = vunpack.c.h.b16 %v540
    %v837 = vunpack.c.l.b16 %v541
    %v838 = vunpack.c.h.b16 %v541
    %v839 = vunpack.c.l.b16 %v542
    %v840 = vunpack.c.h.b16 %v542
    %v841 = vunpack.c.l.b16 %v543
    %v842 = vunpack.c.h.b16 %v543
    %v843 = vunpack.c.l.b16 %v544
    %v844 = vunpack.c.h.b16 %v544
    %v845 = vunpack.c.l.b16 %v545
    %v846 = vunpack.c.h.b16 %v545
    %v847 = vunpack.c.l.b16 %v546
    %v848 = vunpack.c.h.b16 %v546
    %v849 = vunpack.c.l.b16 %v547
    %v850 = vunpack.c.h.b16 %v547
    %v851 = vunpack.c.l.b16 %v548
    %v852 = vunpack.c.h.b16 %v548
    %v853 = vunpack.c.l.b16 %v549
    %v854 = vunpack.c.h.b16 %v549
    %v855 = vunpack.c.l.b16 %v550
    %v856 = vunpack.c.h.b16 %v550
    %v857 = vunpack.c.l.b16 %v551
    %v858 = vunpack.c.h.b16 %v551
    %v859 = vunpack.c.l.b16 %v552
    %v860 = vunpack.c.h.b16 %v552
    %v861 = vunpack.c.l.b16 %v553
    %v862 = vunpack.c.h.b16 %v553
    %v863 = vunpack.c.l.b16 %v554
    %v864 = vunpack.c.h.b16 %v554
    %v865 = vunpack.c.l.b16 %v555
    %v866 = vunpack.c.h.b16 %v555
    %v867 = vunpack.c.l.b16 %v556
    %v868 = vunpack.c.h.b16 %v556
    %v869 = vunpack.c.l.b16 %v557
    %v870 = vunpack.c.h.b16 %v557
    %v871 = vunpack.c.l.b16 %v558
    %v872 = vunpack.c.h.b16 %v558
    %v873 = vunpack.c.l.b16 %v559
    %v874 = vunpack.c.h.b16 %v559
    %v875 = vunpack.c.l.b16 %v560
    %v876 = vunpack.c.h.b16 %v560
    %v877 = vunpack.c.l.b16 %v561
    %v878 = vunpack.c.h.b16 %v561
    %v879 = vunpack.c.l.b16 %v562
    %v880 = vunpack.c.h.b16 %v562
    %v881 = vunpack.c.l.b16 %v563
    %v882 = vunpack.c.h.b16 %v563
    %v883 = vunpack.c.l.b16 %v564
    %v884 = vunpack.c.h.b16 %v564
    %v885 = vunpack.c.l.b16 %v565
    %v886 = vunpack.c.h.b16 %v565
    %v887 = vunpack.c.l.b16 %v566
    %v888 = vunpack.c.h.b16 %v566
    %v889 = vunpack.c.l.b16 %v567
    %v890 = vunpack.c.h.b16 %v567
    %v891 = vunpack.c.l.b16 %v568
    %v892 = vunpack.c.h.b16 %v568
    %v893 = vunpack.c.l.b16 %v569
    %v894 = vunpack.c.h.b16 %v569
    %v895 = vunpack.c.l.b16 %v570
    %v896 = vunpack.c.h.b16 %v570
    %v897 = vunpack.c.l.b16 %v571
    %v898 = vunpack.c.h.b16 %v571
    %v899 = vunpack.c.l.b16 %v572
    %v900 = vunpack.c.h.b16 %v572
    %v901 = vunpack.c.l.b16 %v573
    %v902 = vunpack.c.h.b16 %v573
    %v903 = vunpack.c.l.b16 %v574
    %v904 = vunpack.c.h.b16 %v574
    %v905 = vunpack.c.l.b16 %v575
    %v906 = vunpack.c.h.b16 %v575
    %v907 = vunpack.c.l.b16 %v576
    %v908 = vunpack.c.h.b16 %v576
    %v909 = vunpack.c.l.b16 %v577
    %v910 = vunpack.c.h.b16 %v577
    %v911 = vunpack.c.l.b16 %v578
    %v912 = vunpack.c.h.b16 %v578
    %v913 = vunpack.c.l.b16 %v579
    %v914 = vunpack.c.h.b16 %v579
    %v915 = vunpack.c.l.b16 %v580
    %v916 = vunpack.c.h.b16 %v580
    %v917 = vunpack.c.l.b16 %v581
    %v918 = vunpack.c.h.b16 %v581
    %v919 = vunpack.c.l.b16 %v582
    %v920 = vunpack.c.h.b16 %v582
    %v921 = vunpack.c.l.b16 %v583
    %v922 = vunpack.c.h.b16 %v583
    %v923 = vunpack.c.l.b16 %v584
    %v924 = vunpack.c.h.b16 %v584
    %v925 = vunpack.c.l.b16 %v585
    %v926 = vunpack.c.h.b16 %v585
    %v927 = vunpack.c.l.b16 %v586
    %v928 = vunpack.c.h.b16 %v586
    %v929 = vunpack.c.l.b16 %v587
    %v930 = vunpack.c.h.b16 %v587
    %v931 = vunpack.c.l.b16 %v588
    %v932 = vunpack.c.h.b16 %v588
    %v933 = vunpack.c.l.b16 %v589
    %v934 = vunpack.c.h.b16 %v589
    %v935 = vunpack.c.l.b16 %v590
    %v936 = vunpack.c.h.b16 %v590
    %v937 = vunpack.c.l.b16 %v591
    %v938 = vunpack.c.h.b16 %v591
    %v939 = vunpack.c.l.b16 %v592
    %v940 = vunpack.c.h.b16 %v592
    %v941 = vunpack.c.l.b16 %v593
    %v942 = vunpack.c.h.b16 %v593
    %v943 = vunpack.c.l.b16 %v594
    %v944 = vunpack.c.h.b16 %v594
    %v945 = vunpack.c.l.b16 %v595
    %v946 = vunpack.c.h.b16 %v595
    %v947 = vunpack.c.l.b16 %v596
    %v948 = vunpack.c.h.b16 %v596
    %v949 = vunpack.c.l.b16 %v597
    %v950 = vunpack.c.h.b16 %v597
    %v951 = vunpack.c.l.b16 %v598
    %v952 = vunpack.c.h.b16 %v598
    %v953 = vunpack.c.l.b16 %v599
    %v954 = vunpack.c.h.b16 %v599
    %v955 = vunpack.c.l.b16 %v600
    %v956 = vunpack.c.h.b16 %v600
    %v957 = vunpack.c.l.b16 %v601
    %v958 = vunpack.c.h.b16 %v601
    %v959 = vunpack.c.l.b16 %v602
    %v960 = vunpack.c.h.b16 %v602
    %v961 = vunpack.c.l.b16 %v603
    %v962 = vunpack.c.h.b16 %v603
    %v963 = vunpack.c.l.b16 %v604
    %v964 = vunpack.c.h.b16 %v604
    %v965 = vunpack.c.l.b16 %v605
    %v966 = vunpack.c.h.b16 %v605
    %v967 = vunpack.c.l.b16 %v606
    %v968 = vunpack.c.h.b16 %v606
    %v969 = vunpack.c.l.b16 %v607
    %v970 = vunpack.c.h.b16 %v607
    %v971 = vunpack.c.l.b16 %v608
    %v972 = vunpack.c.h.b16 %v608
    %v973 = vunpack.c.l.b16 %v609
    %v974 = vunpack.c.h.b16 %v609
    %v975 = vunpack.c.l.b16 %v610
    %v976 = vunpack.c.h.b16 %v610
    %v977 = vunpack.c.l.b16 %v611
    %v978 = vunpack.c.h.b16 %v611
    %v979 = vunpack.c.l.b16 %v612
    %v980 = vunpack.c.h.b16 %v612
    %v981 = vunpack.c.l.b16 %v613
    %v982 = vunpack.c.h.b16 %v613
    %v983 = vunpack.c.l.b16 %v614
    %v984 = vunpack.c.h.b16 %v614
    %v985 = vunpack.c.l.b16 %v615
    %v986 = vunpack.c.h.b16 %v615
    %v987 = vunpack.c.l.b16 %v616
    %v988 = vunpack.c.h.b16 %v616
    %v989 = vunpack.c.l.b16 %v617
    %v990 = vunpack.c.h.b16 %v617
    %v991 = vunpack.c.l.b16 %v618
    %v992 = vunpack.c.h.b16 %v618
    %v993 = vunpack.c.l.b16 %v619
    %v994 = vunpack.c.h.b16 %v619
    %v995 = vunpack.c.l.b16 %v620
    %v996 = vunpack.c.h.b16 %v620
    %v997 = vunpack.c.l.b16 %v621
    %v998 = vunpack.c.h.b16 %v621
    %v999 = vunpack.c.l.b16 %v622
    %v1000 = vunpack.c.h.b16 %v622
    %v1001 = vunpack.c.l.b16 %v623
    %v1002 = vunpack.c.h.b16 %v623
    %v1003 = vunpack.c.l.b16 %v624
    %v1004 = vunpack.c.h.b16 %v624
    %v1005 = vunpack.c.l.b16 %v625
    %v1006 = vunpack.c.h.b16 %v625
    %v1007 = vunpack.c.l.b16 %v626
    %v1008 = vunpack.c.h.b16 %v626
    %v1009 = vunpack.c.l.b16 %v627
    %v1010 = vunpack.c.h.b16 %v627
    %v1011 = vunpack.c.l.b16 %v628
    %v1012 = vunpack.c.h.b16 %v628
    %v1013 = vpack.c.b16 %v759, %v757
    %v1014 = vpack.c.b16 %v760, %v758
    %v1015 = vpack.c.b16 %v763, %v761
    %v1016 = vpack.c.b16 %v764, %v762
    %v1017 = vpack.c.b16 %v767, %v765
    %v1018 = vpack.c.b16 %v768, %v766
    %v1019 = vpack.c.b16 %v771, %v769
    %v1020 = vpack.c.b16 %v772, %v770
    %v1021 = vpack.c.b16 %v775, %v773
    %v1022 = vpack.c.b16 %v776, %v774
    %v1023 = vpack.c.b16 %v779, %v777
    %v1024 = vpack.c.b16 %v780, %v778
    %v1025 = vpack.c.b16 %v783, %v781
    %v1026 = vpack.c.b16 %v784, %v782
    %v1027 = vpack.c.b16 %v787, %v785
    %v1028 = vpack.c.b16 %v788, %v786
    %v1029 = vpack.c.b16 %v791, %v789
    %v1030 = vpack.c.b16 %v792, %v790
    %v1031 = vpack.c.b16 %v795, %v793
    %v1032 = vpack.c.b16 %v796, %v794
    %v1033 = vpack.c.b16 %v799, %v797
    %v1034 = vpack.c.b16 %v800, %v798
    %v1035 = vpack.c.b16 %v803, %v801
    %v1036 = vpack.c.b16 %v804, %v802
    %v1037 = vpack.c.b16 %v807, %v805
    %v1038 = vpack.c.b16 %v808, %v806
    %v1039 = vpack.c.b16 %v811, %v809
    %v1040 = vpack.c.b16 %v812, %v810
    %v1041 = vpack.c.b16 %v815, %v813
    %v1042 = vpack.c.b16 %v816, %v814
    %v1043 = vpack.c.b16 %v819, %v817
    %v1044 = vpack.c.b16 %v820, %v818
    %v1045 = vpack.c.b16 %v823, %v821
    %v1046 = vpack.c.b16 %v824, %v822
    %v1047 = vpack.c.b16 %v827, %v825
    %v1048 = vpack.c.b16 %v828, %v826
    %v1049 = vpack.c.b16 %v831, %v829
    %v1050 = vpack.c.b16 %v832, %v830
    %v1051 = vpack.c.b16 %v835, %v833
    %v1052 = vpack.c.b16 %v836, %v834
    %v1053 = vpack.c.b16 %v839, %v837
    %v1054 = vpack.c.b16 %v840, %v838
    %v1055 = vpack.c.b16 %v843, %v841
    %v1056 = vpack.c.b16 %v844, %v842
    %v1057 = vpack.c.b16 %v847, %v845
    %v1058 = vpack.c.b16 %v848, %v846
    %v1059 = vpack.c.b16 %v851, %v849
    %v1060 = vpack.c.b16 %v852, %v850
    %v1061 = vpack.c.b16 %v855, %v853
    %v1062 = vpack.c.b16 %v856, %v854
    %v1063 = vpack.c.b16 %v859, %v857
    %v1064 = vpack.c.b16 %v860, %v858
    %v1065 = vpack.c.b16 %v863, %v861
    %v1066 = vpack.c.b16 %v864, %v862
    %v1067 = vpack.c.b16 %v867, %v865
    %v1068 = vpack.c.b16 %v868, %v866
    %v1069 = vpack.c.b16 %v871, %v869
    %v1070 = vpack.c.b16 %v872, %v870
    %v1071 = vpack.c.b16 %v875, %v873
    %v1072 = vpack.c.b16 %v876, %v874
    %v1073 = vpack.c.b16 %v879, %v877
    %v1074 = vpack.c.b16 %v880, %v878
    %v1075 = vpack.c.b16 %v883, %v881
    %v1076 = vpack.c.b16 %v884, %v882
    %v1077 = vpack.c.b16 %v887, %v885
    %v1078 = vpack.c.b16 %v888, %v886
    %v1079 = vpack.c.b16 %v891, %v889
    %v1080 = vpack.c.b16 %v892, %v890
    %v1081 = vpack.c.b16 %v895, %v893
    %v1082 = vpack.c.b16 %v896, %v894
    %v1083 = vpack.c.b16 %v899, %v897
    %v1084 = vpack.c.b16 %v900, %v898
    %v1085 = vpack.c.b16 %v903, %v901
    %v1086 = vpack.c.b16 %v904, %v902
    %v1087 = vpack.c.b16 %v907, %v905
    %v1088 = vpack.c.b16 %v908, %v906
    %v1089 = vpack.c.b16 %v911, %v909
    %v1090 = vpack.c.b16 %v912, %v910
    %v1091 = vpack.c.b16 %v915, %v913
    %v1092 = vpack.c.b16 %v916, %v914
    %v1093 = vpack.c.b16 %v919, %v917
    %v1094 = vpack.c.b16 %v920, %v918
    %v1095 = vpack.c.b16 %v923, %v921
    %v1096 = vpack.c.b16 %v924, %v922
    %v1097 = vpack.c.b16 %v927, %v925
    %v1098 = vpack.c.b16 %v928, %v926
    %v1099 = vpack.c.b16 %v931, %v929
    %v1100 = vpack.c.b16 %v932, %v930
    %v1101 = vpack.c.b16 %v935, %v933
    %v1102 = vpack.c.b16 %v936, %v934
    %v1103 = vpack.c.b16 %v939, %v937
    %v1104 = vpack.c.b16 %v940, %v938
    %v1105 = vpack.c.b16 %v943, %v941
    %v1106 = vpack.c.b16 %v944, %v942
    %v1107 = vpack.c.b16 %v947, %v945
    %v1108 = vpack.c.b16 %v948, %v946
    %v1109 = vpack.c.b16 %v951, %v949
    %v1110 = vpack.c.b16 %v952, %v950
    %v1111 = vpack.c.b16 %v955, %v953
    %v1112 = vpack.c.b16 %v956, %v954
    %v1113 = vpack.c.b16 %v959, %v957
    %v1114 = vpack.c.b16 %v960, %v958
    %v1115 = vpack.c.b16 %v963, %v961
    %v1116 = vpack.c.b16 %v964, %v962
    %v1117 = vpack.c.b16 %v967, %v965
    %v1118 = vpack.c.b16 %v968, %v966
    %v1119 = vpack.c.b16 %v971, %v969
    %v1120 = vpack.c.b16 %v972, %v970
    %v1121 = vpack.c.b16 %v975, %v973
    %v1122 = vpack.c.b16 %v976, %v974
    %v1123 = vpack.c.b16 %v979, %v977
    %v1124 = vpack.c.b16 %v980, %v978
    %v1125 = vpack.c.b16 %v983, %v981
    %v1126 = vpack.c.b16 %v984, %v982
    %v1127 = vpack.c.b16 %v987, %v985
    %v1128 = vpack.c.b16 %v988, %v986
    %v1129 = vpack.c.b16 %v991, %v989
    %v1130 = vpack.c.b16 %v992, %v990
    %v1131 = vpack.c.b16 %v995, %v993
    %v1132 = vpack.c.b16 %v996, %v994
    %v1133 = vpack.c.b16 %v999, %v997
    %v1134 = vpack.c.b16 %v1000, %v998
    %v1135 = vpack.c.b16 %v1003, %v1001
    %v1136 = vpack.c.b16 %v1004, %v1002
    %v1137 = vpack.c.b16 %v1007, %v1005
    %v1138 = vpack.c.b16 %v1008, %v1006
    %v1139 = vpack.c.b16 %v1011, %v1009
    %v1140 = vpack.c.b16 %v1012, %v1010
    %1269 = vmatprep.subr.bf16.mxu0 %v1014
    %1270 = vmatpush1.bf16.msra.mxu0 %v1013
    %1271 = vmatprep.subr.bf16.mxu0 %v1016
    %1272 = vmatpush1.bf16.msra.mxu0 %v1015
    %1273 = vmatprep.subr.bf16.mxu0 %v1018
    %1274 = vmatpush1.bf16.msra.mxu0 %v1017
    %1275 = vmatprep.subr.bf16.mxu0 %v1020
    %1276 = vmatpush1.bf16.msra.mxu0 %v1019
    %1277 = vmatprep.subr.bf16.mxu0 %v1022
    %1278 = vmatpush1.bf16.msra.mxu0 %v1021
    %1279 = vmatprep.subr.bf16.mxu0 %v1024
    %1280 = vmatpush1.bf16.msra.mxu0 %v1023
    %1281 = vmatprep.subr.bf16.mxu0 %v1026
    %1282 = vmatpush1.bf16.msra.mxu0 %v1025
    %1283 = vmatprep.subr.bf16.mxu0 %v1028
    %1284 = vmatpush1.bf16.msra.mxu0 %v1027
    %1285 = vmatprep.subr.bf16.mxu0 %v1030
    %1286 = vmatpush1.bf16.msra.mxu0 %v1029
    %1287 = vmatprep.subr.bf16.mxu0 %v1032
    %1288 = vmatpush1.bf16.msra.mxu0 %v1031
    %1289 = vmatprep.subr.bf16.mxu0 %v1034
    %1290 = vmatpush1.bf16.msra.mxu0 %v1033
    %1291 = vmatprep.subr.bf16.mxu0 %v1036
    %1292 = vmatpush1.bf16.msra.mxu0 %v1035
    %1293 = vmatprep.subr.bf16.mxu0 %v1038
    %1294 = vmatpush1.bf16.msra.mxu0 %v1037
    %1295 = vmatprep.subr.bf16.mxu0 %v1040
    %1296 = vmatpush1.bf16.msra.mxu0 %v1039
    %1297 = vmatprep.subr.bf16.mxu0 %v1042
    %1298 = vmatpush1.bf16.msra.mxu0 %v1041
    %1299 = vmatprep.subr.bf16.mxu0 %v1044
    %1300 = vmatpush1.bf16.msra.mxu0 %v1043
    %1301 = vmatprep.mubr.bf16.mxu0 %v494
    %1302 = vmatmul.mubr.bf16.gmra.mrb[0].mxu0 %v493
    %v1303 = vpop.f32.mrb[0].mxu0
    %v1304 = vadd.f32 0.0, %v1303
    %v1305 = vpop.f32.mrb[0].mxu0
    %v1306 = vadd.f32 0.0, %v1305
    %v1307 = vpop.f32.mrb[0].mxu0
    %v1308 = vpop.f32.mrb[0].mxu0
    %1309 = vdwg.mxu0
    %1310 = vmatprep.subr.bf16.mxu0 %v1046
    %1311 = vmatpush1.bf16.msra.mxu0 %v1045
    %1312 = vmatprep.subr.bf16.mxu0 %v1048
    %1313 = vmatpush1.bf16.msra.mxu0 %v1047
    %1314 = vmatprep.subr.bf16.mxu0 %v1050
    %1315 = vmatpush1.bf16.msra.mxu0 %v1049
    %1316 = vmatprep.subr.bf16.mxu0 %v1052
    %1317 = vmatpush1.bf16.msra.mxu0 %v1051
    %1318 = vmatprep.subr.bf16.mxu0 %v1054
    %1319 = vmatpush1.bf16.msra.mxu0 %v1053
    %1320 = vmatprep.subr.bf16.mxu0 %v1056
    %1321 = vmatpush1.bf16.msra.mxu0 %v1055
    %1322 = vmatprep.subr.bf16.mxu0 %v1058
    %1323 = vmatpush1.bf16.msra.mxu0 %v1057
    %1324 = vmatprep.subr.bf16.mxu0 %v1060
    %1325 = vmatpush1.bf16.msra.mxu0 %v1059
    %1326 = vmatprep.subr.bf16.mxu0 %v1062
    %1327 = vmatpush1.bf16.msra.mxu0 %v1061
    %1328 = vmatprep.subr.bf16.mxu0 %v1064
    %1329 = vmatpush1.bf16.msra.mxu0 %v1063
    %1330 = vmatprep.subr.bf16.mxu0 %v1066
    %1331 = vmatpush1.bf16.msra.mxu0 %v1065
    %1332 = vmatprep.subr.bf16.mxu0 %v1068
    %1333 = vmatpush1.bf16.msra.mxu0 %v1067
    %1334 = vmatprep.subr.bf16.mxu0 %v1070
    %1335 = vmatpush1.bf16.msra.mxu0 %v1069
    %1336 = vmatprep.subr.bf16.mxu0 %v1072
    %1337 = vmatpush1.bf16.msra.mxu0 %v1071
    %1338 = vmatprep.subr.bf16.mxu0 %v1074
    %1339 = vmatpush1.bf16.msra.mxu0 %v1073
    %1340 = vmatprep.subr.bf16.mxu0 %v1076
    %1341 = vmatpush1.bf16.msra.mxu0 %v1075
    %1342 = vmatprep.mubr.bf16.mxu0 %v496
    %1343 = vmatmul.mubr.bf16.gmra.mrb[0].mxu0 %v495
    %v1344 = vpop.f32.mrb[0].mxu0
    %v1345 = vadd.f32 %v1304, %v1344
    %v1346 = vpop.f32.mrb[0].mxu0
    %v1347 = vadd.f32 %v1306, %v1346
    %v1348 = vpop.f32.mrb[0].mxu0
    %v1349 = vpop.f32.mrb[0].mxu0
    %1350 = vdwg.mxu0
    %1351 = vmatprep.subr.bf16.mxu0 %v1078
    %1352 = vmatpush1.bf16.msra.mxu0 %v1077
    %1353 = vmatprep.subr.bf16.mxu0 %v1080
    %1354 = vmatpush1.bf16.msra.mxu0 %v1079
    %1355 = vmatprep.subr.bf16.mxu0 %v1082
    %1356 = vmatpush1.bf16.msra.mxu0 %v1081
    %1357 = vmatprep.subr.bf16.mxu0 %v1084
    %1358 = vmatpush1.bf16.msra.mxu0 %v1083
    %1359 = vmatprep.subr.bf16.mxu0 %v1086
    %1360 = vmatpush1.bf16.msra.mxu0 %v1085
    %1361 = vmatprep.subr.bf16.mxu0 %v1088
    %1362 = vmatpush1.bf16.msra.mxu0 %v1087
    %1363 = vmatprep.subr.bf16.mxu0 %v1090
    %1364 = vmatpush1.bf16.msra.mxu0 %v1089
    %1365 = vmatprep.subr.bf16.mxu0 %v1092
    %1366 = vmatpush1.bf16.msra.mxu0 %v1091
    %1367 = vmatprep.subr.bf16.mxu0 %v1094
    %1368 = vmatpush1.bf16.msra.mxu0 %v1093
    %1369 = vmatprep.subr.bf16.mxu0 %v1096
    %1370 = vmatpush1.bf16.msra.mxu0 %v1095
    %1371 = vmatprep.subr.bf16.mxu0 %v1098
    %1372 = vmatpush1.bf16.msra.mxu0 %v1097
    %1373 = vmatprep.subr.bf16.mxu0 %v1100
    %1374 = vmatpush1.bf16.msra.mxu0 %v1099
    %1375 = vmatprep.subr.bf16.mxu0 %v1102
    %1376 = vmatpush1.bf16.msra.mxu0 %v1101
    %1377 = vmatprep.subr.bf16.mxu0 %v1104
    %1378 = vmatpush1.bf16.msra.mxu0 %v1103
    %1379 = vmatprep.subr.bf16.mxu0 %v1106
    %1380 = vmatpush1.bf16.msra.mxu0 %v1105
    %1381 = vmatprep.subr.bf16.mxu0 %v1108
    %1382 = vmatpush1.bf16.msra.mxu0 %v1107
    %1383 = vmatprep.mubr.bf16.mxu0 %v498
    %1384 = vmatmul.mubr.bf16.gmra.mrb[0].mxu0 %v497
    %v1385 = vpop.f32.mrb[0].mxu0
    %v1386 = vadd.f32 %v1345, %v1385
    %v1387 = vpop.f32.mrb[0].mxu0
    %v1388 = vadd.f32 %v1347, %v1387
    %v1389 = vpop.f32.mrb[0].mxu0
    %v1390 = vpop.f32.mrb[0].mxu0
    %1391 = vdwg.mxu0
    %1392 = vmatprep.subr.bf16.mxu0 %v1110
    %1393 = vmatpush1.bf16.msra.mxu0 %v1109
    %1394 = vmatprep.subr.bf16.mxu0 %v1112
    %1395 = vmatpush1.bf16.msra.mxu0 %v1111
    %1396 = vmatprep.subr.bf16.mxu0 %v1114
    %1397 = vmatpush1.bf16.msra.mxu0 %v1113
    %1398 = vmatprep.subr.bf16.mxu0 %v1116
    %1399 = vmatpush1.bf16.msra.mxu0 %v1115
    %1400 = vmatprep.subr.bf16.mxu0 %v1118
    %1401 = vmatpush1.bf16.msra.mxu0 %v1117
    %1402 = vmatprep.subr.bf16.mxu0 %v1120
    %1403 = vmatpush1.bf16.msra.mxu0 %v1119
    %1404 = vmatprep.subr.bf16.mxu0 %v1122
    %1405 = vmatpush1.bf16.msra.mxu0 %v1121
    %1406 = vmatprep.subr.bf16.mxu0 %v1124
    %1407 = vmatpush1.bf16.msra.mxu0 %v1123
    %1408 = vmatprep.subr.bf16.mxu0 %v1126
    %1409 = vmatpush1.bf16.msra.mxu0 %v1125
    %1410 = vmatprep.subr.bf16.mxu0 %v1128
    %1411 = vmatpush1.bf16.msra.mxu0 %v1127
    %1412 = vmatprep.subr.bf16.mxu0 %v1130
    %1413 = vmatpush1.bf16.msra.mxu0 %v1129
    %1414 = vmatprep.subr.bf16.mxu0 %v1132
    %1415 = vmatpush1.bf16.msra.mxu0 %v1131
    %1416 = vmatprep.subr.bf16.mxu0 %v1134
    %1417 = vmatpush1.bf16.msra.mxu0 %v1133
    %1418 = vmatprep.subr.bf16.mxu0 %v1136
    %1419 = vmatpush1.bf16.msra.mxu0 %v1135
    %1420 = vmatprep.subr.bf16.mxu0 %v1138
    %1421 = vmatpush1.bf16.msra.mxu0 %v1137
    %1422 = vmatprep.subr.bf16.mxu0 %v1140
    %1423 = vmatpush1.bf16.msra.mxu0 %v1139
    %1424 = vmatprep.mubr.bf16.mxu0 %v500
    %1425 = vmatmul.mubr.bf16.gmra.mrb[0].mxu0 %v499
    %v1426 = vpop.f32.mrb[0].mxu0
    %v1427 = vadd.f32 %v1386, %v1426
    %v1428 = vpop.f32.mrb[0].mxu0
    %v1429 = vadd.f32 %v1388, %v1428
    %v1430 = vpop.f32.mrb[0].mxu0
    %v1431 = vpop.f32.mrb[0].mxu0
    %1432 = vdwg.mxu0
    %v1433 = vrot.slane %v1427, 4
    %v1434 = vadd.f32 %v1427, %v1433
    %v1435 = vrot.slane %v1434, 2
    %v1436 = vadd.f32 %v1434, %v1435
    %v1437 = vrot.slane %v1436, 1
    %v1438 = vadd.f32 %v1436, %v1437
    %v1439 = vrot.slane %v1429, 4
    %v1440 = vadd.f32 %v1429, %v1439
    %v1441 = vrot.slane %v1440, 2
    %v1442 = vadd.f32 %v1440, %v1441
    %v1443 = vrot.slane %v1442, 1
    %v1444 = vadd.f32 %v1442, %v1443
    %v1445 = vmul.f32 %v1427, %v1427
    %v1446 = vmul.f32 %v1429, %v1429
    %v1447 = vrot.slane %v1445, 4
    %v1448 = vadd.f32 %v1445, %v1447
    %v1449 = vrot.slane %v1448, 2
    %v1450 = vadd.f32 %v1448, %v1449
    %v1451 = vrot.slane %v1450, 1
    %v1452 = vadd.f32 %v1450, %v1451
    %v1453 = vrot.slane %v1446, 4
    %v1454 = vadd.f32 %v1446, %v1453
    %v1455 = vrot.slane %v1454, 2
    %v1456 = vadd.f32 %v1454, %v1455
    %v1457 = vrot.slane %v1456, 1
    %v1458 = vadd.f32 %v1456, %v1457
    %v1459 = vld [vmem:[%s7] sm:$0xff]
    %v1460 = vld [vmem:[%s7 + $0x8] sm:$0xff]
    %v1461 = vld [vmem:[%s7 + $0x10] sm:$0xff]
    %v1462 = vld [vmem:[%s7 + $0x18] sm:$0xff]
    %v1463 = vld [vmem:[%s7 + $0x20] sm:$0xff]
    %v1464 = vld [vmem:[%s7 + $0x28] sm:$0xff]
    %v1465 = vld [vmem:[%s7 + $0x30] sm:$0xff]
    %v1466 = vld [vmem:[%s7 + $0x38] sm:$0xff]
    %v1467 = vld [vmem:[%s7 + $0x40] sm:$0xff]
    %v1468 = vld [vmem:[%s7 + $0x48] sm:$0xff]
    %v1469 = vld [vmem:[%s7 + $0x50] sm:$0xff]
    %v1470 = vld [vmem:[%s7 + $0x58] sm:$0xff]
    %v1471 = vld [vmem:[%s7 + $0x60] sm:$0xff]
    %v1472 = vld [vmem:[%s7 + $0x68] sm:$0xff]
    %v1473 = vld [vmem:[%s7 + $0x70] sm:$0xff]
    %v1474 = vld [vmem:[%s7 + $0x78] sm:$0xff]
    %v1475 = vld [vmem:[%s7 + $0x80] sm:$0xff]
    %v1476 = vld [vmem:[%s7 + $0x88] sm:$0xff]
    %v1477 = vld [vmem:[%s7 + $0x90] sm:$0xff]
    %v1478 = vld [vmem:[%s7 + $0x98] sm:$0xff]
    %v1479 = vld [vmem:[%s7 + $0xa0] sm:$0xff]
    %v1480 = vld [vmem:[%s7 + $0xa8] sm:$0xff]
    %v1481 = vld [vmem:[%s7 + $0xb0] sm:$0xff]
    %v1482 = vld [vmem:[%s7 + $0xb8] sm:$0xff]
    %v1483 = vld [vmem:[%s7 + $0xc0] sm:$0xff]
    %v1484 = vld [vmem:[%s7 + $0xc8] sm:$0xff]
    %v1485 = vld [vmem:[%s7 + $0xd0] sm:$0xff]
    %v1486 = vld [vmem:[%s7 + $0xd8] sm:$0xff]
    %v1487 = vld [vmem:[%s7 + $0xe0] sm:$0xff]
    %v1488 = vld [vmem:[%s7 + $0xe8] sm:$0xff]
    %v1489 = vld [vmem:[%s7 + $0xf0] sm:$0xff]
    %v1490 = vld [vmem:[%s7 + $0xf8] sm:$0xff]
    %1491 = vmatprep.subr.mxu0 0.0
    %1492 = vmatpush1.msra.mxu0 %v1459
    %1493 = vmatprep.subr.mxu0 0.0
    %1494 = vmatpush1.msra.mxu0 %v1460
    %1495 = vmatprep.subr.mxu0 0.0
    %1496 = vmatpush1.msra.mxu0 %v1461
    %1497 = vmatprep.subr.mxu0 0.0
    %1498 = vmatpush1.msra.mxu0 %v1462
    %1499 = vmatprep.subr.mxu0 0.0
    %1500 = vmatpush1.msra.mxu0 %v1463
    %1501 = vmatprep.subr.mxu0 0.0
    %1502 = vmatpush1.msra.mxu0 %v1464
    %1503 = vmatprep.subr.mxu0 0.0
    %1504 = vmatpush1.msra.mxu0 %v1465
    %1505 = vmatprep.subr.mxu0 0.0
    %1506 = vmatpush1.msra.mxu0 %v1466
    %1507 = vmatprep.subr.mxu0 0.0
    %1508 = vmatpush1.msra.mxu0 %v1467
    %1509 = vmatprep.subr.mxu0 0.0
    %1510 = vmatpush1.msra.mxu0 %v1468
    %1511 = vmatprep.subr.mxu0 0.0
    %1512 = vmatpush1.msra.mxu0 %v1469
    %1513 = vmatprep.subr.mxu0 0.0
    %1514 = vmatpush1.msra.mxu0 %v1470
    %1515 = vmatprep.subr.mxu0 0.0
    %1516 = vmatpush1.msra.mxu0 %v1471
    %1517 = vmatprep.subr.mxu0 0.0
    %1518 = vmatpush1.msra.mxu0 %v1472
    %1519 = vmatprep.subr.mxu0 0.0
    %1520 = vmatpush1.msra.mxu0 %v1473
    %1521 = vmatprep.subr.mxu0 0.0
    %1522 = vmatpush1.msra.mxu0 %v1474
    %1523 = vmatprep.subr.mxu0 0.0
    %1524 = vmatpush1.msra.mxu0 %v1475
    %1525 = vmatprep.subr.mxu0 0.0
    %1526 = vmatpush1.msra.mxu0 %v1476
    %1527 = vmatprep.subr.mxu0 0.0
    %1528 = vmatpush1.msra.mxu0 %v1477
    %1529 = vmatprep.subr.mxu0 0.0
    %1530 = vmatpush1.msra.mxu0 %v1478
    %1531 = vmatprep.subr.mxu0 0.0
    %1532 = vmatpush1.msra.mxu0 %v1479
    %1533 = vmatprep.subr.mxu0 0.0
    %1534 = vmatpush1.msra.mxu0 %v1480
    %1535 = vmatprep.subr.mxu0 0.0
    %1536 = vmatpush1.msra.mxu0 %v1481
    %1537 = vmatprep.subr.mxu0 0.0
    %1538 = vmatpush1.msra.mxu0 %v1482
    %1539 = vmatprep.subr.mxu0 0.0
    %1540 = vmatpush1.msra.mxu0 %v1483
    %1541 = vmatprep.subr.mxu0 0.0
    %1542 = vmatpush1.msra.mxu0 %v1484
    %1543 = vmatprep.subr.mxu0 0.0
    %1544 = vmatpush1.msra.mxu0 %v1485
    %1545 = vmatprep.subr.mxu0 0.0
    %1546 = vmatpush1.msra.mxu0 %v1486
    %1547 = vmatprep.subr.mxu0 0.0
    %1548 = vmatpush1.msra.mxu0 %v1487
    %1549 = vmatprep.subr.mxu0 0.0
    %1550 = vmatpush1.msra.mxu0 %v1488
    %1551 = vmatprep.subr.mxu0 0.0
    %1552 = vmatpush1.msra.mxu0 %v1489
    %1553 = vmatprep.subr.mxu0 0.0
    %1554 = vmatpush1.msra.mxu0 %v1490
    %1555 = vmatprep.mubr.f32.mxu0 %v1444
    %1556 = vmatmul.mubr.f32.gmra.mrb[0].mxu0 %v1438
    %v1557 = vpop.f32.mrb[0].mxu0
    %v1558 = vadd.f32 0.0, %v1557
    %v1559 = vpop.f32.mrb[0].mxu0
    %1560 = vdwg.mxu0
    %v1561 = vmul.f32 %v1558, 0.03125
    %1562 = vmatprep.subr.mxu0 0.0
    %1563 = vmatpush1.msra.mxu0 %v1459
    %1564 = vmatprep.subr.mxu0 0.0
    %1565 = vmatpush1.msra.mxu0 %v1460
    %1566 = vmatprep.subr.mxu0 0.0
    %1567 = vmatpush1.msra.mxu0 %v1461
    %1568 = vmatprep.subr.mxu0 0.0
    %1569 = vmatpush1.msra.mxu0 %v1462
    %1570 = vmatprep.subr.mxu0 0.0
    %1571 = vmatpush1.msra.mxu0 %v1463
    %1572 = vmatprep.subr.mxu0 0.0
    %1573 = vmatpush1.msra.mxu0 %v1464
    %1574 = vmatprep.subr.mxu0 0.0
    %1575 = vmatpush1.msra.mxu0 %v1465
    %1576 = vmatprep.subr.mxu0 0.0
    %1577 = vmatpush1.msra.mxu0 %v1466
    %1578 = vmatprep.subr.mxu0 0.0
    %1579 = vmatpush1.msra.mxu0 %v1467
    %1580 = vmatprep.subr.mxu0 0.0
    %1581 = vmatpush1.msra.mxu0 %v1468
    %1582 = vmatprep.subr.mxu0 0.0
    %1583 = vmatpush1.msra.mxu0 %v1469
    %1584 = vmatprep.subr.mxu0 0.0
    %1585 = vmatpush1.msra.mxu0 %v1470
    %1586 = vmatprep.subr.mxu0 0.0
    %1587 = vmatpush1.msra.mxu0 %v1471
    %1588 = vmatprep.subr.mxu0 0.0
    %1589 = vmatpush1.msra.mxu0 %v1472
    %1590 = vmatprep.subr.mxu0 0.0
    %1591 = vmatpush1.msra.mxu0 %v1473
    %1592 = vmatprep.subr.mxu0 0.0
    %1593 = vmatpush1.msra.mxu0 %v1474
    %1594 = vmatprep.subr.mxu0 0.0
    %1595 = vmatpush1.msra.mxu0 %v1475
    %1596 = vmatprep.subr.mxu0 0.0
    %1597 = vmatpush1.msra.mxu0 %v1476
    %1598 = vmatprep.subr.mxu0 0.0
    %1599 = vmatpush1.msra.mxu0 %v1477
    %1600 = vmatprep.subr.mxu0 0.0
    %1601 = vmatpush1.msra.mxu0 %v1478
    %1602 = vmatprep.subr.mxu0 0.0
    %1603 = vmatpush1.msra.mxu0 %v1479
    %1604 = vmatprep.subr.mxu0 0.0
    %1605 = vmatpush1.msra.mxu0 %v1480
    %1606 = vmatprep.subr.mxu0 0.0
    %1607 = vmatpush1.msra.mxu0 %v1481
    %1608 = vmatprep.subr.mxu0 0.0
    %1609 = vmatpush1.msra.mxu0 %v1482
    %1610 = vmatprep.subr.mxu0 0.0
    %1611 = vmatpush1.msra.mxu0 %v1483
    %1612 = vmatprep.subr.mxu0 0.0
    %1613 = vmatpush1.msra.mxu0 %v1484
    %1614 = vmatprep.subr.mxu0 0.0
    %1615 = vmatpush1.msra.mxu0 %v1485
    %1616 = vmatprep.subr.mxu0 0.0
    %1617 = vmatpush1.msra.mxu0 %v1486
    %1618 = vmatprep.subr.mxu0 0.0
    %1619 = vmatpush1.msra.mxu0 %v1487
    %1620 = vmatprep.subr.mxu0 0.0
    %1621 = vmatpush1.msra.mxu0 %v1488
    %1622 = vmatprep.subr.mxu0 0.0
    %1623 = vmatpush1.msra.mxu0 %v1489
    %1624 = vmatprep.subr.mxu0 0.0
    %1625 = vmatpush1.msra.mxu0 %v1490
    %1626 = vmatprep.mubr.f32.mxu0 %v1458
    %1627 = vmatmul.mubr.f32.gmra.mrb[0].mxu0 %v1452
    %v1628 = vpop.f32.mrb[0].mxu0
    %v1629 = vadd.f32 0.0, %v1628
    %v1630 = vpop.f32.mrb[0].mxu0
    %1631 = vdwg.mxu0
    %v1632 = vmul.f32 %v1629, 0.03125
    %v1633 = vmul.f32 %v1561, %v1561
    %v1634 = vsub.f32 %v1632, %v1633
    %v1635 = vadd.f32 %v1634, 1e-05
    %v1636 = vrsqrt.pop %v1635
    %v1637 = vld [vmem:[%s6] sm:$0x1]
    %v1638 = vmul.f32 %v1637, %v1636
    %v1639 = vld [vmem:[%s6 + $0x1] sm:$0x1]
    %v1640 = vmul.f32 %v1561, %v1638
    %v1641 = vsub.f32 %v1639, %v1640
    %v1642 = vld [vmem:[%s8] sm:$0xff]
    %v1643 = vld [vmem:[%s8 + $0x8] sm:$0xff]
    %v1644 = vld [vmem:[%s8 + $0x10] sm:$0xff]
    %v1645 = vld [vmem:[%s8 + $0x18] sm:$0xff]
    %v1646 = vld [vmem:[%s8 + $0x20] sm:$0xff]
    %v1647 = vld [vmem:[%s8 + $0x28] sm:$0xff]
    %v1648 = vld [vmem:[%s8 + $0x30] sm:$0xff]
    %v1649 = vld [vmem:[%s8 + $0x38] sm:$0xff]
    %v1650 = vld [vmem:[%s8 + $0x40] sm:$0xff]
    %v1651 = vld [vmem:[%s8 + $0x48] sm:$0xff]
    %v1652 = vld [vmem:[%s8 + $0x50] sm:$0xff]
    %v1653 = vld [vmem:[%s8 + $0x58] sm:$0xff]
    %v1654 = vld [vmem:[%s8 + $0x60] sm:$0xff]
    %v1655 = vld [vmem:[%s8 + $0x68] sm:$0xff]
    %v1656 = vld [vmem:[%s8 + $0x70] sm:$0xff]
    %v1657 = vld [vmem:[%s8 + $0x78] sm:$0xff]
    %v1659 = vsel %vm255, %v1638, 0
    %1661 = vmatprep.subr.mxu0 %v1643
    %1662 = vmatpush1.msra.mxu0 %v1642
    %1663 = vmatprep.subr.mxu0 %v1645
    %1664 = vmatpush1.msra.mxu0 %v1644
    %1665 = vmatprep.subr.mxu0 %v1647
    %1666 = vmatpush1.msra.mxu0 %v1646
    %1667 = vmatprep.subr.mxu0 %v1649
    %1668 = vmatpush1.msra.mxu0 %v1648
    %1669 = vmatprep.subr.mxu0 %v1651
    %1670 = vmatpush1.msra.mxu0 %v1650
    %1671 = vmatprep.subr.mxu0 %v1653
    %1672 = vmatpush1.msra.mxu0 %v1652
    %1673 = vmatprep.subr.mxu0 %v1655
    %1674 = vmatpush1.msra.mxu0 %v1654
    %1675 = vmatprep.subr.mxu0 %v1657
    %1676 = vmatpush1.msra.mxu0 %v1656
    %1677 = vmatprep.subr.mxu0 0.0
    %1678 = vmatpush1.msra.mxu0 0.0
    %1679 = vmatprep.subr.mxu0 0.0
    %1680 = vmatpush1.msra.mxu0 0.0
    %1681 = vmatprep.subr.mxu0 0.0
    %1682 = vmatpush1.msra.mxu0 0.0
    %1683 = vmatprep.subr.mxu0 0.0
    %1684 = vmatpush1.msra.mxu0 0.0
    %1685 = vmatprep.subr.mxu0 0.0
    %1686 = vmatpush1.msra.mxu0 0.0
    %1687 = vmatprep.subr.mxu0 0.0
    %1688 = vmatpush1.msra.mxu0 0.0
    %1689 = vmatprep.subr.mxu0 0.0
    %1690 = vmatpush1.msra.mxu0 0.0
    %1691 = vmatprep.subr.mxu0 0.0
    %1692 = vmatpush1.msra.mxu0 0.0
    %1693 = vmatprep.subr.mxu0 0.0
    %1694 = vmatpush1.msra.mxu0 0.0
    %1695 = vmatprep.subr.mxu0 0.0
    %1696 = vmatpush1.msra.mxu0 0.0
    %1697 = vmatprep.subr.mxu0 0.0
    %1698 = vmatpush1.msra.mxu0 0.0
    %1699 = vmatprep.subr.mxu0 0.0
    %1700 = vmatpush1.msra.mxu0 0.0
    %1701 = vmatprep.subr.mxu0 0.0
    %1702 = vmatpush1.msra.mxu0 0.0
    %1703 = vmatprep.subr.mxu0 0.0
    %1704 = vmatpush1.msra.mxu0 0.0
    %1705 = vmatprep.subr.mxu0 0.0
    %1706 = vmatpush1.msra.mxu0 0.0
    %1707 = vmatprep.subr.mxu0 0.0
    %1708 = vmatpush1.msra.mxu0 0.0
    %1709 = vmatprep.subr.mxu0 0.0
    %1710 = vmatpush1.msra.mxu0 0.0
    %1711 = vmatprep.subr.mxu0 0.0
    %1712 = vmatpush1.msra.mxu0 0.0
    %1713 = vmatprep.subr.mxu0 0.0
    %1714 = vmatpush1.msra.mxu0 0.0
    %1715 = vmatprep.subr.mxu0 0.0
    %1716 = vmatpush1.msra.mxu0 0.0
    %1717 = vmatprep.subr.mxu0 0.0
    %1718 = vmatpush1.msra.mxu0 0.0
    %1719 = vmatprep.subr.mxu0 0.0
    %1720 = vmatpush1.msra.mxu0 0.0
    %1721 = vmatprep.subr.mxu0 0.0
    %1722 = vmatpush1.msra.mxu0 0.0
    %1723 = vmatprep.subr.mxu0 0.0
    %1724 = vmatpush1.msra.mxu0 0.0
    %1725 = vmatprep.mubr.f32.mxu0 0.0
    %1726 = vmatmul.mubr.f32.gmra.mrb[0].mxu0 %v1659
    %v1727 = vpop.f32.mrb[0].mxu0
    %v1728 = vadd.f32 0.0, %v1727
    %v1729 = vpop.f32.mrb[0].mxu0
    %v1730 = vadd.f32 0.0, %v1729
    %1731 = vdwg.mxu0
    %v1733 = vsel %vm255, %v1641, 0
    %1735 = vmatprep.subr.mxu0 %v1643
    %1736 = vmatpush1.msra.mxu0 %v1642
    %1737 = vmatprep.subr.mxu0 %v1645
    %1738 = vmatpush1.msra.mxu0 %v1644
    %1739 = vmatprep.subr.mxu0 %v1647
    %1740 = vmatpush1.msra.mxu0 %v1646
    %1741 = vmatprep.subr.mxu0 %v1649
    %1742 = vmatpush1.msra.mxu0 %v1648
    %1743 = vmatprep.subr.mxu0 %v1651
    %1744 = vmatpush1.msra.mxu0 %v1650
    %1745 = vmatprep.subr.mxu0 %v1653
    %1746 = vmatpush1.msra.mxu0 %v1652
    %1747 = vmatprep.subr.mxu0 %v1655
    %1748 = vmatpush1.msra.mxu0 %v1654
    %1749 = vmatprep.subr.mxu0 %v1657
    %1750 = vmatpush1.msra.mxu0 %v1656
    %1751 = vmatprep.subr.mxu0 0.0
    %1752 = vmatpush1.msra.mxu0 0.0
    %1753 = vmatprep.subr.mxu0 0.0
    %1754 = vmatpush1.msra.mxu0 0.0
    %1755 = vmatprep.subr.mxu0 0.0
    %1756 = vmatpush1.msra.mxu0 0.0
    %1757 = vmatprep.subr.mxu0 0.0
    %1758 = vmatpush1.msra.mxu0 0.0
    %1759 = vmatprep.subr.mxu0 0.0
    %1760 = vmatpush1.msra.mxu0 0.0
    %1761 = vmatprep.subr.mxu0 0.0
    %1762 = vmatpush1.msra.mxu0 0.0
    %1763 = vmatprep.subr.mxu0 0.0
    %1764 = vmatpush1.msra.mxu0 0.0
    %1765 = vmatprep.subr.mxu0 0.0
    %1766 = vmatpush1.msra.mxu0 0.0
    %1767 = vmatprep.subr.mxu0 0.0
    %1768 = vmatpush1.msra.mxu0 0.0
    %1769 = vmatprep.subr.mxu0 0.0
    %1770 = vmatpush1.msra.mxu0 0.0
    %1771 = vmatprep.subr.mxu0 0.0
    %1772 = vmatpush1.msra.mxu0 0.0
    %1773 = vmatprep.subr.mxu0 0.0
    %1774 = vmatpush1.msra.mxu0 0.0
    %1775 = vmatprep.subr.mxu0 0.0
    %1776 = vmatpush1.msra.mxu0 0.0
    %1777 = vmatprep.subr.mxu0 0.0
    %1778 = vmatpush1.msra.mxu0 0.0
    %1779 = vmatprep.subr.mxu0 0.0
    %1780 = vmatpush1.msra.mxu0 0.0
    %1781 = vmatprep.subr.mxu0 0.0
    %1782 = vmatpush1.msra.mxu0 0.0
    %1783 = vmatprep.subr.mxu0 0.0
    %1784 = vmatpush1.msra.mxu0 0.0
    %1785 = vmatprep.subr.mxu0 0.0
    %1786 = vmatpush1.msra.mxu0 0.0
    %1787 = vmatprep.subr.mxu0 0.0
    %1788 = vmatpush1.msra.mxu0 0.0
    %1789 = vmatprep.subr.mxu0 0.0
    %1790 = vmatpush1.msra.mxu0 0.0
    %1791 = vmatprep.subr.mxu0 0.0
    %1792 = vmatpush1.msra.mxu0 0.0
    %1793 = vmatprep.subr.mxu0 0.0
    %1794 = vmatpush1.msra.mxu0 0.0
    %1795 = vmatprep.subr.mxu0 0.0
    %1796 = vmatpush1.msra.mxu0 0.0
    %1797 = vmatprep.subr.mxu0 0.0
    %1798 = vmatpush1.msra.mxu0 0.0
    %1799 = vmatprep.mubr.f32.mxu0 0.0
    %1800 = vmatmul.mubr.f32.gmra.mrb[0].mxu0 %v1733
    %v1801 = vpop.f32.mrb[0].mxu0
    %v1802 = vadd.f32 0.0, %v1801
    %v1803 = vpop.f32.mrb[0].mxu0
    %v1804 = vadd.f32 0.0, %v1803
    %1805 = vdwg.mxu0
    %v1806 = vlaneseq
    %v1807 = vshrl.u32 %v1806, 7
    %v1808 = vsub.s32 0, %v1807
    %v1809 = vrot.slane %v1728, %v1808
    %v1810 = vlaneseq
    %v1811 = vshrl.u32 %v1810, 7
    %v1812 = vsub.s32 0, %v1811
    %v1813 = vrot.slane %v1730, %v1812
    %v1814 = vmul.f32 %v1427, %v1809
    %v1815 = vmul.f32 %v1429, %v1813
    %v1816 = vlaneseq
    %v1817 = vshrl.u32 %v1816, 7
    %v1818 = vsub.s32 0, %v1817
    %v1819 = vrot.slane %v1802, %v1818
    %v1820 = vlaneseq
    %v1821 = vshrl.u32 %v1820, 7
    %v1822 = vsub.s32 0, %v1821
    %v1823 = vrot.slane %v1804, %v1822
    %v1824 = vadd.f32 %v1814, %v1819
    %v1825 = vadd.f32 %v1815, %v1823
    %vm1826 = vcmp.gt.f32.partialorder %v1824, 0.0
    %vm1827 = vcmp.gt.f32.partialorder %v1825, 0.0
    %v1828 = vmul.f32 %v1824, 0.2
    %v1829 = vmul.f32 %v1825, 0.2
    %v1830 = vsel %vm1826, %v1824, %v1828
    %v1831 = vsel %vm1827, %v1825, %v1829
    %v1832 = vpack.c.bf16 %v1830, %v1830
    %v1833 = vpack.c.bf16 %v1831, %v1831
    %v1834 = vld [vmem:[%s9] sm:$0xf]
    %v1835 = vld [vmem:[%s9 + $0x4] sm:$0xf]
    %v1838 = vunpack.c.l.b16 %v1834
    %v1839 = vunpack.c.l.b16 %v1835
    %v1840 = vpack.c.b16 %v1839, %v1838
    %vm1841 = vcmask 64512
    %v1843 = vsel %vm1841, %v1840, 0
    %vm1845 = vcmask 1043456
    %v1847 = vsel %vm1845, %v1832, 0
    %v1850 = vsel %vm1845, %v1833, 0
    %1852 = vmatprep.subr.bf16.mxu0 %v1850
    %1853 = vmatpush1.bf16.msra.mxu0 %v1847
    %1854 = vmatprep.subr.bf16.mxu0 0
    %1855 = vmatpush1.bf16.msra.mxu0 0
    %1856 = vmatprep.subr.bf16.mxu0 0
    %1857 = vmatpush1.bf16.msra.mxu0 0
    %1858 = vmatprep.subr.bf16.mxu0 0
    %1859 = vmatpush1.bf16.msra.mxu0 0
    %1860 = vmatprep.subr.bf16.mxu0 0
    %1861 = vmatpush1.bf16.msra.mxu0 0
    %1862 = vmatprep.subr.bf16.mxu0 0
    %1863 = vmatpush1.bf16.msra.mxu0 0
    %1864 = vmatprep.subr.bf16.mxu0 0
    %1865 = vmatpush1.bf16.msra.mxu0 0
    %1866 = vmatprep.subr.bf16.mxu0 0
    %1867 = vmatpush1.bf16.msra.mxu0 0
    %1868 = vmatprep.subr.bf16.mxu0 0
    %1869 = vmatpush1.bf16.msra.mxu0 0
    %1870 = vmatprep.subr.bf16.mxu0 0
    %1871 = vmatpush1.bf16.msra.mxu0 0
    %1872 = vmatprep.subr.bf16.mxu0 0
    %1873 = vmatpush1.bf16.msra.mxu0 0
    %1874 = vmatprep.subr.bf16.mxu0 0
    %1875 = vmatpush1.bf16.msra.mxu0 0
    %1876 = vmatprep.subr.bf16.mxu0 0
    %1877 = vmatpush1.bf16.msra.mxu0 0
    %1878 = vmatprep.subr.bf16.mxu0 0
    %1879 = vmatpush1.bf16.msra.mxu0 0
    %1880 = vmatprep.subr.bf16.mxu0 0
    %1881 = vmatpush1.bf16.msra.mxu0 0
    %1882 = vmatprep.subr.bf16.mxu0 0
    %1883 = vmatpush1.bf16.msra.mxu0 0
    %1884 = vmatprep.mubr.bf16.mxu0 0
    %1885 = vmatmul.mubr.bf16.gmra.mrb[0].mxu0 %v1843
    %v1886 = vpop.f32.mrb[0].mxu0
    %v1887 = vadd.f32 0.0, %v1886
    %v1888 = vpop.f32.mrb[0].mxu0
    %v1889 = vadd.f32 0.0, %v1888
    %v1890 = vpop.f32.mrb[0].mxu0
    %v1891 = vadd.f32 0.0, %v1890
    %v1892 = vpop.f32.mrb[0].mxu0
    %v1893 = vadd.f32 0.0, %v1892
    %1894 = vdwg.mxu0
    %s1895 = scalar_lea.vmem %s9, 8
    %v1896 = vld [vmem:[%s1895] sm:$0xf]
    %v1897 = vld [vmem:[%s1895 + $0x4] sm:$0xf]
    %v1900 = vunpack.c.l.b16 %v1896
    %v1901 = vunpack.c.l.b16 %v1897
    %v1902 = vpack.c.b16 %v1901, %v1900
    %v1904 = vsel %vm1841, %v1902, 0
    %1906 = vmatprep.subr.bf16.mxu0 %v1850
    %1907 = vmatpush1.bf16.msra.mxu0 %v1847
    %1908 = vmatprep.subr.bf16.mxu0 0
    %1909 = vmatpush1.bf16.msra.mxu0 0
    %1910 = vmatprep.subr.bf16.mxu0 0
    %1911 = vmatpush1.bf16.msra.mxu0 0
    %1912 = vmatprep.subr.bf16.mxu0 0
    %1913 = vmatpush1.bf16.msra.mxu0 0
    %1914 = vmatprep.subr.bf16.mxu0 0
    %1915 = vmatpush1.bf16.msra.mxu0 0
    %1916 = vmatprep.subr.bf16.mxu0 0
    %1917 = vmatpush1.bf16.msra.mxu0 0
    %1918 = vmatprep.subr.bf16.mxu0 0
    %1919 = vmatpush1.bf16.msra.mxu0 0
    %1920 = vmatprep.subr.bf16.mxu0 0
    %1921 = vmatpush1.bf16.msra.mxu0 0
    %1922 = vmatprep.subr.bf16.mxu0 0
    %1923 = vmatpush1.bf16.msra.mxu0 0
    %1924 = vmatprep.subr.bf16.mxu0 0
    %1925 = vmatpush1.bf16.msra.mxu0 0
    %1926 = vmatprep.subr.bf16.mxu0 0
    %1927 = vmatpush1.bf16.msra.mxu0 0
    %1928 = vmatprep.subr.bf16.mxu0 0
    %1929 = vmatpush1.bf16.msra.mxu0 0
    %1930 = vmatprep.subr.bf16.mxu0 0
    %1931 = vmatpush1.bf16.msra.mxu0 0
    %1932 = vmatprep.subr.bf16.mxu0 0
    %1933 = vmatpush1.bf16.msra.mxu0 0
    %1934 = vmatprep.subr.bf16.mxu0 0
    %1935 = vmatpush1.bf16.msra.mxu0 0
    %1936 = vmatprep.subr.bf16.mxu0 0
    %1937 = vmatpush1.bf16.msra.mxu0 0
    %1938 = vmatprep.mubr.bf16.mxu0 0
    %1939 = vmatmul.mubr.bf16.gmra.mrb[0].mxu0 %v1904
    %v1940 = vpop.f32.mrb[0].mxu0
    %v1941 = vadd.f32 0.0, %v1940
    %v1942 = vpop.f32.mrb[0].mxu0
    %v1943 = vadd.f32 0.0, %v1942
    %v1944 = vpop.f32.mrb[0].mxu0
    %v1945 = vadd.f32 0.0, %v1944
    %v1946 = vpop.f32.mrb[0].mxu0
    %v1947 = vadd.f32 0.0, %v1946
    %1948 = vdwg.mxu0
    %s1949 = scalar_lea.vmem %s9, 16
    %v1950 = vld [vmem:[%s1949] sm:$0xf]
    %v1951 = vld [vmem:[%s1949 + $0x4] sm:$0xf]
    %v1954 = vunpack.c.l.b16 %v1950
    %v1955 = vunpack.c.l.b16 %v1951
    %v1956 = vpack.c.b16 %v1955, %v1954
    %v1958 = vsel %vm1841, %v1956, 0
    %1960 = vmatprep.subr.bf16.mxu0 %v1850
    %1961 = vmatpush1.bf16.msra.mxu0 %v1847
    %1962 = vmatprep.subr.bf16.mxu0 0
    %1963 = vmatpush1.bf16.msra.mxu0 0
    %1964 = vmatprep.subr.bf16.mxu0 0
    %1965 = vmatpush1.bf16.msra.mxu0 0
    %1966 = vmatprep.subr.bf16.mxu0 0
    %1967 = vmatpush1.bf16.msra.mxu0 0
    %1968 = vmatprep.subr.bf16.mxu0 0
    %1969 = vmatpush1.bf16.msra.mxu0 0
    %1970 = vmatprep.subr.bf16.mxu0 0
    %1971 = vmatpush1.bf16.msra.mxu0 0
    %1972 = vmatprep.subr.bf16.mxu0 0
    %1973 = vmatpush1.bf16.msra.mxu0 0
    %1974 = vmatprep.subr.bf16.mxu0 0
    %1975 = vmatpush1.bf16.msra.mxu0 0
    %1976 = vmatprep.subr.bf16.mxu0 0
    %1977 = vmatpush1.bf16.msra.mxu0 0
    %1978 = vmatprep.subr.bf16.mxu0 0
    %1979 = vmatpush1.bf16.msra.mxu0 0
    %1980 = vmatprep.subr.bf16.mxu0 0
    %1981 = vmatpush1.bf16.msra.mxu0 0
    %1982 = vmatprep.subr.bf16.mxu0 0
    %1983 = vmatpush1.bf16.msra.mxu0 0
    %1984 = vmatprep.subr.bf16.mxu0 0
    %1985 = vmatpush1.bf16.msra.mxu0 0
    %1986 = vmatprep.subr.bf16.mxu0 0
    %1987 = vmatpush1.bf16.msra.mxu0 0
    %1988 = vmatprep.subr.bf16.mxu0 0
    %1989 = vmatpush1.bf16.msra.mxu0 0
    %1990 = vmatprep.subr.bf16.mxu0 0
    %1991 = vmatpush1.bf16.msra.mxu0 0
    %1992 = vmatprep.mubr.bf16.mxu0 0
    %1993 = vmatmul.mubr.bf16.gmra.mrb[0].mxu0 %v1958
    %v1994 = vpop.f32.mrb[0].mxu0
    %v1995 = vadd.f32 0.0, %v1994
    %v1996 = vpop.f32.mrb[0].mxu0
    %v1997 = vadd.f32 0.0, %v1996
    %v1998 = vpop.f32.mrb[0].mxu0
    %v1999 = vadd.f32 0.0, %v1998
    %v2000 = vpop.f32.mrb[0].mxu0
    %v2001 = vadd.f32 0.0, %v2000
    %2002 = vdwg.mxu0
    %s2003 = scalar_lea.vmem %s9, 24
    %v2004 = vld [vmem:[%s2003] sm:$0xf]
    %v2005 = vld [vmem:[%s2003 + $0x4] sm:$0xf]
    %v2008 = vunpack.c.l.b16 %v2004
    %v2009 = vunpack.c.l.b16 %v2005
    %v2010 = vpack.c.b16 %v2009, %v2008
    %v2012 = vsel %vm1841, %v2010, 0
    %2014 = vmatprep.subr.bf16.mxu0 %v1850
    %2015 = vmatpush1.bf16.msra.mxu0 %v1847
    %2016 = vmatprep.subr.bf16.mxu0 0
    %2017 = vmatpush1.bf16.msra.mxu0 0
    %2018 = vmatprep.subr.bf16.mxu0 0
    %2019 = vmatpush1.bf16.msra.mxu0 0
    %2020 = vmatprep.subr.bf16.mxu0 0
    %2021 = vmatpush1.bf16.msra.mxu0 0
    %2022 = vmatprep.subr.bf16.mxu0 0
    %2023 = vmatpush1.bf16.msra.mxu0 0
    %2024 = vmatprep.subr.bf16.mxu0 0
    %2025 = vmatpush1.bf16.msra.mxu0 0
    %2026 = vmatprep.subr.bf16.mxu0 0
    %2027 = vmatpush1.bf16.msra.mxu0 0
    %2028 = vmatprep.subr.bf16.mxu0 0
    %2029 = vmatpush1.bf16.msra.mxu0 0
    %2030 = vmatprep.subr.bf16.mxu0 0
    %2031 = vmatpush1.bf16.msra.mxu0 0
    %2032 = vmatprep.subr.bf16.mxu0 0
    %2033 = vmatpush1.bf16.msra.mxu0 0
    %2034 = vmatprep.subr.bf16.mxu0 0
    %2035 = vmatpush1.bf16.msra.mxu0 0
    %2036 = vmatprep.subr.bf16.mxu0 0
    %2037 = vmatpush1.bf16.msra.mxu0 0
    %2038 = vmatprep.subr.bf16.mxu0 0
    %2039 = vmatpush1.bf16.msra.mxu0 0
    %2040 = vmatprep.subr.bf16.mxu0 0
    %2041 = vmatpush1.bf16.msra.mxu0 0
    %2042 = vmatprep.subr.bf16.mxu0 0
    %2043 = vmatpush1.bf16.msra.mxu0 0
    %2044 = vmatprep.subr.bf16.mxu0 0
    %2045 = vmatpush1.bf16.msra.mxu0 0
    %2046 = vmatprep.mubr.bf16.mxu0 0
    %2047 = vmatmul.mubr.bf16.gmra.mrb[0].mxu0 %v2012
    %v2048 = vpop.f32.mrb[0].mxu0
    %v2049 = vadd.f32 0.0, %v2048
    %v2050 = vpop.f32.mrb[0].mxu0
    %v2051 = vadd.f32 0.0, %v2050
    %v2052 = vpop.f32.mrb[0].mxu0
    %v2053 = vadd.f32 0.0, %v2052
    %v2054 = vpop.f32.mrb[0].mxu0
    %v2055 = vadd.f32 0.0, %v2054
    %2056 = vdwg.mxu0
    %v2057 = vpack.c.bf16 %v1891, %v1887
    %v2058 = vpack.c.bf16 %v1893, %v1889
    %v2059 = vpack.c.bf16 %v1945, %v1941
    %v2060 = vpack.c.bf16 %v1947, %v1943
    %v2061 = vpack.c.bf16 %v1999, %v1995
    %v2062 = vpack.c.bf16 %v2001, %v1997
    %v2063 = vpack.c.bf16 %v2053, %v2049
    %v2064 = vpack.c.bf16 %v2055, %v2051
    %v2065 = vld [vmem:[%s10] sm:$0xff]
    %v2066 = vld [vmem:[%s10 + $0x8] sm:$0xff]
    %v2067 = vld [vmem:[%s10 + $0x10] sm:$0xff]
    %v2068 = vld [vmem:[%s10 + $0x18] sm:$0xff]
    %v2069 = vld [vmem:[%s10 + $0x20] sm:$0xff]
    %v2070 = vld [vmem:[%s10 + $0x28] sm:$0xff]
    %v2071 = vld [vmem:[%s10 + $0x30] sm:$0xff]
    %v2072 = vld [vmem:[%s10 + $0x38] sm:$0xff]
    %v2073 = vld [vmem:[%s10 + $0x40] sm:$0xff]
    %v2074 = vld [vmem:[%s10 + $0x48] sm:$0xff]
    %v2075 = vld [vmem:[%s10 + $0x50] sm:$0xff]
    %v2076 = vld [vmem:[%s10 + $0x58] sm:$0xff]
    %v2077 = vld [vmem:[%s10 + $0x60] sm:$0xff]
    %v2078 = vld [vmem:[%s10 + $0x68] sm:$0xff]
    %v2079 = vld [vmem:[%s10 + $0x70] sm:$0xff]
    %v2080 = vld [vmem:[%s10 + $0x78] sm:$0xff]
    %v2081 = vld [vmem:[%s10 + $0x80] sm:$0xff]
    %v2082 = vld [vmem:[%s10 + $0x88] sm:$0xff]
    %v2083 = vld [vmem:[%s10 + $0x90] sm:$0xff]
    %v2084 = vld [vmem:[%s10 + $0x98] sm:$0xff]
    %v2085 = vld [vmem:[%s10 + $0xa0] sm:$0xff]
    %v2086 = vld [vmem:[%s10 + $0xa8] sm:$0xff]
    %v2087 = vld [vmem:[%s10 + $0xb0] sm:$0xff]
    %v2088 = vld [vmem:[%s10 + $0xb8] sm:$0xff]
    %v2089 = vld [vmem:[%s10 + $0xc0] sm:$0xff]
    %v2090 = vld [vmem:[%s10 + $0xc8] sm:$0xff]
    %v2091 = vld [vmem:[%s10 + $0xd0] sm:$0xff]
    %v2092 = vld [vmem:[%s10 + $0xd8] sm:$0xff]
    %v2093 = vld [vmem:[%s10 + $0xe0] sm:$0xff]
    %v2094 = vld [vmem:[%s10 + $0xe8] sm:$0xff]
    %v2095 = vld [vmem:[%s10 + $0xf0] sm:$0xff]
    %v2096 = vld [vmem:[%s10 + $0xf8] sm:$0xff]
    %v2097 = vld [vmem:[%s10 + $0x100] sm:$0xff]
    %v2098 = vld [vmem:[%s10 + $0x108] sm:$0xff]
    %v2099 = vld [vmem:[%s10 + $0x110] sm:$0xff]
    %v2100 = vld [vmem:[%s10 + $0x118] sm:$0xff]
    %v2101 = vld [vmem:[%s10 + $0x120] sm:$0xff]
    %v2102 = vld [vmem:[%s10 + $0x128] sm:$0xff]
    %v2103 = vld [vmem:[%s10 + $0x130] sm:$0xff]
    %v2104 = vld [vmem:[%s10 + $0x138] sm:$0xff]
    %v2105 = vld [vmem:[%s10 + $0x140] sm:$0xff]
    %v2106 = vld [vmem:[%s10 + $0x148] sm:$0xff]
    %v2107 = vld [vmem:[%s10 + $0x150] sm:$0xff]
    %v2108 = vld [vmem:[%s10 + $0x158] sm:$0xff]
    %v2109 = vld [vmem:[%s10 + $0x160] sm:$0xff]
    %v2110 = vld [vmem:[%s10 + $0x168] sm:$0xff]
    %v2111 = vld [vmem:[%s10 + $0x170] sm:$0xff]
    %v2112 = vld [vmem:[%s10 + $0x178] sm:$0xff]
    %v2113 = vld [vmem:[%s10 + $0x180] sm:$0xff]
    %v2114 = vld [vmem:[%s10 + $0x188] sm:$0xff]
    %v2115 = vld [vmem:[%s10 + $0x190] sm:$0xff]
    %v2116 = vld [vmem:[%s10 + $0x198] sm:$0xff]
    %v2117 = vld [vmem:[%s10 + $0x1a0] sm:$0xff]
    %v2118 = vld [vmem:[%s10 + $0x1a8] sm:$0xff]
    %v2119 = vld [vmem:[%s10 + $0x1b0] sm:$0xff]
    %v2120 = vld [vmem:[%s10 + $0x1b8] sm:$0xff]
    %v2121 = vld [vmem:[%s10 + $0x1c0] sm:$0xff]
    %v2122 = vld [vmem:[%s10 + $0x1c8] sm:$0xff]
    %v2123 = vld [vmem:[%s10 + $0x1d0] sm:$0xff]
    %v2124 = vld [vmem:[%s10 + $0x1d8] sm:$0xff]
    %v2125 = vld [vmem:[%s10 + $0x1e0] sm:$0xff]
    %v2126 = vld [vmem:[%s10 + $0x1e8] sm:$0xff]
    %v2127 = vld [vmem:[%s10 + $0x1f0] sm:$0xff]
    %v2128 = vld [vmem:[%s10 + $0x1f8] sm:$0xff]
    %v2129 = vld [vmem:[%s10 + $0x200] sm:$0xff]
    %v2130 = vld [vmem:[%s10 + $0x208] sm:$0xff]
    %v2131 = vld [vmem:[%s10 + $0x210] sm:$0xff]
    %v2132 = vld [vmem:[%s10 + $0x218] sm:$0xff]
    %v2133 = vld [vmem:[%s10 + $0x220] sm:$0xff]
    %v2134 = vld [vmem:[%s10 + $0x228] sm:$0xff]
    %v2135 = vld [vmem:[%s10 + $0x230] sm:$0xff]
    %v2136 = vld [vmem:[%s10 + $0x238] sm:$0xff]
    %v2137 = vld [vmem:[%s10 + $0x240] sm:$0xff]
    %v2138 = vld [vmem:[%s10 + $0x248] sm:$0xff]
    %v2139 = vld [vmem:[%s10 + $0x250] sm:$0xff]
    %v2140 = vld [vmem:[%s10 + $0x258] sm:$0xff]
    %v2141 = vld [vmem:[%s10 + $0x260] sm:$0xff]
    %v2142 = vld [vmem:[%s10 + $0x268] sm:$0xff]
    %v2143 = vld [vmem:[%s10 + $0x270] sm:$0xff]
    %v2144 = vld [vmem:[%s10 + $0x278] sm:$0xff]
    %v2145 = vld [vmem:[%s10 + $0x280] sm:$0xff]
    %v2146 = vld [vmem:[%s10 + $0x288] sm:$0xff]
    %v2147 = vld [vmem:[%s10 + $0x290] sm:$0xff]
    %v2148 = vld [vmem:[%s10 + $0x298] sm:$0xff]
    %v2149 = vld [vmem:[%s10 + $0x2a0] sm:$0xff]
    %v2150 = vld [vmem:[%s10 + $0x2a8] sm:$0xff]
    %v2151 = vld [vmem:[%s10 + $0x2b0] sm:$0xff]
    %v2152 = vld [vmem:[%s10 + $0x2b8] sm:$0xff]
    %v2153 = vld [vmem:[%s10 + $0x2c0] sm:$0xff]
    %v2154 = vld [vmem:[%s10 + $0x2c8] sm:$0xff]
    %v2155 = vld [vmem:[%s10 + $0x2d0] sm:$0xff]
    %v2156 = vld [vmem:[%s10 + $0x2d8] sm:$0xff]
    %v2157 = vld [vmem:[%s10 + $0x2e0] sm:$0xff]
    %v2158 = vld [vmem:[%s10 + $0x2e8] sm:$0xff]
    %v2159 = vld [vmem:[%s10 + $0x2f0] sm:$0xff]
    %v2160 = vld [vmem:[%s10 + $0x2f8] sm:$0xff]
    %v2161 = vld [vmem:[%s10 + $0x300] sm:$0xff]
    %v2162 = vld [vmem:[%s10 + $0x308] sm:$0xff]
    %v2163 = vld [vmem:[%s10 + $0x310] sm:$0xff]
    %v2164 = vld [vmem:[%s10 + $0x318] sm:$0xff]
    %v2165 = vld [vmem:[%s10 + $0x320] sm:$0xff]
    %v2166 = vld [vmem:[%s10 + $0x328] sm:$0xff]
    %v2167 = vld [vmem:[%s10 + $0x330] sm:$0xff]
    %v2168 = vld [vmem:[%s10 + $0x338] sm:$0xff]
    %v2169 = vld [vmem:[%s10 + $0x340] sm:$0xff]
    %v2170 = vld [vmem:[%s10 + $0x348] sm:$0xff]
    %v2171 = vld [vmem:[%s10 + $0x350] sm:$0xff]
    %v2172 = vld [vmem:[%s10 + $0x358] sm:$0xff]
    %v2173 = vld [vmem:[%s10 + $0x360] sm:$0xff]
    %v2174 = vld [vmem:[%s10 + $0x368] sm:$0xff]
    %v2175 = vld [vmem:[%s10 + $0x370] sm:$0xff]
    %v2176 = vld [vmem:[%s10 + $0x378] sm:$0xff]
    %v2177 = vld [vmem:[%s10 + $0x380] sm:$0xff]
    %v2178 = vld [vmem:[%s10 + $0x388] sm:$0xff]
    %v2179 = vld [vmem:[%s10 + $0x390] sm:$0xff]
    %v2180 = vld [vmem:[%s10 + $0x398] sm:$0xff]
    %v2181 = vld [vmem:[%s10 + $0x3a0] sm:$0xff]
    %v2182 = vld [vmem:[%s10 + $0x3a8] sm:$0xff]
    %v2183 = vld [vmem:[%s10 + $0x3b0] sm:$0xff]
    %v2184 = vld [vmem:[%s10 + $0x3b8] sm:$0xff]
    %v2185 = vld [vmem:[%s10 + $0x3c0] sm:$0xff]
    %v2186 = vld [vmem:[%s10 + $0x3c8] sm:$0xff]
    %v2187 = vld [vmem:[%s10 + $0x3d0] sm:$0xff]
    %v2188 = vld [vmem:[%s10 + $0x3d8] sm:$0xff]
    %v2189 = vld [vmem:[%s10 + $0x3e0] sm:$0xff]
    %v2190 = vld [vmem:[%s10 + $0x3e8] sm:$0xff]
    %v2191 = vld [vmem:[%s10 + $0x3f0] sm:$0xff]
    %v2192 = vld [vmem:[%s10 + $0x3f8] sm:$0xff]
    %v2321 = vunpack.c.l.b16 %v2065
    %v2322 = vunpack.c.h.b16 %v2065
    %v2323 = vunpack.c.l.b16 %v2066
    %v2324 = vunpack.c.h.b16 %v2066
    %v2325 = vunpack.c.l.b16 %v2067
    %v2326 = vunpack.c.h.b16 %v2067
    %v2327 = vunpack.c.l.b16 %v2068
    %v2328 = vunpack.c.h.b16 %v2068
    %v2329 = vunpack.c.l.b16 %v2069
    %v2330 = vunpack.c.h.b16 %v2069
    %v2331 = vunpack.c.l.b16 %v2070
    %v2332 = vunpack.c.h.b16 %v2070
    %v2333 = vunpack.c.l.b16 %v2071
    %v2334 = vunpack.c.h.b16 %v2071
    %v2335 = vunpack.c.l.b16 %v2072
    %v2336 = vunpack.c.h.b16 %v2072
    %v2337 = vunpack.c.l.b16 %v2073
    %v2338 = vunpack.c.h.b16 %v2073
    %v2339 = vunpack.c.l.b16 %v2074
    %v2340 = vunpack.c.h.b16 %v2074
    %v2341 = vunpack.c.l.b16 %v2075
    %v2342 = vunpack.c.h.b16 %v2075
    %v2343 = vunpack.c.l.b16 %v2076
    %v2344 = vunpack.c.h.b16 %v2076
    %v2345 = vunpack.c.l.b16 %v2077
    %v2346 = vunpack.c.h.b16 %v2077
    %v2347 = vunpack.c.l.b16 %v2078
    %v2348 = vunpack.c.h.b16 %v2078
    %v2349 = vunpack.c.l.b16 %v2079
    %v2350 = vunpack.c.h.b16 %v2079
    %v2351 = vunpack.c.l.b16 %v2080
    %v2352 = vunpack.c.h.b16 %v2080
    %v2353 = vunpack.c.l.b16 %v2081
    %v2354 = vunpack.c.h.b16 %v2081
    %v2355 = vunpack.c.l.b16 %v2082
    %v2356 = vunpack.c.h.b16 %v2082
    %v2357 = vunpack.c.l.b16 %v2083
    %v2358 = vunpack.c.h.b16 %v2083
    %v2359 = vunpack.c.l.b16 %v2084
    %v2360 = vunpack.c.h.b16 %v2084
    %v2361 = vunpack.c.l.b16 %v2085
    %v2362 = vunpack.c.h.b16 %v2085
    %v2363 = vunpack.c.l.b16 %v2086
    %v2364 = vunpack.c.h.b16 %v2086
    %v2365 = vunpack.c.l.b16 %v2087
    %v2366 = vunpack.c.h.b16 %v2087
    %v2367 = vunpack.c.l.b16 %v2088
    %v2368 = vunpack.c.h.b16 %v2088
    %v2369 = vunpack.c.l.b16 %v2089
    %v2370 = vunpack.c.h.b16 %v2089
    %v2371 = vunpack.c.l.b16 %v2090
    %v2372 = vunpack.c.h.b16 %v2090
    %v2373 = vunpack.c.l.b16 %v2091
    %v2374 = vunpack.c.h.b16 %v2091
    %v2375 = vunpack.c.l.b16 %v2092
    %v2376 = vunpack.c.h.b16 %v2092
    %v2377 = vunpack.c.l.b16 %v2093
    %v2378 = vunpack.c.h.b16 %v2093
    %v2379 = vunpack.c.l.b16 %v2094
    %v2380 = vunpack.c.h.b16 %v2094
    %v2381 = vunpack.c.l.b16 %v2095
    %v2382 = vunpack.c.h.b16 %v2095
    %v2383 = vunpack.c.l.b16 %v2096
    %v2384 = vunpack.c.h.b16 %v2096
    %v2385 = vunpack.c.l.b16 %v2097
    %v2386 = vunpack.c.h.b16 %v2097
    %v2387 = vunpack.c.l.b16 %v2098
    %v2388 = vunpack.c.h.b16 %v2098
    %v2389 = vunpack.c.l.b16 %v2099
    %v2390 = vunpack.c.h.b16 %v2099
    %v2391 = vunpack.c.l.b16 %v2100
    %v2392 = vunpack.c.h.b16 %v2100
    %v2393 = vunpack.c.l.b16 %v2101
    %v2394 = vunpack.c.h.b16 %v2101
    %v2395 = vunpack.c.l.b16 %v2102
    %v2396 = vunpack.c.h.b16 %v2102
    %v2397 = vunpack.c.l.b16 %v2103
    %v2398 = vunpack.c.h.b16 %v2103
    %v2399 = vunpack.c.l.b16 %v2104
    %v2400 = vunpack.c.h.b16 %v2104
    %v2401 = vunpack.c.l.b16 %v2105
    %v2402 = vunpack.c.h.b16 %v2105
    %v2403 = vunpack.c.l.b16 %v2106
    %v2404 = vunpack.c.h.b16 %v2106
    %v2405 = vunpack.c.l.b16 %v2107
    %v2406 = vunpack.c.h.b16 %v2107
    %v2407 = vunpack.c.l.b16 %v2108
    %v2408 = vunpack.c.h.b16 %v2108
    %v2409 = vunpack.c.l.b16 %v2109
    %v2410 = vunpack.c.h.b16 %v2109
    %v2411 = vunpack.c.l.b16 %v2110
    %v2412 = vunpack.c.h.b16 %v2110
    %v2413 = vunpack.c.l.b16 %v2111
    %v2414 = vunpack.c.h.b16 %v2111
    %v2415 = vunpack.c.l.b16 %v2112
    %v2416 = vunpack.c.h.b16 %v2112
    %v2417 = vunpack.c.l.b16 %v2113
    %v2418 = vunpack.c.h.b16 %v2113
    %v2419 = vunpack.c.l.b16 %v2114
    %v2420 = vunpack.c.h.b16 %v2114
    %v2421 = vunpack.c.l.b16 %v2115
    %v2422 = vunpack.c.h.b16 %v2115
    %v2423 = vunpack.c.l.b16 %v2116
    %v2424 = vunpack.c.h.b16 %v2116
    %v2425 = vunpack.c.l.b16 %v2117
    %v2426 = vunpack.c.h.b16 %v2117
    %v2427 = vunpack.c.l.b16 %v2118
    %v2428 = vunpack.c.h.b16 %v2118
    %v2429 = vunpack.c.l.b16 %v2119
    %v2430 = vunpack.c.h.b16 %v2119
    %v2431 = vunpack.c.l.b16 %v2120
    %v2432 = vunpack.c.h.b16 %v2120
    %v2433 = vunpack.c.l.b16 %v2121
    %v2434 = vunpack.c.h.b16 %v2121
    %v2435 = vunpack.c.l.b16 %v2122
    %v2436 = vunpack.c.h.b16 %v2122
    %v2437 = vunpack.c.l.b16 %v2123
    %v2438 = vunpack.c.h.b16 %v2123
    %v2439 = vunpack.c.l.b16 %v2124
    %v2440 = vunpack.c.h.b16 %v2124
    %v2441 = vunpack.c.l.b16 %v2125
    %v2442 = vunpack.c.h.b16 %v2125
    %v2443 = vunpack.c.l.b16 %v2126
    %v2444 = vunpack.c.h.b16 %v2126
    %v2445 = vunpack.c.l.b16 %v2127
    %v2446 = vunpack.c.h.b16 %v2127
    %v2447 = vunpack.c.l.b16 %v2128
    %v2448 = vunpack.c.h.b16 %v2128
    %v2449 = vunpack.c.l.b16 %v2129
    %v2450 = vunpack.c.h.b16 %v2129
    %v2451 = vunpack.c.l.b16 %v2130
    %v2452 = vunpack.c.h.b16 %v2130
    %v2453 = vunpack.c.l.b16 %v2131
    %v2454 = vunpack.c.h.b16 %v2131
    %v2455 = vunpack.c.l.b16 %v2132
    %v2456 = vunpack.c.h.b16 %v2132
    %v2457 = vunpack.c.l.b16 %v2133
    %v2458 = vunpack.c.h.b16 %v2133
    %v2459 = vunpack.c.l.b16 %v2134
    %v2460 = vunpack.c.h.b16 %v2134
    %v2461 = vunpack.c.l.b16 %v2135
    %v2462 = vunpack.c.h.b16 %v2135
    %v2463 = vunpack.c.l.b16 %v2136
    %v2464 = vunpack.c.h.b16 %v2136
    %v2465 = vunpack.c.l.b16 %v2137
    %v2466 = vunpack.c.h.b16 %v2137
    %v2467 = vunpack.c.l.b16 %v2138
    %v2468 = vunpack.c.h.b16 %v2138
    %v2469 = vunpack.c.l.b16 %v2139
    %v2470 = vunpack.c.h.b16 %v2139
    %v2471 = vunpack.c.l.b16 %v2140
    %v2472 = vunpack.c.h.b16 %v2140
    %v2473 = vunpack.c.l.b16 %v2141
    %v2474 = vunpack.c.h.b16 %v2141
    %v2475 = vunpack.c.l.b16 %v2142
    %v2476 = vunpack.c.h.b16 %v2142
    %v2477 = vunpack.c.l.b16 %v2143
    %v2478 = vunpack.c.h.b16 %v2143
    %v2479 = vunpack.c.l.b16 %v2144
    %v2480 = vunpack.c.h.b16 %v2144
    %v2481 = vunpack.c.l.b16 %v2145
    %v2482 = vunpack.c.h.b16 %v2145
    %v2483 = vunpack.c.l.b16 %v2146
    %v2484 = vunpack.c.h.b16 %v2146
    %v2485 = vunpack.c.l.b16 %v2147
    %v2486 = vunpack.c.h.b16 %v2147
    %v2487 = vunpack.c.l.b16 %v2148
    %v2488 = vunpack.c.h.b16 %v2148
    %v2489 = vunpack.c.l.b16 %v2149
    %v2490 = vunpack.c.h.b16 %v2149
    %v2491 = vunpack.c.l.b16 %v2150
    %v2492 = vunpack.c.h.b16 %v2150
    %v2493 = vunpack.c.l.b16 %v2151
    %v2494 = vunpack.c.h.b16 %v2151
    %v2495 = vunpack.c.l.b16 %v2152
    %v2496 = vunpack.c.h.b16 %v2152
    %v2497 = vunpack.c.l.b16 %v2153
    %v2498 = vunpack.c.h.b16 %v2153
    %v2499 = vunpack.c.l.b16 %v2154
    %v2500 = vunpack.c.h.b16 %v2154
    %v2501 = vunpack.c.l.b16 %v2155
    %v2502 = vunpack.c.h.b16 %v2155
    %v2503 = vunpack.c.l.b16 %v2156
    %v2504 = vunpack.c.h.b16 %v2156
    %v2505 = vunpack.c.l.b16 %v2157
    %v2506 = vunpack.c.h.b16 %v2157
    %v2507 = vunpack.c.l.b16 %v2158
    %v2508 = vunpack.c.h.b16 %v2158
    %v2509 = vunpack.c.l.b16 %v2159
    %v2510 = vunpack.c.h.b16 %v2159
    %v2511 = vunpack.c.l.b16 %v2160
    %v2512 = vunpack.c.h.b16 %v2160
    %v2513 = vunpack.c.l.b16 %v2161
    %v2514 = vunpack.c.h.b16 %v2161
    %v2515 = vunpack.c.l.b16 %v2162
    %v2516 = vunpack.c.h.b16 %v2162
    %v2517 = vunpack.c.l.b16 %v2163
    %v2518 = vunpack.c.h.b16 %v2163
    %v2519 = vunpack.c.l.b16 %v2164
    %v2520 = vunpack.c.h.b16 %v2164
    %v2521 = vunpack.c.l.b16 %v2165
    %v2522 = vunpack.c.h.b16 %v2165
    %v2523 = vunpack.c.l.b16 %v2166
    %v2524 = vunpack.c.h.b16 %v2166
    %v2525 = vunpack.c.l.b16 %v2167
    %v2526 = vunpack.c.h.b16 %v2167
    %v2527 = vunpack.c.l.b16 %v2168
    %v2528 = vunpack.c.h.b16 %v2168
    %v2529 = vunpack.c.l.b16 %v2169
    %v2530 = vunpack.c.h.b16 %v2169
    %v2531 = vunpack.c.l.b16 %v2170
    %v2532 = vunpack.c.h.b16 %v2170
    %v2533 = vunpack.c.l.b16 %v2171
    %v2534 = vunpack.c.h.b16 %v2171
    %v2535 = vunpack.c.l.b16 %v2172
    %v2536 = vunpack.c.h.b16 %v2172
    %v2537 = vunpack.c.l.b16 %v2173
    %v2538 = vunpack.c.h.b16 %v2173
    %v2539 = vunpack.c.l.b16 %v2174
    %v2540 = vunpack.c.h.b16 %v2174
    %v2541 = vunpack.c.l.b16 %v2175
    %v2542 = vunpack.c.h.b16 %v2175
    %v2543 = vunpack.c.l.b16 %v2176
    %v2544 = vunpack.c.h.b16 %v2176
    %v2545 = vunpack.c.l.b16 %v2177
    %v2546 = vunpack.c.h.b16 %v2177
    %v2547 = vunpack.c.l.b16 %v2178
    %v2548 = vunpack.c.h.b16 %v2178
    %v2549 = vunpack.c.l.b16 %v2179
    %v2550 = vunpack.c.h.b16 %v2179
    %v2551 = vunpack.c.l.b16 %v2180
    %v2552 = vunpack.c.h.b16 %v2180
    %v2553 = vunpack.c.l.b16 %v2181
    %v2554 = vunpack.c.h.b16 %v2181
    %v2555 = vunpack.c.l.b16 %v2182
    %v2556 = vunpack.c.h.b16 %v2182
    %v2557 = vunpack.c.l.b16 %v2183
    %v2558 = vunpack.c.h.b16 %v2183
    %v2559 = vunpack.c.l.b16 %v2184
    %v2560 = vunpack.c.h.b16 %v2184
    %v2561 = vunpack.c.l.b16 %v2185
    %v2562 = vunpack.c.h.b16 %v2185
    %v2563 = vunpack.c.l.b16 %v2186
    %v2564 = vunpack.c.h.b16 %v2186
    %v2565 = vunpack.c.l.b16 %v2187
    %v2566 = vunpack.c.h.b16 %v2187
    %v2567 = vunpack.c.l.b16 %v2188
    %v2568 = vunpack.c.h.b16 %v2188
    %v2569 = vunpack.c.l.b16 %v2189
    %v2570 = vunpack.c.h.b16 %v2189
    %v2571 = vunpack.c.l.b16 %v2190
    %v2572 = vunpack.c.h.b16 %v2190
    %v2573 = vunpack.c.l.b16 %v2191
    %v2574 = vunpack.c.h.b16 %v2191
    %v2575 = vunpack.c.l.b16 %v2192
    %v2576 = vunpack.c.h.b16 %v2192
    %v2577 = vpack.c.b16 %v2323, %v2321
    %v2578 = vpack.c.b16 %v2324, %v2322
    %v2579 = vpack.c.b16 %v2327, %v2325
    %v2580 = vpack.c.b16 %v2328, %v2326
    %v2581 = vpack.c.b16 %v2331, %v2329
    %v2582 = vpack.c.b16 %v2332, %v2330
    %v2583 = vpack.c.b16 %v2335, %v2333
    %v2584 = vpack.c.b16 %v2336, %v2334
    %v2585 = vpack.c.b16 %v2339, %v2337
    %v2586 = vpack.c.b16 %v2340, %v2338
    %v2587 = vpack.c.b16 %v2343, %v2341
    %v2588 = vpack.c.b16 %v2344, %v2342
    %v2589 = vpack.c.b16 %v2347, %v2345
    %v2590 = vpack.c.b16 %v2348, %v2346
    %v2591 = vpack.c.b16 %v2351, %v2349
    %v2592 = vpack.c.b16 %v2352, %v2350
    %v2593 = vpack.c.b16 %v2355, %v2353
    %v2594 = vpack.c.b16 %v2356, %v2354
    %v2595 = vpack.c.b16 %v2359, %v2357
    %v2596 = vpack.c.b16 %v2360, %v2358
    %v2597 = vpack.c.b16 %v2363, %v2361
    %v2598 = vpack.c.b16 %v2364, %v2362
    %v2599 = vpack.c.b16 %v2367, %v2365
    %v2600 = vpack.c.b16 %v2368, %v2366
    %v2601 = vpack.c.b16 %v2371, %v2369
    %v2602 = vpack.c.b16 %v2372, %v2370
    %v2603 = vpack.c.b16 %v2375, %v2373
    %v2604 = vpack.c.b16 %v2376, %v2374
    %v2605 = vpack.c.b16 %v2379, %v2377
    %v2606 = vpack.c.b16 %v2380, %v2378
    %v2607 = vpack.c.b16 %v2383, %v2381
    %v2608 = vpack.c.b16 %v2384, %v2382
    %v2609 = vpack.c.b16 %v2387, %v2385
    %v2610 = vpack.c.b16 %v2388, %v2386
    %v2611 = vpack.c.b16 %v2391, %v2389
    %v2612 = vpack.c.b16 %v2392, %v2390
    %v2613 = vpack.c.b16 %v2395, %v2393
    %v2614 = vpack.c.b16 %v2396, %v2394
    %v2615 = vpack.c.b16 %v2399, %v2397
    %v2616 = vpack.c.b16 %v2400, %v2398
    %v2617 = vpack.c.b16 %v2403, %v2401
    %v2618 = vpack.c.b16 %v2404, %v2402
    %v2619 = vpack.c.b16 %v2407, %v2405
    %v2620 = vpack.c.b16 %v2408, %v2406
    %v2621 = vpack.c.b16 %v2411, %v2409
    %v2622 = vpack.c.b16 %v2412, %v2410
    %v2623 = vpack.c.b16 %v2415, %v2413
    %v2624 = vpack.c.b16 %v2416, %v2414
    %v2625 = vpack.c.b16 %v2419, %v2417
    %v2626 = vpack.c.b16 %v2420, %v2418
    %v2627 = vpack.c.b16 %v2423, %v2421
    %v2628 = vpack.c.b16 %v2424, %v2422
    %v2629 = vpack.c.b16 %v2427, %v2425
    %v2630 = vpack.c.b16 %v2428, %v2426
    %v2631 = vpack.c.b16 %v2431, %v2429
    %v2632 = vpack.c.b16 %v2432, %v2430
    %v2633 = vpack.c.b16 %v2435, %v2433
    %v2634 = vpack.c.b16 %v2436, %v2434
    %v2635 = vpack.c.b16 %v2439, %v2437
    %v2636 = vpack.c.b16 %v2440, %v2438
    %v2637 = vpack.c.b16 %v2443, %v2441
    %v2638 = vpack.c.b16 %v2444, %v2442
    %v2639 = vpack.c.b16 %v2447, %v2445
    %v2640 = vpack.c.b16 %v2448, %v2446
    %v2641 = vpack.c.b16 %v2451, %v2449
    %v2642 = vpack.c.b16 %v2452, %v2450
    %v2643 = vpack.c.b16 %v2455, %v2453
    %v2644 = vpack.c.b16 %v2456, %v2454
    %v2645 = vpack.c.b16 %v2459, %v2457
    %v2646 = vpack.c.b16 %v2460, %v2458
    %v2647 = vpack.c.b16 %v2463, %v2461
    %v2648 = vpack.c.b16 %v2464, %v2462
    %v2649 = vpack.c.b16 %v2467, %v2465
    %v2650 = vpack.c.b16 %v2468, %v2466
    %v2651 = vpack.c.b16 %v2471, %v2469
    %v2652 = vpack.c.b16 %v2472, %v2470
    %v2653 = vpack.c.b16 %v2475, %v2473
    %v2654 = vpack.c.b16 %v2476, %v2474
    %v2655 = vpack.c.b16 %v2479, %v2477
    %v2656 = vpack.c.b16 %v2480, %v2478
    %v2657 = vpack.c.b16 %v2483, %v2481
    %v2658 = vpack.c.b16 %v2484, %v2482
    %v2659 = vpack.c.b16 %v2487, %v2485
    %v2660 = vpack.c.b16 %v2488, %v2486
    %v2661 = vpack.c.b16 %v2491, %v2489
    %v2662 = vpack.c.b16 %v2492, %v2490
    %v2663 = vpack.c.b16 %v2495, %v2493
    %v2664 = vpack.c.b16 %v2496, %v2494
    %v2665 = vpack.c.b16 %v2499, %v2497
    %v2666 = vpack.c.b16 %v2500, %v2498
    %v2667 = vpack.c.b16 %v2503, %v2501
    %v2668 = vpack.c.b16 %v2504, %v2502
    %v2669 = vpack.c.b16 %v2507, %v2505
    %v2670 = vpack.c.b16 %v2508, %v2506
    %v2671 = vpack.c.b16 %v2511, %v2509
    %v2672 = vpack.c.b16 %v2512, %v2510
    %v2673 = vpack.c.b16 %v2515, %v2513
    %v2674 = vpack.c.b16 %v2516, %v2514
    %v2675 = vpack.c.b16 %v2519, %v2517
    %v2676 = vpack.c.b16 %v2520, %v2518
    %v2677 = vpack.c.b16 %v2523, %v2521
    %v2678 = vpack.c.b16 %v2524, %v2522
    %v2679 = vpack.c.b16 %v2527, %v2525
    %v2680 = vpack.c.b16 %v2528, %v2526
    %v2681 = vpack.c.b16 %v2531, %v2529
    %v2682 = vpack.c.b16 %v2532, %v2530
    %v2683 = vpack.c.b16 %v2535, %v2533
    %v2684 = vpack.c.b16 %v2536, %v2534
    %v2685 = vpack.c.b16 %v2539, %v2537
    %v2686 = vpack.c.b16 %v2540, %v2538
    %v2687 = vpack.c.b16 %v2543, %v2541
    %v2688 = vpack.c.b16 %v2544, %v2542
    %v2689 = vpack.c.b16 %v2547, %v2545
    %v2690 = vpack.c.b16 %v2548, %v2546
    %v2691 = vpack.c.b16 %v2551, %v2549
    %v2692 = vpack.c.b16 %v2552, %v2550
    %v2693 = vpack.c.b16 %v2555, %v2553
    %v2694 = vpack.c.b16 %v2556, %v2554
    %v2695 = vpack.c.b16 %v2559, %v2557
    %v2696 = vpack.c.b16 %v2560, %v2558
    %v2697 = vpack.c.b16 %v2563, %v2561
    %v2698 = vpack.c.b16 %v2564, %v2562
    %v2699 = vpack.c.b16 %v2567, %v2565
    %v2700 = vpack.c.b16 %v2568, %v2566
    %v2701 = vpack.c.b16 %v2571, %v2569
    %v2702 = vpack.c.b16 %v2572, %v2570
    %v2703 = vpack.c.b16 %v2575, %v2573
    %v2704 = vpack.c.b16 %v2576, %v2574
    %2833 = vmatprep.subr.bf16.mxu0 %v2578
    %2834 = vmatpush1.bf16.msra.mxu0 %v2577
    %2835 = vmatprep.subr.bf16.mxu0 %v2580
    %2836 = vmatpush1.bf16.msra.mxu0 %v2579
    %2837 = vmatprep.subr.bf16.mxu0 %v2582
    %2838 = vmatpush1.bf16.msra.mxu0 %v2581
    %2839 = vmatprep.subr.bf16.mxu0 %v2584
    %2840 = vmatpush1.bf16.msra.mxu0 %v2583
    %2841 = vmatprep.subr.bf16.mxu0 %v2586
    %2842 = vmatpush1.bf16.msra.mxu0 %v2585
    %2843 = vmatprep.subr.bf16.mxu0 %v2588
    %2844 = vmatpush1.bf16.msra.mxu0 %v2587
    %2845 = vmatprep.subr.bf16.mxu0 %v2590
    %2846 = vmatpush1.bf16.msra.mxu0 %v2589
    %2847 = vmatprep.subr.bf16.mxu0 %v2592
    %2848 = vmatpush1.bf16.msra.mxu0 %v2591
    %2849 = vmatprep.subr.bf16.mxu0 %v2594
    %2850 = vmatpush1.bf16.msra.mxu0 %v2593
    %2851 = vmatprep.subr.bf16.mxu0 %v2596
    %2852 = vmatpush1.bf16.msra.mxu0 %v2595
    %2853 = vmatprep.subr.bf16.mxu0 %v2598
    %2854 = vmatpush1.bf16.msra.mxu0 %v2597
    %2855 = vmatprep.subr.bf16.mxu0 %v2600
    %2856 = vmatpush1.bf16.msra.mxu0 %v2599
    %2857 = vmatprep.subr.bf16.mxu0 %v2602
    %2858 = vmatpush1.bf16.msra.mxu0 %v2601
    %2859 = vmatprep.subr.bf16.mxu0 %v2604
    %2860 = vmatpush1.bf16.msra.mxu0 %v2603
    %2861 = vmatprep.subr.bf16.mxu0 %v2606
    %2862 = vmatpush1.bf16.msra.mxu0 %v2605
    %2863 = vmatprep.subr.bf16.mxu0 %v2608
    %2864 = vmatpush1.bf16.msra.mxu0 %v2607
    %2865 = vmatprep.mubr.bf16.mxu0 %v2058
    %2866 = vmatmul.mubr.bf16.gmra.mrb[0].mxu0 %v2057
    %v2867 = vpop.f32.mrb[0].mxu0
    %v2868 = vadd.f32 0.0, %v2867
    %v2869 = vpop.f32.mrb[0].mxu0
    %v2870 = vadd.f32 0.0, %v2869
    %v2871 = vpop.f32.mrb[0].mxu0
    %v2872 = vadd.f32 0.0, %v2871
    %v2873 = vpop.f32.mrb[0].mxu0
    %v2874 = vadd.f32 0.0, %v2873
    %2875 = vdwg.mxu0
    %2876 = vmatprep.subr.bf16.mxu0 %v2610
    %2877 = vmatpush1.bf16.msra.mxu0 %v2609
    %2878 = vmatprep.subr.bf16.mxu0 %v2612
    %2879 = vmatpush1.bf16.msra.mxu0 %v2611
    %2880 = vmatprep.subr.bf16.mxu0 %v2614
    %2881 = vmatpush1.bf16.msra.mxu0 %v2613
    %2882 = vmatprep.subr.bf16.mxu0 %v2616
    %2883 = vmatpush1.bf16.msra.mxu0 %v2615
    %2884 = vmatprep.subr.bf16.mxu0 %v2618
    %2885 = vmatpush1.bf16.msra.mxu0 %v2617
    %2886 = vmatprep.subr.bf16.mxu0 %v2620
    %2887 = vmatpush1.bf16.msra.mxu0 %v2619
    %2888 = vmatprep.subr.bf16.mxu0 %v2622
    %2889 = vmatpush1.bf16.msra.mxu0 %v2621
    %2890 = vmatprep.subr.bf16.mxu0 %v2624
    %2891 = vmatpush1.bf16.msra.mxu0 %v2623
    %2892 = vmatprep.subr.bf16.mxu0 %v2626
    %2893 = vmatpush1.bf16.msra.mxu0 %v2625
    %2894 = vmatprep.subr.bf16.mxu0 %v2628
    %2895 = vmatpush1.bf16.msra.mxu0 %v2627
    %2896 = vmatprep.subr.bf16.mxu0 %v2630
    %2897 = vmatpush1.bf16.msra.mxu0 %v2629
    %2898 = vmatprep.subr.bf16.mxu0 %v2632
    %2899 = vmatpush1.bf16.msra.mxu0 %v2631
    %2900 = vmatprep.subr.bf16.mxu0 %v2634
    %2901 = vmatpush1.bf16.msra.mxu0 %v2633
    %2902 = vmatprep.subr.bf16.mxu0 %v2636
    %2903 = vmatpush1.bf16.msra.mxu0 %v2635
    %2904 = vmatprep.subr.bf16.mxu0 %v2638
    %2905 = vmatpush1.bf16.msra.mxu0 %v2637
    %2906 = vmatprep.subr.bf16.mxu0 %v2640
    %2907 = vmatpush1.bf16.msra.mxu0 %v2639
    %2908 = vmatprep.mubr.bf16.mxu0 %v2060
    %2909 = vmatmul.mubr.bf16.gmra.mrb[0].mxu0 %v2059
    %v2910 = vpop.f32.mrb[0].mxu0
    %v2911 = vadd.f32 %v2868, %v2910
    %v2912 = vpop.f32.mrb[0].mxu0
    %v2913 = vadd.f32 %v2870, %v2912
    %v2914 = vpop.f32.mrb[0].mxu0
    %v2915 = vadd.f32 %v2872, %v2914
    %v2916 = vpop.f32.mrb[0].mxu0
    %v2917 = vadd.f32 %v2874, %v2916
    %2918 = vdwg.mxu0
    %2919 = vmatprep.subr.bf16.mxu0 %v2642
    %2920 = vmatpush1.bf16.msra.mxu0 %v2641
    %2921 = vmatprep.subr.bf16.mxu0 %v2644
    %2922 = vmatpush1.bf16.msra.mxu0 %v2643
    %2923 = vmatprep.subr.bf16.mxu0 %v2646
    %2924 = vmatpush1.bf16.msra.mxu0 %v2645
    %2925 = vmatprep.subr.bf16.mxu0 %v2648
    %2926 = vmatpush1.bf16.msra.mxu0 %v2647
    %2927 = vmatprep.subr.bf16.mxu0 %v2650
    %2928 = vmatpush1.bf16.msra.mxu0 %v2649
    %2929 = vmatprep.subr.bf16.mxu0 %v2652
    %2930 = vmatpush1.bf16.msra.mxu0 %v2651
    %2931 = vmatprep.subr.bf16.mxu0 %v2654
    %2932 = vmatpush1.bf16.msra.mxu0 %v2653
    %2933 = vmatprep.subr.bf16.mxu0 %v2656
    %2934 = vmatpush1.bf16.msra.mxu0 %v2655
    %2935 = vmatprep.subr.bf16.mxu0 %v2658
    %2936 = vmatpush1.bf16.msra.mxu0 %v2657
    %2937 = vmatprep.subr.bf16.mxu0 %v2660
    %2938 = vmatpush1.bf16.msra.mxu0 %v2659
    %2939 = vmatprep.subr.bf16.mxu0 %v2662
    %2940 = vmatpush1.bf16.msra.mxu0 %v2661
    %2941 = vmatprep.subr.bf16.mxu0 %v2664
    %2942 = vmatpush1.bf16.msra.mxu0 %v2663
    %2943 = vmatprep.subr.bf16.mxu0 %v2666
    %2944 = vmatpush1.bf16.msra.mxu0 %v2665
    %2945 = vmatprep.subr.bf16.mxu0 %v2668
    %2946 = vmatpush1.bf16.msra.mxu0 %v2667
    %2947 = vmatprep.subr.bf16.mxu0 %v2670
    %2948 = vmatpush1.bf16.msra.mxu0 %v2669
    %2949 = vmatprep.subr.bf16.mxu0 %v2672
    %2950 = vmatpush1.bf16.msra.mxu0 %v2671
    %2951 = vmatprep.mubr.bf16.mxu0 %v2062
    %2952 = vmatmul.mubr.bf16.gmra.mrb[0].mxu0 %v2061
    %v2953 = vpop.f32.mrb[0].mxu0
    %v2954 = vadd.f32 %v2911, %v2953
    %v2955 = vpop.f32.mrb[0].mxu0
    %v2956 = vadd.f32 %v2913, %v2955
    %v2957 = vpop.f32.mrb[0].mxu0
    %v2958 = vadd.f32 %v2915, %v2957
    %v2959 = vpop.f32.mrb[0].mxu0
    %v2960 = vadd.f32 %v2917, %v2959
    %2961 = vdwg.mxu0
    %2962 = vmatprep.subr.bf16.mxu0 %v2674
    %2963 = vmatpush1.bf16.msra.mxu0 %v2673
    %2964 = vmatprep.subr.bf16.mxu0 %v2676
    %2965 = vmatpush1.bf16.msra.mxu0 %v2675
    %2966 = vmatprep.subr.bf16.mxu0 %v2678
    %2967 = vmatpush1.bf16.msra.mxu0 %v2677
    %2968 = vmatprep.subr.bf16.mxu0 %v2680
    %2969 = vmatpush1.bf16.msra.mxu0 %v2679
    %2970 = vmatprep.subr.bf16.mxu0 %v2682
    %2971 = vmatpush1.bf16.msra.mxu0 %v2681
    %2972 = vmatprep.subr.bf16.mxu0 %v2684
    %2973 = vmatpush1.bf16.msra.mxu0 %v2683
    %2974 = vmatprep.subr.bf16.mxu0 %v2686
    %2975 = vmatpush1.bf16.msra.mxu0 %v2685
    %2976 = vmatprep.subr.bf16.mxu0 %v2688
    %2977 = vmatpush1.bf16.msra.mxu0 %v2687
    %2978 = vmatprep.subr.bf16.mxu0 %v2690
    %2979 = vmatpush1.bf16.msra.mxu0 %v2689
    %2980 = vmatprep.subr.bf16.mxu0 %v2692
    %2981 = vmatpush1.bf16.msra.mxu0 %v2691
    %2982 = vmatprep.subr.bf16.mxu0 %v2694
    %2983 = vmatpush1.bf16.msra.mxu0 %v2693
    %2984 = vmatprep.subr.bf16.mxu0 %v2696
    %2985 = vmatpush1.bf16.msra.mxu0 %v2695
    %2986 = vmatprep.subr.bf16.mxu0 %v2698
    %2987 = vmatpush1.bf16.msra.mxu0 %v2697
    %2988 = vmatprep.subr.bf16.mxu0 %v2700
    %2989 = vmatpush1.bf16.msra.mxu0 %v2699
    %2990 = vmatprep.subr.bf16.mxu0 %v2702
    %2991 = vmatpush1.bf16.msra.mxu0 %v2701
    %2992 = vmatprep.subr.bf16.mxu0 %v2704
    %2993 = vmatpush1.bf16.msra.mxu0 %v2703
    %2994 = vmatprep.mubr.bf16.mxu0 %v2064
    %2995 = vmatmul.mubr.bf16.gmra.mrb[0].mxu0 %v2063
    %v2996 = vpop.f32.mrb[0].mxu0
    %v2997 = vadd.f32 %v2954, %v2996
    %v2998 = vpop.f32.mrb[0].mxu0
    %v2999 = vadd.f32 %v2956, %v2998
    %v3000 = vpop.f32.mrb[0].mxu0
    %v3001 = vadd.f32 %v2958, %v3000
    %v3002 = vpop.f32.mrb[0].mxu0
    %v3003 = vadd.f32 %v2960, %v3002
    %3004 = vdwg.mxu0
    %v3005 = vadd.f32 %v2997, %v3001
    %v3006 = vrot.slane %v3005, 4
    %v3007 = vadd.f32 %v3005, %v3006
    %v3008 = vrot.slane %v3007, 2
    %v3009 = vadd.f32 %v3007, %v3008
    %v3010 = vrot.slane %v3009, 1
    %v3011 = vadd.f32 %v3009, %v3010
    %v3012 = vadd.f32 %v2999, %v3003
    %v3013 = vrot.slane %v3012, 4
    %v3014 = vadd.f32 %v3012, %v3013
    %v3015 = vrot.slane %v3014, 2
    %v3016 = vadd.f32 %v3014, %v3015
    %v3017 = vrot.slane %v3016, 1
    %v3018 = vadd.f32 %v3016, %v3017
    %v3019 = vmul.f32 %v2997, %v2997
    %v3020 = vmul.f32 %v2999, %v2999
    %v3021 = vmul.f32 %v3001, %v3001
    %v3022 = vmul.f32 %v3003, %v3003
    %v3023 = vadd.f32 %v3019, %v3021
    %v3024 = vrot.slane %v3023, 4
    %v3025 = vadd.f32 %v3023, %v3024
    %v3026 = vrot.slane %v3025, 2
    %v3027 = vadd.f32 %v3025, %v3026
    %v3028 = vrot.slane %v3027, 1
    %v3029 = vadd.f32 %v3027, %v3028
    %v3030 = vadd.f32 %v3020, %v3022
    %v3031 = vrot.slane %v3030, 4
    %v3032 = vadd.f32 %v3030, %v3031
    %v3033 = vrot.slane %v3032, 2
    %v3034 = vadd.f32 %v3032, %v3033
    %v3035 = vrot.slane %v3034, 1
    %v3036 = vadd.f32 %v3034, %v3035
    %v3037 = vld [vmem:[%s12] sm:$0xff]
    %v3038 = vld [vmem:[%s12 + $0x8] sm:$0xff]
    %v3039 = vld [vmem:[%s12 + $0x10] sm:$0xff]
    %v3040 = vld [vmem:[%s12 + $0x18] sm:$0xff]
    %v3041 = vld [vmem:[%s12 + $0x20] sm:$0xff]
    %v3042 = vld [vmem:[%s12 + $0x28] sm:$0xff]
    %v3043 = vld [vmem:[%s12 + $0x30] sm:$0xff]
    %v3044 = vld [vmem:[%s12 + $0x38] sm:$0xff]
    %v3045 = vld [vmem:[%s12 + $0x40] sm:$0xff]
    %v3046 = vld [vmem:[%s12 + $0x48] sm:$0xff]
    %v3047 = vld [vmem:[%s12 + $0x50] sm:$0xff]
    %v3048 = vld [vmem:[%s12 + $0x58] sm:$0xff]
    %v3049 = vld [vmem:[%s12 + $0x60] sm:$0xff]
    %v3050 = vld [vmem:[%s12 + $0x68] sm:$0xff]
    %v3051 = vld [vmem:[%s12 + $0x70] sm:$0xff]
    %v3052 = vld [vmem:[%s12 + $0x78] sm:$0xff]
    %v3053 = vld [vmem:[%s12 + $0x80] sm:$0xff]
    %v3054 = vld [vmem:[%s12 + $0x88] sm:$0xff]
    %v3055 = vld [vmem:[%s12 + $0x90] sm:$0xff]
    %v3056 = vld [vmem:[%s12 + $0x98] sm:$0xff]
    %v3057 = vld [vmem:[%s12 + $0xa0] sm:$0xff]
    %v3058 = vld [vmem:[%s12 + $0xa8] sm:$0xff]
    %v3059 = vld [vmem:[%s12 + $0xb0] sm:$0xff]
    %v3060 = vld [vmem:[%s12 + $0xb8] sm:$0xff]
    %v3061 = vld [vmem:[%s12 + $0xc0] sm:$0xff]
    %v3062 = vld [vmem:[%s12 + $0xc8] sm:$0xff]
    %v3063 = vld [vmem:[%s12 + $0xd0] sm:$0xff]
    %v3064 = vld [vmem:[%s12 + $0xd8] sm:$0xff]
    %v3065 = vld [vmem:[%s12 + $0xe0] sm:$0xff]
    %v3066 = vld [vmem:[%s12 + $0xe8] sm:$0xff]
    %v3067 = vld [vmem:[%s12 + $0xf0] sm:$0xff]
    %v3068 = vld [vmem:[%s12 + $0xf8] sm:$0xff]
    %3069 = vmatprep.subr.mxu0 0.0
    %3070 = vmatpush1.msra.mxu0 %v3037
    %3071 = vmatprep.subr.mxu0 0.0
    %3072 = vmatpush1.msra.mxu0 %v3038
    %3073 = vmatprep.subr.mxu0 0.0
    %3074 = vmatpush1.msra.mxu0 %v3039
    %3075 = vmatprep.subr.mxu0 0.0
    %3076 = vmatpush1.msra.mxu0 %v3040
    %3077 = vmatprep.subr.mxu0 0.0
    %3078 = vmatpush1.msra.mxu0 %v3041
    %3079 = vmatprep.subr.mxu0 0.0
    %3080 = vmatpush1.msra.mxu0 %v3042
    %3081 = vmatprep.subr.mxu0 0.0
    %3082 = vmatpush1.msra.mxu0 %v3043
    %3083 = vmatprep.subr.mxu0 0.0
    %3084 = vmatpush1.msra.mxu0 %v3044
    %3085 = vmatprep.subr.mxu0 0.0
    %3086 = vmatpush1.msra.mxu0 %v3045
    %3087 = vmatprep.subr.mxu0 0.0
    %3088 = vmatpush1.msra.mxu0 %v3046
    %3089 = vmatprep.subr.mxu0 0.0
    %3090 = vmatpush1.msra.mxu0 %v3047
    %3091 = vmatprep.subr.mxu0 0.0
    %3092 = vmatpush1.msra.mxu0 %v3048
    %3093 = vmatprep.subr.mxu0 0.0
    %3094 = vmatpush1.msra.mxu0 %v3049
    %3095 = vmatprep.subr.mxu0 0.0
    %3096 = vmatpush1.msra.mxu0 %v3050
    %3097 = vmatprep.subr.mxu0 0.0
    %3098 = vmatpush1.msra.mxu0 %v3051
    %3099 = vmatprep.subr.mxu0 0.0
    %3100 = vmatpush1.msra.mxu0 %v3052
    %3101 = vmatprep.subr.mxu0 0.0
    %3102 = vmatpush1.msra.mxu0 %v3053
    %3103 = vmatprep.subr.mxu0 0.0
    %3104 = vmatpush1.msra.mxu0 %v3054
    %3105 = vmatprep.subr.mxu0 0.0
    %3106 = vmatpush1.msra.mxu0 %v3055
    %3107 = vmatprep.subr.mxu0 0.0
    %3108 = vmatpush1.msra.mxu0 %v3056
    %3109 = vmatprep.subr.mxu0 0.0
    %3110 = vmatpush1.msra.mxu0 %v3057
    %3111 = vmatprep.subr.mxu0 0.0
    %3112 = vmatpush1.msra.mxu0 %v3058
    %3113 = vmatprep.subr.mxu0 0.0
    %3114 = vmatpush1.msra.mxu0 %v3059
    %3115 = vmatprep.subr.mxu0 0.0
    %3116 = vmatpush1.msra.mxu0 %v3060
    %3117 = vmatprep.subr.mxu0 0.0
    %3118 = vmatpush1.msra.mxu0 %v3061
    %3119 = vmatprep.subr.mxu0 0.0
    %3120 = vmatpush1.msra.mxu0 %v3062
    %3121 = vmatprep.subr.mxu0 0.0
    %3122 = vmatpush1.msra.mxu0 %v3063
    %3123 = vmatprep.subr.mxu0 0.0
    %3124 = vmatpush1.msra.mxu0 %v3064
    %3125 = vmatprep.subr.mxu0 0.0
    %3126 = vmatpush1.msra.mxu0 %v3065
    %3127 = vmatprep.subr.mxu0 0.0
    %3128 = vmatpush1.msra.mxu0 %v3066
    %3129 = vmatprep.subr.mxu0 0.0
    %3130 = vmatpush1.msra.mxu0 %v3067
    %3131 = vmatprep.subr.mxu0 0.0
    %3132 = vmatpush1.msra.mxu0 %v3068
    %3133 = vmatprep.mubr.f32.mxu0 %v3018
    %3134 = vmatmul.mubr.f32.gmra.mrb[0].mxu0 %v3011
    %v3135 = vpop.f32.mrb[0].mxu0
    %v3136 = vadd.f32 0.0, %v3135
    %v3137 = vpop.f32.mrb[0].mxu0
    %3138 = vdwg.mxu0
    %v3139 = vmul.f32 %v3136, 0.0078125
    %3140 = vmatprep.subr.mxu0 0.0
    %3141 = vmatpush1.msra.mxu0 %v3037
    %3142 = vmatprep.subr.mxu0 0.0
    %3143 = vmatpush1.msra.mxu0 %v3038
    %3144 = vmatprep.subr.mxu0 0.0
    %3145 = vmatpush1.msra.mxu0 %v3039
    %3146 = vmatprep.subr.mxu0 0.0
    %3147 = vmatpush1.msra.mxu0 %v3040
    %3148 = vmatprep.subr.mxu0 0.0
    %3149 = vmatpush1.msra.mxu0 %v3041
    %3150 = vmatprep.subr.mxu0 0.0
    %3151 = vmatpush1.msra.mxu0 %v3042
    %3152 = vmatprep.subr.mxu0 0.0
    %3153 = vmatpush1.msra.mxu0 %v3043
    %3154 = vmatprep.subr.mxu0 0.0
    %3155 = vmatpush1.msra.mxu0 %v3044
    %3156 = vmatprep.subr.mxu0 0.0
    %3157 = vmatpush1.msra.mxu0 %v3045
    %3158 = vmatprep.subr.mxu0 0.0
    %3159 = vmatpush1.msra.mxu0 %v3046
    %3160 = vmatprep.subr.mxu0 0.0
    %3161 = vmatpush1.msra.mxu0 %v3047
    %3162 = vmatprep.subr.mxu0 0.0
    %3163 = vmatpush1.msra.mxu0 %v3048
    %3164 = vmatprep.subr.mxu0 0.0
    %3165 = vmatpush1.msra.mxu0 %v3049
    %3166 = vmatprep.subr.mxu0 0.0
    %3167 = vmatpush1.msra.mxu0 %v3050
    %3168 = vmatprep.subr.mxu0 0.0
    %3169 = vmatpush1.msra.mxu0 %v3051
    %3170 = vmatprep.subr.mxu0 0.0
    %3171 = vmatpush1.msra.mxu0 %v3052
    %3172 = vmatprep.subr.mxu0 0.0
    %3173 = vmatpush1.msra.mxu0 %v3053
    %3174 = vmatprep.subr.mxu0 0.0
    %3175 = vmatpush1.msra.mxu0 %v3054
    %3176 = vmatprep.subr.mxu0 0.0
    %3177 = vmatpush1.msra.mxu0 %v3055
    %3178 = vmatprep.subr.mxu0 0.0
    %3179 = vmatpush1.msra.mxu0 %v3056
    %3180 = vmatprep.subr.mxu0 0.0
    %3181 = vmatpush1.msra.mxu0 %v3057
    %3182 = vmatprep.subr.mxu0 0.0
    %3183 = vmatpush1.msra.mxu0 %v3058
    %3184 = vmatprep.subr.mxu0 0.0
    %3185 = vmatpush1.msra.mxu0 %v3059
    %3186 = vmatprep.subr.mxu0 0.0
    %3187 = vmatpush1.msra.mxu0 %v3060
    %3188 = vmatprep.subr.mxu0 0.0
    %3189 = vmatpush1.msra.mxu0 %v3061
    %3190 = vmatprep.subr.mxu0 0.0
    %3191 = vmatpush1.msra.mxu0 %v3062
    %3192 = vmatprep.subr.mxu0 0.0
    %3193 = vmatpush1.msra.mxu0 %v3063
    %3194 = vmatprep.subr.mxu0 0.0
    %3195 = vmatpush1.msra.mxu0 %v3064
    %3196 = vmatprep.subr.mxu0 0.0
    %3197 = vmatpush1.msra.mxu0 %v3065
    %3198 = vmatprep.subr.mxu0 0.0
    %3199 = vmatpush1.msra.mxu0 %v3066
    %3200 = vmatprep.subr.mxu0 0.0
    %3201 = vmatpush1.msra.mxu0 %v3067
    %3202 = vmatprep.subr.mxu0 0.0
    %3203 = vmatpush1.msra.mxu0 %v3068
    %3204 = vmatprep.mubr.f32.mxu0 %v3036
    %3205 = vmatmul.mubr.f32.gmra.mrb[0].mxu0 %v3029
    %v3206 = vpop.f32.mrb[0].mxu0
    %v3207 = vadd.f32 0.0, %v3206
    %v3208 = vpop.f32.mrb[0].mxu0
    %3209 = vdwg.mxu0
    %v3210 = vmul.f32 %v3207, 0.0078125
    %v3211 = vmul.f32 %v3139, %v3139
    %v3212 = vsub.f32 %v3210, %v3211
    %v3213 = vadd.f32 %v3212, 1e-05
    %v3214 = vrsqrt.pop %v3213
    %v3215 = vld [vmem:[#allocation5] sm:$0x1]
    %v3216 = vmul.f32 %v3215, %v3214
    %v3217 = vld [vmem:[#allocation5 + $0x1] sm:$0x1]
    %v3218 = vmul.f32 %v3139, %v3216
    %v3219 = vsub.f32 %v3217, %v3218
    %v3220 = vld [vmem:[#allocation7] sm:$0xff]
    %v3221 = vld [vmem:[#allocation7 + $0x8] sm:$0xff]
    %v3222 = vld [vmem:[#allocation7 + $0x10] sm:$0xff]
    %v3223 = vld [vmem:[#allocation7 + $0x18] sm:$0xff]
    %v3224 = vld [vmem:[#allocation7 + $0x20] sm:$0xff]
    %v3225 = vld [vmem:[#allocation7 + $0x28] sm:$0xff]
    %v3226 = vld [vmem:[#allocation7 + $0x30] sm:$0xff]
    %v3227 = vld [vmem:[#allocation7 + $0x38] sm:$0xff]
    %vm3228 = vcmask 261120
    %v3230 = vsel %vm3228, %v3216, 0
    %3232 = vmatprep.subr.mxu0 %v3221
    %3233 = vmatpush1.msra.mxu0 %v3220
    %3234 = vmatprep.subr.mxu0 %v3223
    %3235 = vmatpush1.msra.mxu0 %v3222
    %3236 = vmatprep.subr.mxu0 %v3225
    %3237 = vmatpush1.msra.mxu0 %v3224
    %3238 = vmatprep.subr.mxu0 %v3227
    %3239 = vmatpush1.msra.mxu0 %v3226
    %3240 = vmatprep.subr.mxu0 0.0
    %3241 = vmatpush1.msra.mxu0 0.0
    %3242 = vmatprep.subr.mxu0 0.0
    %3243 = vmatpush1.msra.mxu0 0.0
    %3244 = vmatprep.subr.mxu0 0.0
    %3245 = vmatpush1.msra.mxu0 0.0
    %3246 = vmatprep.subr.mxu0 0.0
    %3247 = vmatpush1.msra.mxu0 0.0
    %3248 = vmatprep.subr.mxu0 0.0
    %3249 = vmatpush1.msra.mxu0 0.0
    %3250 = vmatprep.subr.mxu0 0.0
    %3251 = vmatpush1.msra.mxu0 0.0
    %3252 = vmatprep.subr.mxu0 0.0
    %3253 = vmatpush1.msra.mxu0 0.0
    %3254 = vmatprep.subr.mxu0 0.0
    %3255 = vmatpush1.msra.mxu0 0.0
    %3256 = vmatprep.subr.mxu0 0.0
    %3257 = vmatpush1.msra.mxu0 0.0
    %3258 = vmatprep.subr.mxu0 0.0
    %3259 = vmatpush1.msra.mxu0 0.0
    %3260 = vmatprep.subr.mxu0 0.0
    %3261 = vmatpush1.msra.mxu0 0.0
    %3262 = vmatprep.subr.mxu0 0.0
    %3263 = vmatpush1.msra.mxu0 0.0
    %3264 = vmatprep.subr.mxu0 0.0
    %3265 = vmatpush1.msra.mxu0 0.0
    %3266 = vmatprep.subr.mxu0 0.0
    %3267 = vmatpush1.msra.mxu0 0.0
    %3268 = vmatprep.subr.mxu0 0.0
    %3269 = vmatpush1.msra.mxu0 0.0
    %3270 = vmatprep.subr.mxu0 0.0
    %3271 = vmatpush1.msra.mxu0 0.0
    %3272 = vmatprep.subr.mxu0 0.0
    %3273 = vmatpush1.msra.mxu0 0.0
    %3274 = vmatprep.subr.mxu0 0.0
    %3275 = vmatpush1.msra.mxu0 0.0
    %3276 = vmatprep.subr.mxu0 0.0
    %3277 = vmatpush1.msra.mxu0 0.0
    %3278 = vmatprep.subr.mxu0 0.0
    %3279 = vmatpush1.msra.mxu0 0.0
    %3280 = vmatprep.subr.mxu0 0.0
    %3281 = vmatpush1.msra.mxu0 0.0
    %3282 = vmatprep.subr.mxu0 0.0
    %3283 = vmatpush1.msra.mxu0 0.0
    %3284 = vmatprep.subr.mxu0 0.0
    %3285 = vmatpush1.msra.mxu0 0.0
    %3286 = vmatprep.subr.mxu0 0.0
    %3287 = vmatpush1.msra.mxu0 0.0
    %3288 = vmatprep.subr.mxu0 0.0
    %3289 = vmatpush1.msra.mxu0 0.0
    %3290 = vmatprep.subr.mxu0 0.0
    %3291 = vmatpush1.msra.mxu0 0.0
    %3292 = vmatprep.subr.mxu0 0.0
    %3293 = vmatpush1.msra.mxu0 0.0
    %3294 = vmatprep.subr.mxu0 0.0
    %3295 = vmatpush1.msra.mxu0 0.0
    %3296 = vmatprep.mubr.f32.mxu0 0.0
    %3297 = vmatmul.mubr.f32.gmra.mrb[0].mxu0 %v3230
    %v3298 = vpop.f32.mrb[0].mxu0
    %v3299 = vadd.f32 0.0, %v3298
    %v3300 = vpop.f32.mrb[0].mxu0
    %v3301 = vadd.f32 0.0, %v3300
    %3302 = vdwg.mxu0
    %v3304 = vsel %vm3228, %v3219, 0
    %3306 = vmatprep.subr.mxu0 %v3221
    %3307 = vmatpush1.msra.mxu0 %v3220
    %3308 = vmatprep.subr.mxu0 %v3223
    %3309 = vmatpush1.msra.mxu0 %v3222
    %3310 = vmatprep.subr.mxu0 %v3225
    %3311 = vmatpush1.msra.mxu0 %v3224
    %3312 = vmatprep.subr.mxu0 %v3227
    %3313 = vmatpush1.msra.mxu0 %v3226
    %3314 = vmatprep.subr.mxu0 0.0
    %3315 = vmatpush1.msra.mxu0 0.0
    %3316 = vmatprep.subr.mxu0 0.0
    %3317 = vmatpush1.msra.mxu0 0.0
    %3318 = vmatprep.subr.mxu0 0.0
    %3319 = vmatpush1.msra.mxu0 0.0
    %3320 = vmatprep.subr.mxu0 0.0
    %3321 = vmatpush1.msra.mxu0 0.0
    %3322 = vmatprep.subr.mxu0 0.0
    %3323 = vmatpush1.msra.mxu0 0.0
    %3324 = vmatprep.subr.mxu0 0.0
    %3325 = vmatpush1.msra.mxu0 0.0
    %3326 = vmatprep.subr.mxu0 0.0
    %3327 = vmatpush1.msra.mxu0 0.0
    %3328 = vmatprep.subr.mxu0 0.0
    %3329 = vmatpush1.msra.mxu0 0.0
    %3330 = vmatprep.subr.mxu0 0.0
    %3331 = vmatpush1.msra.mxu0 0.0
    %3332 = vmatprep.subr.mxu0 0.0
    %3333 = vmatpush1.msra.mxu0 0.0
    %3334 = vmatprep.subr.mxu0 0.0
    %3335 = vmatpush1.msra.mxu0 0.0
    %3336 = vmatprep.subr.mxu0 0.0
    %3337 = vmatpush1.msra.mxu0 0.0
    %3338 = vmatprep.subr.mxu0 0.0
    %3339 = vmatpush1.msra.mxu0 0.0
    %3340 = vmatprep.subr.mxu0 0.0
    %3341 = vmatpush1.msra.mxu0 0.0
    %3342 = vmatprep.subr.mxu0 0.0
    %3343 = vmatpush1.msra.mxu0 0.0
    %3344 = vmatprep.subr.mxu0 0.0
    %3345 = vmatpush1.msra.mxu0 0.0
    %3346 = vmatprep.subr.mxu0 0.0
    %3347 = vmatpush1.msra.mxu0 0.0
    %3348 = vmatprep.subr.mxu0 0.0
    %3349 = vmatpush1.msra.mxu0 0.0
    %3350 = vmatprep.subr.mxu0 0.0
    %3351 = vmatpush1.msra.mxu0 0.0
    %3352 = vmatprep.subr.mxu0 0.0
    %3353 = vmatpush1.msra.mxu0 0.0
    %3354 = vmatprep.subr.mxu0 0.0
    %3355 = vmatpush1.msra.mxu0 0.0
    %3356 = vmatprep.subr.mxu0 0.0
    %3357 = vmatpush1.msra.mxu0 0.0
    %3358 = vmatprep.subr.mxu0 0.0
    %3359 = vmatpush1.msra.mxu0 0.0
    %3360 = vmatprep.subr.mxu0 0.0
    %3361 = vmatpush1.msra.mxu0 0.0
    %3362 = vmatprep.subr.mxu0 0.0
    %3363 = vmatpush1.msra.mxu0 0.0
    %3364 = vmatprep.subr.mxu0 0.0
    %3365 = vmatpush1.msra.mxu0 0.0
    %3366 = vmatprep.subr.mxu0 0.0
    %3367 = vmatpush1.msra.mxu0 0.0
    %3368 = vmatprep.subr.mxu0 0.0
    %3369 = vmatpush1.msra.mxu0 0.0
    %3370 = vmatprep.mubr.f32.mxu0 0.0
    %3371 = vmatmul.mubr.f32.gmra.mrb[0].mxu0 %v3304
    %v3372 = vpop.f32.mrb[0].mxu0
    %v3373 = vadd.f32 0.0, %v3372
    %v3374 = vpop.f32.mrb[0].mxu0
    %v3375 = vadd.f32 0.0, %v3374
    %3376 = vdwg.mxu0
    %v3377 = vlaneseq
    %v3378 = vshrl.u32 %v3377, 7
    %v3379 = vsub.s32 0, %v3378
    %v3380 = vrot.slane %v3299, %v3379
    %v3381 = vlaneseq
    %v3382 = vshrl.u32 %v3381, 7
    %v3383 = vsub.s32 0, %v3382
    %v3384 = vrot.slane %v3301, %v3383
    %v3385 = vmul.f32 %v2997, %v3380
    %v3386 = vmul.f32 %v2999, %v3384
    %v3387 = vmul.f32 %v3001, %v3380
    %v3388 = vmul.f32 %v3003, %v3384
    %v3389 = vlaneseq
    %v3390 = vshrl.u32 %v3389, 7
    %v3391 = vsub.s32 0, %v3390
    %v3392 = vrot.slane %v3373, %v3391
    %v3393 = vlaneseq
    %v3394 = vshrl.u32 %v3393, 7
    %v3395 = vsub.s32 0, %v3394
    %v3396 = vrot.slane %v3375, %v3395
    %v3397 = vadd.f32 %v3385, %v3392
    %v3398 = vadd.f32 %v3386, %v3396
    %v3399 = vadd.f32 %v3387, %v3392
    %v3400 = vadd.f32 %v3388, %v3396
    %vm3401 = vcmp.gt.f32.partialorder %v3397, 0.0
    %vm3402 = vcmp.gt.f32.partialorder %v3398, 0.0
    %vm3403 = vcmp.gt.f32.partialorder %v3399, 0.0
    %vm3404 = vcmp.gt.f32.partialorder %v3400, 0.0
    %v3405 = vmul.f32 %v3397, 0.2
    %v3406 = vmul.f32 %v3398, 0.2
    %v3407 = vmul.f32 %v3399, 0.2
    %v3408 = vmul.f32 %v3400, 0.2
    %v3409 = vsel %vm3401, %v3397, %v3405
    %v3410 = vsel %vm3402, %v3398, %v3406
    %v3411 = vsel %vm3403, %v3399, %v3407
    %v3412 = vsel %vm3404, %v3400, %v3408
    %v3413 = vpack.c.bf16 %v3411, %v3409
    %v3414 = vpack.c.bf16 %v3412, %v3410
    %v3415 = vld [vmem:[%s14] sm:$0xf]
    %v3416 = vld [vmem:[%s14 + $0x4] sm:$0xf]
    %v3417 = vld [vmem:[%s14 + $0x8] sm:$0xf]
    %v3418 = vld [vmem:[%s14 + $0xc] sm:$0xf]
    %v3423 = vunpack.c.l.b16 %v3415
    %v3424 = vunpack.c.l.b16 %v3416
    %v3425 = vunpack.c.l.b16 %v3417
    %v3426 = vunpack.c.l.b16 %v3418
    %v3427 = vpack.c.b16 %v3424, %v3423
    %v3428 = vpack.c.b16 %v3426, %v3425
    %vm3429 = vcmask 130048
    %v3431 = vsel %vm3429, %v3427, 0
    %v3434 = vsel %vm3429, %v3428, 0
    %3436 = vmatprep.subr.bf16.mxu0 %v3414
    %3437 = vmatpush1.bf16.msra.mxu0 %v3413
    %3438 = vmatprep.subr.bf16.mxu0 0
    %3439 = vmatpush1.bf16.msra.mxu0 0
    %3440 = vmatprep.subr.bf16.mxu0 0
    %3441 = vmatpush1.bf16.msra.mxu0 0
    %3442 = vmatprep.subr.bf16.mxu0 0
    %3443 = vmatpush1.bf16.msra.mxu0 0
    %3444 = vmatprep.subr.bf16.mxu0 0
    %3445 = vmatpush1.bf16.msra.mxu0 0
    %3446 = vmatprep.subr.bf16.mxu0 0
    %3447 = vmatpush1.bf16.msra.mxu0 0
    %3448 = vmatprep.subr.bf16.mxu0 0
    %3449 = vmatpush1.bf16.msra.mxu0 0
    %3450 = vmatprep.subr.bf16.mxu0 0
    %3451 = vmatpush1.bf16.msra.mxu0 0
    %3452 = vmatprep.subr.bf16.mxu0 0
    %3453 = vmatpush1.bf16.msra.mxu0 0
    %3454 = vmatprep.subr.bf16.mxu0 0
    %3455 = vmatpush1.bf16.msra.mxu0 0
    %3456 = vmatprep.subr.bf16.mxu0 0
    %3457 = vmatpush1.bf16.msra.mxu0 0
    %3458 = vmatprep.subr.bf16.mxu0 0
    %3459 = vmatpush1.bf16.msra.mxu0 0
    %3460 = vmatprep.subr.bf16.mxu0 0
    %3461 = vmatpush1.bf16.msra.mxu0 0
    %3462 = vmatprep.subr.bf16.mxu0 0
    %3463 = vmatpush1.bf16.msra.mxu0 0
    %3464 = vmatprep.subr.bf16.mxu0 0
    %3465 = vmatpush1.bf16.msra.mxu0 0
    %3466 = vmatprep.subr.bf16.mxu0 0
    %3467 = vmatpush1.bf16.msra.mxu0 0
    %3468 = vmatprep.mubr.bf16.mxu0 0
    %3469 = vmatmul.mubr.bf16.gmra.mrb[0].mxu0 %v3431
    %v3470 = vpop.f32.mrb[0].mxu0
    %v3471 = vadd.f32 0.0, %v3470
    %v3472 = vpop.f32.mrb[0].mxu0
    %v3473 = vadd.f32 0.0, %v3472
    %v3474 = vpop.f32.mrb[0].mxu0
    %v3475 = vadd.f32 0.0, %v3474
    %v3476 = vpop.f32.mrb[0].mxu0
    %v3477 = vadd.f32 0.0, %v3476
    %3478 = vmatprep.mubr.bf16.mxu0 0
    %3479 = vmatmul.mubr.bf16.gmra.mrb[0].mxu0 %v3434
    %v3480 = vpop.f32.mrb[0].mxu0
    %v3481 = vadd.f32 0.0, %v3480
    %v3482 = vpop.f32.mrb[0].mxu0
    %v3483 = vadd.f32 0.0, %v3482
    %v3484 = vpop.f32.mrb[0].mxu0
    %v3485 = vadd.f32 0.0, %v3484
    %v3486 = vpop.f32.mrb[0].mxu0
    %v3487 = vadd.f32 0.0, %v3486
    %3488 = vdwg.mxu0
    %s3489 = scalar_lea.vmem %s14, 16
    %v3490 = vld [vmem:[%s3489] sm:$0xf]
    %v3491 = vld [vmem:[%s3489 + $0x4] sm:$0xf]
    %v3492 = vld [vmem:[%s3489 + $0x8] sm:$0xf]
    %v3493 = vld [vmem:[%s3489 + $0xc] sm:$0xf]
    %v3498 = vunpack.c.l.b16 %v3490
    %v3499 = vunpack.c.l.b16 %v3491
    %v3500 = vunpack.c.l.b16 %v3492
    %v3501 = vunpack.c.l.b16 %v3493
    %v3502 = vpack.c.b16 %v3499, %v3498
    %v3503 = vpack.c.b16 %v3501, %v3500
    %v3505 = vsel %vm3429, %v3502, 0
    %v3508 = vsel %vm3429, %v3503, 0
    %3510 = vmatprep.subr.bf16.mxu0 %v3414
    %3511 = vmatpush1.bf16.msra.mxu0 %v3413
    %3512 = vmatprep.subr.bf16.mxu0 0
    %3513 = vmatpush1.bf16.msra.mxu0 0
    %3514 = vmatprep.subr.bf16.mxu0 0
    %3515 = vmatpush1.bf16.msra.mxu0 0
    %3516 = vmatprep.subr.bf16.mxu0 0
    %3517 = vmatpush1.bf16.msra.mxu0 0
    %3518 = vmatprep.subr.bf16.mxu0 0
    %3519 = vmatpush1.bf16.msra.mxu0 0
    %3520 = vmatprep.subr.bf16.mxu0 0
    %3521 = vmatpush1.bf16.msra.mxu0 0
    %3522 = vmatprep.subr.bf16.mxu0 0
    %3523 = vmatpush1.bf16.msra.mxu0 0
    %3524 = vmatprep.subr.bf16.mxu0 0
    %3525 = vmatpush1.bf16.msra.mxu0 0
    %3526 = vmatprep.subr.bf16.mxu0 0
    %3527 = vmatpush1.bf16.msra.mxu0 0
    %3528 = vmatprep.subr.bf16.mxu0 0
    %3529 = vmatpush1.bf16.msra.mxu0 0
    %3530 = vmatprep.subr.bf16.mxu0 0
    %3531 = vmatpush1.bf16.msra.mxu0 0
    %3532 = vmatprep.subr.bf16.mxu0 0
    %3533 = vmatpush1.bf16.msra.mxu0 0
    %3534 = vmatprep.subr.bf16.mxu0 0
    %3535 = vmatpush1.bf16.msra.mxu0 0
    %3536 = vmatprep.subr.bf16.mxu0 0
    %3537 = vmatpush1.bf16.msra.mxu0 0
    %3538 = vmatprep.subr.bf16.mxu0 0
    %3539 = vmatpush1.bf16.msra.mxu0 0
    %3540 = vmatprep.subr.bf16.mxu0 0
    %3541 = vmatpush1.bf16.msra.mxu0 0
    %3542 = vmatprep.mubr.bf16.mxu0 0
    %3543 = vmatmul.mubr.bf16.gmra.mrb[0].mxu0 %v3505
    %v3544 = vpop.f32.mrb[0].mxu0
    %v3545 = vadd.f32 0.0, %v3544
    %v3546 = vpop.f32.mrb[0].mxu0
    %v3547 = vadd.f32 0.0, %v3546
    %v3548 = vpop.f32.mrb[0].mxu0
    %v3549 = vadd.f32 0.0, %v3548
    %v3550 = vpop.f32.mrb[0].mxu0
    %v3551 = vadd.f32 0.0, %v3550
    %3552 = vmatprep.mubr.bf16.mxu0 0
    %3553 = vmatmul.mubr.bf16.gmra.mrb[0].mxu0 %v3508
    %v3554 = vpop.f32.mrb[0].mxu0
    %v3555 = vadd.f32 0.0, %v3554
    %v3556 = vpop.f32.mrb[0].mxu0
    %v3557 = vadd.f32 0.0, %v3556
    %v3558 = vpop.f32.mrb[0].mxu0
    %v3559 = vadd.f32 0.0, %v3558
    %v3560 = vpop.f32.mrb[0].mxu0
    %v3561 = vadd.f32 0.0, %v3560
    %3562 = vdwg.mxu0
    %s3563 = scalar_lea.vmem %s14, 32
    %v3564 = vld [vmem:[%s3563] sm:$0xf]
    %v3565 = vld [vmem:[%s3563 + $0x4] sm:$0xf]
    %v3566 = vld [vmem:[%s3563 + $0x8] sm:$0xf]
    %v3567 = vld [vmem:[%s3563 + $0xc] sm:$0xf]
    %v3572 = vunpack.c.l.b16 %v3564
    %v3573 = vunpack.c.l.b16 %v3565
    %v3574 = vunpack.c.l.b16 %v3566
    %v3575 = vunpack.c.l.b16 %v3567
    %v3576 = vpack.c.b16 %v3573, %v3572
    %v3577 = vpack.c.b16 %v3575, %v3574
    %v3579 = vsel %vm3429, %v3576, 0
    %v3582 = vsel %vm3429, %v3577, 0
    %3584 = vmatprep.subr.bf16.mxu0 %v3414
    %3585 = vmatpush1.bf16.msra.mxu0 %v3413
    %3586 = vmatprep.subr.bf16.mxu0 0
    %3587 = vmatpush1.bf16.msra.mxu0 0
    %3588 = vmatprep.subr.bf16.mxu0 0
    %3589 = vmatpush1.bf16.msra.mxu0 0
    %3590 = vmatprep.subr.bf16.mxu0 0
    %3591 = vmatpush1.bf16.msra.mxu0 0
    %3592 = vmatprep.subr.bf16.mxu0 0
    %3593 = vmatpush1.bf16.msra.mxu0 0
    %3594 = vmatprep.subr.bf16.mxu0 0
    %3595 = vmatpush1.bf16.msra.mxu0 0
    %3596 = vmatprep.subr.bf16.mxu0 0
    %3597 = vmatpush1.bf16.msra.mxu0 0
    %3598 = vmatprep.subr.bf16.mxu0 0
    %3599 = vmatpush1.bf16.msra.mxu0 0
    %3600 = vmatprep.subr.bf16.mxu0 0
    %3601 = vmatpush1.bf16.msra.mxu0 0
    %3602 = vmatprep.subr.bf16.mxu0 0
    %3603 = vmatpush1.bf16.msra.mxu0 0
    %3604 = vmatprep.subr.bf16.mxu0 0
    %3605 = vmatpush1.bf16.msra.mxu0 0
    %3606 = vmatprep.subr.bf16.mxu0 0
    %3607 = vmatpush1.bf16.msra.mxu0 0
    %3608 = vmatprep.subr.bf16.mxu0 0
    %3609 = vmatpush1.bf16.msra.mxu0 0
    %3610 = vmatprep.subr.bf16.mxu0 0
    %3611 = vmatpush1.bf16.msra.mxu0 0
    %3612 = vmatprep.subr.bf16.mxu0 0
    %3613 = vmatpush1.bf16.msra.mxu0 0
    %3614 = vmatprep.subr.bf16.mxu0 0
    %3615 = vmatpush1.bf16.msra.mxu0 0
    %3616 = vmatprep.mubr.bf16.mxu0 0
    %3617 = vmatmul.mubr.bf16.gmra.mrb[0].mxu0 %v3579
    %v3618 = vpop.f32.mrb[0].mxu0
    %v3619 = vadd.f32 0.0, %v3618
    %v3620 = vpop.f32.mrb[0].mxu0
    %v3621 = vadd.f32 0.0, %v3620
    %v3622 = vpop.f32.mrb[0].mxu0
    %v3623 = vadd.f32 0.0, %v3622
    %v3624 = vpop.f32.mrb[0].mxu0
    %v3625 = vadd.f32 0.0, %v3624
    %3626 = vmatprep.mubr.bf16.mxu0 0
    %3627 = vmatmul.mubr.bf16.gmra.mrb[0].mxu0 %v3582
    %v3628 = vpop.f32.mrb[0].mxu0
    %v3629 = vadd.f32 0.0, %v3628
    %v3630 = vpop.f32.mrb[0].mxu0
    %v3631 = vadd.f32 0.0, %v3630
    %v3632 = vpop.f32.mrb[0].mxu0
    %v3633 = vadd.f32 0.0, %v3632
    %v3634 = vpop.f32.mrb[0].mxu0
    %v3635 = vadd.f32 0.0, %v3634
    %3636 = vdwg.mxu0
    %s3637 = scalar_lea.vmem %s14, 48
    %v3638 = vld [vmem:[%s3637] sm:$0xf]
    %v3639 = vld [vmem:[%s3637 + $0x4] sm:$0xf]
    %v3640 = vld [vmem:[%s3637 + $0x8] sm:$0xf]
    %v3641 = vld [vmem:[%s3637 + $0xc] sm:$0xf]
    %v3646 = vunpack.c.l.b16 %v3638
    %v3647 = vunpack.c.l.b16 %v3639
    %v3648 = vunpack.c.l.b16 %v3640
    %v3649 = vunpack.c.l.b16 %v3641
    %v3650 = vpack.c.b16 %v3647, %v3646
    %v3651 = vpack.c.b16 %v3649, %v3648
    %v3653 = vsel %vm3429, %v3650, 0
    %v3656 = vsel %vm3429, %v3651, 0
    %3658 = vmatprep.subr.bf16.mxu0 %v3414
    %3659 = vmatpush1.bf16.msra.mxu0 %v3413
    %3660 = vmatprep.subr.bf16.mxu0 0
    %3661 = vmatpush1.bf16.msra.mxu0 0
    %3662 = vmatprep.subr.bf16.mxu0 0
    %3663 = vmatpush1.bf16.msra.mxu0 0
    %3664 = vmatprep.subr.bf16.mxu0 0
    %3665 = vmatpush1.bf16.msra.mxu0 0
    %3666 = vmatprep.subr.bf16.mxu0 0
    %3667 = vmatpush1.bf16.msra.mxu0 0
    %3668 = vmatprep.subr.bf16.mxu0 0
    %3669 = vmatpush1.bf16.msra.mxu0 0
    %3670 = vmatprep.subr.bf16.mxu0 0
    %3671 = vmatpush1.bf16.msra.mxu0 0
    %3672 = vmatprep.subr.bf16.mxu0 0
    %3673 = vmatpush1.bf16.msra.mxu0 0
    %3674 = vmatprep.subr.bf16.mxu0 0
    %3675 = vmatpush1.bf16.msra.mxu0 0
    %3676 = vmatprep.subr.bf16.mxu0 0
    %3677 = vmatpush1.bf16.msra.mxu0 0
    %3678 = vmatprep.subr.bf16.mxu0 0
    %3679 = vmatpush1.bf16.msra.mxu0 0
    %3680 = vmatprep.subr.bf16.mxu0 0
    %3681 = vmatpush1.bf16.msra.mxu0 0
    %3682 = vmatprep.subr.bf16.mxu0 0
    %3683 = vmatpush1.bf16.msra.mxu0 0
    %3684 = vmatprep.subr.bf16.mxu0 0
    %3685 = vmatpush1.bf16.msra.mxu0 0
    %3686 = vmatprep.subr.bf16.mxu0 0
    %3687 = vmatpush1.bf16.msra.mxu0 0
    %3688 = vmatprep.subr.bf16.mxu0 0
    %3689 = vmatpush1.bf16.msra.mxu0 0
    %3690 = vmatprep.mubr.bf16.mxu0 0
    %3691 = vmatmul.mubr.bf16.gmra.mrb[0].mxu0 %v3653
    %v3692 = vpop.f32.mrb[0].mxu0
    %v3693 = vadd.f32 0.0, %v3692
    %v3694 = vpop.f32.mrb[0].mxu0
    %v3695 = vadd.f32 0.0, %v3694
    %v3696 = vpop.f32.mrb[0].mxu0
    %v3697 = vadd.f32 0.0, %v3696
    %v3698 = vpop.f32.mrb[0].mxu0
    %v3699 = vadd.f32 0.0, %v3698
    %3700 = vmatprep.mubr.bf16.mxu0 0
    %3701 = vmatmul.mubr.bf16.gmra.mrb[0].mxu0 %v3656
    %v3702 = vpop.f32.mrb[0].mxu0
    %v3703 = vadd.f32 0.0, %v3702
    %v3704 = vpop.f32.mrb[0].mxu0
    %v3705 = vadd.f32 0.0, %v3704
    %v3706 = vpop.f32.mrb[0].mxu0
    %v3707 = vadd.f32 0.0, %v3706
    %v3708 = vpop.f32.mrb[0].mxu0
    %v3709 = vadd.f32 0.0, %v3708
    %3710 = vdwg.mxu0
    %v3711 = vpack.c.bf16 %v3475, %v3471
    %v3712 = vpack.c.bf16 %v3477, %v3473
    %v3713 = vpack.c.bf16 %v3549, %v3545
    %v3714 = vpack.c.bf16 %v3551, %v3547
    %v3715 = vpack.c.bf16 %v3623, %v3619
    %v3716 = vpack.c.bf16 %v3625, %v3621
    %v3717 = vpack.c.bf16 %v3697, %v3693
    %v3718 = vpack.c.bf16 %v3699, %v3695
    %v3719 = vpack.c.bf16 %v3485, %v3481
    %v3720 = vpack.c.bf16 %v3487, %v3483
    %v3721 = vpack.c.bf16 %v3559, %v3555
    %v3722 = vpack.c.bf16 %v3561, %v3557
    %v3723 = vpack.c.bf16 %v3633, %v3629
    %v3724 = vpack.c.bf16 %v3635, %v3631
    %v3725 = vpack.c.bf16 %v3707, %v3703
    %v3726 = vpack.c.bf16 %v3709, %v3705
    %v3727 = vld [vmem:[#allocation8] sm:$0xff]
    %v3728 = vld [vmem:[#allocation8 + $0x8] sm:$0xff]
    %v3729 = vld [vmem:[#allocation8 + $0x10] sm:$0xff]
    %v3730 = vld [vmem:[#allocation8 + $0x18] sm:$0xff]
    %v3731 = vld [vmem:[#allocation8 + $0x20] sm:$0xff]
    %v3732 = vld [vmem:[#allocation8 + $0x28] sm:$0xff]
    %v3733 = vld [vmem:[#allocation8 + $0x30] sm:$0xff]
    %v3734 = vld [vmem:[#allocation8 + $0x38] sm:$0xff]
    %v3735 = vld [vmem:[#allocation8 + $0x40] sm:$0xff]
    %v3736 = vld [vmem:[#allocation8 + $0x48] sm:$0xff]
    %v3737 = vld [vmem:[#allocation8 + $0x50] sm:$0xff]
    %v3738 = vld [vmem:[#allocation8 + $0x58] sm:$0xff]
    %v3739 = vld [vmem:[#allocation8 + $0x60] sm:$0xff]
    %v3740 = vld [vmem:[#allocation8 + $0x68] sm:$0xff]
    %v3741 = vld [vmem:[#allocation8 + $0x70] sm:$0xff]
    %v3742 = vld [vmem:[#allocation8 + $0x78] sm:$0xff]
    %v3743 = vld [vmem:[#allocation8 + $0x80] sm:$0xff]
    %v3744 = vld [vmem:[#allocation8 + $0x88] sm:$0xff]
    %v3745 = vld [vmem:[#allocation8 + $0x90] sm:$0xff]
    %v3746 = vld [vmem:[#allocation8 + $0x98] sm:$0xff]
    %v3747 = vld [vmem:[#allocation8 + $0xa0] sm:$0xff]
    %v3748 = vld [vmem:[#allocation8 + $0xa8] sm:$0xff]
    %v3749 = vld [vmem:[#allocation8 + $0xb0] sm:$0xff]
    %v3750 = vld [vmem:[#allocation8 + $0xb8] sm:$0xff]
    %v3751 = vld [vmem:[#allocation8 + $0xc0] sm:$0xff]
    %v3752 = vld [vmem:[#allocation8 + $0xc8] sm:$0xff]
    %v3753 = vld [vmem:[#allocation8 + $0xd0] sm:$0xff]
    %v3754 = vld [vmem:[#allocation8 + $0xd8] sm:$0xff]
    %v3755 = vld [vmem:[#allocation8 + $0xe0] sm:$0xff]
    %v3756 = vld [vmem:[#allocation8 + $0xe8] sm:$0xff]
    %v3757 = vld [vmem:[#allocation8 + $0xf0] sm:$0xff]
    %v3758 = vld [vmem:[#allocation8 + $0xf8] sm:$0xff]
    %v3759 = vld [vmem:[#allocation8 + $0x100] sm:$0xff]
    %v3760 = vld [vmem:[#allocation8 + $0x108] sm:$0xff]
    %v3761 = vld [vmem:[#allocation8 + $0x110] sm:$0xff]
    %v3762 = vld [vmem:[#allocation8 + $0x118] sm:$0xff]
    %v3763 = vld [vmem:[#allocation8 + $0x120] sm:$0xff]
    %v3764 = vld [vmem:[#allocation8 + $0x128] sm:$0xff]
    %v3765 = vld [vmem:[#allocation8 + $0x130] sm:$0xff]
    %v3766 = vld [vmem:[#allocation8 + $0x138] sm:$0xff]
    %v3767 = vld [vmem:[#allocation8 + $0x140] sm:$0xff]
    %v3768 = vld [vmem:[#allocation8 + $0x148] sm:$0xff]
    %v3769 = vld [vmem:[#allocation8 + $0x150] sm:$0xff]
    %v3770 = vld [vmem:[#allocation8 + $0x158] sm:$0xff]
    %v3771 = vld [vmem:[#allocation8 + $0x160] sm:$0xff]
    %v3772 = vld [vmem:[#allocation8 + $0x168] sm:$0xff]
    %v3773 = vld [vmem:[#allocation8 + $0x170] sm:$0xff]
    %v3774 = vld [vmem:[#allocation8 + $0x178] sm:$0xff]
    %v3775 = vld [vmem:[#allocation8 + $0x180] sm:$0xff]
    %v3776 = vld [vmem:[#allocation8 + $0x188] sm:$0xff]
    %v3777 = vld [vmem:[#allocation8 + $0x190] sm:$0xff]
    %v3778 = vld [vmem:[#allocation8 + $0x198] sm:$0xff]
    %v3779 = vld [vmem:[#allocation8 + $0x1a0] sm:$0xff]
    %v3780 = vld [vmem:[#allocation8 + $0x1a8] sm:$0xff]
    %v3781 = vld [vmem:[#allocation8 + $0x1b0] sm:$0xff]
    %v3782 = vld [vmem:[#allocation8 + $0x1b8] sm:$0xff]
    %v3783 = vld [vmem:[#allocation8 + $0x1c0] sm:$0xff]
    %v3784 = vld [vmem:[#allocation8 + $0x1c8] sm:$0xff]
    %v3785 = vld [vmem:[#allocation8 + $0x1d0] sm:$0xff]
    %v3786 = vld [vmem:[#allocation8 + $0x1d8] sm:$0xff]
    %v3787 = vld [vmem:[#allocation8 + $0x1e0] sm:$0xff]
    %v3788 = vld [vmem:[#allocation8 + $0x1e8] sm:$0xff]
    %v3789 = vld [vmem:[#allocation8 + $0x1f0] sm:$0xff]
    %v3790 = vld [vmem:[#allocation8 + $0x1f8] sm:$0xff]
    %v3791 = vld [vmem:[#allocation8 + $0x200] sm:$0xff]
    %v3792 = vld [vmem:[#allocation8 + $0x208] sm:$0xff]
    %v3793 = vld [vmem:[#allocation8 + $0x210] sm:$0xff]
    %v3794 = vld [vmem:[#allocation8 + $0x218] sm:$0xff]
    %v3795 = vld [vmem:[#allocation8 + $0x220] sm:$0xff]
    %v3796 = vld [vmem:[#allocation8 + $0x228] sm:$0xff]
    %v3797 = vld [vmem:[#allocation8 + $0x230] sm:$0xff]
    %v3798 = vld [vmem:[#allocation8 + $0x238] sm:$0xff]
    %v3799 = vld [vmem:[#allocation8 + $0x240] sm:$0xff]
    %v3800 = vld [vmem:[#allocation8 + $0x248] sm:$0xff]
    %v3801 = vld [vmem:[#allocation8 + $0x250] sm:$0xff]
    %v3802 = vld [vmem:[#allocation8 + $0x258] sm:$0xff]
    %v3803 = vld [vmem:[#allocation8 + $0x260] sm:$0xff]
    %v3804 = vld [vmem:[#allocation8 + $0x268] sm:$0xff]
    %v3805 = vld [vmem:[#allocation8 + $0x270] sm:$0xff]
    %v3806 = vld [vmem:[#allocation8 + $0x278] sm:$0xff]
    %v3807 = vld [vmem:[#allocation8 + $0x280] sm:$0xff]
    %v3808 = vld [vmem:[#allocation8 + $0x288] sm:$0xff]
    %v3809 = vld [vmem:[#allocation8 + $0x290] sm:$0xff]
    %v3810 = vld [vmem:[#allocation8 + $0x298] sm:$0xff]
    %v3811 = vld [vmem:[#allocation8 + $0x2a0] sm:$0xff]
    %v3812 = vld [vmem:[#allocation8 + $0x2a8] sm:$0xff]
    %v3813 = vld [vmem:[#allocation8 + $0x2b0] sm:$0xff]
    %v3814 = vld [vmem:[#allocation8 + $0x2b8] sm:$0xff]
    %v3815 = vld [vmem:[#allocation8 + $0x2c0] sm:$0xff]
    %v3816 = vld [vmem:[#allocation8 + $0x2c8] sm:$0xff]
    %v3817 = vld [vmem:[#allocation8 + $0x2d0] sm:$0xff]
    %v3818 = vld [vmem:[#allocation8 + $0x2d8] sm:$0xff]
    %v3819 = vld [vmem:[#allocation8 + $0x2e0] sm:$0xff]
    %v3820 = vld [vmem:[#allocation8 + $0x2e8] sm:$0xff]
    %v3821 = vld [vmem:[#allocation8 + $0x2f0] sm:$0xff]
    %v3822 = vld [vmem:[#allocation8 + $0x2f8] sm:$0xff]
    %v3823 = vld [vmem:[#allocation8 + $0x300] sm:$0xff]
    %v3824 = vld [vmem:[#allocation8 + $0x308] sm:$0xff]
    %v3825 = vld [vmem:[#allocation8 + $0x310] sm:$0xff]
    %v3826 = vld [vmem:[#allocation8 + $0x318] sm:$0xff]
    %v3827 = vld [vmem:[#allocation8 + $0x320] sm:$0xff]
    %v3828 = vld [vmem:[#allocation8 + $0x328] sm:$0xff]
    %v3829 = vld [vmem:[#allocation8 + $0x330] sm:$0xff]
    %v3830 = vld [vmem:[#allocation8 + $0x338] sm:$0xff]
    %v3831 = vld [vmem:[#allocation8 + $0x340] sm:$0xff]
    %v3832 = vld [vmem:[#allocation8 + $0x348] sm:$0xff]
    %v3833 = vld [vmem:[#allocation8 + $0x350] sm:$0xff]
    %v3834 = vld [vmem:[#allocation8 + $0x358] sm:$0xff]
    %v3835 = vld [vmem:[#allocation8 + $0x360] sm:$0xff]
    %v3836 = vld [vmem:[#allocation8 + $0x368] sm:$0xff]
    %v3837 = vld [vmem:[#allocation8 + $0x370] sm:$0xff]
    %v3838 = vld [vmem:[#allocation8 + $0x378] sm:$0xff]
    %v3839 = vld [vmem:[#allocation8 + $0x380] sm:$0xff]
    %v3840 = vld [vmem:[#allocation8 + $0x388] sm:$0xff]
    %v3841 = vld [vmem:[#allocation8 + $0x390] sm:$0xff]
    %v3842 = vld [vmem:[#allocation8 + $0x398] sm:$0xff]
    %v3843 = vld [vmem:[#allocation8 + $0x3a0] sm:$0xff]
    %v3844 = vld [vmem:[#allocation8 + $0x3a8] sm:$0xff]
    %v3845 = vld [vmem:[#allocation8 + $0x3b0] sm:$0xff]
    %v3846 = vld [vmem:[#allocation8 + $0x3b8] sm:$0xff]
    %v3847 = vld [vmem:[#allocation8 + $0x3c0] sm:$0xff]
    %v3848 = vld [vmem:[#allocation8 + $0x3c8] sm:$0xff]
    %v3849 = vld [vmem:[#allocation8 + $0x3d0] sm:$0xff]
    %v3850 = vld [vmem:[#allocation8 + $0x3d8] sm:$0xff]
    %v3851 = vld [vmem:[#allocation8 + $0x3e0] sm:$0xff]
    %v3852 = vld [vmem:[#allocation8 + $0x3e8] sm:$0xff]
    %v3853 = vld [vmem:[#allocation8 + $0x3f0] sm:$0xff]
    %v3854 = vld [vmem:[#allocation8 + $0x3f8] sm:$0xff]
    %v3983 = vunpack.c.l.b16 %v3727
    %v3984 = vunpack.c.h.b16 %v3727
    %v3985 = vunpack.c.l.b16 %v3728
    %v3986 = vunpack.c.h.b16 %v3728
    %v3987 = vunpack.c.l.b16 %v3729
    %v3988 = vunpack.c.h.b16 %v3729
    %v3989 = vunpack.c.l.b16 %v3730
    %v3990 = vunpack.c.h.b16 %v3730
    %v3991 = vunpack.c.l.b16 %v3731
    %v3992 = vunpack.c.h.b16 %v3731
    %v3993 = vunpack.c.l.b16 %v3732
    %v3994 = vunpack.c.h.b16 %v3732
    %v3995 = vunpack.c.l.b16 %v3733
    %v3996 = vunpack.c.h.b16 %v3733
    %v3997 = vunpack.c.l.b16 %v3734
    %v3998 = vunpack.c.h.b16 %v3734
    %v3999 = vunpack.c.l.b16 %v3735
    %v4000 = vunpack.c.h.b16 %v3735
    %v4001 = vunpack.c.l.b16 %v3736
    %v4002 = vunpack.c.h.b16 %v3736
    %v4003 = vunpack.c.l.b16 %v3737
    %v4004 = vunpack.c.h.b16 %v3737
    %v4005 = vunpack.c.l.b16 %v3738
    %v4006 = vunpack.c.h.b16 %v3738
    %v4007 = vunpack.c.l.b16 %v3739
    %v4008 = vunpack.c.h.b16 %v3739
    %v4009 = vunpack.c.l.b16 %v3740
    %v4010 = vunpack.c.h.b16 %v3740
    %v4011 = vunpack.c.l.b16 %v3741
    %v4012 = vunpack.c.h.b16 %v3741
    %v4013 = vunpack.c.l.b16 %v3742
    %v4014 = vunpack.c.h.b16 %v3742
    %v4015 = vunpack.c.l.b16 %v3743
    %v4016 = vunpack.c.h.b16 %v3743
    %v4017 = vunpack.c.l.b16 %v3744
    %v4018 = vunpack.c.h.b16 %v3744
    %v4019 = vunpack.c.l.b16 %v3745
    %v4020 = vunpack.c.h.b16 %v3745
    %v4021 = vunpack.c.l.b16 %v3746
    %v4022 = vunpack.c.h.b16 %v3746
    %v4023 = vunpack.c.l.b16 %v3747
    %v4024 = vunpack.c.h.b16 %v3747
    %v4025 = vunpack.c.l.b16 %v3748
    %v4026 = vunpack.c.h.b16 %v3748
    %v4027 = vunpack.c.l.b16 %v3749
    %v4028 = vunpack.c.h.b16 %v3749
    %v4029 = vunpack.c.l.b16 %v3750
    %v4030 = vunpack.c.h.b16 %v3750
    %v4031 = vunpack.c.l.b16 %v3751
    %v4032 = vunpack.c.h.b16 %v3751
    %v4033 = vunpack.c.l.b16 %v3752
    %v4034 = vunpack.c.h.b16 %v3752
    %v4035 = vunpack.c.l.b16 %v3753
    %v4036 = vunpack.c.h.b16 %v3753
    %v4037 = vunpack.c.l.b16 %v3754
    %v4038 = vunpack.c.h.b16 %v3754
    %v4039 = vunpack.c.l.b16 %v3755
    %v4040 = vunpack.c.h.b16 %v3755
    %v4041 = vunpack.c.l.b16 %v3756
    %v4042 = vunpack.c.h.b16 %v3756
    %v4043 = vunpack.c.l.b16 %v3757
    %v4044 = vunpack.c.h.b16 %v3757
    %v4045 = vunpack.c.l.b16 %v3758
    %v4046 = vunpack.c.h.b16 %v3758
    %v4047 = vunpack.c.l.b16 %v3759
    %v4048 = vunpack.c.h.b16 %v3759
    %v4049 = vunpack.c.l.b16 %v3760
    %v4050 = vunpack.c.h.b16 %v3760
    %v4051 = vunpack.c.l.b16 %v3761
    %v4052 = vunpack.c.h.b16 %v3761
    %v4053 = vunpack.c.l.b16 %v3762
    %v4054 = vunpack.c.h.b16 %v3762
    %v4055 = vunpack.c.l.b16 %v3763
    %v4056 = vunpack.c.h.b16 %v3763
    %v4057 = vunpack.c.l.b16 %v3764
    %v4058 = vunpack.c.h.b16 %v3764
    %v4059 = vunpack.c.l.b16 %v3765
    %v4060 = vunpack.c.h.b16 %v3765
    %v4061 = vunpack.c.l.b16 %v3766
    %v4062 = vunpack.c.h.b16 %v3766
    %v4063 = vunpack.c.l.b16 %v3767
    %v4064 = vunpack.c.h.b16 %v3767
    %v4065 = vunpack.c.l.b16 %v3768
    %v4066 = vunpack.c.h.b16 %v3768
    %v4067 = vunpack.c.l.b16 %v3769
    %v4068 = vunpack.c.h.b16 %v3769
    %v4069 = vunpack.c.l.b16 %v3770
    %v4070 = vunpack.c.h.b16 %v3770
    %v4071 = vunpack.c.l.b16 %v3771
    %v4072 = vunpack.c.h.b16 %v3771
    %v4073 = vunpack.c.l.b16 %v3772
    %v4074 = vunpack.c.h.b16 %v3772
    %v4075 = vunpack.c.l.b16 %v3773
    %v4076 = vunpack.c.h.b16 %v3773
    %v4077 = vunpack.c.l.b16 %v3774
    %v4078 = vunpack.c.h.b16 %v3774
    %v4079 = vunpack.c.l.b16 %v3775
    %v4080 = vunpack.c.h.b16 %v3775
    %v4081 = vunpack.c.l.b16 %v3776
    %v4082 = vunpack.c.h.b16 %v3776
    %v4083 = vunpack.c.l.b16 %v3777
    %v4084 = vunpack.c.h.b16 %v3777
    %v4085 = vunpack.c.l.b16 %v3778
    %v4086 = vunpack.c.h.b16 %v3778
    %v4087 = vunpack.c.l.b16 %v3779
    %v4088 = vunpack.c.h.b16 %v3779
    %v4089 = vunpack.c.l.b16 %v3780
    %v4090 = vunpack.c.h.b16 %v3780
    %v4091 = vunpack.c.l.b16 %v3781
    %v4092 = vunpack.c.h.b16 %v3781
    %v4093 = vunpack.c.l.b16 %v3782
    %v4094 = vunpack.c.h.b16 %v3782
    %v4095 = vunpack.c.l.b16 %v3783
    %v4096 = vunpack.c.h.b16 %v3783
    %v4097 = vunpack.c.l.b16 %v3784
    %v4098 = vunpack.c.h.b16 %v3784
    %v4099 = vunpack.c.l.b16 %v3785
    %v4100 = vunpack.c.h.b16 %v3785
    %v4101 = vunpack.c.l.b16 %v3786
    %v4102 = vunpack.c.h.b16 %v3786
    %v4103 = vunpack.c.l.b16 %v3787
    %v4104 = vunpack.c.h.b16 %v3787
    %v4105 = vunpack.c.l.b16 %v3788
    %v4106 = vunpack.c.h.b16 %v3788
    %v4107 = vunpack.c.l.b16 %v3789
    %v4108 = vunpack.c.h.b16 %v3789
    %v4109 = vunpack.c.l.b16 %v3790
    %v4110 = vunpack.c.h.b16 %v3790
    %v4111 = vunpack.c.l.b16 %v3791
    %v4112 = vunpack.c.h.b16 %v3791
    %v4113 = vunpack.c.l.b16 %v3792
    %v4114 = vunpack.c.h.b16 %v3792
    %v4115 = vunpack.c.l.b16 %v3793
    %v4116 = vunpack.c.h.b16 %v3793
    %v4117 = vunpack.c.l.b16 %v3794
    %v4118 = vunpack.c.h.b16 %v3794
    %v4119 = vunpack.c.l.b16 %v3795
    %v4120 = vunpack.c.h.b16 %v3795
    %v4121 = vunpack.c.l.b16 %v3796
    %v4122 = vunpack.c.h.b16 %v3796
    %v4123 = vunpack.c.l.b16 %v3797
    %v4124 = vunpack.c.h.b16 %v3797
    %v4125 = vunpack.c.l.b16 %v3798
    %v4126 = vunpack.c.h.b16 %v3798
    %v4127 = vunpack.c.l.b16 %v3799
    %v4128 = vunpack.c.h.b16 %v3799
    %v4129 = vunpack.c.l.b16 %v3800
    %v4130 = vunpack.c.h.b16 %v3800
    %v4131 = vunpack.c.l.b16 %v3801
    %v4132 = vunpack.c.h.b16 %v3801
    %v4133 = vunpack.c.l.b16 %v3802
    %v4134 = vunpack.c.h.b16 %v3802
    %v4135 = vunpack.c.l.b16 %v3803
    %v4136 = vunpack.c.h.b16 %v3803
    %v4137 = vunpack.c.l.b16 %v3804
    %v4138 = vunpack.c.h.b16 %v3804
    %v4139 = vunpack.c.l.b16 %v3805
    %v4140 = vunpack.c.h.b16 %v3805
    %v4141 = vunpack.c.l.b16 %v3806
    %v4142 = vunpack.c.h.b16 %v3806
    %v4143 = vunpack.c.l.b16 %v3807
    %v4144 = vunpack.c.h.b16 %v3807
    %v4145 = vunpack.c.l.b16 %v3808
    %v4146 = vunpack.c.h.b16 %v3808
    %v4147 = vunpack.c.l.b16 %v3809
    %v4148 = vunpack.c.h.b16 %v3809
    %v4149 = vunpack.c.l.b16 %v3810
    %v4150 = vunpack.c.h.b16 %v3810
    %v4151 = vunpack.c.l.b16 %v3811
    %v4152 = vunpack.c.h.b16 %v3811
    %v4153 = vunpack.c.l.b16 %v3812
    %v4154 = vunpack.c.h.b16 %v3812
    %v4155 = vunpack.c.l.b16 %v3813
    %v4156 = vunpack.c.h.b16 %v3813
    %v4157 = vunpack.c.l.b16 %v3814
    %v4158 = vunpack.c.h.b16 %v3814
    %v4159 = vunpack.c.l.b16 %v3815
    %v4160 = vunpack.c.h.b16 %v3815
    %v4161 = vunpack.c.l.b16 %v3816
    %v4162 = vunpack.c.h.b16 %v3816
    %v4163 = vunpack.c.l.b16 %v3817
    %v4164 = vunpack.c.h.b16 %v3817
    %v4165 = vunpack.c.l.b16 %v3818
    %v4166 = vunpack.c.h.b16 %v3818
    %v4167 = vunpack.c.l.b16 %v3819
    %v4168 = vunpack.c.h.b16 %v3819
    %v4169 = vunpack.c.l.b16 %v3820
    %v4170 = vunpack.c.h.b16 %v3820
    %v4171 = vunpack.c.l.b16 %v3821
    %v4172 = vunpack.c.h.b16 %v3821
    %v4173 = vunpack.c.l.b16 %v3822
    %v4174 = vunpack.c.h.b16 %v3822
    %v4175 = vunpack.c.l.b16 %v3823
    %v4176 = vunpack.c.h.b16 %v3823
    %v4177 = vunpack.c.l.b16 %v3824
    %v4178 = vunpack.c.h.b16 %v3824
    %v4179 = vunpack.c.l.b16 %v3825
    %v4180 = vunpack.c.h.b16 %v3825
    %v4181 = vunpack.c.l.b16 %v3826
    %v4182 = vunpack.c.h.b16 %v3826
    %v4183 = vunpack.c.l.b16 %v3827
    %v4184 = vunpack.c.h.b16 %v3827
    %v4185 = vunpack.c.l.b16 %v3828
    %v4186 = vunpack.c.h.b16 %v3828
    %v4187 = vunpack.c.l.b16 %v3829
    %v4188 = vunpack.c.h.b16 %v3829
    %v4189 = vunpack.c.l.b16 %v3830
    %v4190 = vunpack.c.h.b16 %v3830
    %v4191 = vunpack.c.l.b16 %v3831
    %v4192 = vunpack.c.h.b16 %v3831
    %v4193 = vunpack.c.l.b16 %v3832
    %v4194 = vunpack.c.h.b16 %v3832
    %v4195 = vunpack.c.l.b16 %v3833
    %v4196 = vunpack.c.h.b16 %v3833
    %v4197 = vunpack.c.l.b16 %v3834
    %v4198 = vunpack.c.h.b16 %v3834
    %v4199 = vunpack.c.l.b16 %v3835
    %v4200 = vunpack.c.h.b16 %v3835
    %v4201 = vunpack.c.l.b16 %v3836
    %v4202 = vunpack.c.h.b16 %v3836
    %v4203 = vunpack.c.l.b16 %v3837
    %v4204 = vunpack.c.h.b16 %v3837
    %v4205 = vunpack.c.l.b16 %v3838
    %v4206 = vunpack.c.h.b16 %v3838
    %v4207 = vunpack.c.l.b16 %v3839
    %v4208 = vunpack.c.h.b16 %v3839
    %v4209 = vunpack.c.l.b16 %v3840
    %v4210 = vunpack.c.h.b16 %v3840
    %v4211 = vunpack.c.l.b16 %v3841
    %v4212 = vunpack.c.h.b16 %v3841
    %v4213 = vunpack.c.l.b16 %v3842
    %v4214 = vunpack.c.h.b16 %v3842
    %v4215 = vunpack.c.l.b16 %v3843
    %v4216 = vunpack.c.h.b16 %v3843
    %v4217 = vunpack.c.l.b16 %v3844
    %v4218 = vunpack.c.h.b16 %v3844
    %v4219 = vunpack.c.l.b16 %v3845
    %v4220 = vunpack.c.h.b16 %v3845
    %v4221 = vunpack.c.l.b16 %v3846
    %v4222 = vunpack.c.h.b16 %v3846
    %v4223 = vunpack.c.l.b16 %v3847
    %v4224 = vunpack.c.h.b16 %v3847
    %v4225 = vunpack.c.l.b16 %v3848
    %v4226 = vunpack.c.h.b16 %v3848
    %v4227 = vunpack.c.l.b16 %v3849
    %v4228 = vunpack.c.h.b16 %v3849
    %v4229 = vunpack.c.l.b16 %v3850
    %v4230 = vunpack.c.h.b16 %v3850
    %v4231 = vunpack.c.l.b16 %v3851
    %v4232 = vunpack.c.h.b16 %v3851
    %v4233 = vunpack.c.l.b16 %v3852
    %v4234 = vunpack.c.h.b16 %v3852
    %v4235 = vunpack.c.l.b16 %v3853
    %v4236 = vunpack.c.h.b16 %v3853
    %v4237 = vunpack.c.l.b16 %v3854
    %v4238 = vunpack.c.h.b16 %v3854
    %v4239 = vpack.c.b16 %v3985, %v3983
    %v4240 = vpack.c.b16 %v3986, %v3984
    %v4241 = vpack.c.b16 %v3989, %v3987
    %v4242 = vpack.c.b16 %v3990, %v3988
    %v4243 = vpack.c.b16 %v3993, %v3991
    %v4244 = vpack.c.b16 %v3994, %v3992
    %v4245 = vpack.c.b16 %v3997, %v3995
    %v4246 = vpack.c.b16 %v3998, %v3996
    %v4247 = vpack.c.b16 %v4001, %v3999
    %v4248 = vpack.c.b16 %v4002, %v4000
    %v4249 = vpack.c.b16 %v4005, %v4003
    %v4250 = vpack.c.b16 %v4006, %v4004
    %v4251 = vpack.c.b16 %v4009, %v4007
    %v4252 = vpack.c.b16 %v4010, %v4008
    %v4253 = vpack.c.b16 %v4013, %v4011
    %v4254 = vpack.c.b16 %v4014, %v4012
    %v4255 = vpack.c.b16 %v4017, %v4015
    %v4256 = vpack.c.b16 %v4018, %v4016
    %v4257 = vpack.c.b16 %v4021, %v4019
    %v4258 = vpack.c.b16 %v4022, %v4020
    %v4259 = vpack.c.b16 %v4025, %v4023
    %v4260 = vpack.c.b16 %v4026, %v4024
    %v4261 = vpack.c.b16 %v4029, %v4027
    %v4262 = vpack.c.b16 %v4030, %v4028
    %v4263 = vpack.c.b16 %v4033, %v4031
    %v4264 = vpack.c.b16 %v4034, %v4032
    %v4265 = vpack.c.b16 %v4037, %v4035
    %v4266 = vpack.c.b16 %v4038, %v4036
    %v4267 = vpack.c.b16 %v4041, %v4039
    %v4268 = vpack.c.b16 %v4042, %v4040
    %v4269 = vpack.c.b16 %v4045, %v4043
    %v4270 = vpack.c.b16 %v4046, %v4044
    %v4271 = vpack.c.b16 %v4049, %v4047
    %v4272 = vpack.c.b16 %v4050, %v4048
    %v4273 = vpack.c.b16 %v4053, %v4051
    %v4274 = vpack.c.b16 %v4054, %v4052
    %v4275 = vpack.c.b16 %v4057, %v4055
    %v4276 = vpack.c.b16 %v4058, %v4056
    %v4277 = vpack.c.b16 %v4061, %v4059
    %v4278 = vpack.c.b16 %v4062, %v4060
    %v4279 = vpack.c.b16 %v4065, %v4063
    %v4280 = vpack.c.b16 %v4066, %v4064
    %v4281 = vpack.c.b16 %v4069, %v4067
    %v4282 = vpack.c.b16 %v4070, %v4068
    %v4283 = vpack.c.b16 %v4073, %v4071
    %v4284 = vpack.c.b16 %v4074, %v4072
    %v4285 = vpack.c.b16 %v4077, %v4075
    %v4286 = vpack.c.b16 %v4078, %v4076
    %v4287 = vpack.c.b16 %v4081, %v4079
    %v4288 = vpack.c.b16 %v4082, %v4080
    %v4289 = vpack.c.b16 %v4085, %v4083
    %v4290 = vpack.c.b16 %v4086, %v4084
    %v4291 = vpack.c.b16 %v4089, %v4087
    %v4292 = vpack.c.b16 %v4090, %v4088
    %v4293 = vpack.c.b16 %v4093, %v4091
    %v4294 = vpack.c.b16 %v4094, %v4092
    %v4295 = vpack.c.b16 %v4097, %v4095
    %v4296 = vpack.c.b16 %v4098, %v4096
    %v4297 = vpack.c.b16 %v4101, %v4099
    %v4298 = vpack.c.b16 %v4102, %v4100
    %v4299 = vpack.c.b16 %v4105, %v4103
    %v4300 = vpack.c.b16 %v4106, %v4104
    %v4301 = vpack.c.b16 %v4109, %v4107
    %v4302 = vpack.c.b16 %v4110, %v4108
    %v4303 = vpack.c.b16 %v4113, %v4111
    %v4304 = vpack.c.b16 %v4114, %v4112
    %v4305 = vpack.c.b16 %v4117, %v4115
    %v4306 = vpack.c.b16 %v4118, %v4116
    %v4307 = vpack.c.b16 %v4121, %v4119
    %v4308 = vpack.c.b16 %v4122, %v4120
    %v4309 = vpack.c.b16 %v4125, %v4123
    %v4310 = vpack.c.b16 %v4126, %v4124
    %v4311 = vpack.c.b16 %v4129, %v4127
    %v4312 = vpack.c.b16 %v4130, %v4128
    %v4313 = vpack.c.b16 %v4133, %v4131
    %v4314 = vpack.c.b16 %v4134, %v4132
    %v4315 = vpack.c.b16 %v4137, %v4135
    %v4316 = vpack.c.b16 %v4138, %v4136
    %v4317 = vpack.c.b16 %v4141, %v4139
    %v4318 = vpack.c.b16 %v4142, %v4140
    %v4319 = vpack.c.b16 %v4145, %v4143
    %v4320 = vpack.c.b16 %v4146, %v4144
    %v4321 = vpack.c.b16 %v4149, %v4147
    %v4322 = vpack.c.b16 %v4150, %v4148
    %v4323 = vpack.c.b16 %v4153, %v4151
    %v4324 = vpack.c.b16 %v4154, %v4152
    %v4325 = vpack.c.b16 %v4157, %v4155
    %v4326 = vpack.c.b16 %v4158, %v4156
    %v4327 = vpack.c.b16 %v4161, %v4159
    %v4328 = vpack.c.b16 %v4162, %v4160
    %v4329 = vpack.c.b16 %v4165, %v4163
    %v4330 = vpack.c.b16 %v4166, %v4164
    %v4331 = vpack.c.b16 %v4169, %v4167
    %v4332 = vpack.c.b16 %v4170, %v4168
    %v4333 = vpack.c.b16 %v4173, %v4171
    %v4334 = vpack.c.b16 %v4174, %v4172
    %v4335 = vpack.c.b16 %v4177, %v4175
    %v4336 = vpack.c.b16 %v4178, %v4176
    %v4337 = vpack.c.b16 %v4181, %v4179
    %v4338 = vpack.c.b16 %v4182, %v4180
    %v4339 = vpack.c.b16 %v4185, %v4183
    %v4340 = vpack.c.b16 %v4186, %v4184
    %v4341 = vpack.c.b16 %v4189, %v4187
    %v4342 = vpack.c.b16 %v4190, %v4188
    %v4343 = vpack.c.b16 %v4193, %v4191
    %v4344 = vpack.c.b16 %v4194, %v4192
    %v4345 = vpack.c.b16 %v4197, %v4195
    %v4346 = vpack.c.b16 %v4198, %v4196
    %v4347 = vpack.c.b16 %v4201, %v4199
    %v4348 = vpack.c.b16 %v4202, %v4200
    %v4349 = vpack.c.b16 %v4205, %v4203
    %v4350 = vpack.c.b16 %v4206, %v4204
    %v4351 = vpack.c.b16 %v4209, %v4207
    %v4352 = vpack.c.b16 %v4210, %v4208
    %v4353 = vpack.c.b16 %v4213, %v4211
    %v4354 = vpack.c.b16 %v4214, %v4212
    %v4355 = vpack.c.b16 %v4217, %v4215
    %v4356 = vpack.c.b16 %v4218, %v4216
    %v4357 = vpack.c.b16 %v4221, %v4219
    %v4358 = vpack.c.b16 %v4222, %v4220
    %v4359 = vpack.c.b16 %v4225, %v4223
    %v4360 = vpack.c.b16 %v4226, %v4224
    %v4361 = vpack.c.b16 %v4229, %v4227
    %v4362 = vpack.c.b16 %v4230, %v4228
    %v4363 = vpack.c.b16 %v4233, %v4231
    %v4364 = vpack.c.b16 %v4234, %v4232
    %v4365 = vpack.c.b16 %v4237, %v4235
    %v4366 = vpack.c.b16 %v4238, %v4236
    %4495 = vmatprep.subr.bf16.mxu0 %v4240
    %4496 = vmatpush1.bf16.msra.mxu0 %v4239
    %4497 = vmatprep.subr.bf16.mxu0 %v4242
    %4498 = vmatpush1.bf16.msra.mxu0 %v4241
    %4499 = vmatprep.subr.bf16.mxu0 %v4244
    %4500 = vmatpush1.bf16.msra.mxu0 %v4243
    %4501 = vmatprep.subr.bf16.mxu0 %v4246
    %4502 = vmatpush1.bf16.msra.mxu0 %v4245
    %4503 = vmatprep.subr.bf16.mxu0 %v4248
    %4504 = vmatpush1.bf16.msra.mxu0 %v4247
    %4505 = vmatprep.subr.bf16.mxu0 %v4250
    %4506 = vmatpush1.bf16.msra.mxu0 %v4249
    %4507 = vmatprep.subr.bf16.mxu0 %v4252
    %4508 = vmatpush1.bf16.msra.mxu0 %v4251
    %4509 = vmatprep.subr.bf16.mxu0 %v4254
    %4510 = vmatpush1.bf16.msra.mxu0 %v4253
    %4511 = vmatprep.subr.bf16.mxu0 %v4256
    %4512 = vmatpush1.bf16.msra.mxu0 %v4255
    %4513 = vmatprep.subr.bf16.mxu0 %v4258
    %4514 = vmatpush1.bf16.msra.mxu0 %v4257
    %4515 = vmatprep.subr.bf16.mxu0 %v4260
    %4516 = vmatpush1.bf16.msra.mxu0 %v4259
    %4517 = vmatprep.subr.bf16.mxu0 %v4262
    %4518 = vmatpush1.bf16.msra.mxu0 %v4261
    %4519 = vmatprep.subr.bf16.mxu0 %v4264
    %4520 = vmatpush1.bf16.msra.mxu0 %v4263
    %4521 = vmatprep.subr.bf16.mxu0 %v4266
    %4522 = vmatpush1.bf16.msra.mxu0 %v4265
    %4523 = vmatprep.subr.bf16.mxu0 %v4268
    %4524 = vmatpush1.bf16.msra.mxu0 %v4267
    %4525 = vmatprep.subr.bf16.mxu0 %v4270
    %4526 = vmatpush1.bf16.msra.mxu0 %v4269
    %4527 = vmatprep.mubr.bf16.mxu0 %v3712
    %4528 = vmatmul.mubr.bf16.gmra.mrb[0].mxu0 %v3711
    %v4529 = vpop.f32.mrb[0].mxu0
    %v4530 = vadd.f32 0.0, %v4529
    %v4531 = vpop.f32.mrb[0].mxu0
    %v4532 = vadd.f32 0.0, %v4531
    %v4533 = vpop.f32.mrb[0].mxu0
    %v4534 = vadd.f32 0.0, %v4533
    %v4535 = vpop.f32.mrb[0].mxu0
    %v4536 = vadd.f32 0.0, %v4535
    %4537 = vmatprep.mubr.bf16.mxu0 %v3720
    %4538 = vmatmul.mubr.bf16.gmra.mrb[0].mxu0 %v3719
    %v4539 = vpop.f32.mrb[0].mxu0
    %v4540 = vadd.f32 0.0, %v4539
    %v4541 = vpop.f32.mrb[0].mxu0
    %v4542 = vadd.f32 0.0, %v4541
    %v4543 = vpop.f32.mrb[0].mxu0
    %v4544 = vadd.f32 0.0, %v4543
    %v4545 = vpop.f32.mrb[0].mxu0
    %v4546 = vadd.f32 0.0, %v4545
    %4547 = vdwg.mxu0
    %4548 = vmatprep.subr.bf16.mxu0 %v4272
    %4549 = vmatpush1.bf16.msra.mxu0 %v4271
    %4550 = vmatprep.subr.bf16.mxu0 %v4274
    %4551 = vmatpush1.bf16.msra.mxu0 %v4273
    %4552 = vmatprep.subr.bf16.mxu0 %v4276
    %4553 = vmatpush1.bf16.msra.mxu0 %v4275
    %4554 = vmatprep.subr.bf16.mxu0 %v4278
    %4555 = vmatpush1.bf16.msra.mxu0 %v4277
    %4556 = vmatprep.subr.bf16.mxu0 %v4280
    %4557 = vmatpush1.bf16.msra.mxu0 %v4279
    %4558 = vmatprep.subr.bf16.mxu0 %v4282
    %4559 = vmatpush1.bf16.msra.mxu0 %v4281
    %4560 = vmatprep.subr.bf16.mxu0 %v4284
    %4561 = vmatpush1.bf16.msra.mxu0 %v4283
    %4562 = vmatprep.subr.bf16.mxu0 %v4286
    %4563 = vmatpush1.bf16.msra.mxu0 %v4285
    %4564 = vmatprep.subr.bf16.mxu0 %v4288
    %4565 = vmatpush1.bf16.msra.mxu0 %v4287
    %4566 = vmatprep.subr.bf16.mxu0 %v4290
    %4567 = vmatpush1.bf16.msra.mxu0 %v4289
    %4568 = vmatprep.subr.bf16.mxu0 %v4292
    %4569 = vmatpush1.bf16.msra.mxu0 %v4291
    %4570 = vmatprep.subr.bf16.mxu0 %v4294
    %4571 = vmatpush1.bf16.msra.mxu0 %v4293
    %4572 = vmatprep.subr.bf16.mxu0 %v4296
    %4573 = vmatpush1.bf16.msra.mxu0 %v4295
    %4574 = vmatprep.subr.bf16.mxu0 %v4298
    %4575 = vmatpush1.bf16.msra.mxu0 %v4297
    %4576 = vmatprep.subr.bf16.mxu0 %v4300
    %4577 = vmatpush1.bf16.msra.mxu0 %v4299
    %4578 = vmatprep.subr.bf16.mxu0 %v4302
    %4579 = vmatpush1.bf16.msra.mxu0 %v4301
    %4580 = vmatprep.mubr.bf16.mxu0 %v3714
    %4581 = vmatmul.mubr.bf16.gmra.mrb[0].mxu0 %v3713
    %v4582 = vpop.f32.mrb[0].mxu0
    %v4583 = vadd.f32 %v4530, %v4582
    %v4584 = vpop.f32.mrb[0].mxu0
    %v4585 = vadd.f32 %v4532, %v4584
    %v4586 = vpop.f32.mrb[0].mxu0
    %v4587 = vadd.f32 %v4534, %v4586
    %v4588 = vpop.f32.mrb[0].mxu0
    %v4589 = vadd.f32 %v4536, %v4588
    %4590 = vmatprep.mubr.bf16.mxu0 %v3722
    %4591 = vmatmul.mubr.bf16.gmra.mrb[0].mxu0 %v3721
    %v4592 = vpop.f32.mrb[0].mxu0
    %v4593 = vadd.f32 %v4540, %v4592
    %v4594 = vpop.f32.mrb[0].mxu0
    %v4595 = vadd.f32 %v4542, %v4594
    %v4596 = vpop.f32.mrb[0].mxu0
    %v4597 = vadd.f32 %v4544, %v4596
    %v4598 = vpop.f32.mrb[0].mxu0
    %v4599 = vadd.f32 %v4546, %v4598
    %4600 = vdwg.mxu0
    %4601 = vmatprep.subr.bf16.mxu0 %v4304
    %4602 = vmatpush1.bf16.msra.mxu0 %v4303
    %4603 = vmatprep.subr.bf16.mxu0 %v4306
    %4604 = vmatpush1.bf16.msra.mxu0 %v4305
    %4605 = vmatprep.subr.bf16.mxu0 %v4308
    %4606 = vmatpush1.bf16.msra.mxu0 %v4307
    %4607 = vmatprep.subr.bf16.mxu0 %v4310
    %4608 = vmatpush1.bf16.msra.mxu0 %v4309
    %4609 = vmatprep.subr.bf16.mxu0 %v4312
    %4610 = vmatpush1.bf16.msra.mxu0 %v4311
    %4611 = vmatprep.subr.bf16.mxu0 %v4314
    %4612 = vmatpush1.bf16.msra.mxu0 %v4313
    %4613 = vmatprep.subr.bf16.mxu0 %v4316
    %4614 = vmatpush1.bf16.msra.mxu0 %v4315
    %4615 = vmatprep.subr.bf16.mxu0 %v4318
    %4616 = vmatpush1.bf16.msra.mxu0 %v4317
    %4617 = vmatprep.subr.bf16.mxu0 %v4320
    %4618 = vmatpush1.bf16.msra.mxu0 %v4319
    %4619 = vmatprep.subr.bf16.mxu0 %v4322
    %4620 = vmatpush1.bf16.msra.mxu0 %v4321
    %4621 = vmatprep.subr.bf16.mxu0 %v4324
    %4622 = vmatpush1.bf16.msra.mxu0 %v4323
    %4623 = vmatprep.subr.bf16.mxu0 %v4326
    %4624 = vmatpush1.bf16.msra.mxu0 %v4325
    %4625 = vmatprep.subr.bf16.mxu0 %v4328
    %4626 = vmatpush1.bf16.msra.mxu0 %v4327
    %4627 = vmatprep.subr.bf16.mxu0 %v4330
    %4628 = vmatpush1.bf16.msra.mxu0 %v4329
    %4629 = vmatprep.subr.bf16.mxu0 %v4332
    %4630 = vmatpush1.bf16.msra.mxu0 %v4331
    %4631 = vmatprep.subr.bf16.mxu0 %v4334
    %4632 = vmatpush1.bf16.msra.mxu0 %v4333
    %4633 = vmatprep.mubr.bf16.mxu0 %v3716
    %4634 = vmatmul.mubr.bf16.gmra.mrb[0].mxu0 %v3715
    %v4635 = vpop.f32.mrb[0].mxu0
    %v4636 = vadd.f32 %v4583, %v4635
    %v4637 = vpop.f32.mrb[0].mxu0
    %v4638 = vadd.f32 %v4585, %v4637
    %v4639 = vpop.f32.mrb[0].mxu0
    %v4640 = vadd.f32 %v4587, %v4639
    %v4641 = vpop.f32.mrb[0].mxu0
    %v4642 = vadd.f32 %v4589, %v4641
    %4643 = vmatprep.mubr.bf16.mxu0 %v3724
    %4644 = vmatmul.mubr.bf16.gmra.mrb[0].mxu0 %v3723
    %v4645 = vpop.f32.mrb[0].mxu0
    %v4646 = vadd.f32 %v4593, %v4645
    %v4647 = vpop.f32.mrb[0].mxu0
    %v4648 = vadd.f32 %v4595, %v4647
    %v4649 = vpop.f32.mrb[0].mxu0
    %v4650 = vadd.f32 %v4597, %v4649
    %v4651 = vpop.f32.mrb[0].mxu0
    %v4652 = vadd.f32 %v4599, %v4651
    %4653 = vdwg.mxu0
    %4654 = vmatprep.subr.bf16.mxu0 %v4336
    %4655 = vmatpush1.bf16.msra.mxu0 %v4335
    %4656 = vmatprep.subr.bf16.mxu0 %v4338
    %4657 = vmatpush1.bf16.msra.mxu0 %v4337
    %4658 = vmatprep.subr.bf16.mxu0 %v4340
    %4659 = vmatpush1.bf16.msra.mxu0 %v4339
    %4660 = vmatprep.subr.bf16.mxu0 %v4342
    %4661 = vmatpush1.bf16.msra.mxu0 %v4341
    %4662 = vmatprep.subr.bf16.mxu0 %v4344
    %4663 = vmatpush1.bf16.msra.mxu0 %v4343
    %4664 = vmatprep.subr.bf16.mxu0 %v4346
    %4665 = vmatpush1.bf16.msra.mxu0 %v4345
    %4666 = vmatprep.subr.bf16.mxu0 %v4348
    %4667 = vmatpush1.bf16.msra.mxu0 %v4347
    %4668 = vmatprep.subr.bf16.mxu0 %v4350
    %4669 = vmatpush1.bf16.msra.mxu0 %v4349
    %4670 = vmatprep.subr.bf16.mxu0 %v4352
    %4671 = vmatpush1.bf16.msra.mxu0 %v4351
    %4672 = vmatprep.subr.bf16.mxu0 %v4354
    %4673 = vmatpush1.bf16.msra.mxu0 %v4353
    %4674 = vmatprep.subr.bf16.mxu0 %v4356
    %4675 = vmatpush1.bf16.msra.mxu0 %v4355
    %4676 = vmatprep.subr.bf16.mxu0 %v4358
    %4677 = vmatpush1.bf16.msra.mxu0 %v4357
    %4678 = vmatprep.subr.bf16.mxu0 %v4360
    %4679 = vmatpush1.bf16.msra.mxu0 %v4359
    %4680 = vmatprep.subr.bf16.mxu0 %v4362
    %4681 = vmatpush1.bf16.msra.mxu0 %v4361
    %4682 = vmatprep.subr.bf16.mxu0 %v4364
    %4683 = vmatpush1.bf16.msra.mxu0 %v4363
    %4684 = vmatprep.subr.bf16.mxu0 %v4366
    %4685 = vmatpush1.bf16.msra.mxu0 %v4365
    %4686 = vmatprep.mubr.bf16.mxu0 %v3718
    %4687 = vmatmul.mubr.bf16.gmra.mrb[0].mxu0 %v3717
    %v4688 = vpop.f32.mrb[0].mxu0
    %v4689 = vadd.f32 %v4636, %v4688
    %v4690 = vpop.f32.mrb[0].mxu0
    %v4691 = vadd.f32 %v4638, %v4690
    %v4692 = vpop.f32.mrb[0].mxu0
    %v4693 = vadd.f32 %v4640, %v4692
    %v4694 = vpop.f32.mrb[0].mxu0
    %v4695 = vadd.f32 %v4642, %v4694
    %4696 = vmatprep.mubr.bf16.mxu0 %v3726
    %4697 = vmatmul.mubr.bf16.gmra.mrb[0].mxu0 %v3725
    %v4698 = vpop.f32.mrb[0].mxu0
    %v4699 = vadd.f32 %v4646, %v4698
    %v4700 = vpop.f32.mrb[0].mxu0
    %v4701 = vadd.f32 %v4648, %v4700
    %v4702 = vpop.f32.mrb[0].mxu0
    %v4703 = vadd.f32 %v4650, %v4702
    %v4704 = vpop.f32.mrb[0].mxu0
    %v4705 = vadd.f32 %v4652, %v4704
    %4706 = vdwg.mxu0
    %v4707 = vadd.f32 %v4689, %v4693
    %v4708 = vadd.f32 %v4707, %v4699
    %v4709 = vadd.f32 %v4708, %v4703
    %v4710 = vrot.slane %v4709, 4
    %v4711 = vadd.f32 %v4709, %v4710
    %v4712 = vrot.slane %v4711, 2
    %v4713 = vadd.f32 %v4711, %v4712
    %v4714 = vrot.slane %v4713, 1
    %v4715 = vadd.f32 %v4713, %v4714
    %v4716 = vadd.f32 %v4691, %v4695
    %v4717 = vadd.f32 %v4716, %v4701
    %v4718 = vadd.f32 %v4717, %v4705
    %v4719 = vrot.slane %v4718, 4
    %v4720 = vadd.f32 %v4718, %v4719
    %v4721 = vrot.slane %v4720, 2
    %v4722 = vadd.f32 %v4720, %v4721
    %v4723 = vrot.slane %v4722, 1
    %v4724 = vadd.f32 %v4722, %v4723
    %v4725 = vmul.f32 %v4689, %v4689
    %v4726 = vmul.f32 %v4691, %v4691
    %v4727 = vmul.f32 %v4693, %v4693
    %v4728 = vmul.f32 %v4695, %v4695
    %v4729 = vmul.f32 %v4699, %v4699
    %v4730 = vmul.f32 %v4701, %v4701
    %v4731 = vmul.f32 %v4703, %v4703
    %v4732 = vmul.f32 %v4705, %v4705
    %v4733 = vadd.f32 %v4725, %v4727
    %v4734 = vadd.f32 %v4733, %v4729
    %v4735 = vadd.f32 %v4734, %v4731
    %v4736 = vrot.slane %v4735, 4
    %v4737 = vadd.f32 %v4735, %v4736
    %v4738 = vrot.slane %v4737, 2
    %v4739 = vadd.f32 %v4737, %v4738
    %v4740 = vrot.slane %v4739, 1
    %v4741 = vadd.f32 %v4739, %v4740
    %v4742 = vadd.f32 %v4726, %v4728
    %v4743 = vadd.f32 %v4742, %v4730
    %v4744 = vadd.f32 %v4743, %v4732
    %v4745 = vrot.slane %v4744, 4
    %v4746 = vadd.f32 %v4744, %v4745
    %v4747 = vrot.slane %v4746, 2
    %v4748 = vadd.f32 %v4746, %v4747
    %v4749 = vrot.slane %v4748, 1
    %v4750 = vadd.f32 %v4748, %v4749
    %v4751 = vld [vmem:[%s17] sm:$0xff]
    %v4752 = vld [vmem:[%s17 + $0x8] sm:$0xff]
    %v4753 = vld [vmem:[%s17 + $0x10] sm:$0xff]
    %v4754 = vld [vmem:[%s17 + $0x18] sm:$0xff]
    %v4755 = vld [vmem:[%s17 + $0x20] sm:$0xff]
    %v4756 = vld [vmem:[%s17 + $0x28] sm:$0xff]
    %v4757 = vld [vmem:[%s17 + $0x30] sm:$0xff]
    %v4758 = vld [vmem:[%s17 + $0x38] sm:$0xff]
    %v4759 = vld [vmem:[%s17 + $0x40] sm:$0xff]
    %v4760 = vld [vmem:[%s17 + $0x48] sm:$0xff]
    %v4761 = vld [vmem:[%s17 + $0x50] sm:$0xff]
    %v4762 = vld [vmem:[%s17 + $0x58] sm:$0xff]
    %v4763 = vld [vmem:[%s17 + $0x60] sm:$0xff]
    %v4764 = vld [vmem:[%s17 + $0x68] sm:$0xff]
    %v4765 = vld [vmem:[%s17 + $0x70] sm:$0xff]
    %v4766 = vld [vmem:[%s17 + $0x78] sm:$0xff]
    %v4767 = vld [vmem:[%s17 + $0x80] sm:$0xff]
    %v4768 = vld [vmem:[%s17 + $0x88] sm:$0xff]
    %v4769 = vld [vmem:[%s17 + $0x90] sm:$0xff]
    %v4770 = vld [vmem:[%s17 + $0x98] sm:$0xff]
    %v4771 = vld [vmem:[%s17 + $0xa0] sm:$0xff]
    %v4772 = vld [vmem:[%s17 + $0xa8] sm:$0xff]
    %v4773 = vld [vmem:[%s17 + $0xb0] sm:$0xff]
    %v4774 = vld [vmem:[%s17 + $0xb8] sm:$0xff]
    %v4775 = vld [vmem:[%s17 + $0xc0] sm:$0xff]
    %v4776 = vld [vmem:[%s17 + $0xc8] sm:$0xff]
    %v4777 = vld [vmem:[%s17 + $0xd0] sm:$0xff]
    %v4778 = vld [vmem:[%s17 + $0xd8] sm:$0xff]
    %v4779 = vld [vmem:[%s17 + $0xe0] sm:$0xff]
    %v4780 = vld [vmem:[%s17 + $0xe8] sm:$0xff]
    %v4781 = vld [vmem:[%s17 + $0xf0] sm:$0xff]
    %v4782 = vld [vmem:[%s17 + $0xf8] sm:$0xff]
    %4783 = vmatprep.subr.mxu0 0.0
    %4784 = vmatpush1.msra.mxu0 %v4751
    %4785 = vmatprep.subr.mxu0 0.0
    %4786 = vmatpush1.msra.mxu0 %v4752
    %4787 = vmatprep.subr.mxu0 0.0
    %4788 = vmatpush1.msra.mxu0 %v4753
    %4789 = vmatprep.subr.mxu0 0.0
    %4790 = vmatpush1.msra.mxu0 %v4754
    %4791 = vmatprep.subr.mxu0 0.0
    %4792 = vmatpush1.msra.mxu0 %v4755
    %4793 = vmatprep.subr.mxu0 0.0
    %4794 = vmatpush1.msra.mxu0 %v4756
    %4795 = vmatprep.subr.mxu0 0.0
    %4796 = vmatpush1.msra.mxu0 %v4757
    %4797 = vmatprep.subr.mxu0 0.0
    %4798 = vmatpush1.msra.mxu0 %v4758
    %4799 = vmatprep.subr.mxu0 0.0
    %4800 = vmatpush1.msra.mxu0 %v4759
    %4801 = vmatprep.subr.mxu0 0.0
    %4802 = vmatpush1.msra.mxu0 %v4760
    %4803 = vmatprep.subr.mxu0 0.0
    %4804 = vmatpush1.msra.mxu0 %v4761
    %4805 = vmatprep.subr.mxu0 0.0
    %4806 = vmatpush1.msra.mxu0 %v4762
    %4807 = vmatprep.subr.mxu0 0.0
    %4808 = vmatpush1.msra.mxu0 %v4763
    %4809 = vmatprep.subr.mxu0 0.0
    %4810 = vmatpush1.msra.mxu0 %v4764
    %4811 = vmatprep.subr.mxu0 0.0
    %4812 = vmatpush1.msra.mxu0 %v4765
    %4813 = vmatprep.subr.mxu0 0.0
    %4814 = vmatpush1.msra.mxu0 %v4766
    %4815 = vmatprep.subr.mxu0 0.0
    %4816 = vmatpush1.msra.mxu0 %v4767
    %4817 = vmatprep.subr.mxu0 0.0
    %4818 = vmatpush1.msra.mxu0 %v4768
    %4819 = vmatprep.subr.mxu0 0.0
    %4820 = vmatpush1.msra.mxu0 %v4769
    %4821 = vmatprep.subr.mxu0 0.0
    %4822 = vmatpush1.msra.mxu0 %v4770
    %4823 = vmatprep.subr.mxu0 0.0
    %4824 = vmatpush1.msra.mxu0 %v4771
    %4825 = vmatprep.subr.mxu0 0.0
    %4826 = vmatpush1.msra.mxu0 %v4772
    %4827 = vmatprep.subr.mxu0 0.0
    %4828 = vmatpush1.msra.mxu0 %v4773
    %4829 = vmatprep.subr.mxu0 0.0
    %4830 = vmatpush1.msra.mxu0 %v4774
    %4831 = vmatprep.subr.mxu0 0.0
    %4832 = vmatpush1.msra.mxu0 %v4775
    %4833 = vmatprep.subr.mxu0 0.0
    %4834 = vmatpush1.msra.mxu0 %v4776
    %4835 = vmatprep.subr.mxu0 0.0
    %4836 = vmatpush1.msra.mxu0 %v4777
    %4837 = vmatprep.subr.mxu0 0.0
    %4838 = vmatpush1.msra.mxu0 %v4778
    %4839 = vmatprep.subr.mxu0 0.0
    %4840 = vmatpush1.msra.mxu0 %v4779
    %4841 = vmatprep.subr.mxu0 0.0
    %4842 = vmatpush1.msra.mxu0 %v4780
    %4843 = vmatprep.subr.mxu0 0.0
    %4844 = vmatpush1.msra.mxu0 %v4781
    %4845 = vmatprep.subr.mxu0 0.0
    %4846 = vmatpush1.msra.mxu0 %v4782
    %4847 = vmatprep.mubr.f32.mxu0 %v4724
    %4848 = vmatmul.mubr.f32.gmra.mrb[0].mxu0 %v4715
    %v4849 = vpop.f32.mrb[0].mxu0
    %v4850 = vadd.f32 0.0, %v4849
    %v4851 = vpop.f32.mrb[0].mxu0
    %4852 = vdwg.mxu0
    %v4853 = vmul.f32 %v4850, 0.001953125
    %4854 = vmatprep.subr.mxu0 0.0
    %4855 = vmatpush1.msra.mxu0 %v4751
    %4856 = vmatprep.subr.mxu0 0.0
    %4857 = vmatpush1.msra.mxu0 %v4752
    %4858 = vmatprep.subr.mxu0 0.0
    %4859 = vmatpush1.msra.mxu0 %v4753
    %4860 = vmatprep.subr.mxu0 0.0
    %4861 = vmatpush1.msra.mxu0 %v4754
    %4862 = vmatprep.subr.mxu0 0.0
    %4863 = vmatpush1.msra.mxu0 %v4755
    %4864 = vmatprep.subr.mxu0 0.0
    %4865 = vmatpush1.msra.mxu0 %v4756
    %4866 = vmatprep.subr.mxu0 0.0
    %4867 = vmatpush1.msra.mxu0 %v4757
    %4868 = vmatprep.subr.mxu0 0.0
    %4869 = vmatpush1.msra.mxu0 %v4758
    %4870 = vmatprep.subr.mxu0 0.0
    %4871 = vmatpush1.msra.mxu0 %v4759
    %4872 = vmatprep.subr.mxu0 0.0
    %4873 = vmatpush1.msra.mxu0 %v4760
    %4874 = vmatprep.subr.mxu0 0.0
    %4875 = vmatpush1.msra.mxu0 %v4761
    %4876 = vmatprep.subr.mxu0 0.0
    %4877 = vmatpush1.msra.mxu0 %v4762
    %4878 = vmatprep.subr.mxu0 0.0
    %4879 = vmatpush1.msra.mxu0 %v4763
    %4880 = vmatprep.subr.mxu0 0.0
    %4881 = vmatpush1.msra.mxu0 %v4764
    %4882 = vmatprep.subr.mxu0 0.0
    %4883 = vmatpush1.msra.mxu0 %v4765
    %4884 = vmatprep.subr.mxu0 0.0
    %4885 = vmatpush1.msra.mxu0 %v4766
    %4886 = vmatprep.subr.mxu0 0.0
    %4887 = vmatpush1.msra.mxu0 %v4767
    %4888 = vmatprep.subr.mxu0 0.0
    %4889 = vmatpush1.msra.mxu0 %v4768
    %4890 = vmatprep.subr.mxu0 0.0
    %4891 = vmatpush1.msra.mxu0 %v4769
    %4892 = vmatprep.subr.mxu0 0.0
    %4893 = vmatpush1.msra.mxu0 %v4770
    %4894 = vmatprep.subr.mxu0 0.0
    %4895 = vmatpush1.msra.mxu0 %v4771
    %4896 = vmatprep.subr.mxu0 0.0
    %4897 = vmatpush1.msra.mxu0 %v4772
    %4898 = vmatprep.subr.mxu0 0.0
    %4899 = vmatpush1.msra.mxu0 %v4773
    %4900 = vmatprep.subr.mxu0 0.0
    %4901 = vmatpush1.msra.mxu0 %v4774
    %4902 = vmatprep.subr.mxu0 0.0
    %4903 = vmatpush1.msra.mxu0 %v4775
    %4904 = vmatprep.subr.mxu0 0.0
    %4905 = vmatpush1.msra.mxu0 %v4776
    %4906 = vmatprep.subr.mxu0 0.0
    %4907 = vmatpush1.msra.mxu0 %v4777
    %4908 = vmatprep.subr.mxu0 0.0
    %4909 = vmatpush1.msra.mxu0 %v4778
    %4910 = vmatprep.subr.mxu0 0.0
    %4911 = vmatpush1.msra.mxu0 %v4779
    %4912 = vmatprep.subr.mxu0 0.0
    %4913 = vmatpush1.msra.mxu0 %v4780
    %4914 = vmatprep.subr.mxu0 0.0
    %4915 = vmatpush1.msra.mxu0 %v4781
    %4916 = vmatprep.subr.mxu0 0.0
    %4917 = vmatpush1.msra.mxu0 %v4782
    %4918 = vmatprep.mubr.f32.mxu0 %v4750
    %4919 = vmatmul.mubr.f32.gmra.mrb[0].mxu0 %v4741
    %v4920 = vpop.f32.mrb[0].mxu0
    %v4921 = vadd.f32 0.0, %v4920
    %v4922 = vpop.f32.mrb[0].mxu0
    %4923 = vdwg.mxu0
    %v4924 = vmul.f32 %v4921, 0.001953125
    %v4925 = vmul.f32 %v4853, %v4853
    %v4926 = vsub.f32 %v4924, %v4925
    %v4927 = vadd.f32 %v4926, 1e-05
    %v4928 = vrsqrt.pop %v4927
    %v4929 = vld [vmem:[#allocation10] sm:$0x1]
    %v4930 = vmul.f32 %v4929, %v4928
    %v4931 = vld [vmem:[#allocation10 + $0x1] sm:$0x1]
    %v4932 = vmul.f32 %v4853, %v4930
    %v4933 = vsub.f32 %v4931, %v4932
    %v4934 = vld [vmem:[#allocation11] sm:$0xff]
    %v4935 = vld [vmem:[#allocation11 + $0x8] sm:$0xff]
    %v4936 = vld [vmem:[#allocation11 + $0x10] sm:$0xff]
    %v4937 = vld [vmem:[#allocation11 + $0x18] sm:$0xff]
    %v4939 = vsel %vm3429, %v4930, 0
    %4941 = vmatprep.subr.mxu0 %v4935
    %4942 = vmatpush1.msra.mxu0 %v4934
    %4943 = vmatprep.subr.mxu0 %v4937
    %4944 = vmatpush1.msra.mxu0 %v4936
    %4945 = vmatprep.subr.mxu0 0.0
    %4946 = vmatpush1.msra.mxu0 0.0
    %4947 = vmatprep.subr.mxu0 0.0
    %4948 = vmatpush1.msra.mxu0 0.0
    %4949 = vmatprep.subr.mxu0 0.0
    %4950 = vmatpush1.msra.mxu0 0.0
    %4951 = vmatprep.subr.mxu0 0.0
    %4952 = vmatpush1.msra.mxu0 0.0
    %4953 = vmatprep.subr.mxu0 0.0
    %4954 = vmatpush1.msra.mxu0 0.0
    %4955 = vmatprep.subr.mxu0 0.0
    %4956 = vmatpush1.msra.mxu0 0.0
    %4957 = vmatprep.subr.mxu0 0.0
    %4958 = vmatpush1.msra.mxu0 0.0
    %4959 = vmatprep.subr.mxu0 0.0
    %4960 = vmatpush1.msra.mxu0 0.0
    %4961 = vmatprep.subr.mxu0 0.0
    %4962 = vmatpush1.msra.mxu0 0.0
    %4963 = vmatprep.subr.mxu0 0.0
    %4964 = vmatpush1.msra.mxu0 0.0
    %4965 = vmatprep.subr.mxu0 0.0
    %4966 = vmatpush1.msra.mxu0 0.0
    %4967 = vmatprep.subr.mxu0 0.0
    %4968 = vmatpush1.msra.mxu0 0.0
    %4969 = vmatprep.subr.mxu0 0.0
    %4970 = vmatpush1.msra.mxu0 0.0
    %4971 = vmatprep.subr.mxu0 0.0
    %4972 = vmatpush1.msra.mxu0 0.0
    %4973 = vmatprep.subr.mxu0 0.0
    %4974 = vmatpush1.msra.mxu0 0.0
    %4975 = vmatprep.subr.mxu0 0.0
    %4976 = vmatpush1.msra.mxu0 0.0
    %4977 = vmatprep.subr.mxu0 0.0
    %4978 = vmatpush1.msra.mxu0 0.0
    %4979 = vmatprep.subr.mxu0 0.0
    %4980 = vmatpush1.msra.mxu0 0.0
    %4981 = vmatprep.subr.mxu0 0.0
    %4982 = vmatpush1.msra.mxu0 0.0
    %4983 = vmatprep.subr.mxu0 0.0
    %4984 = vmatpush1.msra.mxu0 0.0
    %4985 = vmatprep.subr.mxu0 0.0
    %4986 = vmatpush1.msra.mxu0 0.0
    %4987 = vmatprep.subr.mxu0 0.0
    %4988 = vmatpush1.msra.mxu0 0.0
    %4989 = vmatprep.subr.mxu0 0.0
    %4990 = vmatpush1.msra.mxu0 0.0
    %4991 = vmatprep.subr.mxu0 0.0
    %4992 = vmatpush1.msra.mxu0 0.0
    %4993 = vmatprep.subr.mxu0 0.0
    %4994 = vmatpush1.msra.mxu0 0.0
    %4995 = vmatprep.subr.mxu0 0.0
    %4996 = vmatpush1.msra.mxu0 0.0
    %4997 = vmatprep.subr.mxu0 0.0
    %4998 = vmatpush1.msra.mxu0 0.0
    %4999 = vmatprep.subr.mxu0 0.0
    %5000 = vmatpush1.msra.mxu0 0.0
    %5001 = vmatprep.subr.mxu0 0.0
    %5002 = vmatpush1.msra.mxu0 0.0
    %5003 = vmatprep.subr.mxu0 0.0
    %5004 = vmatpush1.msra.mxu0 0.0
    %5005 = vmatprep.mubr.f32.mxu0 0.0
    %5006 = vmatmul.mubr.f32.gmra.mrb[0].mxu0 %v4939
    %v5007 = vpop.f32.mrb[0].mxu0
    %v5008 = vadd.f32 0.0, %v5007
    %v5009 = vpop.f32.mrb[0].mxu0
    %v5010 = vadd.f32 0.0, %v5009
    %5011 = vdwg.mxu0
    %v5013 = vsel %vm3429, %v4933, 0
    %5015 = vmatprep.subr.mxu0 %v4935
    %5016 = vmatpush1.msra.mxu0 %v4934
    %5017 = vmatprep.subr.mxu0 %v4937
    %5018 = vmatpush1.msra.mxu0 %v4936
    %5019 = vmatprep.subr.mxu0 0.0
    %5020 = vmatpush1.msra.mxu0 0.0
    %5021 = vmatprep.subr.mxu0 0.0
    %5022 = vmatpush1.msra.mxu0 0.0
    %5023 = vmatprep.subr.mxu0 0.0
    %5024 = vmatpush1.msra.mxu0 0.0
    %5025 = vmatprep.subr.mxu0 0.0
    %5026 = vmatpush1.msra.mxu0 0.0
    %5027 = vmatprep.subr.mxu0 0.0
    %5028 = vmatpush1.msra.mxu0 0.0
    %5029 = vmatprep.subr.mxu0 0.0
    %5030 = vmatpush1.msra.mxu0 0.0
    %5031 = vmatprep.subr.mxu0 0.0
    %5032 = vmatpush1.msra.mxu0 0.0
    %5033 = vmatprep.subr.mxu0 0.0
    %5034 = vmatpush1.msra.mxu0 0.0
    %5035 = vmatprep.subr.mxu0 0.0
    %5036 = vmatpush1.msra.mxu0 0.0
    %5037 = vmatprep.subr.mxu0 0.0
    %5038 = vmatpush1.msra.mxu0 0.0
    %5039 = vmatprep.subr.mxu0 0.0
    %5040 = vmatpush1.msra.mxu0 0.0
    %5041 = vmatprep.subr.mxu0 0.0
    %5042 = vmatpush1.msra.mxu0 0.0
    %5043 = vmatprep.subr.mxu0 0.0
    %5044 = vmatpush1.msra.mxu0 0.0
    %5045 = vmatprep.subr.mxu0 0.0
    %5046 = vmatpush1.msra.mxu0 0.0
    %5047 = vmatprep.subr.mxu0 0.0
    %5048 = vmatpush1.msra.mxu0 0.0
    %5049 = vmatprep.subr.mxu0 0.0
    %5050 = vmatpush1.msra.mxu0 0.0
    %5051 = vmatprep.subr.mxu0 0.0
    %5052 = vmatpush1.msra.mxu0 0.0
    %5053 = vmatprep.subr.mxu0 0.0
    %5054 = vmatpush1.msra.mxu0 0.0
    %5055 = vmatprep.subr.mxu0 0.0
    %5056 = vmatpush1.msra.mxu0 0.0
    %5057 = vmatprep.subr.mxu0 0.0
    %5058 = vmatpush1.msra.mxu0 0.0
    %5059 = vmatprep.subr.mxu0 0.0
    %5060 = vmatpush1.msra.mxu0 0.0
    %5061 = vmatprep.subr.mxu0 0.0
    %5062 = vmatpush1.msra.mxu0 0.0
    %5063 = vmatprep.subr.mxu0 0.0
    %5064 = vmatpush1.msra.mxu0 0.0
    %5065 = vmatprep.subr.mxu0 0.0
    %5066 = vmatpush1.msra.mxu0 0.0
    %5067 = vmatprep.subr.mxu0 0.0
    %5068 = vmatpush1.msra.mxu0 0.0
    %5069 = vmatprep.subr.mxu0 0.0
    %5070 = vmatpush1.msra.mxu0 0.0
    %5071 = vmatprep.subr.mxu0 0.0
    %5072 = vmatpush1.msra.mxu0 0.0
    %5073 = vmatprep.subr.mxu0 0.0
    %5074 = vmatpush1.msra.mxu0 0.0
    %5075 = vmatprep.subr.mxu0 0.0
    %5076 = vmatpush1.msra.mxu0 0.0
    %5077 = vmatprep.subr.mxu0 0.0
    %5078 = vmatpush1.msra.mxu0 0.0
    %5079 = vmatprep.mubr.f32.mxu0 0.0
    %5080 = vmatmul.mubr.f32.gmra.mrb[0].mxu0 %v5013
    %v5081 = vpop.f32.mrb[0].mxu0
    %v5082 = vadd.f32 0.0, %v5081
    %v5083 = vpop.f32.mrb[0].mxu0
    %v5084 = vadd.f32 0.0, %v5083
    %5085 = vdwg.mxu0
    %v5086 = vlaneseq
    %v5087 = vshrl.u32 %v5086, 7
    %v5088 = vsub.s32 0, %v5087
    %v5089 = vrot.slane %v5008, %v5088
    %v5090 = vlaneseq
    %v5091 = vshrl.u32 %v5090, 7
    %v5092 = vsub.s32 0, %v5091
    %v5093 = vrot.slane %v5010, %v5092
    %v5094 = vmul.f32 %v4689, %v5089
    %v5095 = vmul.f32 %v4691, %v5093
    %v5096 = vmul.f32 %v4693, %v5089
    %v5097 = vmul.f32 %v4695, %v5093
    %v5098 = vmul.f32 %v4699, %v5089
    %v5099 = vmul.f32 %v4701, %v5093
    %v5100 = vmul.f32 %v4703, %v5089
    %v5101 = vmul.f32 %v4705, %v5093
    %v5102 = vlaneseq
    %v5103 = vshrl.u32 %v5102, 7
    %v5104 = vsub.s32 0, %v5103
    %v5105 = vrot.slane %v5082, %v5104
    %v5106 = vlaneseq
    %v5107 = vshrl.u32 %v5106, 7
    %v5108 = vsub.s32 0, %v5107
    %v5109 = vrot.slane %v5084, %v5108
    %v5110 = vadd.f32 %v5094, %v5105
    %v5111 = vadd.f32 %v5095, %v5109
    %v5112 = vadd.f32 %v5096, %v5105
    %v5113 = vadd.f32 %v5097, %v5109
    %v5114 = vadd.f32 %v5098, %v5105
    %v5115 = vadd.f32 %v5099, %v5109
    %v5116 = vadd.f32 %v5100, %v5105
    %v5117 = vadd.f32 %v5101, %v5109
    %vm5118 = vcmp.gt.f32.partialorder %v5110, 0.0
    %vm5119 = vcmp.gt.f32.partialorder %v5111, 0.0
    %vm5120 = vcmp.gt.f32.partialorder %v5112, 0.0
    %vm5121 = vcmp.gt.f32.partialorder %v5113, 0.0
    %vm5122 = vcmp.gt.f32.partialorder %v5114, 0.0
    %vm5123 = vcmp.gt.f32.partialorder %v5115, 0.0
    %vm5124 = vcmp.gt.f32.partialorder %v5116, 0.0
    %vm5125 = vcmp.gt.f32.partialorder %v5117, 0.0
    %v5126 = vmul.f32 %v5110, 0.2
    %v5127 = vmul.f32 %v5111, 0.2
    %v5128 = vmul.f32 %v5112, 0.2
    %v5129 = vmul.f32 %v5113, 0.2
    %v5130 = vmul.f32 %v5114, 0.2
    %v5131 = vmul.f32 %v5115, 0.2
    %v5132 = vmul.f32 %v5116, 0.2
    %v5133 = vmul.f32 %v5117, 0.2
    %v5134 = vsel %vm5118, %v5110, %v5126
    %v5135 = vsel %vm5119, %v5111, %v5127
    %v5136 = vsel %vm5120, %v5112, %v5128
    %v5137 = vsel %vm5121, %v5113, %v5129
    %v5138 = vsel %vm5122, %v5114, %v5130
    %v5139 = vsel %vm5123, %v5115, %v5131
    %v5140 = vsel %vm5124, %v5116, %v5132
    %v5141 = vsel %vm5125, %v5117, %v5133
    %v5142 = vpack.c.bf16 %v5136, %v5134
    %v5143 = vpack.c.bf16 %v5137, %v5135
    %v5144 = vpack.c.bf16 %v5140, %v5138
    %v5145 = vpack.c.bf16 %v5141, %v5139
    %v5146 = vld [vmem:[%s19] sm:$0xf]
    %v5147 = vld [vmem:[%s19 + $0x4] sm:$0xf]
    %v5148 = vld [vmem:[%s19 + $0x8] sm:$0xf]
    %v5149 = vld [vmem:[%s19 + $0xc] sm:$0xf]
    %v5150 = vld [vmem:[%s19 + $0x10] sm:$0xf]
    %v5151 = vld [vmem:[%s19 + $0x14] sm:$0xf]
    %v5152 = vld [vmem:[%s19 + $0x18] sm:$0xf]
    %v5153 = vld [vmem:[%s19 + $0x1c] sm:$0xf]
    %v5162 = vunpack.c.l.b16 %v5146
    %v5163 = vunpack.c.l.b16 %v5147
    %v5164 = vunpack.c.l.b16 %v5148
    %v5165 = vunpack.c.l.b16 %v5149
    %v5166 = vunpack.c.l.b16 %v5150
    %v5167 = vunpack.c.l.b16 %v5151
    %v5168 = vunpack.c.l.b16 %v5152
    %v5169 = vunpack.c.l.b16 %v5153
    %v5170 = vpack.c.b16 %v5163, %v5162
    %v5171 = vpack.c.b16 %v5165, %v5164
    %v5172 = vpack.c.b16 %v5167, %v5166
    %v5173 = vpack.c.b16 %v5169, %v5168
    %v5175 = vsel %vm3228, %v5170, 0
    %v5178 = vsel %vm3228, %v5171, 0
    %v5181 = vsel %vm3228, %v5172, 0
    %v5184 = vsel %vm3228, %v5173, 0
    %5186 = vmatprep.subr.bf16.mxu0 %v5143
    %5187 = vmatpush1.bf16.msra.mxu0 %v5142
    %5188 = vmatprep.subr.bf16.mxu0 %v5145
    %5189 = vmatpush1.bf16.msra.mxu0 %v5144
    %5190 = vmatprep.subr.bf16.mxu0 0
    %5191 = vmatpush1.bf16.msra.mxu0 0
    %5192 = vmatprep.subr.bf16.mxu0 0
    %5193 = vmatpush1.bf16.msra.mxu0 0
    %5194 = vmatprep.subr.bf16.mxu0 0
    %5195 = vmatpush1.bf16.msra.mxu0 0
    %5196 = vmatprep.subr.bf16.mxu0 0
    %5197 = vmatpush1.bf16.msra.mxu0 0
    %5198 = vmatprep.subr.bf16.mxu0 0
    %5199 = vmatpush1.bf16.msra.mxu0 0
    %5200 = vmatprep.subr.bf16.mxu0 0
    %5201 = vmatpush1.bf16.msra.mxu0 0
    %5202 = vmatprep.subr.bf16.mxu0 0
    %5203 = vmatpush1.bf16.msra.mxu0 0
    %5204 = vmatprep.subr.bf16.mxu0 0
    %5205 = vmatpush1.bf16.msra.mxu0 0
    %5206 = vmatprep.subr.bf16.mxu0 0
    %5207 = vmatpush1.bf16.msra.mxu0 0
    %5208 = vmatprep.subr.bf16.mxu0 0
    %5209 = vmatpush1.bf16.msra.mxu0 0
    %5210 = vmatprep.subr.bf16.mxu0 0
    %5211 = vmatpush1.bf16.msra.mxu0 0
    %5212 = vmatprep.subr.bf16.mxu0 0
    %5213 = vmatpush1.bf16.msra.mxu0 0
    %5214 = vmatprep.subr.bf16.mxu0 0
    %5215 = vmatpush1.bf16.msra.mxu0 0
    %5216 = vmatprep.subr.bf16.mxu0 0
    %5217 = vmatpush1.bf16.msra.mxu0 0
    %5218 = vmatprep.mubr.bf16.mxu0 0
    %5219 = vmatmul.mubr.bf16.gmra.mrb[0].mxu0 %v5175
    %v5220 = vpop.f32.mrb[0].mxu0
    %v5221 = vadd.f32 0.0, %v5220
    %v5222 = vpop.f32.mrb[0].mxu0
    %v5223 = vadd.f32 0.0, %v5222
    %v5224 = vpop.f32.mrb[0].mxu0
    %v5225 = vadd.f32 0.0, %v5224
    %v5226 = vpop.f32.mrb[0].mxu0
    %v5227 = vadd.f32 0.0, %v5226
    %5228 = vmatprep.mubr.bf16.mxu0 0
    %5229 = vmatmul.mubr.bf16.gmra.mrb[0].mxu0 %v5178
    %v5230 = vpop.f32.mrb[0].mxu0
    %v5231 = vadd.f32 0.0, %v5230
    %v5232 = vpop.f32.mrb[0].mxu0
    %v5233 = vadd.f32 0.0, %v5232
    %v5234 = vpop.f32.mrb[0].mxu0
    %v5235 = vadd.f32 0.0, %v5234
    %v5236 = vpop.f32.mrb[0].mxu0
    %v5237 = vadd.f32 0.0, %v5236
    %5238 = vmatprep.mubr.bf16.mxu0 0
    %5239 = vmatmul.mubr.bf16.gmra.mrb[0].mxu0 %v5181
    %v5240 = vpop.f32.mrb[0].mxu0
    %v5241 = vadd.f32 0.0, %v5240
    %v5242 = vpop.f32.mrb[0].mxu0
    %v5243 = vadd.f32 0.0, %v5242
    %v5244 = vpop.f32.mrb[0].mxu0
    %v5245 = vadd.f32 0.0, %v5244
    %v5246 = vpop.f32.mrb[0].mxu0
    %v5247 = vadd.f32 0.0, %v5246
    %5248 = vmatprep.mubr.bf16.mxu0 0
    %5249 = vmatmul.mubr.bf16.gmra.mrb[0].mxu0 %v5184
    %v5250 = vpop.f32.mrb[0].mxu0
    %v5251 = vadd.f32 0.0, %v5250
    %v5252 = vpop.f32.mrb[0].mxu0
    %v5253 = vadd.f32 0.0, %v5252
    %v5254 = vpop.f32.mrb[0].mxu0
    %v5255 = vadd.f32 0.0, %v5254
    %v5256 = vpop.f32.mrb[0].mxu0
    %v5257 = vadd.f32 0.0, %v5256
    %5258 = vdwg.mxu0
    %s5259 = scalar_lea.vmem %s19, 32
    %v5260 = vld [vmem:[%s5259] sm:$0xf]
    %v5261 = vld [vmem:[%s5259 + $0x4] sm:$0xf]
    %v5262 = vld [vmem:[%s5259 + $0x8] sm:$0xf]
    %v5263 = vld [vmem:[%s5259 + $0xc] sm:$0xf]
    %v5264 = vld [vmem:[%s5259 + $0x10] sm:$0xf]
    %v5265 = vld [vmem:[%s5259 + $0x14] sm:$0xf]
    %v5266 = vld [vmem:[%s5259 + $0x18] sm:$0xf]
    %v5267 = vld [vmem:[%s5259 + $0x1c] sm:$0xf]
    %v5276 = vunpack.c.l.b16 %v5260
    %v5277 = vunpack.c.l.b16 %v5261
    %v5278 = vunpack.c.l.b16 %v5262
    %v5279 = vunpack.c.l.b16 %v5263
    %v5280 = vunpack.c.l.b16 %v5264
    %v5281 = vunpack.c.l.b16 %v5265
    %v5282 = vunpack.c.l.b16 %v5266
    %v5283 = vunpack.c.l.b16 %v5267
    %v5284 = vpack.c.b16 %v5277, %v5276
    %v5285 = vpack.c.b16 %v5279, %v5278
    %v5286 = vpack.c.b16 %v5281, %v5280
    %v5287 = vpack.c.b16 %v5283, %v5282
    %v5289 = vsel %vm3228, %v5284, 0
    %v5292 = vsel %vm3228, %v5285, 0
    %v5295 = vsel %vm3228, %v5286, 0
    %v5298 = vsel %vm3228, %v5287, 0
    %5300 = vmatprep.subr.bf16.mxu0 %v5143
    %5301 = vmatpush1.bf16.msra.mxu0 %v5142
    %5302 = vmatprep.subr.bf16.mxu0 %v5145
    %5303 = vmatpush1.bf16.msra.mxu0 %v5144
    %5304 = vmatprep.subr.bf16.mxu0 0
    %5305 = vmatpush1.bf16.msra.mxu0 0
    %5306 = vmatprep.subr.bf16.mxu0 0
    %5307 = vmatpush1.bf16.msra.mxu0 0
    %5308 = vmatprep.subr.bf16.mxu0 0
    %5309 = vmatpush1.bf16.msra.mxu0 0
    %5310 = vmatprep.subr.bf16.mxu0 0
    %5311 = vmatpush1.bf16.msra.mxu0 0
    %5312 = vmatprep.subr.bf16.mxu0 0
    %5313 = vmatpush1.bf16.msra.mxu0 0
    %5314 = vmatprep.subr.bf16.mxu0 0
    %5315 = vmatpush1.bf16.msra.mxu0 0
    %5316 = vmatprep.subr.bf16.mxu0 0
    %5317 = vmatpush1.bf16.msra.mxu0 0
    %5318 = vmatprep.subr.bf16.mxu0 0
    %5319 = vmatpush1.bf16.msra.mxu0 0
    %5320 = vmatprep.subr.bf16.mxu0 0
    %5321 = vmatpush1.bf16.msra.mxu0 0
    %5322 = vmatprep.subr.bf16.mxu0 0
    %5323 = vmatpush1.bf16.msra.mxu0 0
    %5324 = vmatprep.subr.bf16.mxu0 0
    %5325 = vmatpush1.bf16.msra.mxu0 0
    %5326 = vmatprep.subr.bf16.mxu0 0
    %5327 = vmatpush1.bf16.msra.mxu0 0
    %5328 = vmatprep.subr.bf16.mxu0 0
    %5329 = vmatpush1.bf16.msra.mxu0 0
    %5330 = vmatprep.subr.bf16.mxu0 0
    %5331 = vmatpush1.bf16.msra.mxu0 0
    %5332 = vmatprep.mubr.bf16.mxu0 0
    %5333 = vmatmul.mubr.bf16.gmra.mrb[0].mxu0 %v5289
    %v5334 = vpop.f32.mrb[0].mxu0
    %v5335 = vadd.f32 0.0, %v5334
    %v5336 = vpop.f32.mrb[0].mxu0
    %v5337 = vadd.f32 0.0, %v5336
    %v5338 = vpop.f32.mrb[0].mxu0
    %v5339 = vadd.f32 0.0, %v5338
    %v5340 = vpop.f32.mrb[0].mxu0
    %v5341 = vadd.f32 0.0, %v5340
    %5342 = vmatprep.mubr.bf16.mxu0 0
    %5343 = vmatmul.mubr.bf16.gmra.mrb[0].mxu0 %v5292
    %v5344 = vpop.f32.mrb[0].mxu0
    %v5345 = vadd.f32 0.0, %v5344
    %v5346 = vpop.f32.mrb[0].mxu0
    %v5347 = vadd.f32 0.0, %v5346
    %v5348 = vpop.f32.mrb[0].mxu0
    %v5349 = vadd.f32 0.0, %v5348
    %v5350 = vpop.f32.mrb[0].mxu0
    %v5351 = vadd.f32 0.0, %v5350
    %5352 = vmatprep.mubr.bf16.mxu0 0
    %5353 = vmatmul.mubr.bf16.gmra.mrb[0].mxu0 %v5295
    %v5354 = vpop.f32.mrb[0].mxu0
    %v5355 = vadd.f32 0.0, %v5354
    %v5356 = vpop.f32.mrb[0].mxu0
    %v5357 = vadd.f32 0.0, %v5356
    %v5358 = vpop.f32.mrb[0].mxu0
    %v5359 = vadd.f32 0.0, %v5358
    %v5360 = vpop.f32.mrb[0].mxu0
    %v5361 = vadd.f32 0.0, %v5360
    %5362 = vmatprep.mubr.bf16.mxu0 0
    %5363 = vmatmul.mubr.bf16.gmra.mrb[0].mxu0 %v5298
    %v5364 = vpop.f32.mrb[0].mxu0
    %v5365 = vadd.f32 0.0, %v5364
    %v5366 = vpop.f32.mrb[0].mxu0
    %v5367 = vadd.f32 0.0, %v5366
    %v5368 = vpop.f32.mrb[0].mxu0
    %v5369 = vadd.f32 0.0, %v5368
    %v5370 = vpop.f32.mrb[0].mxu0
    %v5371 = vadd.f32 0.0, %v5370
    %5372 = vdwg.mxu0
    %s5373 = scalar_lea.vmem %s19, 64
    %v5374 = vld [vmem:[%s5373] sm:$0xf]
    %v5375 = vld [vmem:[%s5373 + $0x4] sm:$0xf]
    %v5376 = vld [vmem:[%s5373 + $0x8] sm:$0xf]
    %v5377 = vld [vmem:[%s5373 + $0xc] sm:$0xf]
    %v5378 = vld [vmem:[%s5373 + $0x10] sm:$0xf]
    %v5379 = vld [vmem:[%s5373 + $0x14] sm:$0xf]
    %v5380 = vld [vmem:[%s5373 + $0x18] sm:$0xf]
    %v5381 = vld [vmem:[%s5373 + $0x1c] sm:$0xf]
    %v5390 = vunpack.c.l.b16 %v5374
    %v5391 = vunpack.c.l.b16 %v5375
    %v5392 = vunpack.c.l.b16 %v5376
    %v5393 = vunpack.c.l.b16 %v5377
    %v5394 = vunpack.c.l.b16 %v5378
    %v5395 = vunpack.c.l.b16 %v5379
    %v5396 = vunpack.c.l.b16 %v5380
    %v5397 = vunpack.c.l.b16 %v5381
    %v5398 = vpack.c.b16 %v5391, %v5390
    %v5399 = vpack.c.b16 %v5393, %v5392
    %v5400 = vpack.c.b16 %v5395, %v5394
    %v5401 = vpack.c.b16 %v5397, %v5396
    %v5403 = vsel %vm3228, %v5398, 0
    %v5406 = vsel %vm3228, %v5399, 0
    %v5409 = vsel %vm3228, %v5400, 0
    %v5412 = vsel %vm3228, %v5401, 0
    %5414 = vmatprep.subr.bf16.mxu0 %v5143
    %5415 = vmatpush1.bf16.msra.mxu0 %v5142
    %5416 = vmatprep.subr.bf16.mxu0 %v5145
    %5417 = vmatpush1.bf16.msra.mxu0 %v5144
    %5418 = vmatprep.subr.bf16.mxu0 0
    %5419 = vmatpush1.bf16.msra.mxu0 0
    %5420 = vmatprep.subr.bf16.mxu0 0
    %5421 = vmatpush1.bf16.msra.mxu0 0
    %5422 = vmatprep.subr.bf16.mxu0 0
    %5423 = vmatpush1.bf16.msra.mxu0 0
    %5424 = vmatprep.subr.bf16.mxu0 0
    %5425 = vmatpush1.bf16.msra.mxu0 0
    %5426 = vmatprep.subr.bf16.mxu0 0
    %5427 = vmatpush1.bf16.msra.mxu0 0
    %5428 = vmatprep.subr.bf16.mxu0 0
    %5429 = vmatpush1.bf16.msra.mxu0 0
    %5430 = vmatprep.subr.bf16.mxu0 0
    %5431 = vmatpush1.bf16.msra.mxu0 0
    %5432 = vmatprep.subr.bf16.mxu0 0
    %5433 = vmatpush1.bf16.msra.mxu0 0
    %5434 = vmatprep.subr.bf16.mxu0 0
    %5435 = vmatpush1.bf16.msra.mxu0 0
    %5436 = vmatprep.subr.bf16.mxu0 0
    %5437 = vmatpush1.bf16.msra.mxu0 0
    %5438 = vmatprep.subr.bf16.mxu0 0
    %5439 = vmatpush1.bf16.msra.mxu0 0
    %5440 = vmatprep.subr.bf16.mxu0 0
    %5441 = vmatpush1.bf16.msra.mxu0 0
    %5442 = vmatprep.subr.bf16.mxu0 0
    %5443 = vmatpush1.bf16.msra.mxu0 0
    %5444 = vmatprep.subr.bf16.mxu0 0
    %5445 = vmatpush1.bf16.msra.mxu0 0
    %5446 = vmatprep.mubr.bf16.mxu0 0
    %5447 = vmatmul.mubr.bf16.gmra.mrb[0].mxu0 %v5403
    %v5448 = vpop.f32.mrb[0].mxu0
    %v5449 = vadd.f32 0.0, %v5448
    %v5450 = vpop.f32.mrb[0].mxu0
    %v5451 = vadd.f32 0.0, %v5450
    %v5452 = vpop.f32.mrb[0].mxu0
    %v5453 = vadd.f32 0.0, %v5452
    %v5454 = vpop.f32.mrb[0].mxu0
    %v5455 = vadd.f32 0.0, %v5454
    %5456 = vmatprep.mubr.bf16.mxu0 0
    %5457 = vmatmul.mubr.bf16.gmra.mrb[0].mxu0 %v5406
    %v5458 = vpop.f32.mrb[0].mxu0
    %v5459 = vadd.f32 0.0, %v5458
    %v5460 = vpop.f32.mrb[0].mxu0
    %v5461 = vadd.f32 0.0, %v5460
    %v5462 = vpop.f32.mrb[0].mxu0
    %v5463 = vadd.f32 0.0, %v5462
    %v5464 = vpop.f32.mrb[0].mxu0
    %v5465 = vadd.f32 0.0, %v5464
    %5466 = vmatprep.mubr.bf16.mxu0 0
    %5467 = vmatmul.mubr.bf16.gmra.mrb[0].mxu0 %v5409
    %v5468 = vpop.f32.mrb[0].mxu0
    %v5469 = vadd.f32 0.0, %v5468
    %v5470 = vpop.f32.mrb[0].mxu0
    %v5471 = vadd.f32 0.0, %v5470
    %v5472 = vpop.f32.mrb[0].mxu0
    %v5473 = vadd.f32 0.0, %v5472
    %v5474 = vpop.f32.mrb[0].mxu0
    %v5475 = vadd.f32 0.0, %v5474
    %5476 = vmatprep.mubr.bf16.mxu0 0
    %5477 = vmatmul.mubr.bf16.gmra.mrb[0].mxu0 %v5412
    %v5478 = vpop.f32.mrb[0].mxu0
    %v5479 = vadd.f32 0.0, %v5478
    %v5480 = vpop.f32.mrb[0].mxu0
    %v5481 = vadd.f32 0.0, %v5480
    %v5482 = vpop.f32.mrb[0].mxu0
    %v5483 = vadd.f32 0.0, %v5482
    %v5484 = vpop.f32.mrb[0].mxu0
    %v5485 = vadd.f32 0.0, %v5484
    %5486 = vdwg.mxu0
    %s5487 = scalar_lea.vmem %s19, 96
    %v5488 = vld [vmem:[%s5487] sm:$0xf]
    %v5489 = vld [vmem:[%s5487 + $0x4] sm:$0xf]
    %v5490 = vld [vmem:[%s5487 + $0x8] sm:$0xf]
    %v5491 = vld [vmem:[%s5487 + $0xc] sm:$0xf]
    %v5492 = vld [vmem:[%s5487 + $0x10] sm:$0xf]
    %v5493 = vld [vmem:[%s5487 + $0x14] sm:$0xf]
    %v5494 = vld [vmem:[%s5487 + $0x18] sm:$0xf]
    %v5495 = vld [vmem:[%s5487 + $0x1c] sm:$0xf]
    %v5504 = vunpack.c.l.b16 %v5488
    %v5505 = vunpack.c.l.b16 %v5489
    %v5506 = vunpack.c.l.b16 %v5490
    %v5507 = vunpack.c.l.b16 %v5491
    %v5508 = vunpack.c.l.b16 %v5492
    %v5509 = vunpack.c.l.b16 %v5493
    %v5510 = vunpack.c.l.b16 %v5494
    %v5511 = vunpack.c.l.b16 %v5495
    %v5512 = vpack.c.b16 %v5505, %v5504
    %v5513 = vpack.c.b16 %v5507, %v5506
    %v5514 = vpack.c.b16 %v5509, %v5508
    %v5515 = vpack.c.b16 %v5511, %v5510
    %v5517 = vsel %vm3228, %v5512, 0
    %v5520 = vsel %vm3228, %v5513, 0
    %v5523 = vsel %vm3228, %v5514, 0
    %v5526 = vsel %vm3228, %v5515, 0
    %5528 = vmatprep.subr.bf16.mxu0 %v5143
    %5529 = vmatpush1.bf16.msra.mxu0 %v5142
    %5530 = vmatprep.subr.bf16.mxu0 %v5145
    %5531 = vmatpush1.bf16.msra.mxu0 %v5144
    %5532 = vmatprep.subr.bf16.mxu0 0
    %5533 = vmatpush1.bf16.msra.mxu0 0
    %5534 = vmatprep.subr.bf16.mxu0 0
    %5535 = vmatpush1.bf16.msra.mxu0 0
    %5536 = vmatprep.subr.bf16.mxu0 0
    %5537 = vmatpush1.bf16.msra.mxu0 0
    %5538 = vmatprep.subr.bf16.mxu0 0
    %5539 = vmatpush1.bf16.msra.mxu0 0
    %5540 = vmatprep.subr.bf16.mxu0 0
    %5541 = vmatpush1.bf16.msra.mxu0 0
    %5542 = vmatprep.subr.bf16.mxu0 0
    %5543 = vmatpush1.bf16.msra.mxu0 0
    %5544 = vmatprep.subr.bf16.mxu0 0
    %5545 = vmatpush1.bf16.msra.mxu0 0
    %5546 = vmatprep.subr.bf16.mxu0 0
    %5547 = vmatpush1.bf16.msra.mxu0 0
    %5548 = vmatprep.subr.bf16.mxu0 0
    %5549 = vmatpush1.bf16.msra.mxu0 0
    %5550 = vmatprep.subr.bf16.mxu0 0
    %5551 = vmatpush1.bf16.msra.mxu0 0
    %5552 = vmatprep.subr.bf16.mxu0 0
    %5553 = vmatpush1.bf16.msra.mxu0 0
    %5554 = vmatprep.subr.bf16.mxu0 0
    %5555 = vmatpush1.bf16.msra.mxu0 0
    %5556 = vmatprep.subr.bf16.mxu0 0
    %5557 = vmatpush1.bf16.msra.mxu0 0
    %5558 = vmatprep.subr.bf16.mxu0 0
    %5559 = vmatpush1.bf16.msra.mxu0 0
    %5560 = vmatprep.mubr.bf16.mxu0 0
    %5561 = vmatmul.mubr.bf16.gmra.mrb[0].mxu0 %v5517
    %v5562 = vpop.f32.mrb[0].mxu0
    %v5563 = vadd.f32 0.0, %v5562
    %v5564 = vpop.f32.mrb[0].mxu0
    %v5565 = vadd.f32 0.0, %v5564
    %v5566 = vpop.f32.mrb[0].mxu0
    %v5567 = vadd.f32 0.0, %v5566
    %v5568 = vpop.f32.mrb[0].mxu0
    %v5569 = vadd.f32 0.0, %v5568
    %5570 = vmatprep.mubr.bf16.mxu0 0
    %5571 = vmatmul.mubr.bf16.gmra.mrb[0].mxu0 %v5520
    %v5572 = vpop.f32.mrb[0].mxu0
    %v5573 = vadd.f32 0.0, %v5572
    %v5574 = vpop.f32.mrb[0].mxu0
    %v5575 = vadd.f32 0.0, %v5574
    %v5576 = vpop.f32.mrb[0].mxu0
    %v5577 = vadd.f32 0.0, %v5576
    %v5578 = vpop.f32.mrb[0].mxu0
    %v5579 = vadd.f32 0.0, %v5578
    %5580 = vmatprep.mubr.bf16.mxu0 0
    %5581 = vmatmul.mubr.bf16.gmra.mrb[0].mxu0 %v5523
    %v5582 = vpop.f32.mrb[0].mxu0
    %v5583 = vadd.f32 0.0, %v5582
    %v5584 = vpop.f32.mrb[0].mxu0
    %v5585 = vadd.f32 0.0, %v5584
    %v5586 = vpop.f32.mrb[0].mxu0
    %v5587 = vadd.f32 0.0, %v5586
    %v5588 = vpop.f32.mrb[0].mxu0
    %v5589 = vadd.f32 0.0, %v5588
    %5590 = vmatprep.mubr.bf16.mxu0 0
    %5591 = vmatmul.mubr.bf16.gmra.mrb[0].mxu0 %v5526
    %v5592 = vpop.f32.mrb[0].mxu0
    %v5593 = vadd.f32 0.0, %v5592
    %v5594 = vpop.f32.mrb[0].mxu0
    %v5595 = vadd.f32 0.0, %v5594
    %v5596 = vpop.f32.mrb[0].mxu0
    %v5597 = vadd.f32 0.0, %v5596
    %v5598 = vpop.f32.mrb[0].mxu0
    %v5599 = vadd.f32 0.0, %v5598
    %5600 = vdwg.mxu0
    %v5601 = vpack.c.bf16 %v5225, %v5221
    %v5602 = vpack.c.bf16 %v5227, %v5223
    %v5603 = vpack.c.bf16 %v5339, %v5335
    %v5604 = vpack.c.bf16 %v5341, %v5337
    %v5605 = vpack.c.bf16 %v5453, %v5449
    %v5606 = vpack.c.bf16 %v5455, %v5451
    %v5607 = vpack.c.bf16 %v5567, %v5563
    %v5608 = vpack.c.bf16 %v5569, %v5565
    %v5609 = vpack.c.bf16 %v5235, %v5231
    %v5610 = vpack.c.bf16 %v5237, %v5233
    %v5611 = vpack.c.bf16 %v5349, %v5345
    %v5612 = vpack.c.bf16 %v5351, %v5347
    %v5613 = vpack.c.bf16 %v5463, %v5459
    %v5614 = vpack.c.bf16 %v5465, %v5461
    %v5615 = vpack.c.bf16 %v5577, %v5573
    %v5616 = vpack.c.bf16 %v5579, %v5575
    %v5617 = vpack.c.bf16 %v5245, %v5241
    %v5618 = vpack.c.bf16 %v5247, %v5243
    %v5619 = vpack.c.bf16 %v5359, %v5355
    %v5620 = vpack.c.bf16 %v5361, %v5357
    %v5621 = vpack.c.bf16 %v5473, %v5469
    %v5622 = vpack.c.bf16 %v5475, %v5471
    %v5623 = vpack.c.bf16 %v5587, %v5583
    %v5624 = vpack.c.bf16 %v5589, %v5585
    %v5625 = vpack.c.bf16 %v5255, %v5251
    %v5626 = vpack.c.bf16 %v5257, %v5253
    %v5627 = vpack.c.bf16 %v5369, %v5365
    %v5628 = vpack.c.bf16 %v5371, %v5367
    %v5629 = vpack.c.bf16 %v5483, %v5479
    %v5630 = vpack.c.bf16 %v5485, %v5481
    %v5631 = vpack.c.bf16 %v5597, %v5593
    %v5632 = vpack.c.bf16 %v5599, %v5595
    %v5633 = vld [vmem:[#allocation13] sm:$0xff]
    %v5634 = vld [vmem:[#allocation13 + $0x8] sm:$0xff]
    %v5635 = vld [vmem:[#allocation13 + $0x10] sm:$0xff]
    %v5636 = vld [vmem:[#allocation13 + $0x18] sm:$0xff]
    %v5637 = vld [vmem:[#allocation13 + $0x20] sm:$0xff]
    %v5638 = vld [vmem:[#allocation13 + $0x28] sm:$0xff]
    %v5639 = vld [vmem:[#allocation13 + $0x30] sm:$0xff]
    %v5640 = vld [vmem:[#allocation13 + $0x38] sm:$0xff]
    %v5641 = vld [vmem:[#allocation13 + $0x40] sm:$0xff]
    %v5642 = vld [vmem:[#allocation13 + $0x48] sm:$0xff]
    %v5643 = vld [vmem:[#allocation13 + $0x50] sm:$0xff]
    %v5644 = vld [vmem:[#allocation13 + $0x58] sm:$0xff]
    %v5645 = vld [vmem:[#allocation13 + $0x60] sm:$0xff]
    %v5646 = vld [vmem:[#allocation13 + $0x68] sm:$0xff]
    %v5647 = vld [vmem:[#allocation13 + $0x70] sm:$0xff]
    %v5648 = vld [vmem:[#allocation13 + $0x78] sm:$0xff]
    %v5649 = vld [vmem:[#allocation13 + $0x80] sm:$0xff]
    %v5650 = vld [vmem:[#allocation13 + $0x88] sm:$0xff]
    %v5651 = vld [vmem:[#allocation13 + $0x90] sm:$0xff]
    %v5652 = vld [vmem:[#allocation13 + $0x98] sm:$0xff]
    %v5653 = vld [vmem:[#allocation13 + $0xa0] sm:$0xff]
    %v5654 = vld [vmem:[#allocation13 + $0xa8] sm:$0xff]
    %v5655 = vld [vmem:[#allocation13 + $0xb0] sm:$0xff]
    %v5656 = vld [vmem:[#allocation13 + $0xb8] sm:$0xff]
    %v5657 = vld [vmem:[#allocation13 + $0xc0] sm:$0xff]
    %v5658 = vld [vmem:[#allocation13 + $0xc8] sm:$0xff]
    %v5659 = vld [vmem:[#allocation13 + $0xd0] sm:$0xff]
    %v5660 = vld [vmem:[#allocation13 + $0xd8] sm:$0xff]
    %v5661 = vld [vmem:[#allocation13 + $0xe0] sm:$0xff]
    %v5662 = vld [vmem:[#allocation13 + $0xe8] sm:$0xff]
    %v5663 = vld [vmem:[#allocation13 + $0xf0] sm:$0xff]
    %v5664 = vld [vmem:[#allocation13 + $0xf8] sm:$0xff]
    %v5665 = vld [vmem:[#allocation13 + $0x100] sm:$0xff]
    %v5666 = vld [vmem:[#allocation13 + $0x108] sm:$0xff]
    %v5667 = vld [vmem:[#allocation13 + $0x110] sm:$0xff]
    %v5668 = vld [vmem:[#allocation13 + $0x118] sm:$0xff]
    %v5669 = vld [vmem:[#allocation13 + $0x120] sm:$0xff]
    %v5670 = vld [vmem:[#allocation13 + $0x128] sm:$0xff]
    %v5671 = vld [vmem:[#allocation13 + $0x130] sm:$0xff]
    %v5672 = vld [vmem:[#allocation13 + $0x138] sm:$0xff]
    %v5673 = vld [vmem:[#allocation13 + $0x140] sm:$0xff]
    %v5674 = vld [vmem:[#allocation13 + $0x148] sm:$0xff]
    %v5675 = vld [vmem:[#allocation13 + $0x150] sm:$0xff]
    %v5676 = vld [vmem:[#allocation13 + $0x158] sm:$0xff]
    %v5677 = vld [vmem:[#allocation13 + $0x160] sm:$0xff]
    %v5678 = vld [vmem:[#allocation13 + $0x168] sm:$0xff]
    %v5679 = vld [vmem:[#allocation13 + $0x170] sm:$0xff]
    %v5680 = vld [vmem:[#allocation13 + $0x178] sm:$0xff]
    %v5681 = vld [vmem:[#allocation13 + $0x180] sm:$0xff]
    %v5682 = vld [vmem:[#allocation13 + $0x188] sm:$0xff]
    %v5683 = vld [vmem:[#allocation13 + $0x190] sm:$0xff]
    %v5684 = vld [vmem:[#allocation13 + $0x198] sm:$0xff]
    %v5685 = vld [vmem:[#allocation13 + $0x1a0] sm:$0xff]
    %v5686 = vld [vmem:[#allocation13 + $0x1a8] sm:$0xff]
    %v5687 = vld [vmem:[#allocation13 + $0x1b0] sm:$0xff]
    %v5688 = vld [vmem:[#allocation13 + $0x1b8] sm:$0xff]
    %v5689 = vld [vmem:[#allocation13 + $0x1c0] sm:$0xff]
    %v5690 = vld [vmem:[#allocation13 + $0x1c8] sm:$0xff]
    %v5691 = vld [vmem:[#allocation13 + $0x1d0] sm:$0xff]
    %v5692 = vld [vmem:[#allocation13 + $0x1d8] sm:$0xff]
    %v5693 = vld [vmem:[#allocation13 + $0x1e0] sm:$0xff]
    %v5694 = vld [vmem:[#allocation13 + $0x1e8] sm:$0xff]
    %v5695 = vld [vmem:[#allocation13 + $0x1f0] sm:$0xff]
    %v5696 = vld [vmem:[#allocation13 + $0x1f8] sm:$0xff]
    %v5697 = vld [vmem:[#allocation13 + $0x200] sm:$0xff]
    %v5698 = vld [vmem:[#allocation13 + $0x208] sm:$0xff]
    %v5699 = vld [vmem:[#allocation13 + $0x210] sm:$0xff]
    %v5700 = vld [vmem:[#allocation13 + $0x218] sm:$0xff]
    %v5701 = vld [vmem:[#allocation13 + $0x220] sm:$0xff]
    %v5702 = vld [vmem:[#allocation13 + $0x228] sm:$0xff]
    %v5703 = vld [vmem:[#allocation13 + $0x230] sm:$0xff]
    %v5704 = vld [vmem:[#allocation13 + $0x238] sm:$0xff]
    %v5705 = vld [vmem:[#allocation13 + $0x240] sm:$0xff]
    %v5706 = vld [vmem:[#allocation13 + $0x248] sm:$0xff]
    %v5707 = vld [vmem:[#allocation13 + $0x250] sm:$0xff]
    %v5708 = vld [vmem:[#allocation13 + $0x258] sm:$0xff]
    %v5709 = vld [vmem:[#allocation13 + $0x260] sm:$0xff]
    %v5710 = vld [vmem:[#allocation13 + $0x268] sm:$0xff]
    %v5711 = vld [vmem:[#allocation13 + $0x270] sm:$0xff]
    %v5712 = vld [vmem:[#allocation13 + $0x278] sm:$0xff]
    %v5713 = vld [vmem:[#allocation13 + $0x280] sm:$0xff]
    %v5714 = vld [vmem:[#allocation13 + $0x288] sm:$0xff]
    %v5715 = vld [vmem:[#allocation13 + $0x290] sm:$0xff]
    %v5716 = vld [vmem:[#allocation13 + $0x298] sm:$0xff]
    %v5717 = vld [vmem:[#allocation13 + $0x2a0] sm:$0xff]
    %v5718 = vld [vmem:[#allocation13 + $0x2a8] sm:$0xff]
    %v5719 = vld [vmem:[#allocation13 + $0x2b0] sm:$0xff]
    %v5720 = vld [vmem:[#allocation13 + $0x2b8] sm:$0xff]
    %v5721 = vld [vmem:[#allocation13 + $0x2c0] sm:$0xff]
    %v5722 = vld [vmem:[#allocation13 + $0x2c8] sm:$0xff]
    %v5723 = vld [vmem:[#allocation13 + $0x2d0] sm:$0xff]
    %v5724 = vld [vmem:[#allocation13 + $0x2d8] sm:$0xff]
    %v5725 = vld [vmem:[#allocation13 + $0x2e0] sm:$0xff]
    %v5726 = vld [vmem:[#allocation13 + $0x2e8] sm:$0xff]
    %v5727 = vld [vmem:[#allocation13 + $0x2f0] sm:$0xff]
    %v5728 = vld [vmem:[#allocation13 + $0x2f8] sm:$0xff]
    %v5729 = vld [vmem:[#allocation13 + $0x300] sm:$0xff]
    %v5730 = vld [vmem:[#allocation13 + $0x308] sm:$0xff]
    %v5731 = vld [vmem:[#allocation13 + $0x310] sm:$0xff]
    %v5732 = vld [vmem:[#allocation13 + $0x318] sm:$0xff]
    %v5733 = vld [vmem:[#allocation13 + $0x320] sm:$0xff]
    %v5734 = vld [vmem:[#allocation13 + $0x328] sm:$0xff]
    %v5735 = vld [vmem:[#allocation13 + $0x330] sm:$0xff]
    %v5736 = vld [vmem:[#allocation13 + $0x338] sm:$0xff]
    %v5737 = vld [vmem:[#allocation13 + $0x340] sm:$0xff]
    %v5738 = vld [vmem:[#allocation13 + $0x348] sm:$0xff]
    %v5739 = vld [vmem:[#allocation13 + $0x350] sm:$0xff]
    %v5740 = vld [vmem:[#allocation13 + $0x358] sm:$0xff]
    %v5741 = vld [vmem:[#allocation13 + $0x360] sm:$0xff]
    %v5742 = vld [vmem:[#allocation13 + $0x368] sm:$0xff]
    %v5743 = vld [vmem:[#allocation13 + $0x370] sm:$0xff]
    %v5744 = vld [vmem:[#allocation13 + $0x378] sm:$0xff]
    %v5745 = vld [vmem:[#allocation13 + $0x380] sm:$0xff]
    %v5746 = vld [vmem:[#allocation13 + $0x388] sm:$0xff]
    %v5747 = vld [vmem:[#allocation13 + $0x390] sm:$0xff]
    %v5748 = vld [vmem:[#allocation13 + $0x398] sm:$0xff]
    %v5749 = vld [vmem:[#allocation13 + $0x3a0] sm:$0xff]
    %v5750 = vld [vmem:[#allocation13 + $0x3a8] sm:$0xff]
    %v5751 = vld [vmem:[#allocation13 + $0x3b0] sm:$0xff]
    %v5752 = vld [vmem:[#allocation13 + $0x3b8] sm:$0xff]
    %v5753 = vld [vmem:[#allocation13 + $0x3c0] sm:$0xff]
    %v5754 = vld [vmem:[#allocation13 + $0x3c8] sm:$0xff]
    %v5755 = vld [vmem:[#allocation13 + $0x3d0] sm:$0xff]
    %v5756 = vld [vmem:[#allocation13 + $0x3d8] sm:$0xff]
    %v5757 = vld [vmem:[#allocation13 + $0x3e0] sm:$0xff]
    %v5758 = vld [vmem:[#allocation13 + $0x3e8] sm:$0xff]
    %v5759 = vld [vmem:[#allocation13 + $0x3f0] sm:$0xff]
    %v5760 = vld [vmem:[#allocation13 + $0x3f8] sm:$0xff]
    %v5889 = vunpack.c.l.b16 %v5633
    %v5890 = vunpack.c.h.b16 %v5633
    %v5891 = vunpack.c.l.b16 %v5634
    %v5892 = vunpack.c.h.b16 %v5634
    %v5893 = vunpack.c.l.b16 %v5635
    %v5894 = vunpack.c.h.b16 %v5635
    %v5895 = vunpack.c.l.b16 %v5636
    %v5896 = vunpack.c.h.b16 %v5636
    %v5897 = vunpack.c.l.b16 %v5637
    %v5898 = vunpack.c.h.b16 %v5637
    %v5899 = vunpack.c.l.b16 %v5638
    %v5900 = vunpack.c.h.b16 %v5638
    %v5901 = vunpack.c.l.b16 %v5639
    %v5902 = vunpack.c.h.b16 %v5639
    %v5903 = vunpack.c.l.b16 %v5640
    %v5904 = vunpack.c.h.b16 %v5640
    %v5905 = vunpack.c.l.b16 %v5641
    %v5906 = vunpack.c.h.b16 %v5641
    %v5907 = vunpack.c.l.b16 %v5642
    %v5908 = vunpack.c.h.b16 %v5642
    %v5909 = vunpack.c.l.b16 %v5643
    %v5910 = vunpack.c.h.b16 %v5643
    %v5911 = vunpack.c.l.b16 %v5644
    %v5912 = vunpack.c.h.b16 %v5644
    %v5913 = vunpack.c.l.b16 %v5645
    %v5914 = vunpack.c.h.b16 %v5645
    %v5915 = vunpack.c.l.b16 %v5646
    %v5916 = vunpack.c.h.b16 %v5646
    %v5917 = vunpack.c.l.b16 %v5647
    %v5918 = vunpack.c.h.b16 %v5647
    %v5919 = vunpack.c.l.b16 %v5648
    %v5920 = vunpack.c.h.b16 %v5648
    %v5921 = vunpack.c.l.b16 %v5649
    %v5922 = vunpack.c.h.b16 %v5649
    %v5923 = vunpack.c.l.b16 %v5650
    %v5924 = vunpack.c.h.b16 %v5650
    %v5925 = vunpack.c.l.b16 %v5651
    %v5926 = vunpack.c.h.b16 %v5651
    %v5927 = vunpack.c.l.b16 %v5652
    %v5928 = vunpack.c.h.b16 %v5652
    %v5929 = vunpack.c.l.b16 %v5653
    %v5930 = vunpack.c.h.b16 %v5653
    %v5931 = vunpack.c.l.b16 %v5654
    %v5932 = vunpack.c.h.b16 %v5654
    %v5933 = vunpack.c.l.b16 %v5655
    %v5934 = vunpack.c.h.b16 %v5655
    %v5935 = vunpack.c.l.b16 %v5656
    %v5936 = vunpack.c.h.b16 %v5656
    %v5937 = vunpack.c.l.b16 %v5657
    %v5938 = vunpack.c.h.b16 %v5657
    %v5939 = vunpack.c.l.b16 %v5658
    %v5940 = vunpack.c.h.b16 %v5658
    %v5941 = vunpack.c.l.b16 %v5659
    %v5942 = vunpack.c.h.b16 %v5659
    %v5943 = vunpack.c.l.b16 %v5660
    %v5944 = vunpack.c.h.b16 %v5660
    %v5945 = vunpack.c.l.b16 %v5661
    %v5946 = vunpack.c.h.b16 %v5661
    %v5947 = vunpack.c.l.b16 %v5662
    %v5948 = vunpack.c.h.b16 %v5662
    %v5949 = vunpack.c.l.b16 %v5663
    %v5950 = vunpack.c.h.b16 %v5663
    %v5951 = vunpack.c.l.b16 %v5664
    %v5952 = vunpack.c.h.b16 %v5664
    %v5953 = vunpack.c.l.b16 %v5665
    %v5954 = vunpack.c.h.b16 %v5665
    %v5955 = vunpack.c.l.b16 %v5666
    %v5956 = vunpack.c.h.b16 %v5666
    %v5957 = vunpack.c.l.b16 %v5667
    %v5958 = vunpack.c.h.b16 %v5667
    %v5959 = vunpack.c.l.b16 %v5668
    %v5960 = vunpack.c.h.b16 %v5668
    %v5961 = vunpack.c.l.b16 %v5669
    %v5962 = vunpack.c.h.b16 %v5669
    %v5963 = vunpack.c.l.b16 %v5670
    %v5964 = vunpack.c.h.b16 %v5670
    %v5965 = vunpack.c.l.b16 %v5671
    %v5966 = vunpack.c.h.b16 %v5671
    %v5967 = vunpack.c.l.b16 %v5672
    %v5968 = vunpack.c.h.b16 %v5672
    %v5969 = vunpack.c.l.b16 %v5673
    %v5970 = vunpack.c.h.b16 %v5673
    %v5971 = vunpack.c.l.b16 %v5674
    %v5972 = vunpack.c.h.b16 %v5674
    %v5973 = vunpack.c.l.b16 %v5675
    %v5974 = vunpack.c.h.b16 %v5675
    %v5975 = vunpack.c.l.b16 %v5676
    %v5976 = vunpack.c.h.b16 %v5676
    %v5977 = vunpack.c.l.b16 %v5677
    %v5978 = vunpack.c.h.b16 %v5677
    %v5979 = vunpack.c.l.b16 %v5678
    %v5980 = vunpack.c.h.b16 %v5678
    %v5981 = vunpack.c.l.b16 %v5679
    %v5982 = vunpack.c.h.b16 %v5679
    %v5983 = vunpack.c.l.b16 %v5680
    %v5984 = vunpack.c.h.b16 %v5680
    %v5985 = vunpack.c.l.b16 %v5681
    %v5986 = vunpack.c.h.b16 %v5681
    %v5987 = vunpack.c.l.b16 %v5682
    %v5988 = vunpack.c.h.b16 %v5682
    %v5989 = vunpack.c.l.b16 %v5683
    %v5990 = vunpack.c.h.b16 %v5683
    %v5991 = vunpack.c.l.b16 %v5684
    %v5992 = vunpack.c.h.b16 %v5684
    %v5993 = vunpack.c.l.b16 %v5685
    %v5994 = vunpack.c.h.b16 %v5685
    %v5995 = vunpack.c.l.b16 %v5686
    %v5996 = vunpack.c.h.b16 %v5686
    %v5997 = vunpack.c.l.b16 %v5687
    %v5998 = vunpack.c.h.b16 %v5687
    %v5999 = vunpack.c.l.b16 %v5688
    %v6000 = vunpack.c.h.b16 %v5688
    %v6001 = vunpack.c.l.b16 %v5689
    %v6002 = vunpack.c.h.b16 %v5689
    %v6003 = vunpack.c.l.b16 %v5690
    %v6004 = vunpack.c.h.b16 %v5690
    %v6005 = vunpack.c.l.b16 %v5691
    %v6006 = vunpack.c.h.b16 %v5691
    %v6007 = vunpack.c.l.b16 %v5692
    %v6008 = vunpack.c.h.b16 %v5692
    %v6009 = vunpack.c.l.b16 %v5693
    %v6010 = vunpack.c.h.b16 %v5693
    %v6011 = vunpack.c.l.b16 %v5694
    %v6012 = vunpack.c.h.b16 %v5694
    %v6013 = vunpack.c.l.b16 %v5695
    %v6014 = vunpack.c.h.b16 %v5695
    %v6015 = vunpack.c.l.b16 %v5696
    %v6016 = vunpack.c.h.b16 %v5696
    %v6017 = vunpack.c.l.b16 %v5697
    %v6018 = vunpack.c.h.b16 %v5697
    %v6019 = vunpack.c.l.b16 %v5698
    %v6020 = vunpack.c.h.b16 %v5698
    %v6021 = vunpack.c.l.b16 %v5699
    %v6022 = vunpack.c.h.b16 %v5699
    %v6023 = vunpack.c.l.b16 %v5700
    %v6024 = vunpack.c.h.b16 %v5700
    %v6025 = vunpack.c.l.b16 %v5701
    %v6026 = vunpack.c.h.b16 %v5701
    %v6027 = vunpack.c.l.b16 %v5702
    %v6028 = vunpack.c.h.b16 %v5702
    %v6029 = vunpack.c.l.b16 %v5703
    %v6030 = vunpack.c.h.b16 %v5703
    %v6031 = vunpack.c.l.b16 %v5704
    %v6032 = vunpack.c.h.b16 %v5704
    %v6033 = vunpack.c.l.b16 %v5705
    %v6034 = vunpack.c.h.b16 %v5705
    %v6035 = vunpack.c.l.b16 %v5706
    %v6036 = vunpack.c.h.b16 %v5706
    %v6037 = vunpack.c.l.b16 %v5707
    %v6038 = vunpack.c.h.b16 %v5707
    %v6039 = vunpack.c.l.b16 %v5708
    %v6040 = vunpack.c.h.b16 %v5708
    %v6041 = vunpack.c.l.b16 %v5709
    %v6042 = vunpack.c.h.b16 %v5709
    %v6043 = vunpack.c.l.b16 %v5710
    %v6044 = vunpack.c.h.b16 %v5710
    %v6045 = vunpack.c.l.b16 %v5711
    %v6046 = vunpack.c.h.b16 %v5711
    %v6047 = vunpack.c.l.b16 %v5712
    %v6048 = vunpack.c.h.b16 %v5712
    %v6049 = vunpack.c.l.b16 %v5713
    %v6050 = vunpack.c.h.b16 %v5713
    %v6051 = vunpack.c.l.b16 %v5714
    %v6052 = vunpack.c.h.b16 %v5714
    %v6053 = vunpack.c.l.b16 %v5715
    %v6054 = vunpack.c.h.b16 %v5715
    %v6055 = vunpack.c.l.b16 %v5716
    %v6056 = vunpack.c.h.b16 %v5716
    %v6057 = vunpack.c.l.b16 %v5717
    %v6058 = vunpack.c.h.b16 %v5717
    %v6059 = vunpack.c.l.b16 %v5718
    %v6060 = vunpack.c.h.b16 %v5718
    %v6061 = vunpack.c.l.b16 %v5719
    %v6062 = vunpack.c.h.b16 %v5719
    %v6063 = vunpack.c.l.b16 %v5720
    %v6064 = vunpack.c.h.b16 %v5720
    %v6065 = vunpack.c.l.b16 %v5721
    %v6066 = vunpack.c.h.b16 %v5721
    %v6067 = vunpack.c.l.b16 %v5722
    %v6068 = vunpack.c.h.b16 %v5722
    %v6069 = vunpack.c.l.b16 %v5723
    %v6070 = vunpack.c.h.b16 %v5723
    %v6071 = vunpack.c.l.b16 %v5724
    %v6072 = vunpack.c.h.b16 %v5724
    %v6073 = vunpack.c.l.b16 %v5725
    %v6074 = vunpack.c.h.b16 %v5725
    %v6075 = vunpack.c.l.b16 %v5726
    %v6076 = vunpack.c.h.b16 %v5726
    %v6077 = vunpack.c.l.b16 %v5727
    %v6078 = vunpack.c.h.b16 %v5727
    %v6079 = vunpack.c.l.b16 %v5728
    %v6080 = vunpack.c.h.b16 %v5728
    %v6081 = vunpack.c.l.b16 %v5729
    %v6082 = vunpack.c.h.b16 %v5729
    %v6083 = vunpack.c.l.b16 %v5730
    %v6084 = vunpack.c.h.b16 %v5730
    %v6085 = vunpack.c.l.b16 %v5731
    %v6086 = vunpack.c.h.b16 %v5731
    %v6087 = vunpack.c.l.b16 %v5732
    %v6088 = vunpack.c.h.b16 %v5732
    %v6089 = vunpack.c.l.b16 %v5733
    %v6090 = vunpack.c.h.b16 %v5733
    %v6091 = vunpack.c.l.b16 %v5734
    %v6092 = vunpack.c.h.b16 %v5734
    %v6093 = vunpack.c.l.b16 %v5735
    %v6094 = vunpack.c.h.b16 %v5735
    %v6095 = vunpack.c.l.b16 %v5736
    %v6096 = vunpack.c.h.b16 %v5736
    %v6097 = vunpack.c.l.b16 %v5737
    %v6098 = vunpack.c.h.b16 %v5737
    %v6099 = vunpack.c.l.b16 %v5738
    %v6100 = vunpack.c.h.b16 %v5738
    %v6101 = vunpack.c.l.b16 %v5739
    %v6102 = vunpack.c.h.b16 %v5739
    %v6103 = vunpack.c.l.b16 %v5740
    %v6104 = vunpack.c.h.b16 %v5740
    %v6105 = vunpack.c.l.b16 %v5741
    %v6106 = vunpack.c.h.b16 %v5741
    %v6107 = vunpack.c.l.b16 %v5742
    %v6108 = vunpack.c.h.b16 %v5742
    %v6109 = vunpack.c.l.b16 %v5743
    %v6110 = vunpack.c.h.b16 %v5743
    %v6111 = vunpack.c.l.b16 %v5744
    %v6112 = vunpack.c.h.b16 %v5744
    %v6113 = vunpack.c.l.b16 %v5745
    %v6114 = vunpack.c.h.b16 %v5745
    %v6115 = vunpack.c.l.b16 %v5746
    %v6116 = vunpack.c.h.b16 %v5746
    %v6117 = vunpack.c.l.b16 %v5747
    %v6118 = vunpack.c.h.b16 %v5747
    %v6119 = vunpack.c.l.b16 %v5748
    %v6120 = vunpack.c.h.b16 %v5748
    %v6121 = vunpack.c.l.b16 %v5749
    %v6122 = vunpack.c.h.b16 %v5749
    %v6123 = vunpack.c.l.b16 %v5750
    %v6124 = vunpack.c.h.b16 %v5750
    %v6125 = vunpack.c.l.b16 %v5751
    %v6126 = vunpack.c.h.b16 %v5751
    %v6127 = vunpack.c.l.b16 %v5752
    %v6128 = vunpack.c.h.b16 %v5752
    %v6129 = vunpack.c.l.b16 %v5753
    %v6130 = vunpack.c.h.b16 %v5753
    %v6131 = vunpack.c.l.b16 %v5754
    %v6132 = vunpack.c.h.b16 %v5754
    %v6133 = vunpack.c.l.b16 %v5755
    %v6134 = vunpack.c.h.b16 %v5755
    %v6135 = vunpack.c.l.b16 %v5756
    %v6136 = vunpack.c.h.b16 %v5756
    %v6137 = vunpack.c.l.b16 %v5757
    %v6138 = vunpack.c.h.b16 %v5757
    %v6139 = vunpack.c.l.b16 %v5758
    %v6140 = vunpack.c.h.b16 %v5758
    %v6141 = vunpack.c.l.b16 %v5759
    %v6142 = vunpack.c.h.b16 %v5759
    %v6143 = vunpack.c.l.b16 %v5760
    %v6144 = vunpack.c.h.b16 %v5760
    %v6145 = vpack.c.b16 %v5891, %v5889
    %v6146 = vpack.c.b16 %v5892, %v5890
    %v6147 = vpack.c.b16 %v5895, %v5893
    %v6148 = vpack.c.b16 %v5896, %v5894
    %v6149 = vpack.c.b16 %v5899, %v5897
    %v6150 = vpack.c.b16 %v5900, %v5898
    %v6151 = vpack.c.b16 %v5903, %v5901
    %v6152 = vpack.c.b16 %v5904, %v5902
    %v6153 = vpack.c.b16 %v5907, %v5905
    %v6154 = vpack.c.b16 %v5908, %v5906
    %v6155 = vpack.c.b16 %v5911, %v5909
    %v6156 = vpack.c.b16 %v5912, %v5910
    %v6157 = vpack.c.b16 %v5915, %v5913
    %v6158 = vpack.c.b16 %v5916, %v5914
    %v6159 = vpack.c.b16 %v5919, %v5917
    %v6160 = vpack.c.b16 %v5920, %v5918
    %v6161 = vpack.c.b16 %v5923, %v5921
    %v6162 = vpack.c.b16 %v5924, %v5922
    %v6163 = vpack.c.b16 %v5927, %v5925
    %v6164 = vpack.c.b16 %v5928, %v5926
    %v6165 = vpack.c.b16 %v5931, %v5929
    %v6166 = vpack.c.b16 %v5932, %v5930
    %v6167 = vpack.c.b16 %v5935, %v5933
    %v6168 = vpack.c.b16 %v5936, %v5934
    %v6169 = vpack.c.b16 %v5939, %v5937
    %v6170 = vpack.c.b16 %v5940, %v5938
    %v6171 = vpack.c.b16 %v5943, %v5941
    %v6172 = vpack.c.b16 %v5944, %v5942
    %v6173 = vpack.c.b16 %v5947, %v5945
    %v6174 = vpack.c.b16 %v5948, %v5946
    %v6175 = vpack.c.b16 %v5951, %v5949
    %v6176 = vpack.c.b16 %v5952, %v5950
    %v6177 = vpack.c.b16 %v5955, %v5953
    %v6178 = vpack.c.b16 %v5956, %v5954
    %v6179 = vpack.c.b16 %v5959, %v5957
    %v6180 = vpack.c.b16 %v5960, %v5958
    %v6181 = vpack.c.b16 %v5963, %v5961
    %v6182 = vpack.c.b16 %v5964, %v5962
    %v6183 = vpack.c.b16 %v5967, %v5965
    %v6184 = vpack.c.b16 %v5968, %v5966
    %v6185 = vpack.c.b16 %v5971, %v5969
    %v6186 = vpack.c.b16 %v5972, %v5970
    %v6187 = vpack.c.b16 %v5975, %v5973
    %v6188 = vpack.c.b16 %v5976, %v5974
    %v6189 = vpack.c.b16 %v5979, %v5977
    %v6190 = vpack.c.b16 %v5980, %v5978
    %v6191 = vpack.c.b16 %v5983, %v5981
    %v6192 = vpack.c.b16 %v5984, %v5982
    %v6193 = vpack.c.b16 %v5987, %v5985
    %v6194 = vpack.c.b16 %v5988, %v5986
    %v6195 = vpack.c.b16 %v5991, %v5989
    %v6196 = vpack.c.b16 %v5992, %v5990
    %v6197 = vpack.c.b16 %v5995, %v5993
    %v6198 = vpack.c.b16 %v5996, %v5994
    %v6199 = vpack.c.b16 %v5999, %v5997
    %v6200 = vpack.c.b16 %v6000, %v5998
    %v6201 = vpack.c.b16 %v6003, %v6001
    %v6202 = vpack.c.b16 %v6004, %v6002
    %v6203 = vpack.c.b16 %v6007, %v6005
    %v6204 = vpack.c.b16 %v6008, %v6006
    %v6205 = vpack.c.b16 %v6011, %v6009
    %v6206 = vpack.c.b16 %v6012, %v6010
    %v6207 = vpack.c.b16 %v6015, %v6013
    %v6208 = vpack.c.b16 %v6016, %v6014
    %v6209 = vpack.c.b16 %v6019, %v6017
    %v6210 = vpack.c.b16 %v6020, %v6018
    %v6211 = vpack.c.b16 %v6023, %v6021
    %v6212 = vpack.c.b16 %v6024, %v6022
    %v6213 = vpack.c.b16 %v6027, %v6025
    %v6214 = vpack.c.b16 %v6028, %v6026
    %v6215 = vpack.c.b16 %v6031, %v6029
    %v6216 = vpack.c.b16 %v6032, %v6030
    %v6217 = vpack.c.b16 %v6035, %v6033
    %v6218 = vpack.c.b16 %v6036, %v6034
    %v6219 = vpack.c.b16 %v6039, %v6037
    %v6220 = vpack.c.b16 %v6040, %v6038
    %v6221 = vpack.c.b16 %v6043, %v6041
    %v6222 = vpack.c.b16 %v6044, %v6042
    %v6223 = vpack.c.b16 %v6047, %v6045
    %v6224 = vpack.c.b16 %v6048, %v6046
    %v6225 = vpack.c.b16 %v6051, %v6049
    %v6226 = vpack.c.b16 %v6052, %v6050
    %v6227 = vpack.c.b16 %v6055, %v6053
    %v6228 = vpack.c.b16 %v6056, %v6054
    %v6229 = vpack.c.b16 %v6059, %v6057
    %v6230 = vpack.c.b16 %v6060, %v6058
    %v6231 = vpack.c.b16 %v6063, %v6061
    %v6232 = vpack.c.b16 %v6064, %v6062
    %v6233 = vpack.c.b16 %v6067, %v6065
    %v6234 = vpack.c.b16 %v6068, %v6066
    %v6235 = vpack.c.b16 %v6071, %v6069
    %v6236 = vpack.c.b16 %v6072, %v6070
    %v6237 = vpack.c.b16 %v6075, %v6073
    %v6238 = vpack.c.b16 %v6076, %v6074
    %v6239 = vpack.c.b16 %v6079, %v6077
    %v6240 = vpack.c.b16 %v6080, %v6078
    %v6241 = vpack.c.b16 %v6083, %v6081
    %v6242 = vpack.c.b16 %v6084, %v6082
    %v6243 = vpack.c.b16 %v6087, %v6085
    %v6244 = vpack.c.b16 %v6088, %v6086
    %v6245 = vpack.c.b16 %v6091, %v6089
    %v6246 = vpack.c.b16 %v6092, %v6090
    %v6247 = vpack.c.b16 %v6095, %v6093
    %v6248 = vpack.c.b16 %v6096, %v6094
    %v6249 = vpack.c.b16 %v6099, %v6097
    %v6250 = vpack.c.b16 %v6100, %v6098
    %v6251 = vpack.c.b16 %v6103, %v6101
    %v6252 = vpack.c.b16 %v6104, %v6102
    %v6253 = vpack.c.b16 %v6107, %v6105
    %v6254 = vpack.c.b16 %v6108, %v6106
    %v6255 = vpack.c.b16 %v6111, %v6109
    %v6256 = vpack.c.b16 %v6112, %v6110
    %v6257 = vpack.c.b16 %v6115, %v6113
    %v6258 = vpack.c.b16 %v6116, %v6114
    %v6259 = vpack.c.b16 %v6119, %v6117
    %v6260 = vpack.c.b16 %v6120, %v6118
    %v6261 = vpack.c.b16 %v6123, %v6121
    %v6262 = vpack.c.b16 %v6124, %v6122
    %v6263 = vpack.c.b16 %v6127, %v6125
    %v6264 = vpack.c.b16 %v6128, %v6126
    %v6265 = vpack.c.b16 %v6131, %v6129
    %v6266 = vpack.c.b16 %v6132, %v6130
    %v6267 = vpack.c.b16 %v6135, %v6133
    %v6268 = vpack.c.b16 %v6136, %v6134
    %v6269 = vpack.c.b16 %v6139, %v6137
    %v6270 = vpack.c.b16 %v6140, %v6138
    %v6271 = vpack.c.b16 %v6143, %v6141
    %v6272 = vpack.c.b16 %v6144, %v6142
    %6401 = vmatprep.subr.bf16.mxu0 %v6146
    %6402 = vmatpush1.bf16.msra.mxu0 %v6145
    %6403 = vmatprep.subr.bf16.mxu0 %v6148
    %6404 = vmatpush1.bf16.msra.mxu0 %v6147
    %6405 = vmatprep.subr.bf16.mxu0 %v6150
    %6406 = vmatpush1.bf16.msra.mxu0 %v6149
    %6407 = vmatprep.subr.bf16.mxu0 %v6152
    %6408 = vmatpush1.bf16.msra.mxu0 %v6151
    %6409 = vmatprep.subr.bf16.mxu0 %v6154
    %6410 = vmatpush1.bf16.msra.mxu0 %v6153
    %6411 = vmatprep.subr.bf16.mxu0 %v6156
    %6412 = vmatpush1.bf16.msra.mxu0 %v6155
    %6413 = vmatprep.subr.bf16.mxu0 %v6158
    %6414 = vmatpush1.bf16.msra.mxu0 %v6157
    %6415 = vmatprep.subr.bf16.mxu0 %v6160
    %6416 = vmatpush1.bf16.msra.mxu0 %v6159
    %6417 = vmatprep.subr.bf16.mxu0 %v6162
    %6418 = vmatpush1.bf16.msra.mxu0 %v6161
    %6419 = vmatprep.subr.bf16.mxu0 %v6164
    %6420 = vmatpush1.bf16.msra.mxu0 %v6163
    %6421 = vmatprep.subr.bf16.mxu0 %v6166
    %6422 = vmatpush1.bf16.msra.mxu0 %v6165
    %6423 = vmatprep.subr.bf16.mxu0 %v6168
    %6424 = vmatpush1.bf16.msra.mxu0 %v6167
    %6425 = vmatprep.subr.bf16.mxu0 %v6170
    %6426 = vmatpush1.bf16.msra.mxu0 %v6169
    %6427 = vmatprep.subr.bf16.mxu0 %v6172
    %6428 = vmatpush1.bf16.msra.mxu0 %v6171
    %6429 = vmatprep.subr.bf16.mxu0 %v6174
    %6430 = vmatpush1.bf16.msra.mxu0 %v6173
    %6431 = vmatprep.subr.bf16.mxu0 %v6176
    %6432 = vmatpush1.bf16.msra.mxu0 %v6175
    %6433 = vmatprep.mubr.bf16.mxu0 %v5602
    %6434 = vmatmul.mubr.bf16.gmra.mrb[0].mxu0 %v5601
    %v6435 = vpop.f32.mrb[0].mxu0
    %v6436 = vadd.f32 0.0, %v6435
    %v6437 = vpop.f32.mrb[0].mxu0
    %v6438 = vadd.f32 0.0, %v6437
    %v6439 = vpop.f32.mrb[0].mxu0
    %v6440 = vadd.f32 0.0, %v6439
    %v6441 = vpop.f32.mrb[0].mxu0
    %v6442 = vadd.f32 0.0, %v6441
    %6443 = vmatprep.mubr.bf16.mxu0 %v5610
    %6444 = vmatmul.mubr.bf16.gmra.mrb[0].mxu0 %v5609
    %v6445 = vpop.f32.mrb[0].mxu0
    %v6446 = vadd.f32 0.0, %v6445
    %v6447 = vpop.f32.mrb[0].mxu0
    %v6448 = vadd.f32 0.0, %v6447
    %v6449 = vpop.f32.mrb[0].mxu0
    %v6450 = vadd.f32 0.0, %v6449
    %v6451 = vpop.f32.mrb[0].mxu0
    %v6452 = vadd.f32 0.0, %v6451
    %6453 = vmatprep.mubr.bf16.mxu0 %v5618
    %6454 = vmatmul.mubr.bf16.gmra.mrb[0].mxu0 %v5617
    %v6455 = vpop.f32.mrb[0].mxu0
    %v6456 = vadd.f32 0.0, %v6455
    %v6457 = vpop.f32.mrb[0].mxu0
    %v6458 = vadd.f32 0.0, %v6457
    %v6459 = vpop.f32.mrb[0].mxu0
    %v6460 = vadd.f32 0.0, %v6459
    %v6461 = vpop.f32.mrb[0].mxu0
    %v6462 = vadd.f32 0.0, %v6461
    %6463 = vmatprep.mubr.bf16.mxu0 %v5626
    %6464 = vmatmul.mubr.bf16.gmra.mrb[0].mxu0 %v5625
    %v6465 = vpop.f32.mrb[0].mxu0
    %v6466 = vadd.f32 0.0, %v6465
    %v6467 = vpop.f32.mrb[0].mxu0
    %v6468 = vadd.f32 0.0, %v6467
    %v6469 = vpop.f32.mrb[0].mxu0
    %v6470 = vadd.f32 0.0, %v6469
    %v6471 = vpop.f32.mrb[0].mxu0
    %v6472 = vadd.f32 0.0, %v6471
    %6473 = vdwg.mxu0
    %6474 = vmatprep.subr.bf16.mxu0 %v6178
    %6475 = vmatpush1.bf16.msra.mxu0 %v6177
    %6476 = vmatprep.subr.bf16.mxu0 %v6180
    %6477 = vmatpush1.bf16.msra.mxu0 %v6179
    %6478 = vmatprep.subr.bf16.mxu0 %v6182
    %6479 = vmatpush1.bf16.msra.mxu0 %v6181
    %6480 = vmatprep.subr.bf16.mxu0 %v6184
    %6481 = vmatpush1.bf16.msra.mxu0 %v6183
    %6482 = vmatprep.subr.bf16.mxu0 %v6186
    %6483 = vmatpush1.bf16.msra.mxu0 %v6185
    %6484 = vmatprep.subr.bf16.mxu0 %v6188
    %6485 = vmatpush1.bf16.msra.mxu0 %v6187
    %6486 = vmatprep.subr.bf16.mxu0 %v6190
    %6487 = vmatpush1.bf16.msra.mxu0 %v6189
    %6488 = vmatprep.subr.bf16.mxu0 %v6192
    %6489 = vmatpush1.bf16.msra.mxu0 %v6191
    %6490 = vmatprep.subr.bf16.mxu0 %v6194
    %6491 = vmatpush1.bf16.msra.mxu0 %v6193
    %6492 = vmatprep.subr.bf16.mxu0 %v6196
    %6493 = vmatpush1.bf16.msra.mxu0 %v6195
    %6494 = vmatprep.subr.bf16.mxu0 %v6198
    %6495 = vmatpush1.bf16.msra.mxu0 %v6197
    %6496 = vmatprep.subr.bf16.mxu0 %v6200
    %6497 = vmatpush1.bf16.msra.mxu0 %v6199
    %6498 = vmatprep.subr.bf16.mxu0 %v6202
    %6499 = vmatpush1.bf16.msra.mxu0 %v6201
    %6500 = vmatprep.subr.bf16.mxu0 %v6204
    %6501 = vmatpush1.bf16.msra.mxu0 %v6203
    %6502 = vmatprep.subr.bf16.mxu0 %v6206
    %6503 = vmatpush1.bf16.msra.mxu0 %v6205
    %6504 = vmatprep.subr.bf16.mxu0 %v6208
    %6505 = vmatpush1.bf16.msra.mxu0 %v6207
    %6506 = vmatprep.mubr.bf16.mxu0 %v5604
    %6507 = vmatmul.mubr.bf16.gmra.mrb[0].mxu0 %v5603
    %v6508 = vpop.f32.mrb[0].mxu0
    %v6509 = vadd.f32 %v6436, %v6508
    %v6510 = vpop.f32.mrb[0].mxu0
    %v6511 = vadd.f32 %v6438, %v6510
    %v6512 = vpop.f32.mrb[0].mxu0
    %v6513 = vadd.f32 %v6440, %v6512
    %v6514 = vpop.f32.mrb[0].mxu0
    %v6515 = vadd.f32 %v6442, %v6514
    %6516 = vmatprep.mubr.bf16.mxu0 %v5612
    %6517 = vmatmul.mubr.bf16.gmra.mrb[0].mxu0 %v5611
    %v6518 = vpop.f32.mrb[0].mxu0
    %v6519 = vadd.f32 %v6446, %v6518
    %v6520 = vpop.f32.mrb[0].mxu0
    %v6521 = vadd.f32 %v6448, %v6520
    %v6522 = vpop.f32.mrb[0].mxu0
    %v6523 = vadd.f32 %v6450, %v6522
    %v6524 = vpop.f32.mrb[0].mxu0
    %v6525 = vadd.f32 %v6452, %v6524
    %6526 = vmatprep.mubr.bf16.mxu0 %v5620
    %6527 = vmatmul.mubr.bf16.gmra.mrb[0].mxu0 %v5619
    %v6528 = vpop.f32.mrb[0].mxu0
    %v6529 = vadd.f32 %v6456, %v6528
    %v6530 = vpop.f32.mrb[0].mxu0
    %v6531 = vadd.f32 %v6458, %v6530
    %v6532 = vpop.f32.mrb[0].mxu0
    %v6533 = vadd.f32 %v6460, %v6532
    %v6534 = vpop.f32.mrb[0].mxu0
    %v6535 = vadd.f32 %v6462, %v6534
    %6536 = vmatprep.mubr.bf16.mxu0 %v5628
    %6537 = vmatmul.mubr.bf16.gmra.mrb[0].mxu0 %v5627
    %v6538 = vpop.f32.mrb[0].mxu0
    %v6539 = vadd.f32 %v6466, %v6538
    %v6540 = vpop.f32.mrb[0].mxu0
    %v6541 = vadd.f32 %v6468, %v6540
    %v6542 = vpop.f32.mrb[0].mxu0
    %v6543 = vadd.f32 %v6470, %v6542
    %v6544 = vpop.f32.mrb[0].mxu0
    %v6545 = vadd.f32 %v6472, %v6544
    %6546 = vdwg.mxu0
    %6547 = vmatprep.subr.bf16.mxu0 %v6210
    %6548 = vmatpush1.bf16.msra.mxu0 %v6209
    %6549 = vmatprep.subr.bf16.mxu0 %v6212
    %6550 = vmatpush1.bf16.msra.mxu0 %v6211
    %6551 = vmatprep.subr.bf16.mxu0 %v6214
    %6552 = vmatpush1.bf16.msra.mxu0 %v6213
    %6553 = vmatprep.subr.bf16.mxu0 %v6216
    %6554 = vmatpush1.bf16.msra.mxu0 %v6215
    %6555 = vmatprep.subr.bf16.mxu0 %v6218
    %6556 = vmatpush1.bf16.msra.mxu0 %v6217
    %6557 = vmatprep.subr.bf16.mxu0 %v6220
    %6558 = vmatpush1.bf16.msra.mxu0 %v6219
    %6559 = vmatprep.subr.bf16.mxu0 %v6222
    %6560 = vmatpush1.bf16.msra.mxu0 %v6221
    %6561 = vmatprep.subr.bf16.mxu0 %v6224
    %6562 = vmatpush1.bf16.msra.mxu0 %v6223
    %6563 = vmatprep.subr.bf16.mxu0 %v6226
    %6564 = vmatpush1.bf16.msra.mxu0 %v6225
    %6565 = vmatprep.subr.bf16.mxu0 %v6228
    %6566 = vmatpush1.bf16.msra.mxu0 %v6227
    %6567 = vmatprep.subr.bf16.mxu0 %v6230
    %6568 = vmatpush1.bf16.msra.mxu0 %v6229
    %6569 = vmatprep.subr.bf16.mxu0 %v6232
    %6570 = vmatpush1.bf16.msra.mxu0 %v6231
    %6571 = vmatprep.subr.bf16.mxu0 %v6234
    %6572 = vmatpush1.bf16.msra.mxu0 %v6233
    %6573 = vmatprep.subr.bf16.mxu0 %v6236
    %6574 = vmatpush1.bf16.msra.mxu0 %v6235
    %6575 = vmatprep.subr.bf16.mxu0 %v6238
    %6576 = vmatpush1.bf16.msra.mxu0 %v6237
    %6577 = vmatprep.subr.bf16.mxu0 %v6240
    %6578 = vmatpush1.bf16.msra.mxu0 %v6239
    %6579 = vmatprep.mubr.bf16.mxu0 %v5606
    %6580 = vmatmul.mubr.bf16.gmra.mrb[0].mxu0 %v5605
    %v6581 = vpop.f32.mrb[0].mxu0
    %v6582 = vadd.f32 %v6509, %v6581
    %v6583 = vpop.f32.mrb[0].mxu0
    %v6584 = vadd.f32 %v6511, %v6583
    %v6585 = vpop.f32.mrb[0].mxu0
    %v6586 = vadd.f32 %v6513, %v6585
    %v6587 = vpop.f32.mrb[0].mxu0
    %v6588 = vadd.f32 %v6515, %v6587
    %6589 = vmatprep.mubr.bf16.mxu0 %v5614
    %6590 = vmatmul.mubr.bf16.gmra.mrb[0].mxu0 %v5613
    %v6591 = vpop.f32.mrb[0].mxu0
    %v6592 = vadd.f32 %v6519, %v6591
    %v6593 = vpop.f32.mrb[0].mxu0
    %v6594 = vadd.f32 %v6521, %v6593
    %v6595 = vpop.f32.mrb[0].mxu0
    %v6596 = vadd.f32 %v6523, %v6595
    %v6597 = vpop.f32.mrb[0].mxu0
    %v6598 = vadd.f32 %v6525, %v6597
    %6599 = vmatprep.mubr.bf16.mxu0 %v5622
    %6600 = vmatmul.mubr.bf16.gmra.mrb[0].mxu0 %v5621
    %v6601 = vpop.f32.mrb[0].mxu0
    %v6602 = vadd.f32 %v6529, %v6601
    %v6603 = vpop.f32.mrb[0].mxu0
    %v6604 = vadd.f32 %v6531, %v6603
    %v6605 = vpop.f32.mrb[0].mxu0
    %v6606 = vadd.f32 %v6533, %v6605
    %v6607 = vpop.f32.mrb[0].mxu0
    %v6608 = vadd.f32 %v6535, %v6607
    %6609 = vmatprep.mubr.bf16.mxu0 %v5630
    %6610 = vmatmul.mubr.bf16.gmra.mrb[0].mxu0 %v5629
    %v6611 = vpop.f32.mrb[0].mxu0
    %v6612 = vadd.f32 %v6539, %v6611
    %v6613 = vpop.f32.mrb[0].mxu0
    %v6614 = vadd.f32 %v6541, %v6613
    %v6615 = vpop.f32.mrb[0].mxu0
    %v6616 = vadd.f32 %v6543, %v6615
    %v6617 = vpop.f32.mrb[0].mxu0
    %v6618 = vadd.f32 %v6545, %v6617
    %6619 = vdwg.mxu0
    %6620 = vmatprep.subr.bf16.mxu0 %v6242
    %6621 = vmatpush1.bf16.msra.mxu0 %v6241
    %6622 = vmatprep.subr.bf16.mxu0 %v6244
    %6623 = vmatpush1.bf16.msra.mxu0 %v6243
    %6624 = vmatprep.subr.bf16.mxu0 %v6246
    %6625 = vmatpush1.bf16.msra.mxu0 %v6245
    %6626 = vmatprep.subr.bf16.mxu0 %v6248
    %6627 = vmatpush1.bf16.msra.mxu0 %v6247
    %6628 = vmatprep.subr.bf16.mxu0 %v6250
    %6629 = vmatpush1.bf16.msra.mxu0 %v6249
    %6630 = vmatprep.subr.bf16.mxu0 %v6252
    %6631 = vmatpush1.bf16.msra.mxu0 %v6251
    %6632 = vmatprep.subr.bf16.mxu0 %v6254
    %6633 = vmatpush1.bf16.msra.mxu0 %v6253
    %6634 = vmatprep.subr.bf16.mxu0 %v6256
    %6635 = vmatpush1.bf16.msra.mxu0 %v6255
    %6636 = vmatprep.subr.bf16.mxu0 %v6258
    %6637 = vmatpush1.bf16.msra.mxu0 %v6257
    %6638 = vmatprep.subr.bf16.mxu0 %v6260
    %6639 = vmatpush1.bf16.msra.mxu0 %v6259
    %6640 = vmatprep.subr.bf16.mxu0 %v6262
    %6641 = vmatpush1.bf16.msra.mxu0 %v6261
    %6642 = vmatprep.subr.bf16.mxu0 %v6264
    %6643 = vmatpush1.bf16.msra.mxu0 %v6263
    %6644 = vmatprep.subr.bf16.mxu0 %v6266
    %6645 = vmatpush1.bf16.msra.mxu0 %v6265
    %6646 = vmatprep.subr.bf16.mxu0 %v6268
    %6647 = vmatpush1.bf16.msra.mxu0 %v6267
    %6648 = vmatprep.subr.bf16.mxu0 %v6270
    %6649 = vmatpush1.bf16.msra.mxu0 %v6269
    %6650 = vmatprep.subr.bf16.mxu0 %v6272
    %6651 = vmatpush1.bf16.msra.mxu0 %v6271
    %6652 = vmatprep.mubr.bf16.mxu0 %v5608
    %6653 = vmatmul.mubr.bf16.gmra.mrb[0].mxu0 %v5607
    %v6654 = vpop.f32.mrb[0].mxu0
    %v6655 = vadd.f32 %v6582, %v6654
    %v6656 = vpop.f32.mrb[0].mxu0
    %v6657 = vadd.f32 %v6584, %v6656
    %v6658 = vpop.f32.mrb[0].mxu0
    %v6659 = vadd.f32 %v6586, %v6658
    %v6660 = vpop.f32.mrb[0].mxu0
    %v6661 = vadd.f32 %v6588, %v6660
    %6662 = vmatprep.mubr.bf16.mxu0 %v5616
    %6663 = vmatmul.mubr.bf16.gmra.mrb[0].mxu0 %v5615
    %v6664 = vpop.f32.mrb[0].mxu0
    %v6665 = vadd.f32 %v6592, %v6664
    %v6666 = vpop.f32.mrb[0].mxu0
    %v6667 = vadd.f32 %v6594, %v6666
    %v6668 = vpop.f32.mrb[0].mxu0
    %v6669 = vadd.f32 %v6596, %v6668
    %v6670 = vpop.f32.mrb[0].mxu0
    %v6671 = vadd.f32 %v6598, %v6670
    %6672 = vmatprep.mubr.bf16.mxu0 %v5624
    %6673 = vmatmul.mubr.bf16.gmra.mrb[0].mxu0 %v5623
    %v6674 = vpop.f32.mrb[0].mxu0
    %v6675 = vadd.f32 %v6602, %v6674
    %v6676 = vpop.f32.mrb[0].mxu0
    %v6677 = vadd.f32 %v6604, %v6676
    %v6678 = vpop.f32.mrb[0].mxu0
    %v6679 = vadd.f32 %v6606, %v6678
    %v6680 = vpop.f32.mrb[0].mxu0
    %v6681 = vadd.f32 %v6608, %v6680
    %6682 = vmatprep.mubr.bf16.mxu0 %v5632
    %6683 = vmatmul.mubr.bf16.gmra.mrb[0].mxu0 %v5631
    %v6684 = vpop.f32.mrb[0].mxu0
    %v6685 = vadd.f32 %v6612, %v6684
    %v6686 = vpop.f32.mrb[0].mxu0
    %v6687 = vadd.f32 %v6614, %v6686
    %v6688 = vpop.f32.mrb[0].mxu0
    %v6689 = vadd.f32 %v6616, %v6688
    %v6690 = vpop.f32.mrb[0].mxu0
    %v6691 = vadd.f32 %v6618, %v6690
    %6692 = vdwg.mxu0
    %v6693 = vadd.f32 %v6655, %v6659
    %v6694 = vadd.f32 %v6693, %v6665
    %v6695 = vadd.f32 %v6694, %v6669
    %v6696 = vadd.f32 %v6695, %v6675
    %v6697 = vadd.f32 %v6696, %v6679
    %v6698 = vadd.f32 %v6697, %v6685
    %v6699 = vadd.f32 %v6698, %v6689
    %v6700 = vrot.slane %v6699, 4
    %v6701 = vadd.f32 %v6699, %v6700
    %v6702 = vrot.slane %v6701, 2
    %v6703 = vadd.f32 %v6701, %v6702
    %v6704 = vrot.slane %v6703, 1
    %v6705 = vadd.f32 %v6703, %v6704
    %v6706 = vadd.f32 %v6657, %v6661
    %v6707 = vadd.f32 %v6706, %v6667
    %v6708 = vadd.f32 %v6707, %v6671
    %v6709 = vadd.f32 %v6708, %v6677
    %v6710 = vadd.f32 %v6709, %v6681
    %v6711 = vadd.f32 %v6710, %v6687
    %v6712 = vadd.f32 %v6711, %v6691
    %v6713 = vrot.slane %v6712, 4
    %v6714 = vadd.f32 %v6712, %v6713
    %v6715 = vrot.slane %v6714, 2
    %v6716 = vadd.f32 %v6714, %v6715
    %v6717 = vrot.slane %v6716, 1
    %v6718 = vadd.f32 %v6716, %v6717
    %v6719 = vmul.f32 %v6655, %v6655
    %v6720 = vmul.f32 %v6657, %v6657
    %v6721 = vmul.f32 %v6659, %v6659
    %v6722 = vmul.f32 %v6661, %v6661
    %v6723 = vmul.f32 %v6665, %v6665
    %v6724 = vmul.f32 %v6667, %v6667
    %v6725 = vmul.f32 %v6669, %v6669
    %v6726 = vmul.f32 %v6671, %v6671
    %v6727 = vmul.f32 %v6675, %v6675
    %v6728 = vmul.f32 %v6677, %v6677
    %v6729 = vmul.f32 %v6679, %v6679
    %v6730 = vmul.f32 %v6681, %v6681
    %v6731 = vmul.f32 %v6685, %v6685
    %v6732 = vmul.f32 %v6687, %v6687
    %v6733 = vmul.f32 %v6689, %v6689
    %v6734 = vmul.f32 %v6691, %v6691
    %v6735 = vadd.f32 %v6719, %v6721
    %v6736 = vadd.f32 %v6735, %v6723
    %v6737 = vadd.f32 %v6736, %v6725
    %v6738 = vadd.f32 %v6737, %v6727
    %v6739 = vadd.f32 %v6738, %v6729
    %v6740 = vadd.f32 %v6739, %v6731
    %v6741 = vadd.f32 %v6740, %v6733
    %v6742 = vrot.slane %v6741, 4
    %v6743 = vadd.f32 %v6741, %v6742
    %v6744 = vrot.slane %v6743, 2
    %v6745 = vadd.f32 %v6743, %v6744
    %v6746 = vrot.slane %v6745, 1
    %v6747 = vadd.f32 %v6745, %v6746
    %v6748 = vadd.f32 %v6720, %v6722
    %v6749 = vadd.f32 %v6748, %v6724
    %v6750 = vadd.f32 %v6749, %v6726
    %v6751 = vadd.f32 %v6750, %v6728
    %v6752 = vadd.f32 %v6751, %v6730
    %v6753 = vadd.f32 %v6752, %v6732
    %v6754 = vadd.f32 %v6753, %v6734
    %v6755 = vrot.slane %v6754, 4
    %v6756 = vadd.f32 %v6754, %v6755
    %v6757 = vrot.slane %v6756, 2
    %v6758 = vadd.f32 %v6756, %v6757
    %v6759 = vrot.slane %v6758, 1
    %v6760 = vadd.f32 %v6758, %v6759
    %v6761 = vld [vmem:[%s22] sm:$0xff]
    %v6762 = vld [vmem:[%s22 + $0x8] sm:$0xff]
    %v6763 = vld [vmem:[%s22 + $0x10] sm:$0xff]
    %v6764 = vld [vmem:[%s22 + $0x18] sm:$0xff]
    %v6765 = vld [vmem:[%s22 + $0x20] sm:$0xff]
    %v6766 = vld [vmem:[%s22 + $0x28] sm:$0xff]
    %v6767 = vld [vmem:[%s22 + $0x30] sm:$0xff]
    %v6768 = vld [vmem:[%s22 + $0x38] sm:$0xff]
    %v6769 = vld [vmem:[%s22 + $0x40] sm:$0xff]
    %v6770 = vld [vmem:[%s22 + $0x48] sm:$0xff]
    %v6771 = vld [vmem:[%s22 + $0x50] sm:$0xff]
    %v6772 = vld [vmem:[%s22 + $0x58] sm:$0xff]
    %v6773 = vld [vmem:[%s22 + $0x60] sm:$0xff]
    %v6774 = vld [vmem:[%s22 + $0x68] sm:$0xff]
    %v6775 = vld [vmem:[%s22 + $0x70] sm:$0xff]
    %v6776 = vld [vmem:[%s22 + $0x78] sm:$0xff]
    %v6777 = vld [vmem:[%s22 + $0x80] sm:$0xff]
    %v6778 = vld [vmem:[%s22 + $0x88] sm:$0xff]
    %v6779 = vld [vmem:[%s22 + $0x90] sm:$0xff]
    %v6780 = vld [vmem:[%s22 + $0x98] sm:$0xff]
    %v6781 = vld [vmem:[%s22 + $0xa0] sm:$0xff]
    %v6782 = vld [vmem:[%s22 + $0xa8] sm:$0xff]
    %v6783 = vld [vmem:[%s22 + $0xb0] sm:$0xff]
    %v6784 = vld [vmem:[%s22 + $0xb8] sm:$0xff]
    %v6785 = vld [vmem:[%s22 + $0xc0] sm:$0xff]
    %v6786 = vld [vmem:[%s22 + $0xc8] sm:$0xff]
    %v6787 = vld [vmem:[%s22 + $0xd0] sm:$0xff]
    %v6788 = vld [vmem:[%s22 + $0xd8] sm:$0xff]
    %v6789 = vld [vmem:[%s22 + $0xe0] sm:$0xff]
    %v6790 = vld [vmem:[%s22 + $0xe8] sm:$0xff]
    %v6791 = vld [vmem:[%s22 + $0xf0] sm:$0xff]
    %v6792 = vld [vmem:[%s22 + $0xf8] sm:$0xff]
    %6793 = vmatprep.subr.mxu0 0.0
    %6794 = vmatpush1.msra.mxu0 %v6761
    %6795 = vmatprep.subr.mxu0 0.0
    %6796 = vmatpush1.msra.mxu0 %v6762
    %6797 = vmatprep.subr.mxu0 0.0
    %6798 = vmatpush1.msra.mxu0 %v6763
    %6799 = vmatprep.subr.mxu0 0.0
    %6800 = vmatpush1.msra.mxu0 %v6764
    %6801 = vmatprep.subr.mxu0 0.0
    %6802 = vmatpush1.msra.mxu0 %v6765
    %6803 = vmatprep.subr.mxu0 0.0
    %6804 = vmatpush1.msra.mxu0 %v6766
    %6805 = vmatprep.subr.mxu0 0.0
    %6806 = vmatpush1.msra.mxu0 %v6767
    %6807 = vmatprep.subr.mxu0 0.0
    %6808 = vmatpush1.msra.mxu0 %v6768
    %6809 = vmatprep.subr.mxu0 0.0
    %6810 = vmatpush1.msra.mxu0 %v6769
    %6811 = vmatprep.subr.mxu0 0.0
    %6812 = vmatpush1.msra.mxu0 %v6770
    %6813 = vmatprep.subr.mxu0 0.0
    %6814 = vmatpush1.msra.mxu0 %v6771
    %6815 = vmatprep.subr.mxu0 0.0
    %6816 = vmatpush1.msra.mxu0 %v6772
    %6817 = vmatprep.subr.mxu0 0.0
    %6818 = vmatpush1.msra.mxu0 %v6773
    %6819 = vmatprep.subr.mxu0 0.0
    %6820 = vmatpush1.msra.mxu0 %v6774
    %6821 = vmatprep.subr.mxu0 0.0
    %6822 = vmatpush1.msra.mxu0 %v6775
    %6823 = vmatprep.subr.mxu0 0.0
    %6824 = vmatpush1.msra.mxu0 %v6776
    %6825 = vmatprep.subr.mxu0 0.0
    %6826 = vmatpush1.msra.mxu0 %v6777
    %6827 = vmatprep.subr.mxu0 0.0
    %6828 = vmatpush1.msra.mxu0 %v6778
    %6829 = vmatprep.subr.mxu0 0.0
    %6830 = vmatpush1.msra.mxu0 %v6779
    %6831 = vmatprep.subr.mxu0 0.0
    %6832 = vmatpush1.msra.mxu0 %v6780
    %6833 = vmatprep.subr.mxu0 0.0
    %6834 = vmatpush1.msra.mxu0 %v6781
    %6835 = vmatprep.subr.mxu0 0.0
    %6836 = vmatpush1.msra.mxu0 %v6782
    %6837 = vmatprep.subr.mxu0 0.0
    %6838 = vmatpush1.msra.mxu0 %v6783
    %6839 = vmatprep.subr.mxu0 0.0
    %6840 = vmatpush1.msra.mxu0 %v6784
    %6841 = vmatprep.subr.mxu0 0.0
    %6842 = vmatpush1.msra.mxu0 %v6785
    %6843 = vmatprep.subr.mxu0 0.0
    %6844 = vmatpush1.msra.mxu0 %v6786
    %6845 = vmatprep.subr.mxu0 0.0
    %6846 = vmatpush1.msra.mxu0 %v6787
    %6847 = vmatprep.subr.mxu0 0.0
    %6848 = vmatpush1.msra.mxu0 %v6788
    %6849 = vmatprep.subr.mxu0 0.0
    %6850 = vmatpush1.msra.mxu0 %v6789
    %6851 = vmatprep.subr.mxu0 0.0
    %6852 = vmatpush1.msra.mxu0 %v6790
    %6853 = vmatprep.subr.mxu0 0.0
    %6854 = vmatpush1.msra.mxu0 %v6791
    %6855 = vmatprep.subr.mxu0 0.0
    %6856 = vmatpush1.msra.mxu0 %v6792
    %6857 = vmatprep.mubr.f32.mxu0 %v6718
    %6858 = vmatmul.mubr.f32.gmra.mrb[0].mxu0 %v6705
    %v6859 = vpop.f32.mrb[0].mxu0
    %v6860 = vadd.f32 0.0, %v6859
    %v6861 = vpop.f32.mrb[0].mxu0
    %6862 = vdwg.mxu0
    %v6863 = vmul.f32 %v6860, 0.00048828125
    %6864 = vmatprep.subr.mxu0 0.0
    %6865 = vmatpush1.msra.mxu0 %v6761
    %6866 = vmatprep.subr.mxu0 0.0
    %6867 = vmatpush1.msra.mxu0 %v6762
    %6868 = vmatprep.subr.mxu0 0.0
    %6869 = vmatpush1.msra.mxu0 %v6763
    %6870 = vmatprep.subr.mxu0 0.0
    %6871 = vmatpush1.msra.mxu0 %v6764
    %6872 = vmatprep.subr.mxu0 0.0
    %6873 = vmatpush1.msra.mxu0 %v6765
    %6874 = vmatprep.subr.mxu0 0.0
    %6875 = vmatpush1.msra.mxu0 %v6766
    %6876 = vmatprep.subr.mxu0 0.0
    %6877 = vmatpush1.msra.mxu0 %v6767
    %6878 = vmatprep.subr.mxu0 0.0
    %6879 = vmatpush1.msra.mxu0 %v6768
    %6880 = vmatprep.subr.mxu0 0.0
    %6881 = vmatpush1.msra.mxu0 %v6769
    %6882 = vmatprep.subr.mxu0 0.0
    %6883 = vmatpush1.msra.mxu0 %v6770
    %6884 = vmatprep.subr.mxu0 0.0
    %6885 = vmatpush1.msra.mxu0 %v6771
    %6886 = vmatprep.subr.mxu0 0.0
    %6887 = vmatpush1.msra.mxu0 %v6772
    %6888 = vmatprep.subr.mxu0 0.0
    %6889 = vmatpush1.msra.mxu0 %v6773
    %6890 = vmatprep.subr.mxu0 0.0
    %6891 = vmatpush1.msra.mxu0 %v6774
    %6892 = vmatprep.subr.mxu0 0.0
    %6893 = vmatpush1.msra.mxu0 %v6775
    %6894 = vmatprep.subr.mxu0 0.0
    %6895 = vmatpush1.msra.mxu0 %v6776
    %6896 = vmatprep.subr.mxu0 0.0
    %6897 = vmatpush1.msra.mxu0 %v6777
    %6898 = vmatprep.subr.mxu0 0.0
    %6899 = vmatpush1.msra.mxu0 %v6778
    %6900 = vmatprep.subr.mxu0 0.0
    %6901 = vmatpush1.msra.mxu0 %v6779
    %6902 = vmatprep.subr.mxu0 0.0
    %6903 = vmatpush1.msra.mxu0 %v6780
    %6904 = vmatprep.subr.mxu0 0.0
    %6905 = vmatpush1.msra.mxu0 %v6781
    %6906 = vmatprep.subr.mxu0 0.0
    %6907 = vmatpush1.msra.mxu0 %v6782
    %6908 = vmatprep.subr.mxu0 0.0
    %6909 = vmatpush1.msra.mxu0 %v6783
    %6910 = vmatprep.subr.mxu0 0.0
    %6911 = vmatpush1.msra.mxu0 %v6784
    %6912 = vmatprep.subr.mxu0 0.0
    %6913 = vmatpush1.msra.mxu0 %v6785
    %6914 = vmatprep.subr.mxu0 0.0
    %6915 = vmatpush1.msra.mxu0 %v6786
    %6916 = vmatprep.subr.mxu0 0.0
    %6917 = vmatpush1.msra.mxu0 %v6787
    %6918 = vmatprep.subr.mxu0 0.0
    %6919 = vmatpush1.msra.mxu0 %v6788
    %6920 = vmatprep.subr.mxu0 0.0
    %6921 = vmatpush1.msra.mxu0 %v6789
    %6922 = vmatprep.subr.mxu0 0.0
    %6923 = vmatpush1.msra.mxu0 %v6790
    %6924 = vmatprep.subr.mxu0 0.0
    %6925 = vmatpush1.msra.mxu0 %v6791
    %6926 = vmatprep.subr.mxu0 0.0
    %6927 = vmatpush1.msra.mxu0 %v6792
    %6928 = vmatprep.mubr.f32.mxu0 %v6760
    %6929 = vmatmul.mubr.f32.gmra.mrb[0].mxu0 %v6747
    %v6930 = vpop.f32.mrb[0].mxu0
    %v6931 = vadd.f32 0.0, %v6930
    %v6932 = vpop.f32.mrb[0].mxu0
    %6933 = vdwg.mxu0
    %v6934 = vmul.f32 %v6931, 0.00048828125
    %v6935 = vmul.f32 %v6863, %v6863
    %v6936 = vsub.f32 %v6934, %v6935
    %v6937 = vadd.f32 %v6936, 1e-05
    %v6938 = vrsqrt.pop %v6937
    %v6939 = vld [vmem:[#allocation14] sm:$0x1]
    %v6940 = vmul.f32 %v6939, %v6938
    %v6941 = vld [vmem:[#allocation14 + $0x1] sm:$0x1]
    %v6942 = vmul.f32 %v6863, %v6940
    %v6943 = vsub.f32 %v6941, %v6942
    %v6944 = vld [vmem:[%s23] sm:$0xff]
    %v6945 = vld [vmem:[%s23 + $0x8] sm:$0xff]
    %v6947 = vsel %vm1841, %v6940, 0
    %6949 = vmatprep.subr.mxu0 %v6945
    %6950 = vmatpush1.msra.mxu0 %v6944
    %6951 = vmatprep.subr.mxu0 0.0
    %6952 = vmatpush1.msra.mxu0 0.0
    %6953 = vmatprep.subr.mxu0 0.0
    %6954 = vmatpush1.msra.mxu0 0.0
    %6955 = vmatprep.subr.mxu0 0.0
    %6956 = vmatpush1.msra.mxu0 0.0
    %6957 = vmatprep.subr.mxu0 0.0
    %6958 = vmatpush1.msra.mxu0 0.0
    %6959 = vmatprep.subr.mxu0 0.0
    %6960 = vmatpush1.msra.mxu0 0.0
    %6961 = vmatprep.subr.mxu0 0.0
    %6962 = vmatpush1.msra.mxu0 0.0
    %6963 = vmatprep.subr.mxu0 0.0
    %6964 = vmatpush1.msra.mxu0 0.0
    %6965 = vmatprep.subr.mxu0 0.0
    %6966 = vmatpush1.msra.mxu0 0.0
    %6967 = vmatprep.subr.mxu0 0.0
    %6968 = vmatpush1.msra.mxu0 0.0
    %6969 = vmatprep.subr.mxu0 0.0
    %6970 = vmatpush1.msra.mxu0 0.0
    %6971 = vmatprep.subr.mxu0 0.0
    %6972 = vmatpush1.msra.mxu0 0.0
    %6973 = vmatprep.subr.mxu0 0.0
    %6974 = vmatpush1.msra.mxu0 0.0
    %6975 = vmatprep.subr.mxu0 0.0
    %6976 = vmatpush1.msra.mxu0 0.0
    %6977 = vmatprep.subr.mxu0 0.0
    %6978 = vmatpush1.msra.mxu0 0.0
    %6979 = vmatprep.subr.mxu0 0.0
    %6980 = vmatpush1.msra.mxu0 0.0
    %6981 = vmatprep.subr.mxu0 0.0
    %6982 = vmatpush1.msra.mxu0 0.0
    %6983 = vmatprep.subr.mxu0 0.0
    %6984 = vmatpush1.msra.mxu0 0.0
    %6985 = vmatprep.subr.mxu0 0.0
    %6986 = vmatpush1.msra.mxu0 0.0
    %6987 = vmatprep.subr.mxu0 0.0
    %6988 = vmatpush1.msra.mxu0 0.0
    %6989 = vmatprep.subr.mxu0 0.0
    %6990 = vmatpush1.msra.mxu0 0.0
    %6991 = vmatprep.subr.mxu0 0.0
    %6992 = vmatpush1.msra.mxu0 0.0
    %6993 = vmatprep.subr.mxu0 0.0
    %6994 = vmatpush1.msra.mxu0 0.0
    %6995 = vmatprep.subr.mxu0 0.0
    %6996 = vmatpush1.msra.mxu0 0.0
    %6997 = vmatprep.subr.mxu0 0.0
    %6998 = vmatpush1.msra.mxu0 0.0
    %6999 = vmatprep.subr.mxu0 0.0
    %7000 = vmatpush1.msra.mxu0 0.0
    %7001 = vmatprep.subr.mxu0 0.0
    %7002 = vmatpush1.msra.mxu0 0.0
    %7003 = vmatprep.subr.mxu0 0.0
    %7004 = vmatpush1.msra.mxu0 0.0
    %7005 = vmatprep.subr.mxu0 0.0
    %7006 = vmatpush1.msra.mxu0 0.0
    %7007 = vmatprep.subr.mxu0 0.0
    %7008 = vmatpush1.msra.mxu0 0.0
    %7009 = vmatprep.subr.mxu0 0.0
    %7010 = vmatpush1.msra.mxu0 0.0
    %7011 = vmatprep.subr.mxu0 0.0
    %7012 = vmatpush1.msra.mxu0 0.0
    %7013 = vmatprep.mubr.f32.mxu0 0.0
    %7014 = vmatmul.mubr.f32.gmra.mrb[0].mxu0 %v6947
    %v7015 = vpop.f32.mrb[0].mxu0
    %v7016 = vadd.f32 0.0, %v7015
    %v7017 = vpop.f32.mrb[0].mxu0
    %v7018 = vadd.f32 0.0, %v7017
    %7019 = vdwg.mxu0
    %v7021 = vsel %vm1841, %v6943, 0
    %7023 = vmatprep.subr.mxu0 %v6945
    %7024 = vmatpush1.msra.mxu0 %v6944
    %7025 = vmatprep.subr.mxu0 0.0
    %7026 = vmatpush1.msra.mxu0 0.0
    %7027 = vmatprep.subr.mxu0 0.0
    %7028 = vmatpush1.msra.mxu0 0.0
    %7029 = vmatprep.subr.mxu0 0.0
    %7030 = vmatpush1.msra.mxu0 0.0
    %7031 = vmatprep.subr.mxu0 0.0
    %7032 = vmatpush1.msra.mxu0 0.0
    %7033 = vmatprep.subr.mxu0 0.0
    %7034 = vmatpush1.msra.mxu0 0.0
    %7035 = vmatprep.subr.mxu0 0.0
    %7036 = vmatpush1.msra.mxu0 0.0
    %7037 = vmatprep.subr.mxu0 0.0
    %7038 = vmatpush1.msra.mxu0 0.0
    %7039 = vmatprep.subr.mxu0 0.0
    %7040 = vmatpush1.msra.mxu0 0.0
    %7041 = vmatprep.subr.mxu0 0.0
    %7042 = vmatpush1.msra.mxu0 0.0
    %7043 = vmatprep.subr.mxu0 0.0
    %7044 = vmatpush1.msra.mxu0 0.0
    %7045 = vmatprep.subr.mxu0 0.0
    %7046 = vmatpush1.msra.mxu0 0.0
    %7047 = vmatprep.subr.mxu0 0.0
    %7048 = vmatpush1.msra.mxu0 0.0
    %7049 = vmatprep.subr.mxu0 0.0
    %7050 = vmatpush1.msra.mxu0 0.0
    %7051 = vmatprep.subr.mxu0 0.0
    %7052 = vmatpush1.msra.mxu0 0.0
    %7053 = vmatprep.subr.mxu0 0.0
    %7054 = vmatpush1.msra.mxu0 0.0
    %7055 = vmatprep.subr.mxu0 0.0
    %7056 = vmatpush1.msra.mxu0 0.0
    %7057 = vmatprep.subr.mxu0 0.0
    %7058 = vmatpush1.msra.mxu0 0.0
    %7059 = vmatprep.subr.mxu0 0.0
    %7060 = vmatpush1.msra.mxu0 0.0
    %7061 = vmatprep.subr.mxu0 0.0
    %7062 = vmatpush1.msra.mxu0 0.0
    %7063 = vmatprep.subr.mxu0 0.0
    %7064 = vmatpush1.msra.mxu0 0.0
    %7065 = vmatprep.subr.mxu0 0.0
    %7066 = vmatpush1.msra.mxu0 0.0
    %7067 = vmatprep.subr.mxu0 0.0
    %7068 = vmatpush1.msra.mxu0 0.0
    %7069 = vmatprep.subr.mxu0 0.0
    %7070 = vmatpush1.msra.mxu0 0.0
    %7071 = vmatprep.subr.mxu0 0.0
    %7072 = vmatpush1.msra.mxu0 0.0
    %7073 = vmatprep.subr.mxu0 0.0
    %7074 = vmatpush1.msra.mxu0 0.0
    %7075 = vmatprep.subr.mxu0 0.0
    %7076 = vmatpush1.msra.mxu0 0.0
    %7077 = vmatprep.subr.mxu0 0.0
    %7078 = vmatpush1.msra.mxu0 0.0
    %7079 = vmatprep.subr.mxu0 0.0
    %7080 = vmatpush1.msra.mxu0 0.0
    %7081 = vmatprep.subr.mxu0 0.0
    %7082 = vmatpush1.msra.mxu0 0.0
    %7083 = vmatprep.subr.mxu0 0.0
    %7084 = vmatpush1.msra.mxu0 0.0
    %7085 = vmatprep.subr.mxu0 0.0
    %7086 = vmatpush1.msra.mxu0 0.0
    %7087 = vmatprep.mubr.f32.mxu0 0.0
    %7088 = vmatmul.mubr.f32.gmra.mrb[0].mxu0 %v7021
    %v7089 = vpop.f32.mrb[0].mxu0
    %v7090 = vadd.f32 0.0, %v7089
    %v7091 = vpop.f32.mrb[0].mxu0
    %v7092 = vadd.f32 0.0, %v7091
    %7093 = vdwg.mxu0
    %v7094 = vlaneseq
    %v7095 = vshrl.u32 %v7094, 7
    %v7096 = vsub.s32 0, %v7095
    %v7097 = vrot.slane %v7016, %v7096
    %v7098 = vlaneseq
    %v7099 = vshrl.u32 %v7098, 7
    %v7100 = vsub.s32 0, %v7099
    %v7101 = vrot.slane %v7018, %v7100
    %v7102 = vmul.f32 %v6655, %v7097
    %v7103 = vmul.f32 %v6657, %v7101
    %v7104 = vmul.f32 %v6659, %v7097
    %v7105 = vmul.f32 %v6661, %v7101
    %v7106 = vmul.f32 %v6665, %v7097
    %v7107 = vmul.f32 %v6667, %v7101
    %v7108 = vmul.f32 %v6669, %v7097
    %v7109 = vmul.f32 %v6671, %v7101
    %v7110 = vmul.f32 %v6675, %v7097
    %v7111 = vmul.f32 %v6677, %v7101
    %v7112 = vmul.f32 %v6679, %v7097
    %v7113 = vmul.f32 %v6681, %v7101
    %v7114 = vmul.f32 %v6685, %v7097
    %v7115 = vmul.f32 %v6687, %v7101
    %v7116 = vmul.f32 %v6689, %v7097
    %v7117 = vmul.f32 %v6691, %v7101
    %v7118 = vlaneseq
    %v7119 = vshrl.u32 %v7118, 7
    %v7120 = vsub.s32 0, %v7119
    %v7121 = vrot.slane %v7090, %v7120
    %v7122 = vlaneseq
    %v7123 = vshrl.u32 %v7122, 7
    %v7124 = vsub.s32 0, %v7123
    %v7125 = vrot.slane %v7092, %v7124
    %v7126 = vadd.f32 %v7102, %v7121
    %v7127 = vadd.f32 %v7103, %v7125
    %v7128 = vadd.f32 %v7104, %v7121
    %v7129 = vadd.f32 %v7105, %v7125
    %v7130 = vadd.f32 %v7106, %v7121
    %v7131 = vadd.f32 %v7107, %v7125
    %v7132 = vadd.f32 %v7108, %v7121
    %v7133 = vadd.f32 %v7109, %v7125
    %v7134 = vadd.f32 %v7110, %v7121
    %v7135 = vadd.f32 %v7111, %v7125
    %v7136 = vadd.f32 %v7112, %v7121
    %v7137 = vadd.f32 %v7113, %v7125
    %v7138 = vadd.f32 %v7114, %v7121
    %v7139 = vadd.f32 %v7115, %v7125
    %v7140 = vadd.f32 %v7116, %v7121
    %v7141 = vadd.f32 %v7117, %v7125
    %vm7142 = vcmp.gt.f32.partialorder %v7126, 0.0
    %vm7143 = vcmp.gt.f32.partialorder %v7127, 0.0
    %vm7144 = vcmp.gt.f32.partialorder %v7128, 0.0
    %vm7145 = vcmp.gt.f32.partialorder %v7129, 0.0
    %vm7146 = vcmp.gt.f32.partialorder %v7130, 0.0
    %vm7147 = vcmp.gt.f32.partialorder %v7131, 0.0
    %vm7148 = vcmp.gt.f32.partialorder %v7132, 0.0
    %vm7149 = vcmp.gt.f32.partialorder %v7133, 0.0
    %vm7150 = vcmp.gt.f32.partialorder %v7134, 0.0
    %vm7151 = vcmp.gt.f32.partialorder %v7135, 0.0
    %vm7152 = vcmp.gt.f32.partialorder %v7136, 0.0
    %vm7153 = vcmp.gt.f32.partialorder %v7137, 0.0
    %vm7154 = vcmp.gt.f32.partialorder %v7138, 0.0
    %vm7155 = vcmp.gt.f32.partialorder %v7139, 0.0
    %vm7156 = vcmp.gt.f32.partialorder %v7140, 0.0
    %vm7157 = vcmp.gt.f32.partialorder %v7141, 0.0
    %v7158 = vmul.f32 %v7126, 0.2
    %v7159 = vmul.f32 %v7127, 0.2
    %v7160 = vmul.f32 %v7128, 0.2
    %v7161 = vmul.f32 %v7129, 0.2
    %v7162 = vmul.f32 %v7130, 0.2
    %v7163 = vmul.f32 %v7131, 0.2
    %v7164 = vmul.f32 %v7132, 0.2
    %v7165 = vmul.f32 %v7133, 0.2
    %v7166 = vmul.f32 %v7134, 0.2
    %v7167 = vmul.f32 %v7135, 0.2
    %v7168 = vmul.f32 %v7136, 0.2
    %v7169 = vmul.f32 %v7137, 0.2
    %v7170 = vmul.f32 %v7138, 0.2
    %v7171 = vmul.f32 %v7139, 0.2
    %v7172 = vmul.f32 %v7140, 0.2
    %v7173 = vmul.f32 %v7141, 0.2
    %v7174 = vsel %vm7142, %v7126, %v7158
    %v7175 = vsel %vm7143, %v7127, %v7159
    %v7176 = vsel %vm7144, %v7128, %v7160
    %v7177 = vsel %vm7145, %v7129, %v7161
    %v7178 = vsel %vm7146, %v7130, %v7162
    %v7179 = vsel %vm7147, %v7131, %v7163
    %v7180 = vsel %vm7148, %v7132, %v7164
    %v7181 = vsel %vm7149, %v7133, %v7165
    %v7182 = vsel %vm7150, %v7134, %v7166
    %v7183 = vsel %vm7151, %v7135, %v7167
    %v7184 = vsel %vm7152, %v7136, %v7168
    %v7185 = vsel %vm7153, %v7137, %v7169
    %v7186 = vsel %vm7154, %v7138, %v7170
    %v7187 = vsel %vm7155, %v7139, %v7171
    %v7188 = vsel %vm7156, %v7140, %v7172
    %v7189 = vsel %vm7157, %v7141, %v7173
    %v7190 = vpack.c.bf16 %v7176, %v7174
    %v7191 = vpack.c.bf16 %v7177, %v7175
    %v7192 = vpack.c.bf16 %v7180, %v7178
    %v7193 = vpack.c.bf16 %v7181, %v7179
    %v7194 = vpack.c.bf16 %v7184, %v7182
    %v7195 = vpack.c.bf16 %v7185, %v7183
    %v7196 = vpack.c.bf16 %v7188, %v7186
    %v7197 = vpack.c.bf16 %v7189, %v7187
    %v7198 = vld [vmem:[#allocation16] sm:$0xf]
    %v7199 = vld [vmem:[#allocation16 + $0x4] sm:$0xf]
    %v7200 = vld [vmem:[#allocation16 + $0x8] sm:$0xf]
    %v7201 = vld [vmem:[#allocation16 + $0xc] sm:$0xf]
    %v7202 = vld [vmem:[#allocation16 + $0x10] sm:$0xf]
    %v7203 = vld [vmem:[#allocation16 + $0x14] sm:$0xf]
    %v7204 = vld [vmem:[#allocation16 + $0x18] sm:$0xf]
    %v7205 = vld [vmem:[#allocation16 + $0x1c] sm:$0xf]
    %v7214 = vunpack.c.l.b16 %v7198
    %v7215 = vunpack.c.l.b16 %v7199
    %v7216 = vunpack.c.l.b16 %v7200
    %v7217 = vunpack.c.l.b16 %v7201
    %v7218 = vunpack.c.l.b16 %v7202
    %v7219 = vunpack.c.l.b16 %v7203
    %v7220 = vunpack.c.l.b16 %v7204
    %v7221 = vunpack.c.l.b16 %v7205
    %v7222 = vpack.c.b16 %v7215, %v7214
    %v7223 = vpack.c.b16 %v7217, %v7216
    %v7224 = vpack.c.b16 %v7219, %v7218
    %v7225 = vpack.c.b16 %v7221, %v7220
    %v7227 = vsel %vm255, %v7222, 0
    %v7230 = vsel %vm255, %v7223, 0
    %v7233 = vsel %vm255, %v7224, 0
    %v7236 = vsel %vm255, %v7225, 0
    %7238 = vmatprep.subr.bf16.mxu0 %v7191
    %7239 = vmatpush1.bf16.msra.mxu0 %v7190
    %7240 = vmatprep.subr.bf16.mxu0 %v7193
    %7241 = vmatpush1.bf16.msra.mxu0 %v7192
    %7242 = vmatprep.subr.bf16.mxu0 %v7195
    %7243 = vmatpush1.bf16.msra.mxu0 %v7194
    %7244 = vmatprep.subr.bf16.mxu0 %v7197
    %7245 = vmatpush1.bf16.msra.mxu0 %v7196
    %7246 = vmatprep.subr.bf16.mxu0 0
    %7247 = vmatpush1.bf16.msra.mxu0 0
    %7248 = vmatprep.subr.bf16.mxu0 0
    %7249 = vmatpush1.bf16.msra.mxu0 0
    %7250 = vmatprep.subr.bf16.mxu0 0
    %7251 = vmatpush1.bf16.msra.mxu0 0
    %7252 = vmatprep.subr.bf16.mxu0 0
    %7253 = vmatpush1.bf16.msra.mxu0 0
    %7254 = vmatprep.subr.bf16.mxu0 0
    %7255 = vmatpush1.bf16.msra.mxu0 0
    %7256 = vmatprep.subr.bf16.mxu0 0
    %7257 = vmatpush1.bf16.msra.mxu0 0
    %7258 = vmatprep.subr.bf16.mxu0 0
    %7259 = vmatpush1.bf16.msra.mxu0 0
    %7260 = vmatprep.subr.bf16.mxu0 0
    %7261 = vmatpush1.bf16.msra.mxu0 0
    %7262 = vmatprep.subr.bf16.mxu0 0
    %7263 = vmatpush1.bf16.msra.mxu0 0
    %7264 = vmatprep.subr.bf16.mxu0 0
    %7265 = vmatpush1.bf16.msra.mxu0 0
    %7266 = vmatprep.subr.bf16.mxu0 0
    %7267 = vmatpush1.bf16.msra.mxu0 0
    %7268 = vmatprep.subr.bf16.mxu0 0
    %7269 = vmatpush1.bf16.msra.mxu0 0
    %7270 = vmatprep.mubr.bf16.mxu0 0
    %7271 = vmatmul.mubr.bf16.gmra.mrb[0].mxu0 %v7227
    %v7272 = vpop.f32.mrb[0].mxu0
    %v7273 = vadd.f32 0.0, %v7272
    %v7274 = vpop.f32.mrb[0].mxu0
    %v7275 = vadd.f32 0.0, %v7274
    %v7276 = vpop.f32.mrb[0].mxu0
    %v7277 = vadd.f32 0.0, %v7276
    %v7278 = vpop.f32.mrb[0].mxu0
    %v7279 = vadd.f32 0.0, %v7278
    %7280 = vmatprep.mubr.bf16.mxu0 0
    %7281 = vmatmul.mubr.bf16.gmra.mrb[0].mxu0 %v7230
    %v7282 = vpop.f32.mrb[0].mxu0
    %v7283 = vadd.f32 0.0, %v7282
    %v7284 = vpop.f32.mrb[0].mxu0
    %v7285 = vadd.f32 0.0, %v7284
    %v7286 = vpop.f32.mrb[0].mxu0
    %v7287 = vadd.f32 0.0, %v7286
    %v7288 = vpop.f32.mrb[0].mxu0
    %v7289 = vadd.f32 0.0, %v7288
    %7290 = vmatprep.mubr.bf16.mxu0 0
    %7291 = vmatmul.mubr.bf16.gmra.mrb[0].mxu0 %v7233
    %v7292 = vpop.f32.mrb[0].mxu0
    %v7293 = vadd.f32 0.0, %v7292
    %v7294 = vpop.f32.mrb[0].mxu0
    %v7295 = vadd.f32 0.0, %v7294
    %v7296 = vpop.f32.mrb[0].mxu0
    %v7297 = vadd.f32 0.0, %v7296
    %v7298 = vpop.f32.mrb[0].mxu0
    %v7299 = vadd.f32 0.0, %v7298
    %7300 = vmatprep.mubr.bf16.mxu0 0
    %7301 = vmatmul.mubr.bf16.gmra.mrb[0].mxu0 %v7236
    %v7302 = vpop.f32.mrb[0].mxu0
    %v7303 = vadd.f32 0.0, %v7302
    %v7304 = vpop.f32.mrb[0].mxu0
    %v7305 = vadd.f32 0.0, %v7304
    %v7306 = vpop.f32.mrb[0].mxu0
    %v7307 = vadd.f32 0.0, %v7306
    %v7308 = vpop.f32.mrb[0].mxu0
    %v7309 = vadd.f32 0.0, %v7308
    %7310 = vdwg.mxu0
    %s7311 = scalar_lea.vmem [#allocation16], 32
    %v7312 = vld [vmem:[%s7311] sm:$0xf]
    %v7313 = vld [vmem:[%s7311 + $0x4] sm:$0xf]
    %v7314 = vld [vmem:[%s7311 + $0x8] sm:$0xf]
    %v7315 = vld [vmem:[%s7311 + $0xc] sm:$0xf]
    %v7316 = vld [vmem:[%s7311 + $0x10] sm:$0xf]
    %v7317 = vld [vmem:[%s7311 + $0x14] sm:$0xf]
    %v7318 = vld [vmem:[%s7311 + $0x18] sm:$0xf]
    %v7319 = vld [vmem:[%s7311 + $0x1c] sm:$0xf]
    %v7328 = vunpack.c.l.b16 %v7312
    %v7329 = vunpack.c.l.b16 %v7313
    %v7330 = vunpack.c.l.b16 %v7314
    %v7331 = vunpack.c.l.b16 %v7315
    %v7332 = vunpack.c.l.b16 %v7316
    %v7333 = vunpack.c.l.b16 %v7317
    %v7334 = vunpack.c.l.b16 %v7318
    %v7335 = vunpack.c.l.b16 %v7319
    %v7336 = vpack.c.b16 %v7329, %v7328
    %v7337 = vpack.c.b16 %v7331, %v7330
    %v7338 = vpack.c.b16 %v7333, %v7332
    %v7339 = vpack.c.b16 %v7335, %v7334
    %v7341 = vsel %vm255, %v7336, 0
    %v7344 = vsel %vm255, %v7337, 0
    %v7347 = vsel %vm255, %v7338, 0
    %v7350 = vsel %vm255, %v7339, 0
    %7352 = vmatprep.subr.bf16.mxu0 %v7191
    %7353 = vmatpush1.bf16.msra.mxu0 %v7190
    %7354 = vmatprep.subr.bf16.mxu0 %v7193
    %7355 = vmatpush1.bf16.msra.mxu0 %v7192
    %7356 = vmatprep.subr.bf16.mxu0 %v7195
    %7357 = vmatpush1.bf16.msra.mxu0 %v7194
    %7358 = vmatprep.subr.bf16.mxu0 %v7197
    %7359 = vmatpush1.bf16.msra.mxu0 %v7196
    %7360 = vmatprep.subr.bf16.mxu0 0
    %7361 = vmatpush1.bf16.msra.mxu0 0
    %7362 = vmatprep.subr.bf16.mxu0 0
    %7363 = vmatpush1.bf16.msra.mxu0 0
    %7364 = vmatprep.subr.bf16.mxu0 0
    %7365 = vmatpush1.bf16.msra.mxu0 0
    %7366 = vmatprep.subr.bf16.mxu0 0
    %7367 = vmatpush1.bf16.msra.mxu0 0
    %7368 = vmatprep.subr.bf16.mxu0 0
    %7369 = vmatpush1.bf16.msra.mxu0 0
    %7370 = vmatprep.subr.bf16.mxu0 0
    %7371 = vmatpush1.bf16.msra.mxu0 0
    %7372 = vmatprep.subr.bf16.mxu0 0
    %7373 = vmatpush1.bf16.msra.mxu0 0
    %7374 = vmatprep.subr.bf16.mxu0 0
    %7375 = vmatpush1.bf16.msra.mxu0 0
    %7376 = vmatprep.subr.bf16.mxu0 0
    %7377 = vmatpush1.bf16.msra.mxu0 0
    %7378 = vmatprep.subr.bf16.mxu0 0
    %7379 = vmatpush1.bf16.msra.mxu0 0
    %7380 = vmatprep.subr.bf16.mxu0 0
    %7381 = vmatpush1.bf16.msra.mxu0 0
    %7382 = vmatprep.subr.bf16.mxu0 0
    %7383 = vmatpush1.bf16.msra.mxu0 0
    %7384 = vmatprep.mubr.bf16.mxu0 0
    %7385 = vmatmul.mubr.bf16.gmra.mrb[0].mxu0 %v7341
    %v7386 = vpop.f32.mrb[0].mxu0
    %v7387 = vadd.f32 0.0, %v7386
    %v7388 = vpop.f32.mrb[0].mxu0
    %v7389 = vadd.f32 0.0, %v7388
    %v7390 = vpop.f32.mrb[0].mxu0
    %v7391 = vadd.f32 0.0, %v7390
    %v7392 = vpop.f32.mrb[0].mxu0
    %v7393 = vadd.f32 0.0, %v7392
    %7394 = vmatprep.mubr.bf16.mxu0 0
    %7395 = vmatmul.mubr.bf16.gmra.mrb[0].mxu0 %v7344
    %v7396 = vpop.f32.mrb[0].mxu0
    %v7397 = vadd.f32 0.0, %v7396
    %v7398 = vpop.f32.mrb[0].mxu0
    %v7399 = vadd.f32 0.0, %v7398
    %v7400 = vpop.f32.mrb[0].mxu0
    %v7401 = vadd.f32 0.0, %v7400
    %v7402 = vpop.f32.mrb[0].mxu0
    %v7403 = vadd.f32 0.0, %v7402
    %7404 = vmatprep.mubr.bf16.mxu0 0
    %7405 = vmatmul.mubr.bf16.gmra.mrb[0].mxu0 %v7347
    %v7406 = vpop.f32.mrb[0].mxu0
    %v7407 = vadd.f32 0.0, %v7406
    %v7408 = vpop.f32.mrb[0].mxu0
    %v7409 = vadd.f32 0.0, %v7408
    %v7410 = vpop.f32.mrb[0].mxu0
    %v7411 = vadd.f32 0.0, %v7410
    %v7412 = vpop.f32.mrb[0].mxu0
    %v7413 = vadd.f32 0.0, %v7412
    %7414 = vmatprep.mubr.bf16.mxu0 0
    %7415 = vmatmul.mubr.bf16.gmra.mrb[0].mxu0 %v7350
    %v7416 = vpop.f32.mrb[0].mxu0
    %v7417 = vadd.f32 0.0, %v7416
    %v7418 = vpop.f32.mrb[0].mxu0
    %v7419 = vadd.f32 0.0, %v7418
    %v7420 = vpop.f32.mrb[0].mxu0
    %v7421 = vadd.f32 0.0, %v7420
    %v7422 = vpop.f32.mrb[0].mxu0
    %v7423 = vadd.f32 0.0, %v7422
    %7424 = vdwg.mxu0
    %s7425 = scalar_lea.vmem [#allocation16], 64
    %v7426 = vld [vmem:[%s7425] sm:$0xf]
    %v7427 = vld [vmem:[%s7425 + $0x4] sm:$0xf]
    %v7428 = vld [vmem:[%s7425 + $0x8] sm:$0xf]
    %v7429 = vld [vmem:[%s7425 + $0xc] sm:$0xf]
    %v7430 = vld [vmem:[%s7425 + $0x10] sm:$0xf]
    %v7431 = vld [vmem:[%s7425 + $0x14] sm:$0xf]
    %v7432 = vld [vmem:[%s7425 + $0x18] sm:$0xf]
    %v7433 = vld [vmem:[%s7425 + $0x1c] sm:$0xf]
    %v7442 = vunpack.c.l.b16 %v7426
    %v7443 = vunpack.c.l.b16 %v7427
    %v7444 = vunpack.c.l.b16 %v7428
    %v7445 = vunpack.c.l.b16 %v7429
    %v7446 = vunpack.c.l.b16 %v7430
    %v7447 = vunpack.c.l.b16 %v7431
    %v7448 = vunpack.c.l.b16 %v7432
    %v7449 = vunpack.c.l.b16 %v7433
    %v7450 = vpack.c.b16 %v7443, %v7442
    %v7451 = vpack.c.b16 %v7445, %v7444
    %v7452 = vpack.c.b16 %v7447, %v7446
    %v7453 = vpack.c.b16 %v7449, %v7448
    %v7455 = vsel %vm255, %v7450, 0
    %v7458 = vsel %vm255, %v7451, 0
    %v7461 = vsel %vm255, %v7452, 0
    %v7464 = vsel %vm255, %v7453, 0
    %7466 = vmatprep.subr.bf16.mxu0 %v7191
    %7467 = vmatpush1.bf16.msra.mxu0 %v7190
    %7468 = vmatprep.subr.bf16.mxu0 %v7193
    %7469 = vmatpush1.bf16.msra.mxu0 %v7192
    %7470 = vmatprep.subr.bf16.mxu0 %v7195
    %7471 = vmatpush1.bf16.msra.mxu0 %v7194
    %7472 = vmatprep.subr.bf16.mxu0 %v7197
    %7473 = vmatpush1.bf16.msra.mxu0 %v7196
    %7474 = vmatprep.subr.bf16.mxu0 0
    %7475 = vmatpush1.bf16.msra.mxu0 0
    %7476 = vmatprep.subr.bf16.mxu0 0
    %7477 = vmatpush1.bf16.msra.mxu0 0
    %7478 = vmatprep.subr.bf16.mxu0 0
    %7479 = vmatpush1.bf16.msra.mxu0 0
    %7480 = vmatprep.subr.bf16.mxu0 0
    %7481 = vmatpush1.bf16.msra.mxu0 0
    %7482 = vmatprep.subr.bf16.mxu0 0
    %7483 = vmatpush1.bf16.msra.mxu0 0
    %7484 = vmatprep.subr.bf16.mxu0 0
    %7485 = vmatpush1.bf16.msra.mxu0 0
    %7486 = vmatprep.subr.bf16.mxu0 0
    %7487 = vmatpush1.bf16.msra.mxu0 0
    %7488 = vmatprep.subr.bf16.mxu0 0
    %7489 = vmatpush1.bf16.msra.mxu0 0
    %7490 = vmatprep.subr.bf16.mxu0 0
    %7491 = vmatpush1.bf16.msra.mxu0 0
    %7492 = vmatprep.subr.bf16.mxu0 0
    %7493 = vmatpush1.bf16.msra.mxu0 0
    %7494 = vmatprep.subr.bf16.mxu0 0
    %7495 = vmatpush1.bf16.msra.mxu0 0
    %7496 = vmatprep.subr.bf16.mxu0 0
    %7497 = vmatpush1.bf16.msra.mxu0 0
    %7498 = vmatprep.mubr.bf16.mxu0 0
    %7499 = vmatmul.mubr.bf16.gmra.mrb[0].mxu0 %v7455
    %v7500 = vpop.f32.mrb[0].mxu0
    %v7501 = vadd.f32 0.0, %v7500
    %v7502 = vpop.f32.mrb[0].mxu0
    %v7503 = vadd.f32 0.0, %v7502
    %v7504 = vpop.f32.mrb[0].mxu0
    %v7505 = vadd.f32 0.0, %v7504
    %v7506 = vpop.f32.mrb[0].mxu0
    %v7507 = vadd.f32 0.0, %v7506
    %7508 = vmatprep.mubr.bf16.mxu0 0
    %7509 = vmatmul.mubr.bf16.gmra.mrb[0].mxu0 %v7458
    %v7510 = vpop.f32.mrb[0].mxu0
    %v7511 = vadd.f32 0.0, %v7510
    %v7512 = vpop.f32.mrb[0].mxu0
    %v7513 = vadd.f32 0.0, %v7512
    %v7514 = vpop.f32.mrb[0].mxu0
    %v7515 = vadd.f32 0.0, %v7514
    %v7516 = vpop.f32.mrb[0].mxu0
    %v7517 = vadd.f32 0.0, %v7516
    %7518 = vmatprep.mubr.bf16.mxu0 0
    %7519 = vmatmul.mubr.bf16.gmra.mrb[0].mxu0 %v7461
    %v7520 = vpop.f32.mrb[0].mxu0
    %v7521 = vadd.f32 0.0, %v7520
    %v7522 = vpop.f32.mrb[0].mxu0
    %v7523 = vadd.f32 0.0, %v7522
    %v7524 = vpop.f32.mrb[0].mxu0
    %v7525 = vadd.f32 0.0, %v7524
    %v7526 = vpop.f32.mrb[0].mxu0
    %v7527 = vadd.f32 0.0, %v7526
    %7528 = vmatprep.mubr.bf16.mxu0 0
    %7529 = vmatmul.mubr.bf16.gmra.mrb[0].mxu0 %v7464
    %v7530 = vpop.f32.mrb[0].mxu0
    %v7531 = vadd.f32 0.0, %v7530
    %v7532 = vpop.f32.mrb[0].mxu0
    %v7533 = vadd.f32 0.0, %v7532
    %v7534 = vpop.f32.mrb[0].mxu0
    %v7535 = vadd.f32 0.0, %v7534
    %v7536 = vpop.f32.mrb[0].mxu0
    %v7537 = vadd.f32 0.0, %v7536
    %7538 = vdwg.mxu0
    %v7539 = vpack.c.bf16 %v7277, %v7273
    %v7540 = vpack.c.bf16 %v7279, %v7275
    %v7541 = vpack.c.bf16 %v7391, %v7387
    %v7542 = vpack.c.bf16 %v7393, %v7389
    %v7543 = vpack.c.bf16 %v7505, %v7501
    %v7544 = vpack.c.bf16 %v7507, %v7503
    %v7545 = vpack.c.bf16 %v7287, %v7283
    %v7546 = vpack.c.bf16 %v7289, %v7285
    %v7547 = vpack.c.bf16 %v7401, %v7397
    %v7548 = vpack.c.bf16 %v7403, %v7399
    %v7549 = vpack.c.bf16 %v7515, %v7511
    %v7550 = vpack.c.bf16 %v7517, %v7513
    %v7551 = vpack.c.bf16 %v7297, %v7293
    %v7552 = vpack.c.bf16 %v7299, %v7295
    %v7553 = vpack.c.bf16 %v7411, %v7407
    %v7554 = vpack.c.bf16 %v7413, %v7409
    %v7555 = vpack.c.bf16 %v7525, %v7521
    %v7556 = vpack.c.bf16 %v7527, %v7523
    %v7557 = vpack.c.bf16 %v7307, %v7303
    %v7558 = vpack.c.bf16 %v7309, %v7305
    %v7559 = vpack.c.bf16 %v7421, %v7417
    %v7560 = vpack.c.bf16 %v7423, %v7419
    %v7561 = vpack.c.bf16 %v7535, %v7531
    %v7562 = vpack.c.bf16 %v7537, %v7533
    %v7563 = vld [vmem:[%s25] sm:$0xf]
    %v7564 = vld [vmem:[%s25 + $0x4] sm:$0xf]
    %v7565 = vld [vmem:[%s25 + $0x8] sm:$0xf]
    %v7566 = vld [vmem:[%s25 + $0xc] sm:$0xf]
    %v7567 = vld [vmem:[%s25 + $0x10] sm:$0xf]
    %v7568 = vld [vmem:[%s25 + $0x14] sm:$0xf]
    %v7569 = vld [vmem:[%s25 + $0x18] sm:$0xf]
    %v7570 = vld [vmem:[%s25 + $0x1c] sm:$0xf]
    %v7571 = vld [vmem:[%s25 + $0x20] sm:$0xf]
    %v7572 = vld [vmem:[%s25 + $0x24] sm:$0xf]
    %v7573 = vld [vmem:[%s25 + $0x28] sm:$0xf]
    %v7574 = vld [vmem:[%s25 + $0x2c] sm:$0xf]
    %v7575 = vld [vmem:[%s25 + $0x30] sm:$0xf]
    %v7576 = vld [vmem:[%s25 + $0x34] sm:$0xf]
    %v7577 = vld [vmem:[%s25 + $0x38] sm:$0xf]
    %v7578 = vld [vmem:[%s25 + $0x3c] sm:$0xf]
    %v7579 = vld [vmem:[%s25 + $0x40] sm:$0xf]
    %v7580 = vld [vmem:[%s25 + $0x44] sm:$0xf]
    %v7581 = vld [vmem:[%s25 + $0x48] sm:$0xf]
    %v7582 = vld [vmem:[%s25 + $0x4c] sm:$0xf]
    %v7583 = vld [vmem:[%s25 + $0x50] sm:$0xf]
    %v7584 = vld [vmem:[%s25 + $0x54] sm:$0xf]
    %v7585 = vld [vmem:[%s25 + $0x58] sm:$0xf]
    %v7586 = vld [vmem:[%s25 + $0x5c] sm:$0xf]
    %v7587 = vld [vmem:[%s25 + $0x60] sm:$0xf]
    %v7588 = vld [vmem:[%s25 + $0x64] sm:$0xf]
    %v7589 = vld [vmem:[%s25 + $0x68] sm:$0xf]
    %v7590 = vld [vmem:[%s25 + $0x6c] sm:$0xf]
    %v7591 = vld [vmem:[%s25 + $0x70] sm:$0xf]
    %v7592 = vld [vmem:[%s25 + $0x74] sm:$0xf]
    %v7593 = vld [vmem:[%s25 + $0x78] sm:$0xf]
    %v7594 = vld [vmem:[%s25 + $0x7c] sm:$0xf]
    %v7595 = vld [vmem:[%s25 + $0x80] sm:$0xf]
    %v7596 = vld [vmem:[%s25 + $0x84] sm:$0xf]
    %v7597 = vld [vmem:[%s25 + $0x88] sm:$0xf]
    %v7598 = vld [vmem:[%s25 + $0x8c] sm:$0xf]
    %v7599 = vld [vmem:[%s25 + $0x90] sm:$0xf]
    %v7600 = vld [vmem:[%s25 + $0x94] sm:$0xf]
    %v7601 = vld [vmem:[%s25 + $0x98] sm:$0xf]
    %v7602 = vld [vmem:[%s25 + $0x9c] sm:$0xf]
    %v7603 = vld [vmem:[%s25 + $0xa0] sm:$0xf]
    %v7604 = vld [vmem:[%s25 + $0xa4] sm:$0xf]
    %v7605 = vld [vmem:[%s25 + $0xa8] sm:$0xf]
    %v7606 = vld [vmem:[%s25 + $0xac] sm:$0xf]
    %v7607 = vld [vmem:[%s25 + $0xb0] sm:$0xf]
    %v7608 = vld [vmem:[%s25 + $0xb4] sm:$0xf]
    %v7609 = vld [vmem:[%s25 + $0xb8] sm:$0xf]
    %v7610 = vld [vmem:[%s25 + $0xbc] sm:$0xf]
    %v7611 = vld [vmem:[%s25 + $0xc0] sm:$0xf]
    %v7612 = vld [vmem:[%s25 + $0xc4] sm:$0xf]
    %v7613 = vld [vmem:[%s25 + $0xc8] sm:$0xf]
    %v7614 = vld [vmem:[%s25 + $0xcc] sm:$0xf]
    %v7615 = vld [vmem:[%s25 + $0xd0] sm:$0xf]
    %v7616 = vld [vmem:[%s25 + $0xd4] sm:$0xf]
    %v7617 = vld [vmem:[%s25 + $0xd8] sm:$0xf]
    %v7618 = vld [vmem:[%s25 + $0xdc] sm:$0xf]
    %v7619 = vld [vmem:[%s25 + $0xe0] sm:$0xf]
    %v7620 = vld [vmem:[%s25 + $0xe4] sm:$0xf]
    %v7621 = vld [vmem:[%s25 + $0xe8] sm:$0xf]
    %v7622 = vld [vmem:[%s25 + $0xec] sm:$0xf]
    %v7623 = vld [vmem:[%s25 + $0xf0] sm:$0xf]
    %v7624 = vld [vmem:[%s25 + $0xf4] sm:$0xf]
    %v7625 = vld [vmem:[%s25 + $0xf8] sm:$0xf]
    %v7626 = vld [vmem:[%s25 + $0xfc] sm:$0xf]
    %v7627 = vld [vmem:[%s25 + $0x100] sm:$0xf]
    %v7628 = vld [vmem:[%s25 + $0x104] sm:$0xf]
    %v7629 = vld [vmem:[%s25 + $0x108] sm:$0xf]
    %v7630 = vld [vmem:[%s25 + $0x10c] sm:$0xf]
    %v7631 = vld [vmem:[%s25 + $0x110] sm:$0xf]
    %v7632 = vld [vmem:[%s25 + $0x114] sm:$0xf]
    %v7633 = vld [vmem:[%s25 + $0x118] sm:$0xf]
    %v7634 = vld [vmem:[%s25 + $0x11c] sm:$0xf]
    %v7635 = vld [vmem:[%s25 + $0x120] sm:$0xf]
    %v7636 = vld [vmem:[%s25 + $0x124] sm:$0xf]
    %v7637 = vld [vmem:[%s25 + $0x128] sm:$0xf]
    %v7638 = vld [vmem:[%s25 + $0x12c] sm:$0xf]
    %v7639 = vld [vmem:[%s25 + $0x130] sm:$0xf]
    %v7640 = vld [vmem:[%s25 + $0x134] sm:$0xf]
    %v7641 = vld [vmem:[%s25 + $0x138] sm:$0xf]
    %v7642 = vld [vmem:[%s25 + $0x13c] sm:$0xf]
    %v7643 = vld [vmem:[%s25 + $0x140] sm:$0xf]
    %v7644 = vld [vmem:[%s25 + $0x144] sm:$0xf]
    %v7645 = vld [vmem:[%s25 + $0x148] sm:$0xf]
    %v7646 = vld [vmem:[%s25 + $0x14c] sm:$0xf]
    %v7647 = vld [vmem:[%s25 + $0x150] sm:$0xf]
    %v7648 = vld [vmem:[%s25 + $0x154] sm:$0xf]
    %v7649 = vld [vmem:[%s25 + $0x158] sm:$0xf]
    %v7650 = vld [vmem:[%s25 + $0x15c] sm:$0xf]
    %v7651 = vld [vmem:[%s25 + $0x160] sm:$0xf]
    %v7652 = vld [vmem:[%s25 + $0x164] sm:$0xf]
    %v7653 = vld [vmem:[%s25 + $0x168] sm:$0xf]
    %v7654 = vld [vmem:[%s25 + $0x16c] sm:$0xf]
    %v7655 = vld [vmem:[%s25 + $0x170] sm:$0xf]
    %v7656 = vld [vmem:[%s25 + $0x174] sm:$0xf]
    %v7657 = vld [vmem:[%s25 + $0x178] sm:$0xf]
    %v7658 = vld [vmem:[%s25 + $0x17c] sm:$0xf]
    %v7659 = vld [vmem:[#allocation17] sm:$0x1]
    %v7661 = vlaneseq
    %v7662 = vshrl.u32 %v7661, 7
    %v7663 = vsub.s32 0, %v7662
    %v7664 = vrot.slane %v7659, %v7663
    %v7762 = vunpack.c.l.b16 %v7563
    %v7763 = vunpack.c.l.b16 %v7564
    %v7764 = vunpack.c.l.b16 %v7565
    %v7765 = vunpack.c.l.b16 %v7566
    %v7766 = vunpack.c.l.b16 %v7567
    %v7767 = vunpack.c.l.b16 %v7568
    %v7768 = vunpack.c.l.b16 %v7569
    %v7769 = vunpack.c.l.b16 %v7570
    %v7770 = vunpack.c.l.b16 %v7571
    %v7771 = vunpack.c.l.b16 %v7572
    %v7772 = vunpack.c.l.b16 %v7573
    %v7773 = vunpack.c.l.b16 %v7574
    %v7774 = vunpack.c.l.b16 %v7575
    %v7775 = vunpack.c.l.b16 %v7576
    %v7776 = vunpack.c.l.b16 %v7577
    %v7777 = vunpack.c.l.b16 %v7578
    %v7778 = vunpack.c.l.b16 %v7579
    %v7779 = vunpack.c.l.b16 %v7580
    %v7780 = vunpack.c.l.b16 %v7581
    %v7781 = vunpack.c.l.b16 %v7582
    %v7782 = vunpack.c.l.b16 %v7583
    %v7783 = vunpack.c.l.b16 %v7584
    %v7784 = vunpack.c.l.b16 %v7585
    %v7785 = vunpack.c.l.b16 %v7586
    %v7786 = vunpack.c.l.b16 %v7587
    %v7787 = vunpack.c.l.b16 %v7588
    %v7788 = vunpack.c.l.b16 %v7589
    %v7789 = vunpack.c.l.b16 %v7590
    %v7790 = vunpack.c.l.b16 %v7591
    %v7791 = vunpack.c.l.b16 %v7592
    %v7792 = vunpack.c.l.b16 %v7593
    %v7793 = vunpack.c.l.b16 %v7594
    %v7794 = vunpack.c.l.b16 %v7595
    %v7795 = vunpack.c.l.b16 %v7596
    %v7796 = vunpack.c.l.b16 %v7597
    %v7797 = vunpack.c.l.b16 %v7598
    %v7798 = vunpack.c.l.b16 %v7599
    %v7799 = vunpack.c.l.b16 %v7600
    %v7800 = vunpack.c.l.b16 %v7601
    %v7801 = vunpack.c.l.b16 %v7602
    %v7802 = vunpack.c.l.b16 %v7603
    %v7803 = vunpack.c.l.b16 %v7604
    %v7804 = vunpack.c.l.b16 %v7605
    %v7805 = vunpack.c.l.b16 %v7606
    %v7806 = vunpack.c.l.b16 %v7607
    %v7807 = vunpack.c.l.b16 %v7608
    %v7808 = vunpack.c.l.b16 %v7609
    %v7809 = vunpack.c.l.b16 %v7610
    %v7810 = vunpack.c.l.b16 %v7611
    %v7811 = vunpack.c.l.b16 %v7612
    %v7812 = vunpack.c.l.b16 %v7613
    %v7813 = vunpack.c.l.b16 %v7614
    %v7814 = vunpack.c.l.b16 %v7615
    %v7815 = vunpack.c.l.b16 %v7616
    %v7816 = vunpack.c.l.b16 %v7617
    %v7817 = vunpack.c.l.b16 %v7618
    %v7818 = vunpack.c.l.b16 %v7619
    %v7819 = vunpack.c.l.b16 %v7620
    %v7820 = vunpack.c.l.b16 %v7621
    %v7821 = vunpack.c.l.b16 %v7622
    %v7822 = vunpack.c.l.b16 %v7623
    %v7823 = vunpack.c.l.b16 %v7624
    %v7824 = vunpack.c.l.b16 %v7625
    %v7825 = vunpack.c.l.b16 %v7626
    %v7826 = vunpack.c.l.b16 %v7627
    %v7827 = vunpack.c.l.b16 %v7628
    %v7828 = vunpack.c.l.b16 %v7629
    %v7829 = vunpack.c.l.b16 %v7630
    %v7830 = vunpack.c.l.b16 %v7631
    %v7831 = vunpack.c.l.b16 %v7632
    %v7832 = vunpack.c.l.b16 %v7633
    %v7833 = vunpack.c.l.b16 %v7634
    %v7834 = vunpack.c.l.b16 %v7635
    %v7835 = vunpack.c.l.b16 %v7636
    %v7836 = vunpack.c.l.b16 %v7637
    %v7837 = vunpack.c.l.b16 %v7638
    %v7838 = vunpack.c.l.b16 %v7639
    %v7839 = vunpack.c.l.b16 %v7640
    %v7840 = vunpack.c.l.b16 %v7641
    %v7841 = vunpack.c.l.b16 %v7642
    %v7842 = vunpack.c.l.b16 %v7643
    %v7843 = vunpack.c.l.b16 %v7644
    %v7844 = vunpack.c.l.b16 %v7645
    %v7845 = vunpack.c.l.b16 %v7646
    %v7846 = vunpack.c.l.b16 %v7647
    %v7847 = vunpack.c.l.b16 %v7648
    %v7848 = vunpack.c.l.b16 %v7649
    %v7849 = vunpack.c.l.b16 %v7650
    %v7850 = vunpack.c.l.b16 %v7651
    %v7851 = vunpack.c.l.b16 %v7652
    %v7852 = vunpack.c.l.b16 %v7653
    %v7853 = vunpack.c.l.b16 %v7654
    %v7854 = vunpack.c.l.b16 %v7655
    %v7855 = vunpack.c.l.b16 %v7656
    %v7856 = vunpack.c.l.b16 %v7657
    %v7857 = vunpack.c.l.b16 %v7658
    %v7858 = vpack.c.b16 %v7763, %v7762
    %v7859 = vpack.c.b16 %v7765, %v7764
    %v7860 = vpack.c.b16 %v7767, %v7766
    %v7861 = vpack.c.b16 %v7769, %v7768
    %v7862 = vpack.c.b16 %v7771, %v7770
    %v7863 = vpack.c.b16 %v7773, %v7772
    %v7864 = vpack.c.b16 %v7775, %v7774
    %v7865 = vpack.c.b16 %v7777, %v7776
    %v7866 = vpack.c.b16 %v7779, %v7778
    %v7867 = vpack.c.b16 %v7781, %v7780
    %v7868 = vpack.c.b16 %v7783, %v7782
    %v7869 = vpack.c.b16 %v7785, %v7784
    %v7870 = vpack.c.b16 %v7787, %v7786
    %v7871 = vpack.c.b16 %v7789, %v7788
    %v7872 = vpack.c.b16 %v7791, %v7790
    %v7873 = vpack.c.b16 %v7793, %v7792
    %v7874 = vpack.c.b16 %v7795, %v7794
    %v7875 = vpack.c.b16 %v7797, %v7796
    %v7876 = vpack.c.b16 %v7799, %v7798
    %v7877 = vpack.c.b16 %v7801, %v7800
    %v7878 = vpack.c.b16 %v7803, %v7802
    %v7879 = vpack.c.b16 %v7805, %v7804
    %v7880 = vpack.c.b16 %v7807, %v7806
    %v7881 = vpack.c.b16 %v7809, %v7808
    %v7882 = vpack.c.b16 %v7811, %v7810
    %v7883 = vpack.c.b16 %v7813, %v7812
    %v7884 = vpack.c.b16 %v7815, %v7814
    %v7885 = vpack.c.b16 %v7817, %v7816
    %v7886 = vpack.c.b16 %v7819, %v7818
    %v7887 = vpack.c.b16 %v7821, %v7820
    %v7888 = vpack.c.b16 %v7823, %v7822
    %v7889 = vpack.c.b16 %v7825, %v7824
    %v7890 = vpack.c.b16 %v7827, %v7826
    %v7891 = vpack.c.b16 %v7829, %v7828
    %v7892 = vpack.c.b16 %v7831, %v7830
    %v7893 = vpack.c.b16 %v7833, %v7832
    %v7894 = vpack.c.b16 %v7835, %v7834
    %v7895 = vpack.c.b16 %v7837, %v7836
    %v7896 = vpack.c.b16 %v7839, %v7838
    %v7897 = vpack.c.b16 %v7841, %v7840
    %v7898 = vpack.c.b16 %v7843, %v7842
    %v7899 = vpack.c.b16 %v7845, %v7844
    %v7900 = vpack.c.b16 %v7847, %v7846
    %v7901 = vpack.c.b16 %v7849, %v7848
    %v7902 = vpack.c.b16 %v7851, %v7850
    %v7903 = vpack.c.b16 %v7853, %v7852
    %v7904 = vpack.c.b16 %v7855, %v7854
    %v7905 = vpack.c.b16 %v7857, %v7856
    %7954 = vmatprep.subr.bf16.mxu0 0
    %7955 = vmatpush1.bf16.msra.mxu0 %v7858
    %7956 = vmatprep.subr.bf16.mxu0 0
    %7957 = vmatpush1.bf16.msra.mxu0 %v7859
    %7958 = vmatprep.subr.bf16.mxu0 0
    %7959 = vmatpush1.bf16.msra.mxu0 %v7860
    %7960 = vmatprep.subr.bf16.mxu0 0
    %7961 = vmatpush1.bf16.msra.mxu0 %v7861
    %7962 = vmatprep.subr.bf16.mxu0 0
    %7963 = vmatpush1.bf16.msra.mxu0 %v7862
    %7964 = vmatprep.subr.bf16.mxu0 0
    %7965 = vmatpush1.bf16.msra.mxu0 %v7863
    %7966 = vmatprep.subr.bf16.mxu0 0
    %7967 = vmatpush1.bf16.msra.mxu0 %v7864
    %7968 = vmatprep.subr.bf16.mxu0 0
    %7969 = vmatpush1.bf16.msra.mxu0 %v7865
    %7970 = vmatprep.subr.bf16.mxu0 0
    %7971 = vmatpush1.bf16.msra.mxu0 %v7866
    %7972 = vmatprep.subr.bf16.mxu0 0
    %7973 = vmatpush1.bf16.msra.mxu0 %v7867
    %7974 = vmatprep.subr.bf16.mxu0 0
    %7975 = vmatpush1.bf16.msra.mxu0 %v7868
    %7976 = vmatprep.subr.bf16.mxu0 0
    %7977 = vmatpush1.bf16.msra.mxu0 %v7869
    %7978 = vmatprep.subr.bf16.mxu0 0
    %7979 = vmatpush1.bf16.msra.mxu0 %v7870
    %7980 = vmatprep.subr.bf16.mxu0 0
    %7981 = vmatpush1.bf16.msra.mxu0 %v7871
    %7982 = vmatprep.subr.bf16.mxu0 0
    %7983 = vmatpush1.bf16.msra.mxu0 %v7872
    %7984 = vmatprep.subr.bf16.mxu0 0
    %7985 = vmatpush1.bf16.msra.mxu0 %v7873
    %7986 = vmatprep.mubr.bf16.mxu0 %v7540
    %7987 = vmatmul.mubr.bf16.gmra.mrb[0].mxu0 %v7539
    %v7988 = vpop.f32.mrb[0].mxu0
    %v7989 = vadd.f32 %v7664, %v7988
    %v7990 = vpop.f32.mrb[0].mxu0
    %v7991 = vpop.f32.mrb[0].mxu0
    %v7992 = vadd.f32 %v7664, %v7991
    %v7993 = vpop.f32.mrb[0].mxu0
    %7994 = vmatprep.mubr.bf16.mxu0 %v7546
    %7995 = vmatmul.mubr.bf16.gmra.mrb[0].mxu0 %v7545
    %v7996 = vpop.f32.mrb[0].mxu0
    %v7997 = vadd.f32 %v7664, %v7996
    %v7998 = vpop.f32.mrb[0].mxu0
    %v7999 = vpop.f32.mrb[0].mxu0
    %v8000 = vadd.f32 %v7664, %v7999
    %v8001 = vpop.f32.mrb[0].mxu0
    %8002 = vmatprep.mubr.bf16.mxu0 %v7552
    %8003 = vmatmul.mubr.bf16.gmra.mrb[0].mxu0 %v7551
    %v8004 = vpop.f32.mrb[0].mxu0
    %v8005 = vadd.f32 %v7664, %v8004
    %v8006 = vpop.f32.mrb[0].mxu0
    %v8007 = vpop.f32.mrb[0].mxu0
    %v8008 = vadd.f32 %v7664, %v8007
    %v8009 = vpop.f32.mrb[0].mxu0
    %8010 = vmatprep.mubr.bf16.mxu0 %v7558
    %8011 = vmatmul.mubr.bf16.gmra.mrb[0].mxu0 %v7557
    %v8012 = vpop.f32.mrb[0].mxu0
    %v8013 = vadd.f32 %v7664, %v8012
    %v8014 = vpop.f32.mrb[0].mxu0
    %v8015 = vpop.f32.mrb[0].mxu0
    %v8016 = vadd.f32 %v7664, %v8015
    %v8017 = vpop.f32.mrb[0].mxu0
    %8018 = vdwg.mxu0
    %8019 = vmatprep.subr.bf16.mxu0 0
    %8020 = vmatpush1.bf16.msra.mxu0 %v7874
    %8021 = vmatprep.subr.bf16.mxu0 0
    %8022 = vmatpush1.bf16.msra.mxu0 %v7875
    %8023 = vmatprep.subr.bf16.mxu0 0
    %8024 = vmatpush1.bf16.msra.mxu0 %v7876
    %8025 = vmatprep.subr.bf16.mxu0 0
    %8026 = vmatpush1.bf16.msra.mxu0 %v7877
    %8027 = vmatprep.subr.bf16.mxu0 0
    %8028 = vmatpush1.bf16.msra.mxu0 %v7878
    %8029 = vmatprep.subr.bf16.mxu0 0
    %8030 = vmatpush1.bf16.msra.mxu0 %v7879
    %8031 = vmatprep.subr.bf16.mxu0 0
    %8032 = vmatpush1.bf16.msra.mxu0 %v7880
    %8033 = vmatprep.subr.bf16.mxu0 0
    %8034 = vmatpush1.bf16.msra.mxu0 %v7881
    %8035 = vmatprep.subr.bf16.mxu0 0
    %8036 = vmatpush1.bf16.msra.mxu0 %v7882
    %8037 = vmatprep.subr.bf16.mxu0 0
    %8038 = vmatpush1.bf16.msra.mxu0 %v7883
    %8039 = vmatprep.subr.bf16.mxu0 0
    %8040 = vmatpush1.bf16.msra.mxu0 %v7884
    %8041 = vmatprep.subr.bf16.mxu0 0
    %8042 = vmatpush1.bf16.msra.mxu0 %v7885
    %8043 = vmatprep.subr.bf16.mxu0 0
    %8044 = vmatpush1.bf16.msra.mxu0 %v7886
    %8045 = vmatprep.subr.bf16.mxu0 0
    %8046 = vmatpush1.bf16.msra.mxu0 %v7887
    %8047 = vmatprep.subr.bf16.mxu0 0
    %8048 = vmatpush1.bf16.msra.mxu0 %v7888
    %8049 = vmatprep.subr.bf16.mxu0 0
    %8050 = vmatpush1.bf16.msra.mxu0 %v7889
    %8051 = vmatprep.mubr.bf16.mxu0 %v7542
    %8052 = vmatmul.mubr.bf16.gmra.mrb[0].mxu0 %v7541
    %v8053 = vpop.f32.mrb[0].mxu0
    %v8054 = vadd.f32 %v7989, %v8053
    %v8055 = vpop.f32.mrb[0].mxu0
    %v8056 = vpop.f32.mrb[0].mxu0
    %v8057 = vadd.f32 %v7992, %v8056
    %v8058 = vpop.f32.mrb[0].mxu0
    %8059 = vmatprep.mubr.bf16.mxu0 %v7548
    %8060 = vmatmul.mubr.bf16.gmra.mrb[0].mxu0 %v7547
    %v8061 = vpop.f32.mrb[0].mxu0
    %v8062 = vadd.f32 %v7997, %v8061
    %v8063 = vpop.f32.mrb[0].mxu0
    %v8064 = vpop.f32.mrb[0].mxu0
    %v8065 = vadd.f32 %v8000, %v8064
    %v8066 = vpop.f32.mrb[0].mxu0
    %8067 = vmatprep.mubr.bf16.mxu0 %v7554
    %8068 = vmatmul.mubr.bf16.gmra.mrb[0].mxu0 %v7553
    %v8069 = vpop.f32.mrb[0].mxu0
    %v8070 = vadd.f32 %v8005, %v8069
    %v8071 = vpop.f32.mrb[0].mxu0
    %v8072 = vpop.f32.mrb[0].mxu0
    %v8073 = vadd.f32 %v8008, %v8072
    %v8074 = vpop.f32.mrb[0].mxu0
    %8075 = vmatprep.mubr.bf16.mxu0 %v7560
    %8076 = vmatmul.mubr.bf16.gmra.mrb[0].mxu0 %v7559
    %v8077 = vpop.f32.mrb[0].mxu0
    %v8078 = vadd.f32 %v8013, %v8077
    %v8079 = vpop.f32.mrb[0].mxu0
    %v8080 = vpop.f32.mrb[0].mxu0
    %v8081 = vadd.f32 %v8016, %v8080
    %v8082 = vpop.f32.mrb[0].mxu0
    %8083 = vdwg.mxu0
    %8084 = vmatprep.subr.bf16.mxu0 0
    %8085 = vmatpush1.bf16.msra.mxu0 %v7890
    %8086 = vmatprep.subr.bf16.mxu0 0
    %8087 = vmatpush1.bf16.msra.mxu0 %v7891
    %8088 = vmatprep.subr.bf16.mxu0 0
    %8089 = vmatpush1.bf16.msra.mxu0 %v7892
    %8090 = vmatprep.subr.bf16.mxu0 0
    %8091 = vmatpush1.bf16.msra.mxu0 %v7893
    %8092 = vmatprep.subr.bf16.mxu0 0
    %8093 = vmatpush1.bf16.msra.mxu0 %v7894
    %8094 = vmatprep.subr.bf16.mxu0 0
    %8095 = vmatpush1.bf16.msra.mxu0 %v7895
    %8096 = vmatprep.subr.bf16.mxu0 0
    %8097 = vmatpush1.bf16.msra.mxu0 %v7896
    %8098 = vmatprep.subr.bf16.mxu0 0
    %8099 = vmatpush1.bf16.msra.mxu0 %v7897
    %8100 = vmatprep.subr.bf16.mxu0 0
    %8101 = vmatpush1.bf16.msra.mxu0 %v7898
    %8102 = vmatprep.subr.bf16.mxu0 0
    %8103 = vmatpush1.bf16.msra.mxu0 %v7899
    %8104 = vmatprep.subr.bf16.mxu0 0
    %8105 = vmatpush1.bf16.msra.mxu0 %v7900
    %8106 = vmatprep.subr.bf16.mxu0 0
    %8107 = vmatpush1.bf16.msra.mxu0 %v7901
    %8108 = vmatprep.subr.bf16.mxu0 0
    %8109 = vmatpush1.bf16.msra.mxu0 %v7902
    %8110 = vmatprep.subr.bf16.mxu0 0
    %8111 = vmatpush1.bf16.msra.mxu0 %v7903
    %8112 = vmatprep.subr.bf16.mxu0 0
    %8113 = vmatpush1.bf16.msra.mxu0 %v7904
    %8114 = vmatprep.subr.bf16.mxu0 0
    %8115 = vmatpush1.bf16.msra.mxu0 %v7905
    %8116 = vmatprep.mubr.bf16.mxu0 %v7544
    %8117 = vmatmul.mubr.bf16.gmra.mrb[0].mxu0 %v7543
    %v8118 = vpop.f32.mrb[0].mxu0
    %v8119 = vadd.f32 %v8054, %v8118
    %v8120 = vpop.f32.mrb[0].mxu0
    %v8121 = vpop.f32.mrb[0].mxu0
    %v8122 = vadd.f32 %v8057, %v8121
    %v8123 = vpop.f32.mrb[0].mxu0
    %8124 = vmatprep.mubr.bf16.mxu0 %v7550
    %8125 = vmatmul.mubr.bf16.gmra.mrb[0].mxu0 %v7549
    %v8126 = vpop.f32.mrb[0].mxu0
    %v8127 = vadd.f32 %v8062, %v8126
    %v8128 = vpop.f32.mrb[0].mxu0
    %v8129 = vpop.f32.mrb[0].mxu0
    %v8130 = vadd.f32 %v8065, %v8129
    %v8131 = vpop.f32.mrb[0].mxu0
    %8132 = vmatprep.mubr.bf16.mxu0 %v7556
    %8133 = vmatmul.mubr.bf16.gmra.mrb[0].mxu0 %v7555
    %v8134 = vpop.f32.mrb[0].mxu0
    %v8135 = vadd.f32 %v8070, %v8134
    %v8136 = vpop.f32.mrb[0].mxu0
    %v8137 = vpop.f32.mrb[0].mxu0
    %v8138 = vadd.f32 %v8073, %v8137
    %v8139 = vpop.f32.mrb[0].mxu0
    %8140 = vmatprep.mubr.bf16.mxu0 %v7562
    %8141 = vmatmul.mubr.bf16.gmra.mrb[0].mxu0 %v7561
    %v8142 = vpop.f32.mrb[0].mxu0
    %v8143 = vadd.f32 %v8078, %v8142
    %v8144 = vpop.f32.mrb[0].mxu0
    %v8145 = vpop.f32.mrb[0].mxu0
    %v8146 = vadd.f32 %v8081, %v8145
    %v8147 = vpop.f32.mrb[0].mxu0
    %8148 = vdwg.mxu0
    %v8149 = vtanh.pop %v8119
    %v8150 = vtanh.pop %v8122
    %v8151 = vtanh.pop %v8127
    %v8152 = vtanh.pop %v8130
    %v8153 = vtanh.pop %v8135
    %v8154 = vtanh.pop %v8138
    %v8155 = vtanh.pop %v8143
    %v8156 = vtanh.pop %v8146
    %8157 = vst.msk [vmem:[#allocation19] sm:$0xff] %vm3228, %v8149
    %8158 = vst.msk [vmem:[#allocation19 + $0x8] sm:$0xff] %vm3228, %v8150
    %8159 = vst.msk [vmem:[#allocation19 + $0x10] sm:$0xff] %vm3228, %v8151
    %8160 = vst.msk [vmem:[#allocation19 + $0x18] sm:$0xff] %vm3228, %v8152
    %8161 = vst.msk [vmem:[#allocation19 + $0x20] sm:$0xff] %vm3228, %v8153
    %8162 = vst.msk [vmem:[#allocation19 + $0x28] sm:$0xff] %vm3228, %v8154
    %8163 = vst.msk [vmem:[#allocation19 + $0x30] sm:$0xff] %vm3228, %v8155
    %8164 = vst.msk [vmem:[#allocation19 + $0x38] sm:$0xff] %vm3228, %v8156
    // Predicated region
    $region150: #{generator_forward.1} parent=1 // pred_check
      _
    $region151: #{generator_forward.1} parent=1 // pred_check_branch
      %8166 = sbr.rel (0) target = $region153
    $region152: #{generator_forward.1} parent=1 // pred_region
      %s8168 = ssub.s32 1024, 1024
      %8169 = vsyncadd [#allocation4], %s8168
      %s8170 = sshll.u32 [#allocation19], 4
      %s8171 = int_to_ptr.vmem [resolvable:$true] %s8170
      %8176 = dma.vmem_to_hbm [thread:$0]  %s8171, 1024, %s27, [#allocation4], 128, 128, 8
    $region153: #{generator_forward.1} parent=1 // pred_fallthru
      _
    // Predicated region
    $region154: #{generator_forward.1} parent=1 // pred_check
      _
    $region155: #{generator_forward.1} parent=1 // pred_check_branch
      %8178 = sbr.rel (0) target = $region157
    $region156: #{generator_forward.1} parent=1 // pred_region
      %8179 = dma.done [#allocation4], 1024
    $region157: #{generator_forward.1} parent=1 // pred_fallthru
      _
    %8180 = vsyncpa [#allocation3], 1
    %8181 = vsyncpa [#allocation6], 1
    %8182 = vsyncpa [#allocation9], 1
    %8183 = vsyncpa [#allocation12], 1
    %8184 = vsyncpa [#allocation15], 1
    %8185 = vsyncpa [#allocation18], 1
    %8186 = vsyncpa [#allocation4], 1

</llo_original>
